<compile_context>
chip_gen: v5e
topology: v5e:2x2
jax: 0.10.0
libtpu: 0.0.40
codegen_flags: <defaults>
</compile_context>

<pallas_src>
import jax
import jax.numpy as jnp
import numpy as np
from jax.experimental import pallas as pl
from jax.experimental.pallas import tpu as pltpu

IN_EPS = 1e-5  # nn.InstanceNorm2d default (affine=False, no running stats)


def _instance_norm_relu(v):
    """Per-channel InstanceNorm (biased var, eps=1e-5) + ReLU over axis 0 (=H*W)."""
    mu = jnp.mean(v, axis=0, keepdims=True)
    vc = v - mu
    var = jnp.mean(vc * vc, axis=0, keepdims=True)
    return jnp.maximum(vc * jax.lax.rsqrt(var + IN_EPS), 0.0)


def _make_dense_block_kernel(H, W, C0, Cg, Cmid, L):
    """Whole-dense-block kernel for one sample (one grid step)."""
    HW = H * W

    def kernel(x_ref, w1_ref, w2_ref, o_ref):
        # Flattened-spatial row index r = h*W + w; only `%` is needed for masks
        # (h-boundary masks reduce to r >= W / r < HW - W).
        r_idx = jax.lax.broadcasted_iota(jnp.int32, (HW, 1), 0)
        w_idx = r_idx % W

        # Feature chunks of the growing concatenation.  `raw` (f32) feeds the
        # final output; `normed` (bf16, IN+ReLU applied exactly once) feeds the
        # 1x1-conv GEMMs of all later layers.
        raw = [x_ref[0]]                                        # (HW, C0) f32
        normed = [_instance_norm_relu(raw[0]).astype(jnp.bfloat16)]
        offs = [0]                                              # row offsets in w1

        for l in range(L):
            # ---- 1x1 conv over the virtual concat: sum of per-chunk GEMMs ---
            w1_l = w1_ref[l]                                    # (C_total, Cmid) bf16
            b = jnp.zeros((HW, Cmid), jnp.float32)
            for j, hj in enumerate(normed):
                cj = hj.shape[1]
                wj = w1_l[offs[j]:offs[j] + cj, :]              # (cj, Cmid) bf16
                b = b + jnp.dot(hj, wj, preferred_element_type=jnp.float32)

            # ---- InstanceNorm + ReLU on the bottleneck -----------------------
            h2 = _instance_norm_relu(b).astype(jnp.bfloat16)    # (HW, Cmid)

            # ---- 3x3 conv (pad=1): ONE wide GEMM + 9 shifted adds ------------
            y = jnp.dot(h2, w2_ref[l],
                        preferred_element_type=jnp.float32)     # (HW, 9*Cg) f32

            acc = jnp.zeros((HW, Cg), jnp.float32)
            k = 0
            for dh in (-1, 0, 1):
                for dw in (-1, 0, 1):
                    tap = y[:, k * Cg:(k + 1) * Cg]             # tap k = (dh+1)*3+(dw+1)
                    s = dh * W + dw                             # source row r' = r + s
                    if s != 0:
                        tap = pltpu.roll(tap, (-s) % HW, 0)     # tap[r] <- y[r + s]
                    valid = None
                    if dh == -1:
                        valid = r_idx >= W                      # needs row h-1
                    elif dh == 1:
                        valid = r_idx < HW - W                  # needs row h+1
                    if dw == -1:
                        m = w_idx >= 1                          # needs col w-1
                        valid = m if valid is None else jnp.logical_and(valid, m)
                    elif dw == 1:
                        m = w_idx <= W - 2                      # needs col w+1
                        valid = m if valid is None else jnp.logical_and(valid, m)
                    if valid is not None:
                        tap = jnp.where(valid, tap, 0.0)
                    acc = acc + tap
                    k += 1

            raw.append(acc)                                     # (HW, Cg) f32
            if l + 1 < L:
                normed.append(_instance_norm_relu(acc).astype(jnp.bfloat16))
                offs.append(C0 + l * Cg)

        # Single store of the whole concatenation (torch.cat) for this sample.
        o_ref[0] = jnp.concatenate(raw, axis=-1).astype(o_ref.dtype)

    return kernel


def dense_block_forward(x_nchw, w1_stack, w2_stack):
    """_DenseBlock.forward: (N, C0, H, W) -> (N, C0 + L*growth, H, W).

    w1_stack: (L, C_total, Cmid) bf16; layer-l rows >= C0 + l*Cg are zero pad
              (never read by the kernel).
    w2_stack: (L, Cmid, 9*Cg) bf16; column block k = kh*3 + kw holds that tap.
    """
    N, C0, H, W = x_nchw.shape
    L, C_total, Cmid = w1_stack.shape
    Cg = w2_stack.shape[2] // 9
    assert C_total == C0 + L * Cg
    HW = H * W

    # NCHW -> flattened NHWC once at the input boundary.
    x = x_nchw.transpose(0, 2, 3, 1).reshape(N, HW, C0)

    flops = 0
    for l in range(L):
        flops += 2 * HW * Cmid * ((C0 + l * Cg) + 9 * Cg)
    flops *= N
    bytes_accessed = (x.size + N * HW * C_total) * 4 \
        + (w1_stack.size + w2_stack.size) * 2
    transcendentals = N * (C_total + L * Cmid)          # rsqrt per channel

    kernel = _make_dense_block_kernel(H, W, C0, Cg, Cmid, L)
    out = pl.pallas_call(
        kernel,
        out_shape=jax.ShapeDtypeStruct((N, HW, C_total), jnp.float32),
        grid=(N,),
        in_specs=[
            pl.BlockSpec((1, HW, C0), lambda n: (n, 0, 0)),         # per-sample input
            pl.BlockSpec((L, C_total, Cmid), lambda n: (0, 0, 0)),  # resident weights
            pl.BlockSpec((L, Cmid, 9 * Cg), lambda n: (0, 0, 0)),   # resident weights
        ],
        out_specs=pl.BlockSpec((1, HW, C_total), lambda n: (n, 0, 0)),
        compiler_params=pltpu.CompilerParams(dimension_semantics=("parallel",)),
        cost_estimate=pl.CostEstimate(flops=flops,
                                      transcendentals=transcendentals,
                                      bytes_accessed=bytes_accessed),
    )(x, w1_stack, w2_stack)

    # flattened NHWC -> NCHW once at the output boundary.
    return out.reshape(N, H, W, C_total).transpose(0, 3, 1, 2)


def init_params(key, num_layers, num_input_features, bn_size, growth_rate):
    """Deterministic weights in PyTorch layout (f32): (conv1.weight, conv2.weight)."""
    params = []
    cin = num_input_features
    cmid = bn_size * growth_rate
    keys = jax.random.split(key, 2 * num_layers)
    for i in range(num_layers):
        w1_t = 0.1 * jax.random.normal(keys[2 * i], (cmid, cin, 1, 1), jnp.float32)
        w2_t = 0.1 * jax.random.normal(keys[2 * i + 1],
                                       (growth_rate, cmid, 3, 3), jnp.float32)
        params.append((w1_t, w2_t))
        cin += growth_rate
    return params


def pack_params(params, num_input_features, growth_rate):
    """PyTorch-layout weights -> stacked, kernel-ready bf16 weights."""
    L = len(params)
    C0, Cg = num_input_features, growth_rate
    Cmid = params[0][0].shape[0]
    C_total = C0 + L * Cg
    w1s, w2s = [], []
    for l, (w1_t, w2_t) in enumerate(params):
        C_l = C0 + l * Cg
        w1 = w1_t[:, :, 0, 0].T                              # (C_l, Cmid)
        w1 = jnp.pad(w1, ((0, C_total - C_l), (0, 0)))       # zero rows (never read)
        w1s.append(w1)
        w2 = w2_t.transpose(2, 3, 1, 0)                      # (3, 3, Cmid, Cg)
        w2 = w2.reshape(9, Cmid, Cg).transpose(1, 0, 2)      # (Cmid, 9, Cg)
        w2s.append(w2.reshape(Cmid, 9 * Cg))
    return (jnp.stack(w1s).astype(jnp.bfloat16),
            jnp.stack(w2s).astype(jnp.bfloat16))


def dense_block_reference(x_nchw, params):
    """Pure-JAX (f32, XLA conv) reference of _DenseBlock.forward in eval mode."""
    feats = x_nchw
    dn = ('NCHW', 'OIHW', 'NCHW')
    hi = jax.lax.Precision.HIGHEST
    for w1_t, w2_t in params:
        mu = feats.mean(axis=(2, 3), keepdims=True)
        var = feats.var(axis=(2, 3), keepdims=True)
        h = jnp.maximum((feats - mu) * jax.lax.rsqrt(var + IN_EPS), 0.0)
        b = jax.lax.conv_general_dilated(h, w1_t, (1, 1), 'VALID',
                                         dimension_numbers=dn, precision=hi)
        mu2 = b.mean(axis=(2, 3), keepdims=True)
        var2 = b.var(axis=(2, 3), keepdims=True)
        h2 = jnp.maximum((b - mu2) * jax.lax.rsqrt(var2 + IN_EPS), 0.0)
        new = jax.lax.conv_general_dilated(h2, w2_t, (1, 1), ((1, 1), (1, 1)),
                                           dimension_numbers=dn, precision=hi)
        feats = jnp.concatenate([feats, new], axis=1)
    return feats


if __name__ == "__main__":
    key = jax.random.PRNGKey(0)
    k_in, k_par = jax.random.split(key)

    # Small but architecture-consistent shapes.
    batch, num_input_features, H, W = 2, 4, 16, 16
    num_layers, bn_size, growth_rate = 3, 4, 4
    # drop_rate = 0.0 (F.dropout is a no-op); efficient=False (checkpointing is a
    # training-memory optimization with no forward effect).

    x = jax.random.normal(k_in, (batch, num_input_features, H, W), jnp.float32)
    params = init_params(k_par, num_layers, num_input_features, bn_size, growth_rate)
    w1_stack, w2_stack = pack_params(params, num_input_features, growth_rate)

    fwd = jax.jit(dense_block_forward)
    out = fwd(x, w1_stack, w2_stack)
    jax.block_until_ready(out)

    expect_c = num_input_features + num_layers * growth_rate   # 4 + 3*4 = 16
    assert out.shape == (batch, expect_c, H, W), out.shape
    assert out.dtype == jnp.float32

    # Correctness check against a pure-JAX f32 reference (loose tolerance for the
    # kernel's bf16 MXU operands; stats/accumulation are f32).
    ref = dense_block_reference(x, params)
    np.testing.assert_allclose(np.asarray(out), np.asarray(ref), rtol=0.1, atol=0.1)

    print("KERNEL_OK")
</pallas_src>

<mosaic_0001>
module attributes {stable_mosaic.version = 11 : i64} {
  func.func @kernel(%arg0: i32, %arg1: memref<1x256x4xf32, #tpu.memory_space<vmem>>, %arg2: memref<3x16x16xbf16, #tpu.memory_space<vmem>>, %arg3: memref<3x16x36xbf16, #tpu.memory_space<vmem>>, %arg4: memref<1x256x16xf32, #tpu.memory_space<vmem>>) attributes {dimension_semantics = [#tpu.dimension_semantics<parallel>], iteration_bounds = array<i64: 2>, scalar_prefetch = 0 : i64, scratch_operands = 0 : i64, tpu.core_type = #tpu.core_type<tc>, window_params = [{transform_indices = @transform_0, window_bounds = array<i64: 1, 256, 4>}, {pipeline_mode = #tpu.pipeline_mode<synchronous>, transform_indices = @transform_1, window_bounds = array<i64: 3, 16, 16>}, {pipeline_mode = #tpu.pipeline_mode<synchronous>, transform_indices = @transform_2, window_bounds = array<i64: 3, 16, 36>}, {transform_indices = @transform_3, window_bounds = array<i64: 1, 256, 16>}]} {
    %0 = tpu.iota {dimensions = array<i32: 0>} : vector<256x1xi32>
    %c16_i32 = arith.constant 16 : i32
    %c0_i32 = arith.constant 0 : i32
    %1 = arith.cmpi eq, %c16_i32, %c0_i32 : i32
    %c1_i32 = arith.constant 1 : i32
    %2 = arith.select %1, %c1_i32, %c16_i32 : i32
    %3 = vector.broadcast %2 : i32 to vector<256x1xi32>
    %4 = arith.remsi %0, %3 : vector<256x1xi32>
    %c0_i32_0 = arith.constant 0 : i32
    %5 = vector.broadcast %c0_i32_0 : i32 to vector<256x1xi32>
    %6 = arith.cmpi ne, %4, %5 : vector<256x1xi32>
    %c0_i32_1 = arith.constant 0 : i32
    %7 = vector.broadcast %c0_i32_1 : i32 to vector<256x1xi32>
    %8 = arith.cmpi slt, %4, %7 : vector<256x1xi32>
    %c0_i32_2 = arith.constant 0 : i32
    %9 = arith.cmpi slt, %2, %c0_i32_2 : i32
    %10 = vector.broadcast %9 : i1 to vector<256x1xi1>
    %11 = vector.broadcast %10 : vector<256x1xi1> to vector<256x1xi1>
    %12 = arith.xori %8, %11 : vector<256x1xi1>
    %13 = arith.andi %12, %6 : vector<256x1xi1>
    %14 = vector.broadcast %2 : i32 to vector<256x1xi32>
    %15 = arith.addi %4, %14 : vector<256x1xi32>
    %16 = arith.select %13, %15, %4 : vector<256x1xi1>, vector<256x1xi32>
    %c0 = arith.constant 0 : index
    %c0_3 = arith.constant 0 : index
    %c0_4 = arith.constant 0 : index
    %17 = vector.load %arg1[%c0, %c0_3, %c0_4] : memref<1x256x4xf32, #tpu.memory_space<vmem>>, vector<1x256x4xf32>
    %18 = vector.shape_cast %17 : vector<1x256x4xf32> to vector<256x4xf32>
    %cst = arith.constant dense<0.000000e+00> : vector<4xf32>
    %19 = vector.multi_reduction <add>, %18, %cst [0] : vector<256x4xf32> to vector<4xf32>
    %20 = vector.shape_cast %19 : vector<4xf32> to vector<1x4xf32>
    %cst_5 = arith.constant 2.560000e+02 : f32
    %21 = vector.broadcast %cst_5 : f32 to vector<1x4xf32>
    %22 = arith.divf %20, %21 : vector<1x4xf32>
    %23 = vector.broadcast %22 : vector<1x4xf32> to vector<256x4xf32>
    %24 = arith.subf %18, %23 : vector<256x4xf32>
    %25 = arith.mulf %24, %24 : vector<256x4xf32>
    %cst_6 = arith.constant dense<0.000000e+00> : vector<4xf32>
    %26 = vector.multi_reduction <add>, %25, %cst_6 [0] : vector<256x4xf32> to vector<4xf32>
    %27 = vector.shape_cast %26 : vector<4xf32> to vector<1x4xf32>
    %cst_7 = arith.constant 2.560000e+02 : f32
    %28 = vector.broadcast %cst_7 : f32 to vector<1x4xf32>
    %29 = arith.divf %27, %28 : vector<1x4xf32>
    %cst_8 = arith.constant 9.99999974E-6 : f32
    %30 = vector.broadcast %cst_8 : f32 to vector<1x4xf32>
    %31 = arith.addf %29, %30 : vector<1x4xf32>
    %32 = math.rsqrt %31 : vector<1x4xf32>
    %33 = vector.broadcast %32 : vector<1x4xf32> to vector<256x4xf32>
    %34 = arith.mulf %24, %33 : vector<256x4xf32>
    %cst_9 = arith.constant 0.000000e+00 : f32
    %35 = vector.broadcast %cst_9 : f32 to vector<256x4xf32>
    %36 = arith.maximumf %34, %35 : vector<256x4xf32>
    %37 = arith.truncf %36 : vector<256x4xf32> to vector<256x4xbf16>
    %c0_10 = arith.constant 0 : index
    %c0_11 = arith.constant 0 : index
    %c0_12 = arith.constant 0 : index
    %38 = vector.load %arg2[%c0_10, %c0_11, %c0_12] : memref<3x16x16xbf16, #tpu.memory_space<vmem>>, vector<1x16x16xbf16>
    %39 = vector.shape_cast %38 : vector<1x16x16xbf16> to vector<16x16xbf16>
    %cst_13 = arith.constant 0.000000e+00 : f32
    %40 = vector.broadcast %cst_13 : f32 to vector<256x16xf32>
    %41 = vector.extract_strided_slice %39 {offsets = [0, 0], sizes = [4, 16], strides = [1, 1]} : vector<16x16xbf16> to vector<4x16xbf16>
    %cst_14 = arith.constant dense<0.000000e+00> : vector<256x16xf32>
    %42 = tpu.matmul %37, %41, %cst_14 {dimension_numbers = #tpu.dot_dimension_numbers<[1], [0], [0], [1], [0, 0, 1, 1], [], []>} : vector<256x4xbf16>, vector<4x16xbf16>, vector<256x16xf32> -> vector<256x16xf32>
    %43 = arith.addf %40, %42 : vector<256x16xf32>
    %cst_15 = arith.constant dense<0.000000e+00> : vector<16xf32>
    %44 = vector.multi_reduction <add>, %43, %cst_15 [0] : vector<256x16xf32> to vector<16xf32>
    %45 = vector.shape_cast %44 : vector<16xf32> to vector<1x16xf32>
    %cst_16 = arith.constant 2.560000e+02 : f32
    %46 = vector.broadcast %cst_16 : f32 to vector<1x16xf32>
    %47 = arith.divf %45, %46 : vector<1x16xf32>
    %48 = vector.broadcast %47 : vector<1x16xf32> to vector<256x16xf32>
    %49 = arith.subf %43, %48 : vector<256x16xf32>
    %50 = arith.mulf %49, %49 : vector<256x16xf32>
    %cst_17 = arith.constant dense<0.000000e+00> : vector<16xf32>
    %51 = vector.multi_reduction <add>, %50, %cst_17 [0] : vector<256x16xf32> to vector<16xf32>
    %52 = vector.shape_cast %51 : vector<16xf32> to vector<1x16xf32>
    %cst_18 = arith.constant 2.560000e+02 : f32
    %53 = vector.broadcast %cst_18 : f32 to vector<1x16xf32>
    %54 = arith.divf %52, %53 : vector<1x16xf32>
    %cst_19 = arith.constant 9.99999974E-6 : f32
    %55 = vector.broadcast %cst_19 : f32 to vector<1x16xf32>
    %56 = arith.addf %54, %55 : vector<1x16xf32>
    %57 = math.rsqrt %56 : vector<1x16xf32>
    %58 = vector.broadcast %57 : vector<1x16xf32> to vector<256x16xf32>
    %59 = arith.mulf %49, %58 : vector<256x16xf32>
    %cst_20 = arith.constant 0.000000e+00 : f32
    %60 = vector.broadcast %cst_20 : f32 to vector<256x16xf32>
    %61 = arith.maximumf %59, %60 : vector<256x16xf32>
    %62 = arith.truncf %61 : vector<256x16xf32> to vector<256x16xbf16>
    %c0_21 = arith.constant 0 : index
    %c0_22 = arith.constant 0 : index
    %c0_23 = arith.constant 0 : index
    %63 = vector.load %arg3[%c0_21, %c0_22, %c0_23] : memref<3x16x36xbf16, #tpu.memory_space<vmem>>, vector<1x16x36xbf16>
    %64 = vector.shape_cast %63 : vector<1x16x36xbf16> to vector<16x36xbf16>
    %cst_24 = arith.constant dense<0.000000e+00> : vector<256x36xf32>
    %65 = tpu.matmul %62, %64, %cst_24 {dimension_numbers = #tpu.dot_dimension_numbers<[1], [0], [0], [1], [0, 0, 1, 1], [], []>} : vector<256x16xbf16>, vector<16x36xbf16>, vector<256x36xf32> -> vector<256x36xf32>
    %cst_25 = arith.constant 0.000000e+00 : f32
    %66 = vector.broadcast %cst_25 : f32 to vector<256x4xf32>
    %67 = vector.extract_strided_slice %65 {offsets = [0, 0], sizes = [256, 4], strides = [1, 1]} : vector<256x36xf32> to vector<256x4xf32>
    %c17_i32 = arith.constant 17 : i32
    %68 = tpu.dynamic_rotate %67 by %c17_i32 dim 0 : vector<256x4xf32>, i32 -> vector<256x4xf32>
    %c16_i32_26 = arith.constant 16 : i32
    %69 = vector.broadcast %c16_i32_26 : i32 to vector<256x1xi32>
    %70 = arith.cmpi sge, %0, %69 : vector<256x1xi32>
    %c1_i32_27 = arith.constant 1 : i32
    %71 = vector.broadcast %c1_i32_27 : i32 to vector<256x1xi32>
    %72 = arith.cmpi sge, %16, %71 : vector<256x1xi32>
    %73 = arith.andi %70, %72 : vector<256x1xi1>
    %cst_28 = arith.constant 0.000000e+00 : f32
    %74 = vector.shape_cast %73 : vector<256x1xi1> to vector<256x1xi1>
    %75 = vector.broadcast %74 : vector<256x1xi1> to vector<256x4xi1>
    %76 = vector.broadcast %cst_28 : f32 to vector<256x4xf32>
    %77 = arith.select %75, %68, %76 : vector<256x4xi1>, vector<256x4xf32>
    %78 = arith.addf %66, %77 : vector<256x4xf32>
    %79 = vector.extract_strided_slice %65 {offsets = [0, 4], sizes = [256, 4], strides = [1, 1]} : vector<256x36xf32> to vector<256x4xf32>
    %c16_i32_29 = arith.constant 16 : i32
    %80 = tpu.dynamic_rotate %79 by %c16_i32_29 dim 0 : vector<256x4xf32>, i32 -> vector<256x4xf32>
    %c16_i32_30 = arith.constant 16 : i32
    %81 = vector.broadcast %c16_i32_30 : i32 to vector<256x1xi32>
    %82 = arith.cmpi sge, %0, %81 : vector<256x1xi32>
    %cst_31 = arith.constant 0.000000e+00 : f32
    %83 = vector.shape_cast %82 : vector<256x1xi1> to vector<256x1xi1>
    %84 = vector.broadcast %83 : vector<256x1xi1> to vector<256x4xi1>
    %85 = vector.broadcast %cst_31 : f32 to vector<256x4xf32>
    %86 = arith.select %84, %80, %85 : vector<256x4xi1>, vector<256x4xf32>
    %87 = arith.addf %78, %86 : vector<256x4xf32>
    %88 = vector.extract_strided_slice %65 {offsets = [0, 8], sizes = [256, 4], strides = [1, 1]} : vector<256x36xf32> to vector<256x4xf32>
    %c15_i32 = arith.constant 15 : i32
    %89 = tpu.dynamic_rotate %88 by %c15_i32 dim 0 : vector<256x4xf32>, i32 -> vector<256x4xf32>
    %c16_i32_32 = arith.constant 16 : i32
    %90 = vector.broadcast %c16_i32_32 : i32 to vector<256x1xi32>
    %91 = arith.cmpi sge, %0, %90 : vector<256x1xi32>
    %c14_i32 = arith.constant 14 : i32
    %92 = vector.broadcast %c14_i32 : i32 to vector<256x1xi32>
    %93 = arith.cmpi sle, %16, %92 : vector<256x1xi32>
    %94 = arith.andi %91, %93 : vector<256x1xi1>
    %cst_33 = arith.constant 0.000000e+00 : f32
    %95 = vector.shape_cast %94 : vector<256x1xi1> to vector<256x1xi1>
    %96 = vector.broadcast %95 : vector<256x1xi1> to vector<256x4xi1>
    %97 = vector.broadcast %cst_33 : f32 to vector<256x4xf32>
    %98 = arith.select %96, %89, %97 : vector<256x4xi1>, vector<256x4xf32>
    %99 = arith.addf %87, %98 : vector<256x4xf32>
    %100 = vector.extract_strided_slice %65 {offsets = [0, 12], sizes = [256, 4], strides = [1, 1]} : vector<256x36xf32> to vector<256x4xf32>
    %c1_i32_34 = arith.constant 1 : i32
    %101 = tpu.dynamic_rotate %100 by %c1_i32_34 dim 0 : vector<256x4xf32>, i32 -> vector<256x4xf32>
    %c1_i32_35 = arith.constant 1 : i32
    %102 = vector.broadcast %c1_i32_35 : i32 to vector<256x1xi32>
    %103 = arith.cmpi sge, %16, %102 : vector<256x1xi32>
    %cst_36 = arith.constant 0.000000e+00 : f32
    %104 = vector.shape_cast %103 : vector<256x1xi1> to vector<256x1xi1>
    %105 = vector.broadcast %104 : vector<256x1xi1> to vector<256x4xi1>
    %106 = vector.broadcast %cst_36 : f32 to vector<256x4xf32>
    %107 = arith.select %105, %101, %106 : vector<256x4xi1>, vector<256x4xf32>
    %108 = arith.addf %99, %107 : vector<256x4xf32>
    %109 = vector.extract_strided_slice %65 {offsets = [0, 16], sizes = [256, 4], strides = [1, 1]} : vector<256x36xf32> to vector<256x4xf32>
    %110 = arith.addf %108, %109 : vector<256x4xf32>
    %111 = vector.extract_strided_slice %65 {offsets = [0, 20], sizes = [256, 4], strides = [1, 1]} : vector<256x36xf32> to vector<256x4xf32>
    %c255_i32 = arith.constant 255 : i32
    %112 = tpu.dynamic_rotate %111 by %c255_i32 dim 0 : vector<256x4xf32>, i32 -> vector<256x4xf32>
    %c14_i32_37 = arith.constant 14 : i32
    %113 = vector.broadcast %c14_i32_37 : i32 to vector<256x1xi32>
    %114 = arith.cmpi sle, %16, %113 : vector<256x1xi32>
    %cst_38 = arith.constant 0.000000e+00 : f32
    %115 = vector.shape_cast %114 : vector<256x1xi1> to vector<256x1xi1>
    %116 = vector.broadcast %115 : vector<256x1xi1> to vector<256x4xi1>
    %117 = vector.broadcast %cst_38 : f32 to vector<256x4xf32>
    %118 = arith.select %116, %112, %117 : vector<256x4xi1>, vector<256x4xf32>
    %119 = arith.addf %110, %118 : vector<256x4xf32>
    %120 = vector.extract_strided_slice %65 {offsets = [0, 24], sizes = [256, 4], strides = [1, 1]} : vector<256x36xf32> to vector<256x4xf32>
    %c241_i32 = arith.constant 241 : i32
    %121 = tpu.dynamic_rotate %120 by %c241_i32 dim 0 : vector<256x4xf32>, i32 -> vector<256x4xf32>
    %c240_i32 = arith.constant 240 : i32
    %122 = vector.broadcast %c240_i32 : i32 to vector<256x1xi32>
    %123 = arith.cmpi slt, %0, %122 : vector<256x1xi32>
    %c1_i32_39 = arith.constant 1 : i32
    %124 = vector.broadcast %c1_i32_39 : i32 to vector<256x1xi32>
    %125 = arith.cmpi sge, %16, %124 : vector<256x1xi32>
    %126 = arith.andi %123, %125 : vector<256x1xi1>
    %cst_40 = arith.constant 0.000000e+00 : f32
    %127 = vector.shape_cast %126 : vector<256x1xi1> to vector<256x1xi1>
    %128 = vector.broadcast %127 : vector<256x1xi1> to vector<256x4xi1>
    %129 = vector.broadcast %cst_40 : f32 to vector<256x4xf32>
    %130 = arith.select %128, %121, %129 : vector<256x4xi1>, vector<256x4xf32>
    %131 = arith.addf %119, %130 : vector<256x4xf32>
    %132 = vector.extract_strided_slice %65 {offsets = [0, 28], sizes = [256, 4], strides = [1, 1]} : vector<256x36xf32> to vector<256x4xf32>
    %c240_i32_41 = arith.constant 240 : i32
    %133 = tpu.dynamic_rotate %132 by %c240_i32_41 dim 0 : vector<256x4xf32>, i32 -> vector<256x4xf32>
    %c240_i32_42 = arith.constant 240 : i32
    %134 = vector.broadcast %c240_i32_42 : i32 to vector<256x1xi32>
    %135 = arith.cmpi slt, %0, %134 : vector<256x1xi32>
    %cst_43 = arith.constant 0.000000e+00 : f32
    %136 = vector.shape_cast %135 : vector<256x1xi1> to vector<256x1xi1>
    %137 = vector.broadcast %136 : vector<256x1xi1> to vector<256x4xi1>
    %138 = vector.broadcast %cst_43 : f32 to vector<256x4xf32>
    %139 = arith.select %137, %133, %138 : vector<256x4xi1>, vector<256x4xf32>
    %140 = arith.addf %131, %139 : vector<256x4xf32>
    %141 = vector.extract_strided_slice %65 {offsets = [0, 32], sizes = [256, 4], strides = [1, 1]} : vector<256x36xf32> to vector<256x4xf32>
    %c239_i32 = arith.constant 239 : i32
    %142 = tpu.dynamic_rotate %141 by %c239_i32 dim 0 : vector<256x4xf32>, i32 -> vector<256x4xf32>
    %c240_i32_44 = arith.constant 240 : i32
    %143 = vector.broadcast %c240_i32_44 : i32 to vector<256x1xi32>
    %144 = arith.cmpi slt, %0, %143 : vector<256x1xi32>
    %c14_i32_45 = arith.constant 14 : i32
    %145 = vector.broadcast %c14_i32_45 : i32 to vector<256x1xi32>
    %146 = arith.cmpi sle, %16, %145 : vector<256x1xi32>
    %147 = arith.andi %144, %146 : vector<256x1xi1>
    %cst_46 = arith.constant 0.000000e+00 : f32
    %148 = vector.shape_cast %147 : vector<256x1xi1> to vector<256x1xi1>
    %149 = vector.broadcast %148 : vector<256x1xi1> to vector<256x4xi1>
    %150 = vector.broadcast %cst_46 : f32 to vector<256x4xf32>
    %151 = arith.select %149, %142, %150 : vector<256x4xi1>, vector<256x4xf32>
    %152 = arith.addf %140, %151 : vector<256x4xf32>
    %cst_47 = arith.constant dense<0.000000e+00> : vector<4xf32>
    %153 = vector.multi_reduction <add>, %152, %cst_47 [0] : vector<256x4xf32> to vector<4xf32>
    %154 = vector.shape_cast %153 : vector<4xf32> to vector<1x4xf32>
    %cst_48 = arith.constant 2.560000e+02 : f32
    %155 = vector.broadcast %cst_48 : f32 to vector<1x4xf32>
    %156 = arith.divf %154, %155 : vector<1x4xf32>
    %157 = vector.broadcast %156 : vector<1x4xf32> to vector<256x4xf32>
    %158 = arith.subf %152, %157 : vector<256x4xf32>
    %159 = arith.mulf %158, %158 : vector<256x4xf32>
    %cst_49 = arith.constant dense<0.000000e+00> : vector<4xf32>
    %160 = vector.multi_reduction <add>, %159, %cst_49 [0] : vector<256x4xf32> to vector<4xf32>
    %161 = vector.shape_cast %160 : vector<4xf32> to vector<1x4xf32>
    %cst_50 = arith.constant 2.560000e+02 : f32
    %162 = vector.broadcast %cst_50 : f32 to vector<1x4xf32>
    %163 = arith.divf %161, %162 : vector<1x4xf32>
    %cst_51 = arith.constant 9.99999974E-6 : f32
    %164 = vector.broadcast %cst_51 : f32 to vector<1x4xf32>
    %165 = arith.addf %163, %164 : vector<1x4xf32>
    %166 = math.rsqrt %165 : vector<1x4xf32>
    %167 = vector.broadcast %166 : vector<1x4xf32> to vector<256x4xf32>
    %168 = arith.mulf %158, %167 : vector<256x4xf32>
    %cst_52 = arith.constant 0.000000e+00 : f32
    %169 = vector.broadcast %cst_52 : f32 to vector<256x4xf32>
    %170 = arith.maximumf %168, %169 : vector<256x4xf32>
    %171 = arith.truncf %170 : vector<256x4xf32> to vector<256x4xbf16>
    %c1 = arith.constant 1 : index
    %c0_53 = arith.constant 0 : index
    %c0_54 = arith.constant 0 : index
    %172 = vector.load %arg2[%c1, %c0_53, %c0_54] : memref<3x16x16xbf16, #tpu.memory_space<vmem>>, vector<1x16x16xbf16>
    %173 = vector.shape_cast %172 : vector<1x16x16xbf16> to vector<16x16xbf16>
    %cst_55 = arith.constant 0.000000e+00 : f32
    %174 = vector.broadcast %cst_55 : f32 to vector<256x16xf32>
    %175 = vector.extract_strided_slice %173 {offsets = [0, 0], sizes = [4, 16], strides = [1, 1]} : vector<16x16xbf16> to vector<4x16xbf16>
    %cst_56 = arith.constant dense<0.000000e+00> : vector<256x16xf32>
    %176 = tpu.matmul %37, %175, %cst_56 {dimension_numbers = #tpu.dot_dimension_numbers<[1], [0], [0], [1], [0, 0, 1, 1], [], []>} : vector<256x4xbf16>, vector<4x16xbf16>, vector<256x16xf32> -> vector<256x16xf32>
    %177 = arith.addf %174, %176 : vector<256x16xf32>
    %178 = vector.extract_strided_slice %173 {offsets = [4, 0], sizes = [4, 16], strides = [1, 1]} : vector<16x16xbf16> to vector<4x16xbf16>
    %cst_57 = arith.constant dense<0.000000e+00> : vector<256x16xf32>
    %179 = tpu.matmul %171, %178, %cst_57 {dimension_numbers = #tpu.dot_dimension_numbers<[1], [0], [0], [1], [0, 0, 1, 1], [], []>} : vector<256x4xbf16>, vector<4x16xbf16>, vector<256x16xf32> -> vector<256x16xf32>
    %180 = arith.addf %177, %179 : vector<256x16xf32>
    %cst_58 = arith.constant dense<0.000000e+00> : vector<16xf32>
    %181 = vector.multi_reduction <add>, %180, %cst_58 [0] : vector<256x16xf32> to vector<16xf32>
    %182 = vector.shape_cast %181 : vector<16xf32> to vector<1x16xf32>
    %cst_59 = arith.constant 2.560000e+02 : f32
    %183 = vector.broadcast %cst_59 : f32 to vector<1x16xf32>
    %184 = arith.divf %182, %183 : vector<1x16xf32>
    %185 = vector.broadcast %184 : vector<1x16xf32> to vector<256x16xf32>
    %186 = arith.subf %180, %185 : vector<256x16xf32>
    %187 = arith.mulf %186, %186 : vector<256x16xf32>
    %cst_60 = arith.constant dense<0.000000e+00> : vector<16xf32>
    %188 = vector.multi_reduction <add>, %187, %cst_60 [0] : vector<256x16xf32> to vector<16xf32>
    %189 = vector.shape_cast %188 : vector<16xf32> to vector<1x16xf32>
    %cst_61 = arith.constant 2.560000e+02 : f32
    %190 = vector.broadcast %cst_61 : f32 to vector<1x16xf32>
    %191 = arith.divf %189, %190 : vector<1x16xf32>
    %cst_62 = arith.constant 9.99999974E-6 : f32
    %192 = vector.broadcast %cst_62 : f32 to vector<1x16xf32>
    %193 = arith.addf %191, %192 : vector<1x16xf32>
    %194 = math.rsqrt %193 : vector<1x16xf32>
    %195 = vector.broadcast %194 : vector<1x16xf32> to vector<256x16xf32>
    %196 = arith.mulf %186, %195 : vector<256x16xf32>
    %cst_63 = arith.constant 0.000000e+00 : f32
    %197 = vector.broadcast %cst_63 : f32 to vector<256x16xf32>
    %198 = arith.maximumf %196, %197 : vector<256x16xf32>
    %199 = arith.truncf %198 : vector<256x16xf32> to vector<256x16xbf16>
    %c1_64 = arith.constant 1 : index
    %c0_65 = arith.constant 0 : index
    %c0_66 = arith.constant 0 : index
    %200 = vector.load %arg3[%c1_64, %c0_65, %c0_66] : memref<3x16x36xbf16, #tpu.memory_space<vmem>>, vector<1x16x36xbf16>
    %201 = vector.shape_cast %200 : vector<1x16x36xbf16> to vector<16x36xbf16>
    %cst_67 = arith.constant dense<0.000000e+00> : vector<256x36xf32>
    %202 = tpu.matmul %199, %201, %cst_67 {dimension_numbers = #tpu.dot_dimension_numbers<[1], [0], [0], [1], [0, 0, 1, 1], [], []>} : vector<256x16xbf16>, vector<16x36xbf16>, vector<256x36xf32> -> vector<256x36xf32>
    %cst_68 = arith.constant 0.000000e+00 : f32
    %203 = vector.broadcast %cst_68 : f32 to vector<256x4xf32>
    %204 = vector.extract_strided_slice %202 {offsets = [0, 0], sizes = [256, 4], strides = [1, 1]} : vector<256x36xf32> to vector<256x4xf32>
    %c17_i32_69 = arith.constant 17 : i32
    %205 = tpu.dynamic_rotate %204 by %c17_i32_69 dim 0 : vector<256x4xf32>, i32 -> vector<256x4xf32>
    %c16_i32_70 = arith.constant 16 : i32
    %206 = vector.broadcast %c16_i32_70 : i32 to vector<256x1xi32>
    %207 = arith.cmpi sge, %0, %206 : vector<256x1xi32>
    %c1_i32_71 = arith.constant 1 : i32
    %208 = vector.broadcast %c1_i32_71 : i32 to vector<256x1xi32>
    %209 = arith.cmpi sge, %16, %208 : vector<256x1xi32>
    %210 = arith.andi %207, %209 : vector<256x1xi1>
    %cst_72 = arith.constant 0.000000e+00 : f32
    %211 = vector.shape_cast %210 : vector<256x1xi1> to vector<256x1xi1>
    %212 = vector.broadcast %211 : vector<256x1xi1> to vector<256x4xi1>
    %213 = vector.broadcast %cst_72 : f32 to vector<256x4xf32>
    %214 = arith.select %212, %205, %213 : vector<256x4xi1>, vector<256x4xf32>
    %215 = arith.addf %203, %214 : vector<256x4xf32>
    %216 = vector.extract_strided_slice %202 {offsets = [0, 4], sizes = [256, 4], strides = [1, 1]} : vector<256x36xf32> to vector<256x4xf32>
    %c16_i32_73 = arith.constant 16 : i32
    %217 = tpu.dynamic_rotate %216 by %c16_i32_73 dim 0 : vector<256x4xf32>, i32 -> vector<256x4xf32>
    %c16_i32_74 = arith.constant 16 : i32
    %218 = vector.broadcast %c16_i32_74 : i32 to vector<256x1xi32>
    %219 = arith.cmpi sge, %0, %218 : vector<256x1xi32>
    %cst_75 = arith.constant 0.000000e+00 : f32
    %220 = vector.shape_cast %219 : vector<256x1xi1> to vector<256x1xi1>
    %221 = vector.broadcast %220 : vector<256x1xi1> to vector<256x4xi1>
    %222 = vector.broadcast %cst_75 : f32 to vector<256x4xf32>
    %223 = arith.select %221, %217, %222 : vector<256x4xi1>, vector<256x4xf32>
    %224 = arith.addf %215, %223 : vector<256x4xf32>
    %225 = vector.extract_strided_slice %202 {offsets = [0, 8], sizes = [256, 4], strides = [1, 1]} : vector<256x36xf32> to vector<256x4xf32>
    %c15_i32_76 = arith.constant 15 : i32
    %226 = tpu.dynamic_rotate %225 by %c15_i32_76 dim 0 : vector<256x4xf32>, i32 -> vector<256x4xf32>
    %c16_i32_77 = arith.constant 16 : i32
    %227 = vector.broadcast %c16_i32_77 : i32 to vector<256x1xi32>
    %228 = arith.cmpi sge, %0, %227 : vector<256x1xi32>
    %c14_i32_78 = arith.constant 14 : i32
    %229 = vector.broadcast %c14_i32_78 : i32 to vector<256x1xi32>
    %230 = arith.cmpi sle, %16, %229 : vector<256x1xi32>
    %231 = arith.andi %228, %230 : vector<256x1xi1>
    %cst_79 = arith.constant 0.000000e+00 : f32
    %232 = vector.shape_cast %231 : vector<256x1xi1> to vector<256x1xi1>
    %233 = vector.broadcast %232 : vector<256x1xi1> to vector<256x4xi1>
    %234 = vector.broadcast %cst_79 : f32 to vector<256x4xf32>
    %235 = arith.select %233, %226, %234 : vector<256x4xi1>, vector<256x4xf32>
    %236 = arith.addf %224, %235 : vector<256x4xf32>
    %237 = vector.extract_strided_slice %202 {offsets = [0, 12], sizes = [256, 4], strides = [1, 1]} : vector<256x36xf32> to vector<256x4xf32>
    %c1_i32_80 = arith.constant 1 : i32
    %238 = tpu.dynamic_rotate %237 by %c1_i32_80 dim 0 : vector<256x4xf32>, i32 -> vector<256x4xf32>
    %c1_i32_81 = arith.constant 1 : i32
    %239 = vector.broadcast %c1_i32_81 : i32 to vector<256x1xi32>
    %240 = arith.cmpi sge, %16, %239 : vector<256x1xi32>
    %cst_82 = arith.constant 0.000000e+00 : f32
    %241 = vector.shape_cast %240 : vector<256x1xi1> to vector<256x1xi1>
    %242 = vector.broadcast %241 : vector<256x1xi1> to vector<256x4xi1>
    %243 = vector.broadcast %cst_82 : f32 to vector<256x4xf32>
    %244 = arith.select %242, %238, %243 : vector<256x4xi1>, vector<256x4xf32>
    %245 = arith.addf %236, %244 : vector<256x4xf32>
    %246 = vector.extract_strided_slice %202 {offsets = [0, 16], sizes = [256, 4], strides = [1, 1]} : vector<256x36xf32> to vector<256x4xf32>
    %247 = arith.addf %245, %246 : vector<256x4xf32>
    %248 = vector.extract_strided_slice %202 {offsets = [0, 20], sizes = [256, 4], strides = [1, 1]} : vector<256x36xf32> to vector<256x4xf32>
    %c255_i32_83 = arith.constant 255 : i32
    %249 = tpu.dynamic_rotate %248 by %c255_i32_83 dim 0 : vector<256x4xf32>, i32 -> vector<256x4xf32>
    %c14_i32_84 = arith.constant 14 : i32
    %250 = vector.broadcast %c14_i32_84 : i32 to vector<256x1xi32>
    %251 = arith.cmpi sle, %16, %250 : vector<256x1xi32>
    %cst_85 = arith.constant 0.000000e+00 : f32
    %252 = vector.shape_cast %251 : vector<256x1xi1> to vector<256x1xi1>
    %253 = vector.broadcast %252 : vector<256x1xi1> to vector<256x4xi1>
    %254 = vector.broadcast %cst_85 : f32 to vector<256x4xf32>
    %255 = arith.select %253, %249, %254 : vector<256x4xi1>, vector<256x4xf32>
    %256 = arith.addf %247, %255 : vector<256x4xf32>
    %257 = vector.extract_strided_slice %202 {offsets = [0, 24], sizes = [256, 4], strides = [1, 1]} : vector<256x36xf32> to vector<256x4xf32>
    %c241_i32_86 = arith.constant 241 : i32
    %258 = tpu.dynamic_rotate %257 by %c241_i32_86 dim 0 : vector<256x4xf32>, i32 -> vector<256x4xf32>
    %c240_i32_87 = arith.constant 240 : i32
    %259 = vector.broadcast %c240_i32_87 : i32 to vector<256x1xi32>
    %260 = arith.cmpi slt, %0, %259 : vector<256x1xi32>
    %c1_i32_88 = arith.constant 1 : i32
    %261 = vector.broadcast %c1_i32_88 : i32 to vector<256x1xi32>
    %262 = arith.cmpi sge, %16, %261 : vector<256x1xi32>
    %263 = arith.andi %260, %262 : vector<256x1xi1>
    %cst_89 = arith.constant 0.000000e+00 : f32
    %264 = vector.shape_cast %263 : vector<256x1xi1> to vector<256x1xi1>
    %265 = vector.broadcast %264 : vector<256x1xi1> to vector<256x4xi1>
    %266 = vector.broadcast %cst_89 : f32 to vector<256x4xf32>
    %267 = arith.select %265, %258, %266 : vector<256x4xi1>, vector<256x4xf32>
    %268 = arith.addf %256, %267 : vector<256x4xf32>
    %269 = vector.extract_strided_slice %202 {offsets = [0, 28], sizes = [256, 4], strides = [1, 1]} : vector<256x36xf32> to vector<256x4xf32>
    %c240_i32_90 = arith.constant 240 : i32
    %270 = tpu.dynamic_rotate %269 by %c240_i32_90 dim 0 : vector<256x4xf32>, i32 -> vector<256x4xf32>
    %c240_i32_91 = arith.constant 240 : i32
    %271 = vector.broadcast %c240_i32_91 : i32 to vector<256x1xi32>
    %272 = arith.cmpi slt, %0, %271 : vector<256x1xi32>
    %cst_92 = arith.constant 0.000000e+00 : f32
    %273 = vector.shape_cast %272 : vector<256x1xi1> to vector<256x1xi1>
    %274 = vector.broadcast %273 : vector<256x1xi1> to vector<256x4xi1>
    %275 = vector.broadcast %cst_92 : f32 to vector<256x4xf32>
    %276 = arith.select %274, %270, %275 : vector<256x4xi1>, vector<256x4xf32>
    %277 = arith.addf %268, %276 : vector<256x4xf32>
    %278 = vector.extract_strided_slice %202 {offsets = [0, 32], sizes = [256, 4], strides = [1, 1]} : vector<256x36xf32> to vector<256x4xf32>
    %c239_i32_93 = arith.constant 239 : i32
    %279 = tpu.dynamic_rotate %278 by %c239_i32_93 dim 0 : vector<256x4xf32>, i32 -> vector<256x4xf32>
    %c240_i32_94 = arith.constant 240 : i32
    %280 = vector.broadcast %c240_i32_94 : i32 to vector<256x1xi32>
    %281 = arith.cmpi slt, %0, %280 : vector<256x1xi32>
    %c14_i32_95 = arith.constant 14 : i32
    %282 = vector.broadcast %c14_i32_95 : i32 to vector<256x1xi32>
    %283 = arith.cmpi sle, %16, %282 : vector<256x1xi32>
    %284 = arith.andi %281, %283 : vector<256x1xi1>
    %cst_96 = arith.constant 0.000000e+00 : f32
    %285 = vector.shape_cast %284 : vector<256x1xi1> to vector<256x1xi1>
    %286 = vector.broadcast %285 : vector<256x1xi1> to vector<256x4xi1>
    %287 = vector.broadcast %cst_96 : f32 to vector<256x4xf32>
    %288 = arith.select %286, %279, %287 : vector<256x4xi1>, vector<256x4xf32>
    %289 = arith.addf %277, %288 : vector<256x4xf32>
    %cst_97 = arith.constant dense<0.000000e+00> : vector<4xf32>
    %290 = vector.multi_reduction <add>, %289, %cst_97 [0] : vector<256x4xf32> to vector<4xf32>
    %291 = vector.shape_cast %290 : vector<4xf32> to vector<1x4xf32>
    %cst_98 = arith.constant 2.560000e+02 : f32
    %292 = vector.broadcast %cst_98 : f32 to vector<1x4xf32>
    %293 = arith.divf %291, %292 : vector<1x4xf32>
    %294 = vector.broadcast %293 : vector<1x4xf32> to vector<256x4xf32>
    %295 = arith.subf %289, %294 : vector<256x4xf32>
    %296 = arith.mulf %295, %295 : vector<256x4xf32>
    %cst_99 = arith.constant dense<0.000000e+00> : vector<4xf32>
    %297 = vector.multi_reduction <add>, %296, %cst_99 [0] : vector<256x4xf32> to vector<4xf32>
    %298 = vector.shape_cast %297 : vector<4xf32> to vector<1x4xf32>
    %cst_100 = arith.constant 2.560000e+02 : f32
    %299 = vector.broadcast %cst_100 : f32 to vector<1x4xf32>
    %300 = arith.divf %298, %299 : vector<1x4xf32>
    %cst_101 = arith.constant 9.99999974E-6 : f32
    %301 = vector.broadcast %cst_101 : f32 to vector<1x4xf32>
    %302 = arith.addf %300, %301 : vector<1x4xf32>
    %303 = math.rsqrt %302 : vector<1x4xf32>
    %304 = vector.broadcast %303 : vector<1x4xf32> to vector<256x4xf32>
    %305 = arith.mulf %295, %304 : vector<256x4xf32>
    %cst_102 = arith.constant 0.000000e+00 : f32
    %306 = vector.broadcast %cst_102 : f32 to vector<256x4xf32>
    %307 = arith.maximumf %305, %306 : vector<256x4xf32>
    %308 = arith.truncf %307 : vector<256x4xf32> to vector<256x4xbf16>
    %c2 = arith.constant 2 : index
    %c0_103 = arith.constant 0 : index
    %c0_104 = arith.constant 0 : index
    %309 = vector.load %arg2[%c2, %c0_103, %c0_104] : memref<3x16x16xbf16, #tpu.memory_space<vmem>>, vector<1x16x16xbf16>
    %310 = vector.shape_cast %309 : vector<1x16x16xbf16> to vector<16x16xbf16>
    %cst_105 = arith.constant 0.000000e+00 : f32
    %311 = vector.broadcast %cst_105 : f32 to vector<256x16xf32>
    %312 = vector.extract_strided_slice %310 {offsets = [0, 0], sizes = [4, 16], strides = [1, 1]} : vector<16x16xbf16> to vector<4x16xbf16>
    %cst_106 = arith.constant dense<0.000000e+00> : vector<256x16xf32>
    %313 = tpu.matmul %37, %312, %cst_106 {dimension_numbers = #tpu.dot_dimension_numbers<[1], [0], [0], [1], [0, 0, 1, 1], [], []>} : vector<256x4xbf16>, vector<4x16xbf16>, vector<256x16xf32> -> vector<256x16xf32>
    %314 = arith.addf %311, %313 : vector<256x16xf32>
    %315 = vector.extract_strided_slice %310 {offsets = [4, 0], sizes = [4, 16], strides = [1, 1]} : vector<16x16xbf16> to vector<4x16xbf16>
    %cst_107 = arith.constant dense<0.000000e+00> : vector<256x16xf32>
    %316 = tpu.matmul %171, %315, %cst_107 {dimension_numbers = #tpu.dot_dimension_numbers<[1], [0], [0], [1], [0, 0, 1, 1], [], []>} : vector<256x4xbf16>, vector<4x16xbf16>, vector<256x16xf32> -> vector<256x16xf32>
    %317 = arith.addf %314, %316 : vector<256x16xf32>
    %318 = vector.extract_strided_slice %310 {offsets = [8, 0], sizes = [4, 16], strides = [1, 1]} : vector<16x16xbf16> to vector<4x16xbf16>
    %cst_108 = arith.constant dense<0.000000e+00> : vector<256x16xf32>
    %319 = tpu.matmul %308, %318, %cst_108 {dimension_numbers = #tpu.dot_dimension_numbers<[1], [0], [0], [1], [0, 0, 1, 1], [], []>} : vector<256x4xbf16>, vector<4x16xbf16>, vector<256x16xf32> -> vector<256x16xf32>
    %320 = arith.addf %317, %319 : vector<256x16xf32>
    %cst_109 = arith.constant dense<0.000000e+00> : vector<16xf32>
    %321 = vector.multi_reduction <add>, %320, %cst_109 [0] : vector<256x16xf32> to vector<16xf32>
    %322 = vector.shape_cast %321 : vector<16xf32> to vector<1x16xf32>
    %cst_110 = arith.constant 2.560000e+02 : f32
    %323 = vector.broadcast %cst_110 : f32 to vector<1x16xf32>
    %324 = arith.divf %322, %323 : vector<1x16xf32>
    %325 = vector.broadcast %324 : vector<1x16xf32> to vector<256x16xf32>
    %326 = arith.subf %320, %325 : vector<256x16xf32>
    %327 = arith.mulf %326, %326 : vector<256x16xf32>
    %cst_111 = arith.constant dense<0.000000e+00> : vector<16xf32>
    %328 = vector.multi_reduction <add>, %327, %cst_111 [0] : vector<256x16xf32> to vector<16xf32>
    %329 = vector.shape_cast %328 : vector<16xf32> to vector<1x16xf32>
    %cst_112 = arith.constant 2.560000e+02 : f32
    %330 = vector.broadcast %cst_112 : f32 to vector<1x16xf32>
    %331 = arith.divf %329, %330 : vector<1x16xf32>
    %cst_113 = arith.constant 9.99999974E-6 : f32
    %332 = vector.broadcast %cst_113 : f32 to vector<1x16xf32>
    %333 = arith.addf %331, %332 : vector<1x16xf32>
    %334 = math.rsqrt %333 : vector<1x16xf32>
    %335 = vector.broadcast %334 : vector<1x16xf32> to vector<256x16xf32>
    %336 = arith.mulf %326, %335 : vector<256x16xf32>
    %cst_114 = arith.constant 0.000000e+00 : f32
    %337 = vector.broadcast %cst_114 : f32 to vector<256x16xf32>
    %338 = arith.maximumf %336, %337 : vector<256x16xf32>
    %339 = arith.truncf %338 : vector<256x16xf32> to vector<256x16xbf16>
    %c2_115 = arith.constant 2 : index
    %c0_116 = arith.constant 0 : index
    %c0_117 = arith.constant 0 : index
    %340 = vector.load %arg3[%c2_115, %c0_116, %c0_117] : memref<3x16x36xbf16, #tpu.memory_space<vmem>>, vector<1x16x36xbf16>
    %341 = vector.shape_cast %340 : vector<1x16x36xbf16> to vector<16x36xbf16>
    %cst_118 = arith.constant dense<0.000000e+00> : vector<256x36xf32>
    %342 = tpu.matmul %339, %341, %cst_118 {dimension_numbers = #tpu.dot_dimension_numbers<[1], [0], [0], [1], [0, 0, 1, 1], [], []>} : vector<256x16xbf16>, vector<16x36xbf16>, vector<256x36xf32> -> vector<256x36xf32>
    %cst_119 = arith.constant 0.000000e+00 : f32
    %343 = vector.broadcast %cst_119 : f32 to vector<256x4xf32>
    %344 = vector.extract_strided_slice %342 {offsets = [0, 0], sizes = [256, 4], strides = [1, 1]} : vector<256x36xf32> to vector<256x4xf32>
    %c17_i32_120 = arith.constant 17 : i32
    %345 = tpu.dynamic_rotate %344 by %c17_i32_120 dim 0 : vector<256x4xf32>, i32 -> vector<256x4xf32>
    %c16_i32_121 = arith.constant 16 : i32
    %346 = vector.broadcast %c16_i32_121 : i32 to vector<256x1xi32>
    %347 = arith.cmpi sge, %0, %346 : vector<256x1xi32>
    %c1_i32_122 = arith.constant 1 : i32
    %348 = vector.broadcast %c1_i32_122 : i32 to vector<256x1xi32>
    %349 = arith.cmpi sge, %16, %348 : vector<256x1xi32>
    %350 = arith.andi %347, %349 : vector<256x1xi1>
    %cst_123 = arith.constant 0.000000e+00 : f32
    %351 = vector.shape_cast %350 : vector<256x1xi1> to vector<256x1xi1>
    %352 = vector.broadcast %351 : vector<256x1xi1> to vector<256x4xi1>
    %353 = vector.broadcast %cst_123 : f32 to vector<256x4xf32>
    %354 = arith.select %352, %345, %353 : vector<256x4xi1>, vector<256x4xf32>
    %355 = arith.addf %343, %354 : vector<256x4xf32>
    %356 = vector.extract_strided_slice %342 {offsets = [0, 4], sizes = [256, 4], strides = [1, 1]} : vector<256x36xf32> to vector<256x4xf32>
    %c16_i32_124 = arith.constant 16 : i32
    %357 = tpu.dynamic_rotate %356 by %c16_i32_124 dim 0 : vector<256x4xf32>, i32 -> vector<256x4xf32>
    %c16_i32_125 = arith.constant 16 : i32
    %358 = vector.broadcast %c16_i32_125 : i32 to vector<256x1xi32>
    %359 = arith.cmpi sge, %0, %358 : vector<256x1xi32>
    %cst_126 = arith.constant 0.000000e+00 : f32
    %360 = vector.shape_cast %359 : vector<256x1xi1> to vector<256x1xi1>
    %361 = vector.broadcast %360 : vector<256x1xi1> to vector<256x4xi1>
    %362 = vector.broadcast %cst_126 : f32 to vector<256x4xf32>
    %363 = arith.select %361, %357, %362 : vector<256x4xi1>, vector<256x4xf32>
    %364 = arith.addf %355, %363 : vector<256x4xf32>
    %365 = vector.extract_strided_slice %342 {offsets = [0, 8], sizes = [256, 4], strides = [1, 1]} : vector<256x36xf32> to vector<256x4xf32>
    %c15_i32_127 = arith.constant 15 : i32
    %366 = tpu.dynamic_rotate %365 by %c15_i32_127 dim 0 : vector<256x4xf32>, i32 -> vector<256x4xf32>
    %c16_i32_128 = arith.constant 16 : i32
    %367 = vector.broadcast %c16_i32_128 : i32 to vector<256x1xi32>
    %368 = arith.cmpi sge, %0, %367 : vector<256x1xi32>
    %c14_i32_129 = arith.constant 14 : i32
    %369 = vector.broadcast %c14_i32_129 : i32 to vector<256x1xi32>
    %370 = arith.cmpi sle, %16, %369 : vector<256x1xi32>
    %371 = arith.andi %368, %370 : vector<256x1xi1>
    %cst_130 = arith.constant 0.000000e+00 : f32
    %372 = vector.shape_cast %371 : vector<256x1xi1> to vector<256x1xi1>
    %373 = vector.broadcast %372 : vector<256x1xi1> to vector<256x4xi1>
    %374 = vector.broadcast %cst_130 : f32 to vector<256x4xf32>
    %375 = arith.select %373, %366, %374 : vector<256x4xi1>, vector<256x4xf32>
    %376 = arith.addf %364, %375 : vector<256x4xf32>
    %377 = vector.extract_strided_slice %342 {offsets = [0, 12], sizes = [256, 4], strides = [1, 1]} : vector<256x36xf32> to vector<256x4xf32>
    %c1_i32_131 = arith.constant 1 : i32
    %378 = tpu.dynamic_rotate %377 by %c1_i32_131 dim 0 : vector<256x4xf32>, i32 -> vector<256x4xf32>
    %c1_i32_132 = arith.constant 1 : i32
    %379 = vector.broadcast %c1_i32_132 : i32 to vector<256x1xi32>
    %380 = arith.cmpi sge, %16, %379 : vector<256x1xi32>
    %cst_133 = arith.constant 0.000000e+00 : f32
    %381 = vector.shape_cast %380 : vector<256x1xi1> to vector<256x1xi1>
    %382 = vector.broadcast %381 : vector<256x1xi1> to vector<256x4xi1>
    %383 = vector.broadcast %cst_133 : f32 to vector<256x4xf32>
    %384 = arith.select %382, %378, %383 : vector<256x4xi1>, vector<256x4xf32>
    %385 = arith.addf %376, %384 : vector<256x4xf32>
    %386 = vector.extract_strided_slice %342 {offsets = [0, 16], sizes = [256, 4], strides = [1, 1]} : vector<256x36xf32> to vector<256x4xf32>
    %387 = arith.addf %385, %386 : vector<256x4xf32>
    %388 = vector.extract_strided_slice %342 {offsets = [0, 20], sizes = [256, 4], strides = [1, 1]} : vector<256x36xf32> to vector<256x4xf32>
    %c255_i32_134 = arith.constant 255 : i32
    %389 = tpu.dynamic_rotate %388 by %c255_i32_134 dim 0 : vector<256x4xf32>, i32 -> vector<256x4xf32>
    %c14_i32_135 = arith.constant 14 : i32
    %390 = vector.broadcast %c14_i32_135 : i32 to vector<256x1xi32>
    %391 = arith.cmpi sle, %16, %390 : vector<256x1xi32>
    %cst_136 = arith.constant 0.000000e+00 : f32
    %392 = vector.shape_cast %391 : vector<256x1xi1> to vector<256x1xi1>
    %393 = vector.broadcast %392 : vector<256x1xi1> to vector<256x4xi1>
    %394 = vector.broadcast %cst_136 : f32 to vector<256x4xf32>
    %395 = arith.select %393, %389, %394 : vector<256x4xi1>, vector<256x4xf32>
    %396 = arith.addf %387, %395 : vector<256x4xf32>
    %397 = vector.extract_strided_slice %342 {offsets = [0, 24], sizes = [256, 4], strides = [1, 1]} : vector<256x36xf32> to vector<256x4xf32>
    %c241_i32_137 = arith.constant 241 : i32
    %398 = tpu.dynamic_rotate %397 by %c241_i32_137 dim 0 : vector<256x4xf32>, i32 -> vector<256x4xf32>
    %c240_i32_138 = arith.constant 240 : i32
    %399 = vector.broadcast %c240_i32_138 : i32 to vector<256x1xi32>
    %400 = arith.cmpi slt, %0, %399 : vector<256x1xi32>
    %c1_i32_139 = arith.constant 1 : i32
    %401 = vector.broadcast %c1_i32_139 : i32 to vector<256x1xi32>
    %402 = arith.cmpi sge, %16, %401 : vector<256x1xi32>
    %403 = arith.andi %400, %402 : vector<256x1xi1>
    %cst_140 = arith.constant 0.000000e+00 : f32
    %404 = vector.shape_cast %403 : vector<256x1xi1> to vector<256x1xi1>
    %405 = vector.broadcast %404 : vector<256x1xi1> to vector<256x4xi1>
    %406 = vector.broadcast %cst_140 : f32 to vector<256x4xf32>
    %407 = arith.select %405, %398, %406 : vector<256x4xi1>, vector<256x4xf32>
    %408 = arith.addf %396, %407 : vector<256x4xf32>
    %409 = vector.extract_strided_slice %342 {offsets = [0, 28], sizes = [256, 4], strides = [1, 1]} : vector<256x36xf32> to vector<256x4xf32>
    %c240_i32_141 = arith.constant 240 : i32
    %410 = tpu.dynamic_rotate %409 by %c240_i32_141 dim 0 : vector<256x4xf32>, i32 -> vector<256x4xf32>
    %c240_i32_142 = arith.constant 240 : i32
    %411 = vector.broadcast %c240_i32_142 : i32 to vector<256x1xi32>
    %412 = arith.cmpi slt, %0, %411 : vector<256x1xi32>
    %cst_143 = arith.constant 0.000000e+00 : f32
    %413 = vector.shape_cast %412 : vector<256x1xi1> to vector<256x1xi1>
    %414 = vector.broadcast %413 : vector<256x1xi1> to vector<256x4xi1>
    %415 = vector.broadcast %cst_143 : f32 to vector<256x4xf32>
    %416 = arith.select %414, %410, %415 : vector<256x4xi1>, vector<256x4xf32>
    %417 = arith.addf %408, %416 : vector<256x4xf32>
    %418 = vector.extract_strided_slice %342 {offsets = [0, 32], sizes = [256, 4], strides = [1, 1]} : vector<256x36xf32> to vector<256x4xf32>
    %c239_i32_144 = arith.constant 239 : i32
    %419 = tpu.dynamic_rotate %418 by %c239_i32_144 dim 0 : vector<256x4xf32>, i32 -> vector<256x4xf32>
    %c240_i32_145 = arith.constant 240 : i32
    %420 = vector.broadcast %c240_i32_145 : i32 to vector<256x1xi32>
    %421 = arith.cmpi slt, %0, %420 : vector<256x1xi32>
    %c14_i32_146 = arith.constant 14 : i32
    %422 = vector.broadcast %c14_i32_146 : i32 to vector<256x1xi32>
    %423 = arith.cmpi sle, %16, %422 : vector<256x1xi32>
    %424 = arith.andi %421, %423 : vector<256x1xi1>
    %cst_147 = arith.constant 0.000000e+00 : f32
    %425 = vector.shape_cast %424 : vector<256x1xi1> to vector<256x1xi1>
    %426 = vector.broadcast %425 : vector<256x1xi1> to vector<256x4xi1>
    %427 = vector.broadcast %cst_147 : f32 to vector<256x4xf32>
    %428 = arith.select %426, %419, %427 : vector<256x4xi1>, vector<256x4xf32>
    %429 = arith.addf %417, %428 : vector<256x4xf32>
    %430 = tpu.concatenate %18, %152, %289, %429 in 1 : vector<256x4xf32>, vector<256x4xf32>, vector<256x4xf32>, vector<256x4xf32> -> vector<256x16xf32>
    %c0_148 = arith.constant 0 : index
    %c0_149 = arith.constant 0 : index
    %c0_150 = arith.constant 0 : index
    %431 = vector.load %arg4[%c0_148, %c0_149, %c0_150] : memref<1x256x16xf32, #tpu.memory_space<vmem>>, vector<1x256x16xf32>
    %432 = vector.shape_cast %431 : vector<1x256x16xf32> to vector<256x16xf32>
    %433 = vector.shape_cast %430 : vector<256x16xf32> to vector<1x256x16xf32>
    tpu.vector_store %arg4[%c0_148, %c0_149, %c0_150], %433 {strides = array<i32>} : memref<1x256x16xf32, #tpu.memory_space<vmem>>, vector<1x256x16xf32>,
    return
  }
  func.func @transform_0(%arg0: i32) -> (i32, i32, i32) {
    %c0_i32 = arith.constant 0 : i32
    %c0_i32_0 = arith.constant 0 : i32
    %c0_i32_1 = arith.constant 0 : i32
    return %arg0, %c0_i32, %c0_i32_0 : i32, i32, i32
  }
  func.func @transform_1(%arg0: i32) -> (i32, i32, i32) {
    %c0_i32 = arith.constant 0 : i32
    %c0_i32_0 = arith.constant 0 : i32
    %c0_i32_1 = arith.constant 0 : i32
    %c0_i32_2 = arith.constant 0 : i32
    return %c0_i32, %c0_i32_0, %c0_i32_1 : i32, i32, i32
  }
  func.func @transform_2(%arg0: i32) -> (i32, i32, i32) {
    %c0_i32 = arith.constant 0 : i32
    %c0_i32_0 = arith.constant 0 : i32
    %c0_i32_1 = arith.constant 0 : i32
    %c0_i32_2 = arith.constant 0 : i32
    return %c0_i32, %c0_i32_0, %c0_i32_1 : i32, i32, i32
  }
  func.func @transform_3(%arg0: i32) -> (i32, i32, i32) {
    %c0_i32 = arith.constant 0 : i32
    %c0_i32_0 = arith.constant 0 : i32
    %c0_i32_1 = arith.constant 0 : i32
    return %arg0, %c0_i32, %c0_i32_0 : i32, i32, i32
  }
}

</mosaic_0001>

<llo_original>
// kernel: dense_block_forward.1
$region0: #{dense_block_forward.1}
  #allocation0 [shape = 'u32[]', space=smem, size = 0x4, offset = 0x4, fixed_abs, tag = 'smem constant byte address 0x4 - core index']
  #allocation1 [shape = 'u32[72,128]{1,0:T(1,128)}', space=vmem, size = 0x9000, scoped, tag = 'internal scratch']
  %s0 = inlined_call_operand.vmem [shape: f32[2,256,4], index: 0, kind: input, shape index: {}]
  %s1 = inlined_call_operand.vmem [shape: bf16[3,16,16], index: 1, kind: input, shape index: {}]
  %s2 = inlined_call_operand.vmem [shape: bf16[3,16,36], index: 2, kind: input, shape index: {}]
  %s3 = inlined_call_operand.vmem [shape: f32[2,256,16], index: 3, kind: output, shape index: {}]
  %s4 = sld [smem:[#allocation0]]
  $region45: #{dense_block_forward.1} parent=0
    _
  %s6 = ssub.s32 1, %s4
  %s7 = scalar_select 0, %s6, %s4
  loop: start=0, step=1, limit=4
  $region2: #{dense_block_forward.1} parent=0 // loop_pre_header
    _
  $region3: #{dense_block_forward.1} parent=0 // loop_header
    %s9 = sphi 0, %s13
    %p10 = scmp.ge.s32.totalorder %s9, 4
    %s19 = sphi 0, %s21
    %s22 = sphi 0, %s19
    %s23 = sphi 0, %s22
    %s39 = sphi 0, %s23
    %s43 = sphi 0, %s43
    %s45 = sphi 0, %s43
    %s46 = sphi 0, %s45
    %s60 = sphi 0, %s46
    %s64 = sphi 0, %s64
    %s66 = sphi 0, %s64
    %s67 = sphi 0, %s66
    %s81 = sphi 0, %s67
    %s87 = sphi 0, %s89
    %s90 = sphi 0, %s87
    %s91 = sphi 0, %s90
    %s107 = sphi 0, %s91
  $region4: #{dense_block_forward.1} parent=0 // loop_header_branch
    %12 = sbr.rel (%p10) target = $region8
  $region5: #{dense_block_forward.1} parent=0 // loop_body
    %s14 = ssub.s32 %s9, 1
    %s15 = ssub.s32 %s9, 2
    %s16 = sadd.s32 %s9, 1
    %s17 = ssub.s32 %s9, %s16
    %p18 = scmp.eq.s32.totalorder %s17, 0
    %s20 = sadd.s32 %s19, 1
    %s21 = scalar_select %p18, %s19, %s20
    %p24 = pneg %p18
    %p25 = scmp.eq.s32.totalorder %s9, 1
    %p26 = por %p24, %p25
    %p27 = scmp.ne.s32.totalorder %s19, %s22
    %p28 = scmp.eq.s32.totalorder %s9, 0
    %p29 = por %p27, %p28
    %p30 = scmp.ne.s32.totalorder %s19, %s22
    %p31 = scmp.eq.s32.totalorder %s14, 1
    %p32 = por %p30, %p31
    %p33 = scmp.ne.s32.totalorder %s22, %s23
    %p34 = scmp.eq.s32.totalorder %s14, 0
    %p35 = por %p33, %p34
    %p36 = scmp.ne.s32.totalorder %s22, %s23
    %p37 = scmp.eq.s32.totalorder %s15, 1
    %p38 = por %p36, %p37
    %p40 = scmp.ne.s32.totalorder %s23, %s39
    %p41 = scmp.eq.s32.totalorder %s15, 0
    %p42 = por %p40, %p41
    %s44 = sadd.s32 %s43, 1
    %p47 = scmp.eq.s32.totalorder %s9, 1
    %p48 = scmp.ne.s32.totalorder %s43, %s45
    %p49 = scmp.eq.s32.totalorder %s9, 0
    %p50 = por %p48, %p49
    %p51 = scmp.ne.s32.totalorder %s43, %s45
    %p52 = scmp.eq.s32.totalorder %s14, 1
    %p53 = por %p51, %p52
    %p54 = scmp.ne.s32.totalorder %s45, %s46
    %p55 = scmp.eq.s32.totalorder %s14, 0
    %p56 = por %p54, %p55
    %p57 = scmp.ne.s32.totalorder %s45, %s46
    %p58 = scmp.eq.s32.totalorder %s15, 1
    %p59 = por %p57, %p58
    %p61 = scmp.ne.s32.totalorder %s46, %s60
    %p62 = scmp.eq.s32.totalorder %s15, 0
    %p63 = por %p61, %p62
    %s65 = sadd.s32 %s64, 1
    %p68 = scmp.eq.s32.totalorder %s9, 1
    %p69 = scmp.ne.s32.totalorder %s64, %s66
    %p70 = scmp.eq.s32.totalorder %s9, 0
    %p71 = por %p69, %p70
    %p72 = scmp.ne.s32.totalorder %s64, %s66
    %p73 = scmp.eq.s32.totalorder %s14, 1
    %p74 = por %p72, %p73
    %p75 = scmp.ne.s32.totalorder %s66, %s67
    %p76 = scmp.eq.s32.totalorder %s14, 0
    %p77 = por %p75, %p76
    %p78 = scmp.ne.s32.totalorder %s66, %s67
    %p79 = scmp.eq.s32.totalorder %s15, 1
    %p80 = por %p78, %p79
    %p82 = scmp.ne.s32.totalorder %s67, %s81
    %p83 = scmp.eq.s32.totalorder %s15, 0
    %p84 = por %p82, %p83
    %s85 = ssub.s32 %s9, %s16
    %p86 = scmp.eq.s32.totalorder %s85, 0
    %s88 = sadd.s32 %s87, 1
    %s89 = scalar_select %p86, %s87, %s88
    %p92 = pneg %p86
    %p93 = scmp.eq.s32.totalorder %s9, 1
    %p94 = por %p92, %p93
    %p95 = scmp.ne.s32.totalorder %s87, %s90
    %p96 = scmp.eq.s32.totalorder %s9, 0
    %p97 = por %p95, %p96
    %p98 = scmp.ne.s32.totalorder %s87, %s90
    %p99 = scmp.eq.s32.totalorder %s14, 1
    %p100 = por %p98, %p99
    %p101 = scmp.ne.s32.totalorder %s90, %s91
    %p102 = scmp.eq.s32.totalorder %s14, 0
    %p103 = por %p101, %p102
    %p104 = scmp.ne.s32.totalorder %s90, %s91
    %p105 = scmp.eq.s32.totalorder %s15, 1
    %p106 = por %p104, %p105
    %p108 = scmp.ne.s32.totalorder %s91, %s107
    %p109 = scmp.eq.s32.totalorder %s15, 0
    %p110 = por %p108, %p109
    %p111 = scmp.le.s32.totalorder 1, %s9
    %p112 = scmp.lt.s32.totalorder %s9, 3
    %p113 = pnand %p111, %p112
    %p114 = pneg %p113
    // Predicated region
    $region9: #{dense_block_forward.1} parent=5 // pred_check
      _
    $region10: #{dense_block_forward.1} parent=5 // pred_check_branch
      %116 = sbr.rel (%p113) target = $region12
    $region11: #{dense_block_forward.1} parent=5 // pred_region
      %s117 = ssub.s32 %s9, 1
      // Predicated region
      $region13: #{dense_block_forward.1} parent=11 // pred_check
        %p118 = pneg %p56
      $region14: #{dense_block_forward.1} parent=11 // pred_check_branch
        %120 = sbr.rel (%p118) target = $region16
      $region15: #{dense_block_forward.1} parent=11 // pred_region
        _
      $region16: #{dense_block_forward.1} parent=11 // pred_fallthru
        _
      // Predicated region
      $region17: #{dense_block_forward.1} parent=11 // pred_check
        %p121 = pneg %p77
      $region18: #{dense_block_forward.1} parent=11 // pred_check_branch
        %123 = sbr.rel (%p121) target = $region20
      $region19: #{dense_block_forward.1} parent=11 // pred_region
        _
      $region20: #{dense_block_forward.1} parent=11 // pred_fallthru
        _
    $region12: #{dense_block_forward.1} parent=5 // pred_fallthru
      _
    %p124 = scmp.lt.s32.totalorder %s9, 2
    // Predicated region
    $region21: #{dense_block_forward.1} parent=5 // pred_check
      %p125 = pneg %p124
    $region22: #{dense_block_forward.1} parent=5 // pred_check_branch
      %127 = sbr.rel (%p125) target = $region24
    $region23: #{dense_block_forward.1} parent=5 // pred_region
      // Predicated region
      $region25: #{dense_block_forward.1} parent=23 // pred_check
        %p128 = pneg %p29
      $region26: #{dense_block_forward.1} parent=23 // pred_check_branch
        %130 = sbr.rel (%p128) target = $region28
      $region27: #{dense_block_forward.1} parent=23 // pred_region
        %p131 = scmp.lt.s32.totalorder %s9, 1
        %s132 = scalar_select %p131, %s9, 1
        %s133 = smul.addr %s132, 32
        %s134 = smul.addr %s133, 8
        %s135 = scalar_lea.vmem %s0, %s134
      $region28: #{dense_block_forward.1} parent=23 // pred_fallthru
        _
    $region24: #{dense_block_forward.1} parent=5 // pred_fallthru
      _
    %p136 = scmp.le.s32.totalorder 1, %s9
    %p137 = scmp.lt.s32.totalorder %s9, 3
    %p138 = pnand %p136, %p137
    %p139 = pneg %p138
    // Predicated region
    $region29: #{dense_block_forward.1} parent=5 // pred_check
      _
    $region30: #{dense_block_forward.1} parent=5 // pred_check_branch
      %141 = sbr.rel (%p138) target = $region32
    $region31: #{dense_block_forward.1} parent=5 // pred_region
      %s142 = ssub.s32 %s9, 1
      %p143 = scmp.lt.s32.totalorder %s14, 1
      %s144 = scalar_select %p143, %s14, 1
      %s145 = smul.addr %s144, 32
      %s146 = smul.addr %s145, 8
      %s147 = scalar_lea.vmem %s0, %s146
      %p148 = pneg %p35
      %p149 = pneg %p32
      %p150 = pneg %p56
      %p151 = pneg %p53
      %p152 = pneg %p77
      %p153 = pneg %p74
      %p154 = pneg %p103
      %p155 = pneg %p100
      %p156 = scmp.lt.s32.totalorder %s14, 1
      %s157 = scalar_select %p156, %s14, 1
      %s158 = smul.addr %s157, 32
      %s159 = smul.addr %s158, 8
      %s160 = scalar_lea.vmem %s3, %s159
      %p161 = scmp.lt.s32.totalorder %s14, 1
      %s162 = scalar_select %p161, %s14, 1
      %s163 = smul.addr %s162, 32
      %s164 = smul.addr %s163, 8
      %s165 = scalar_lea.vmem %s0, %s164
      %p166 = scmp.lt.s32.totalorder %s14, 1
      %s167 = scalar_select %p166, %s14, 1
      %s168 = smul.addr %s167, 32
      %s169 = smul.addr %s168, 8
      %s170 = scalar_lea.vmem %s3, %s169
      %v172 = vlaneseq
      %v173 = vshrl.u32 %v172, 7
      %v174 = vadd.s32 %v173, 8
      %v175 = vadd.s32 %v173, 16
      %v176 = vadd.s32 %v173, 24
      %v177 = vadd.s32 %v173, 32
      %v178 = vadd.s32 %v173, 40
      %v179 = vadd.s32 %v173, 48
      %v180 = vadd.s32 %v173, 56
      %v181 = vadd.s32 %v173, 64
      %v182 = vadd.s32 %v173, 72
      %v183 = vadd.s32 %v173, 80
      %v184 = vadd.s32 %v173, 88
      %v185 = vadd.s32 %v173, 96
      %v186 = vadd.s32 %v173, 104
      %v187 = vadd.s32 %v173, 112
      %v188 = vadd.s32 %v173, 120
      %v189 = vadd.s32 %v173, 128
      %v190 = vadd.s32 %v173, 136
      %v191 = vadd.s32 %v173, 144
      %v192 = vadd.s32 %v173, 152
      %v193 = vadd.s32 %v173, 160
      %v194 = vadd.s32 %v173, 168
      %v195 = vadd.s32 %v173, 176
      %v196 = vadd.s32 %v173, 184
      %v197 = vadd.s32 %v173, 192
      %v198 = vadd.s32 %v173, 200
      %v199 = vadd.s32 %v173, 208
      %v200 = vadd.s32 %v173, 216
      %v201 = vadd.s32 %v173, 224
      %v202 = vadd.s32 %v173, 232
      %v203 = vadd.s32 %v173, 240
      %v204 = vadd.s32 %v173, 248
      %vm205 = vcmp.lt.s32.totalorder %v173, 0
      %v206 = vsub.s32 0, %v173
      %v207 = vsel %vm205, %v206, %v173
      %v208 = vshrl.u32 %v207, 4
      %v209 = vand.u32 %v207, 15
      %v210 = vsub.s32 0, %v209
      %v211 = vsel %vm205, %v210, %v209
      %vm212 = vcmp.lt.s32.totalorder %v174, 0
      %v213 = vsub.s32 0, %v174
      %v214 = vsel %vm212, %v213, %v174
      %v215 = vshrl.u32 %v214, 4
      %v216 = vand.u32 %v214, 15
      %v217 = vsub.s32 0, %v216
      %v218 = vsel %vm212, %v217, %v216
      %vm219 = vcmp.lt.s32.totalorder %v175, 0
      %v220 = vsub.s32 0, %v175
      %v221 = vsel %vm219, %v220, %v175
      %v222 = vshrl.u32 %v221, 4
      %v223 = vand.u32 %v221, 15
      %v224 = vsub.s32 0, %v223
      %v225 = vsel %vm219, %v224, %v223
      %vm226 = vcmp.lt.s32.totalorder %v176, 0
      %v227 = vsub.s32 0, %v176
      %v228 = vsel %vm226, %v227, %v176
      %v229 = vshrl.u32 %v228, 4
      %v230 = vand.u32 %v228, 15
      %v231 = vsub.s32 0, %v230
      %v232 = vsel %vm226, %v231, %v230
      %vm233 = vcmp.lt.s32.totalorder %v177, 0
      %v234 = vsub.s32 0, %v177
      %v235 = vsel %vm233, %v234, %v177
      %v236 = vshrl.u32 %v235, 4
      %v237 = vand.u32 %v235, 15
      %v238 = vsub.s32 0, %v237
      %v239 = vsel %vm233, %v238, %v237
      %vm240 = vcmp.lt.s32.totalorder %v178, 0
      %v241 = vsub.s32 0, %v178
      %v242 = vsel %vm240, %v241, %v178
      %v243 = vshrl.u32 %v242, 4
      %v244 = vand.u32 %v242, 15
      %v245 = vsub.s32 0, %v244
      %v246 = vsel %vm240, %v245, %v244
      %vm247 = vcmp.lt.s32.totalorder %v179, 0
      %v248 = vsub.s32 0, %v179
      %v249 = vsel %vm247, %v248, %v179
      %v250 = vshrl.u32 %v249, 4
      %v251 = vand.u32 %v249, 15
      %v252 = vsub.s32 0, %v251
      %v253 = vsel %vm247, %v252, %v251
      %vm254 = vcmp.lt.s32.totalorder %v180, 0
      %v255 = vsub.s32 0, %v180
      %v256 = vsel %vm254, %v255, %v180
      %v257 = vshrl.u32 %v256, 4
      %v258 = vand.u32 %v256, 15
      %v259 = vsub.s32 0, %v258
      %v260 = vsel %vm254, %v259, %v258
      %vm261 = vcmp.lt.s32.totalorder %v181, 0
      %v262 = vsub.s32 0, %v181
      %v263 = vsel %vm261, %v262, %v181
      %v264 = vshrl.u32 %v263, 4
      %v265 = vand.u32 %v263, 15
      %v266 = vsub.s32 0, %v265
      %v267 = vsel %vm261, %v266, %v265
      %vm268 = vcmp.lt.s32.totalorder %v182, 0
      %v269 = vsub.s32 0, %v182
      %v270 = vsel %vm268, %v269, %v182
      %v271 = vshrl.u32 %v270, 4
      %v272 = vand.u32 %v270, 15
      %v273 = vsub.s32 0, %v272
      %v274 = vsel %vm268, %v273, %v272
      %vm275 = vcmp.lt.s32.totalorder %v183, 0
      %v276 = vsub.s32 0, %v183
      %v277 = vsel %vm275, %v276, %v183
      %v278 = vshrl.u32 %v277, 4
      %v279 = vand.u32 %v277, 15
      %v280 = vsub.s32 0, %v279
      %v281 = vsel %vm275, %v280, %v279
      %vm282 = vcmp.lt.s32.totalorder %v184, 0
      %v283 = vsub.s32 0, %v184
      %v284 = vsel %vm282, %v283, %v184
      %v285 = vshrl.u32 %v284, 4
      %v286 = vand.u32 %v284, 15
      %v287 = vsub.s32 0, %v286
      %v288 = vsel %vm282, %v287, %v286
      %vm289 = vcmp.lt.s32.totalorder %v185, 0
      %v290 = vsub.s32 0, %v185
      %v291 = vsel %vm289, %v290, %v185
      %v292 = vshrl.u32 %v291, 4
      %v293 = vand.u32 %v291, 15
      %v294 = vsub.s32 0, %v293
      %v295 = vsel %vm289, %v294, %v293
      %vm296 = vcmp.lt.s32.totalorder %v186, 0
      %v297 = vsub.s32 0, %v186
      %v298 = vsel %vm296, %v297, %v186
      %v299 = vshrl.u32 %v298, 4
      %v300 = vand.u32 %v298, 15
      %v301 = vsub.s32 0, %v300
      %v302 = vsel %vm296, %v301, %v300
      %vm303 = vcmp.lt.s32.totalorder %v187, 0
      %v304 = vsub.s32 0, %v187
      %v305 = vsel %vm303, %v304, %v187
      %v306 = vshrl.u32 %v305, 4
      %v307 = vand.u32 %v305, 15
      %v308 = vsub.s32 0, %v307
      %v309 = vsel %vm303, %v308, %v307
      %vm310 = vcmp.lt.s32.totalorder %v188, 0
      %v311 = vsub.s32 0, %v188
      %v312 = vsel %vm310, %v311, %v188
      %v313 = vshrl.u32 %v312, 4
      %v314 = vand.u32 %v312, 15
      %v315 = vsub.s32 0, %v314
      %v316 = vsel %vm310, %v315, %v314
      %vm317 = vcmp.lt.s32.totalorder %v189, 0
      %v318 = vsub.s32 0, %v189
      %v319 = vsel %vm317, %v318, %v189
      %v320 = vshrl.u32 %v319, 4
      %v321 = vand.u32 %v319, 15
      %v322 = vsub.s32 0, %v321
      %v323 = vsel %vm317, %v322, %v321
      %vm324 = vcmp.lt.s32.totalorder %v190, 0
      %v325 = vsub.s32 0, %v190
      %v326 = vsel %vm324, %v325, %v190
      %v327 = vshrl.u32 %v326, 4
      %v328 = vand.u32 %v326, 15
      %v329 = vsub.s32 0, %v328
      %v330 = vsel %vm324, %v329, %v328
      %vm331 = vcmp.lt.s32.totalorder %v191, 0
      %v332 = vsub.s32 0, %v191
      %v333 = vsel %vm331, %v332, %v191
      %v334 = vshrl.u32 %v333, 4
      %v335 = vand.u32 %v333, 15
      %v336 = vsub.s32 0, %v335
      %v337 = vsel %vm331, %v336, %v335
      %vm338 = vcmp.lt.s32.totalorder %v192, 0
      %v339 = vsub.s32 0, %v192
      %v340 = vsel %vm338, %v339, %v192
      %v341 = vshrl.u32 %v340, 4
      %v342 = vand.u32 %v340, 15
      %v343 = vsub.s32 0, %v342
      %v344 = vsel %vm338, %v343, %v342
      %vm345 = vcmp.lt.s32.totalorder %v193, 0
      %v346 = vsub.s32 0, %v193
      %v347 = vsel %vm345, %v346, %v193
      %v348 = vshrl.u32 %v347, 4
      %v349 = vand.u32 %v347, 15
      %v350 = vsub.s32 0, %v349
      %v351 = vsel %vm345, %v350, %v349
      %vm352 = vcmp.lt.s32.totalorder %v194, 0
      %v353 = vsub.s32 0, %v194
      %v354 = vsel %vm352, %v353, %v194
      %v355 = vshrl.u32 %v354, 4
      %v356 = vand.u32 %v354, 15
      %v357 = vsub.s32 0, %v356
      %v358 = vsel %vm352, %v357, %v356
      %vm359 = vcmp.lt.s32.totalorder %v195, 0
      %v360 = vsub.s32 0, %v195
      %v361 = vsel %vm359, %v360, %v195
      %v362 = vshrl.u32 %v361, 4
      %v363 = vand.u32 %v361, 15
      %v364 = vsub.s32 0, %v363
      %v365 = vsel %vm359, %v364, %v363
      %vm366 = vcmp.lt.s32.totalorder %v196, 0
      %v367 = vsub.s32 0, %v196
      %v368 = vsel %vm366, %v367, %v196
      %v369 = vshrl.u32 %v368, 4
      %v370 = vand.u32 %v368, 15
      %v371 = vsub.s32 0, %v370
      %v372 = vsel %vm366, %v371, %v370
      %vm373 = vcmp.lt.s32.totalorder %v197, 0
      %v374 = vsub.s32 0, %v197
      %v375 = vsel %vm373, %v374, %v197
      %v376 = vshrl.u32 %v375, 4
      %v377 = vand.u32 %v375, 15
      %v378 = vsub.s32 0, %v377
      %v379 = vsel %vm373, %v378, %v377
      %vm380 = vcmp.lt.s32.totalorder %v198, 0
      %v381 = vsub.s32 0, %v198
      %v382 = vsel %vm380, %v381, %v198
      %v383 = vshrl.u32 %v382, 4
      %v384 = vand.u32 %v382, 15
      %v385 = vsub.s32 0, %v384
      %v386 = vsel %vm380, %v385, %v384
      %vm387 = vcmp.lt.s32.totalorder %v199, 0
      %v388 = vsub.s32 0, %v199
      %v389 = vsel %vm387, %v388, %v199
      %v390 = vshrl.u32 %v389, 4
      %v391 = vand.u32 %v389, 15
      %v392 = vsub.s32 0, %v391
      %v393 = vsel %vm387, %v392, %v391
      %vm394 = vcmp.lt.s32.totalorder %v200, 0
      %v395 = vsub.s32 0, %v200
      %v396 = vsel %vm394, %v395, %v200
      %v397 = vshrl.u32 %v396, 4
      %v398 = vand.u32 %v396, 15
      %v399 = vsub.s32 0, %v398
      %v400 = vsel %vm394, %v399, %v398
      %vm401 = vcmp.lt.s32.totalorder %v201, 0
      %v402 = vsub.s32 0, %v201
      %v403 = vsel %vm401, %v402, %v201
      %v404 = vshrl.u32 %v403, 4
      %v405 = vand.u32 %v403, 15
      %v406 = vsub.s32 0, %v405
      %v407 = vsel %vm401, %v406, %v405
      %vm408 = vcmp.lt.s32.totalorder %v202, 0
      %v409 = vsub.s32 0, %v202
      %v410 = vsel %vm408, %v409, %v202
      %v411 = vshrl.u32 %v410, 4
      %v412 = vand.u32 %v410, 15
      %v413 = vsub.s32 0, %v412
      %v414 = vsel %vm408, %v413, %v412
      %vm415 = vcmp.lt.s32.totalorder %v203, 0
      %v416 = vsub.s32 0, %v203
      %v417 = vsel %vm415, %v416, %v203
      %v418 = vshrl.u32 %v417, 4
      %v419 = vand.u32 %v417, 15
      %v420 = vsub.s32 0, %v419
      %v421 = vsel %vm415, %v420, %v419
      %vm422 = vcmp.lt.s32.totalorder %v204, 0
      %v423 = vsub.s32 0, %v204
      %v424 = vsel %vm422, %v423, %v204
      %v425 = vshrl.u32 %v424, 4
      %v426 = vand.u32 %v424, 15
      %v427 = vsub.s32 0, %v426
      %v428 = vsel %vm422, %v427, %v426
      %vm429 = vcmp.ne.s32.totalorder %v211, 0
      %vm430 = vcmp.ne.s32.totalorder %v218, 0
      %vm431 = vcmp.ne.s32.totalorder %v225, 0
      %vm432 = vcmp.ne.s32.totalorder %v232, 0
      %vm433 = vcmp.ne.s32.totalorder %v239, 0
      %vm434 = vcmp.ne.s32.totalorder %v246, 0
      %vm435 = vcmp.ne.s32.totalorder %v253, 0
      %vm436 = vcmp.ne.s32.totalorder %v260, 0
      %vm437 = vcmp.ne.s32.totalorder %v267, 0
      %vm438 = vcmp.ne.s32.totalorder %v274, 0
      %vm439 = vcmp.ne.s32.totalorder %v281, 0
      %vm440 = vcmp.ne.s32.totalorder %v288, 0
      %vm441 = vcmp.ne.s32.totalorder %v295, 0
      %vm442 = vcmp.ne.s32.totalorder %v302, 0
      %vm443 = vcmp.ne.s32.totalorder %v309, 0
      %vm444 = vcmp.ne.s32.totalorder %v316, 0
      %vm445 = vcmp.ne.s32.totalorder %v323, 0
      %vm446 = vcmp.ne.s32.totalorder %v330, 0
      %vm447 = vcmp.ne.s32.totalorder %v337, 0
      %vm448 = vcmp.ne.s32.totalorder %v344, 0
      %vm449 = vcmp.ne.s32.totalorder %v351, 0
      %vm450 = vcmp.ne.s32.totalorder %v358, 0
      %vm451 = vcmp.ne.s32.totalorder %v365, 0
      %vm452 = vcmp.ne.s32.totalorder %v372, 0
      %vm453 = vcmp.ne.s32.totalorder %v379, 0
      %vm454 = vcmp.ne.s32.totalorder %v386, 0
      %vm455 = vcmp.ne.s32.totalorder %v393, 0
      %vm456 = vcmp.ne.s32.totalorder %v400, 0
      %vm457 = vcmp.ne.s32.totalorder %v407, 0
      %vm458 = vcmp.ne.s32.totalorder %v414, 0
      %vm459 = vcmp.ne.s32.totalorder %v421, 0
      %vm460 = vcmp.ne.s32.totalorder %v428, 0
      %vm461 = vcmp.lt.s32.totalorder %v211, 0
      %vm462 = vcmp.lt.s32.totalorder %v218, 0
      %vm463 = vcmp.lt.s32.totalorder %v225, 0
      %vm464 = vcmp.lt.s32.totalorder %v232, 0
      %vm465 = vcmp.lt.s32.totalorder %v239, 0
      %vm466 = vcmp.lt.s32.totalorder %v246, 0
      %vm467 = vcmp.lt.s32.totalorder %v253, 0
      %vm468 = vcmp.lt.s32.totalorder %v260, 0
      %vm469 = vcmp.lt.s32.totalorder %v267, 0
      %vm470 = vcmp.lt.s32.totalorder %v274, 0
      %vm471 = vcmp.lt.s32.totalorder %v281, 0
      %vm472 = vcmp.lt.s32.totalorder %v288, 0
      %vm473 = vcmp.lt.s32.totalorder %v295, 0
      %vm474 = vcmp.lt.s32.totalorder %v302, 0
      %vm475 = vcmp.lt.s32.totalorder %v309, 0
      %vm476 = vcmp.lt.s32.totalorder %v316, 0
      %vm477 = vcmp.lt.s32.totalorder %v323, 0
      %vm478 = vcmp.lt.s32.totalorder %v330, 0
      %vm479 = vcmp.lt.s32.totalorder %v337, 0
      %vm480 = vcmp.lt.s32.totalorder %v344, 0
      %vm481 = vcmp.lt.s32.totalorder %v351, 0
      %vm482 = vcmp.lt.s32.totalorder %v358, 0
      %vm483 = vcmp.lt.s32.totalorder %v365, 0
      %vm484 = vcmp.lt.s32.totalorder %v372, 0
      %vm485 = vcmp.lt.s32.totalorder %v379, 0
      %vm486 = vcmp.lt.s32.totalorder %v386, 0
      %vm487 = vcmp.lt.s32.totalorder %v393, 0
      %vm488 = vcmp.lt.s32.totalorder %v400, 0
      %vm489 = vcmp.lt.s32.totalorder %v407, 0
      %vm490 = vcmp.lt.s32.totalorder %v414, 0
      %vm491 = vcmp.lt.s32.totalorder %v421, 0
      %vm492 = vcmp.lt.s32.totalorder %v428, 0
      %vm493 = vmand %vm461, %vm429
      %vm494 = vmand %vm462, %vm430
      %vm495 = vmand %vm463, %vm431
      %vm496 = vmand %vm464, %vm432
      %vm497 = vmand %vm465, %vm433
      %vm498 = vmand %vm466, %vm434
      %vm499 = vmand %vm467, %vm435
      %vm500 = vmand %vm468, %vm436
      %vm501 = vmand %vm469, %vm437
      %vm502 = vmand %vm470, %vm438
      %vm503 = vmand %vm471, %vm439
      %vm504 = vmand %vm472, %vm440
      %vm505 = vmand %vm473, %vm441
      %vm506 = vmand %vm474, %vm442
      %vm507 = vmand %vm475, %vm443
      %vm508 = vmand %vm476, %vm444
      %vm509 = vmand %vm477, %vm445
      %vm510 = vmand %vm478, %vm446
      %vm511 = vmand %vm479, %vm447
      %vm512 = vmand %vm480, %vm448
      %vm513 = vmand %vm481, %vm449
      %vm514 = vmand %vm482, %vm450
      %vm515 = vmand %vm483, %vm451
      %vm516 = vmand %vm484, %vm452
      %vm517 = vmand %vm485, %vm453
      %vm518 = vmand %vm486, %vm454
      %vm519 = vmand %vm487, %vm455
      %vm520 = vmand %vm488, %vm456
      %vm521 = vmand %vm489, %vm457
      %vm522 = vmand %vm490, %vm458
      %vm523 = vmand %vm491, %vm459
      %vm524 = vmand %vm492, %vm460
      %v525 = vadd.s32 %v211, 16
      %v526 = vadd.s32 %v218, 16
      %v527 = vadd.s32 %v225, 16
      %v528 = vadd.s32 %v232, 16
      %v529 = vadd.s32 %v239, 16
      %v530 = vadd.s32 %v246, 16
      %v531 = vadd.s32 %v253, 16
      %v532 = vadd.s32 %v260, 16
      %v533 = vadd.s32 %v267, 16
      %v534 = vadd.s32 %v274, 16
      %v535 = vadd.s32 %v281, 16
      %v536 = vadd.s32 %v288, 16
      %v537 = vadd.s32 %v295, 16
      %v538 = vadd.s32 %v302, 16
      %v539 = vadd.s32 %v309, 16
      %v540 = vadd.s32 %v316, 16
      %v541 = vadd.s32 %v323, 16
      %v542 = vadd.s32 %v330, 16
      %v543 = vadd.s32 %v337, 16
      %v544 = vadd.s32 %v344, 16
      %v545 = vadd.s32 %v351, 16
      %v546 = vadd.s32 %v358, 16
      %v547 = vadd.s32 %v365, 16
      %v548 = vadd.s32 %v372, 16
      %v549 = vadd.s32 %v379, 16
      %v550 = vadd.s32 %v386, 16
      %v551 = vadd.s32 %v393, 16
      %v552 = vadd.s32 %v400, 16
      %v553 = vadd.s32 %v407, 16
      %v554 = vadd.s32 %v414, 16
      %v555 = vadd.s32 %v421, 16
      %v556 = vadd.s32 %v428, 16
      %v557 = vsel %vm493, %v525, %v211
      %v558 = vsel %vm494, %v526, %v218
      %v559 = vsel %vm495, %v527, %v225
      %v560 = vsel %vm496, %v528, %v232
      %v561 = vsel %vm497, %v529, %v239
      %v562 = vsel %vm498, %v530, %v246
      %v563 = vsel %vm499, %v531, %v253
      %v564 = vsel %vm500, %v532, %v260
      %v565 = vsel %vm501, %v533, %v267
      %v566 = vsel %vm502, %v534, %v274
      %v567 = vsel %vm503, %v535, %v281
      %v568 = vsel %vm504, %v536, %v288
      %v569 = vsel %vm505, %v537, %v295
      %v570 = vsel %vm506, %v538, %v302
      %v571 = vsel %vm507, %v539, %v309
      %v572 = vsel %vm508, %v540, %v316
      %v573 = vsel %vm509, %v541, %v323
      %v574 = vsel %vm510, %v542, %v330
      %v575 = vsel %vm511, %v543, %v337
      %v576 = vsel %vm512, %v544, %v344
      %v577 = vsel %vm513, %v545, %v351
      %v578 = vsel %vm514, %v546, %v358
      %v579 = vsel %vm515, %v547, %v365
      %v580 = vsel %vm516, %v548, %v372
      %v581 = vsel %vm517, %v549, %v379
      %v582 = vsel %vm518, %v550, %v386
      %v583 = vsel %vm519, %v551, %v393
      %v584 = vsel %vm520, %v552, %v400
      %v585 = vsel %vm521, %v553, %v407
      %v586 = vsel %vm522, %v554, %v414
      %v587 = vsel %vm523, %v555, %v421
      %v588 = vsel %vm524, %v556, %v428
      %v589 = vld [vmem:[%s165] sm:$0xff]
      %v590 = vld [vmem:[%s165 + $0x8] sm:$0xff]
      %v591 = vld [vmem:[%s165 + $0x10] sm:$0xff]
      %v592 = vld [vmem:[%s165 + $0x18] sm:$0xff]
      %v593 = vld [vmem:[%s165 + $0x20] sm:$0xff]
      %v594 = vld [vmem:[%s165 + $0x28] sm:$0xff]
      %v595 = vld [vmem:[%s165 + $0x30] sm:$0xff]
      %v596 = vld [vmem:[%s165 + $0x38] sm:$0xff]
      %v597 = vld [vmem:[%s165 + $0x40] sm:$0xff]
      %v598 = vld [vmem:[%s165 + $0x48] sm:$0xff]
      %v599 = vld [vmem:[%s165 + $0x50] sm:$0xff]
      %v600 = vld [vmem:[%s165 + $0x58] sm:$0xff]
      %v601 = vld [vmem:[%s165 + $0x60] sm:$0xff]
      %v602 = vld [vmem:[%s165 + $0x68] sm:$0xff]
      %v603 = vld [vmem:[%s165 + $0x70] sm:$0xff]
      %v604 = vld [vmem:[%s165 + $0x78] sm:$0xff]
      %v605 = vld [vmem:[%s165 + $0x80] sm:$0xff]
      %v606 = vld [vmem:[%s165 + $0x88] sm:$0xff]
      %v607 = vld [vmem:[%s165 + $0x90] sm:$0xff]
      %v608 = vld [vmem:[%s165 + $0x98] sm:$0xff]
      %v609 = vld [vmem:[%s165 + $0xa0] sm:$0xff]
      %v610 = vld [vmem:[%s165 + $0xa8] sm:$0xff]
      %v611 = vld [vmem:[%s165 + $0xb0] sm:$0xff]
      %v612 = vld [vmem:[%s165 + $0xb8] sm:$0xff]
      %v613 = vld [vmem:[%s165 + $0xc0] sm:$0xff]
      %v614 = vld [vmem:[%s165 + $0xc8] sm:$0xff]
      %v615 = vld [vmem:[%s165 + $0xd0] sm:$0xff]
      %v616 = vld [vmem:[%s165 + $0xd8] sm:$0xff]
      %v617 = vld [vmem:[%s165 + $0xe0] sm:$0xff]
      %v618 = vld [vmem:[%s165 + $0xe8] sm:$0xff]
      %v619 = vld [vmem:[%s165 + $0xf0] sm:$0xff]
      %v620 = vld [vmem:[%s165 + $0xf8] sm:$0xff]
      %vm621 = vcmask 31744
      %v622 = vsel %vm621, %v589, 0.0
      %v623 = vsel %vm621, %v590, 0.0
      %v624 = vadd.f32 %v622, %v623
      %v625 = vsel %vm621, %v591, 0.0
      %v626 = vadd.f32 %v624, %v625
      %v627 = vsel %vm621, %v592, 0.0
      %v628 = vadd.f32 %v626, %v627
      %v629 = vsel %vm621, %v593, 0.0
      %v630 = vadd.f32 %v628, %v629
      %v631 = vsel %vm621, %v594, 0.0
      %v632 = vadd.f32 %v630, %v631
      %v633 = vsel %vm621, %v595, 0.0
      %v634 = vadd.f32 %v632, %v633
      %v635 = vsel %vm621, %v596, 0.0
      %v636 = vadd.f32 %v634, %v635
      %v637 = vsel %vm621, %v597, 0.0
      %v638 = vadd.f32 %v636, %v637
      %v639 = vsel %vm621, %v598, 0.0
      %v640 = vadd.f32 %v638, %v639
      %v641 = vsel %vm621, %v599, 0.0
      %v642 = vadd.f32 %v640, %v641
      %v643 = vsel %vm621, %v600, 0.0
      %v644 = vadd.f32 %v642, %v643
      %v645 = vsel %vm621, %v601, 0.0
      %v646 = vadd.f32 %v644, %v645
      %v647 = vsel %vm621, %v602, 0.0
      %v648 = vadd.f32 %v646, %v647
      %v649 = vsel %vm621, %v603, 0.0
      %v650 = vadd.f32 %v648, %v649
      %v651 = vsel %vm621, %v604, 0.0
      %v652 = vadd.f32 %v650, %v651
      %v653 = vsel %vm621, %v605, 0.0
      %v654 = vadd.f32 %v652, %v653
      %v655 = vsel %vm621, %v606, 0.0
      %v656 = vadd.f32 %v654, %v655
      %v657 = vsel %vm621, %v607, 0.0
      %v658 = vadd.f32 %v656, %v657
      %v659 = vsel %vm621, %v608, 0.0
      %v660 = vadd.f32 %v658, %v659
      %v661 = vsel %vm621, %v609, 0.0
      %v662 = vadd.f32 %v660, %v661
      %v663 = vsel %vm621, %v610, 0.0
      %v664 = vadd.f32 %v662, %v663
      %v665 = vsel %vm621, %v611, 0.0
      %v666 = vadd.f32 %v664, %v665
      %v667 = vsel %vm621, %v612, 0.0
      %v668 = vadd.f32 %v666, %v667
      %v669 = vsel %vm621, %v613, 0.0
      %v670 = vadd.f32 %v668, %v669
      %v671 = vsel %vm621, %v614, 0.0
      %v672 = vadd.f32 %v670, %v671
      %v673 = vsel %vm621, %v615, 0.0
      %v674 = vadd.f32 %v672, %v673
      %v675 = vsel %vm621, %v616, 0.0
      %v676 = vadd.f32 %v674, %v675
      %v677 = vsel %vm621, %v617, 0.0
      %v678 = vadd.f32 %v676, %v677
      %v679 = vsel %vm621, %v618, 0.0
      %v680 = vadd.f32 %v678, %v679
      %v681 = vsel %vm621, %v619, 0.0
      %v682 = vadd.f32 %v680, %v681
      %v683 = vsel %vm621, %v620, 0.0
      %v684 = vadd.f32 %v682, %v683
      %v685 = vrot.slane %v684, 4
      %v686 = vadd.f32 %v684, %v685
      %v687 = vrot.slane %v686, 2
      %v688 = vadd.f32 %v686, %v687
      %v689 = vrot.slane %v688, 1
      %v690 = vadd.f32 %v688, %v689
      %v691 = vrcp.pop 256.0
      %v692 = vmul.f32 256.0, %v691
      %v693 = vsub.f32 1.0, %v692
      %v694 = vmul.f32 %v691, %v693
      %v695 = vadd.f32 %v691, %v694
      %vm696 = vweird.f32 %v691
      %v697 = vsel %vm696, %v691, %v695
      %v698 = vmul.f32 %v690, %v697
      %v699 = vsub.f32 %v589, %v698
      %v700 = vsub.f32 %v590, %v698
      %v701 = vsub.f32 %v591, %v698
      %v702 = vsub.f32 %v592, %v698
      %v703 = vsub.f32 %v593, %v698
      %v704 = vsub.f32 %v594, %v698
      %v705 = vsub.f32 %v595, %v698
      %v706 = vsub.f32 %v596, %v698
      %v707 = vsub.f32 %v597, %v698
      %v708 = vsub.f32 %v598, %v698
      %v709 = vsub.f32 %v599, %v698
      %v710 = vsub.f32 %v600, %v698
      %v711 = vsub.f32 %v601, %v698
      %v712 = vsub.f32 %v602, %v698
      %v713 = vsub.f32 %v603, %v698
      %v714 = vsub.f32 %v604, %v698
      %v715 = vsub.f32 %v605, %v698
      %v716 = vsub.f32 %v606, %v698
      %v717 = vsub.f32 %v607, %v698
      %v718 = vsub.f32 %v608, %v698
      %v719 = vsub.f32 %v609, %v698
      %v720 = vsub.f32 %v610, %v698
      %v721 = vsub.f32 %v611, %v698
      %v722 = vsub.f32 %v612, %v698
      %v723 = vsub.f32 %v613, %v698
      %v724 = vsub.f32 %v614, %v698
      %v725 = vsub.f32 %v615, %v698
      %v726 = vsub.f32 %v616, %v698
      %v727 = vsub.f32 %v617, %v698
      %v728 = vsub.f32 %v618, %v698
      %v729 = vsub.f32 %v619, %v698
      %v730 = vsub.f32 %v620, %v698
      %v731 = vmul.f32 %v699, %v699
      %v732 = vmul.f32 %v700, %v700
      %v733 = vmul.f32 %v701, %v701
      %v734 = vmul.f32 %v702, %v702
      %v735 = vmul.f32 %v703, %v703
      %v736 = vmul.f32 %v704, %v704
      %v737 = vmul.f32 %v705, %v705
      %v738 = vmul.f32 %v706, %v706
      %v739 = vmul.f32 %v707, %v707
      %v740 = vmul.f32 %v708, %v708
      %v741 = vmul.f32 %v709, %v709
      %v742 = vmul.f32 %v710, %v710
      %v743 = vmul.f32 %v711, %v711
      %v744 = vmul.f32 %v712, %v712
      %v745 = vmul.f32 %v713, %v713
      %v746 = vmul.f32 %v714, %v714
      %v747 = vmul.f32 %v715, %v715
      %v748 = vmul.f32 %v716, %v716
      %v749 = vmul.f32 %v717, %v717
      %v750 = vmul.f32 %v718, %v718
      %v751 = vmul.f32 %v719, %v719
      %v752 = vmul.f32 %v720, %v720
      %v753 = vmul.f32 %v721, %v721
      %v754 = vmul.f32 %v722, %v722
      %v755 = vmul.f32 %v723, %v723
      %v756 = vmul.f32 %v724, %v724
      %v757 = vmul.f32 %v725, %v725
      %v758 = vmul.f32 %v726, %v726
      %v759 = vmul.f32 %v727, %v727
      %v760 = vmul.f32 %v728, %v728
      %v761 = vmul.f32 %v729, %v729
      %v762 = vmul.f32 %v730, %v730
      %v763 = vsel %vm621, %v731, 0.0
      %v764 = vsel %vm621, %v732, 0.0
      %v765 = vadd.f32 %v763, %v764
      %v766 = vsel %vm621, %v733, 0.0
      %v767 = vadd.f32 %v765, %v766
      %v768 = vsel %vm621, %v734, 0.0
      %v769 = vadd.f32 %v767, %v768
      %v770 = vsel %vm621, %v735, 0.0
      %v771 = vadd.f32 %v769, %v770
      %v772 = vsel %vm621, %v736, 0.0
      %v773 = vadd.f32 %v771, %v772
      %v774 = vsel %vm621, %v737, 0.0
      %v775 = vadd.f32 %v773, %v774
      %v776 = vsel %vm621, %v738, 0.0
      %v777 = vadd.f32 %v775, %v776
      %v778 = vsel %vm621, %v739, 0.0
      %v779 = vadd.f32 %v777, %v778
      %v780 = vsel %vm621, %v740, 0.0
      %v781 = vadd.f32 %v779, %v780
      %v782 = vsel %vm621, %v741, 0.0
      %v783 = vadd.f32 %v781, %v782
      %v784 = vsel %vm621, %v742, 0.0
      %v785 = vadd.f32 %v783, %v784
      %v786 = vsel %vm621, %v743, 0.0
      %v787 = vadd.f32 %v785, %v786
      %v788 = vsel %vm621, %v744, 0.0
      %v789 = vadd.f32 %v787, %v788
      %v790 = vsel %vm621, %v745, 0.0
      %v791 = vadd.f32 %v789, %v790
      %v792 = vsel %vm621, %v746, 0.0
      %v793 = vadd.f32 %v791, %v792
      %v794 = vsel %vm621, %v747, 0.0
      %v795 = vadd.f32 %v793, %v794
      %v796 = vsel %vm621, %v748, 0.0
      %v797 = vadd.f32 %v795, %v796
      %v798 = vsel %vm621, %v749, 0.0
      %v799 = vadd.f32 %v797, %v798
      %v800 = vsel %vm621, %v750, 0.0
      %v801 = vadd.f32 %v799, %v800
      %v802 = vsel %vm621, %v751, 0.0
      %v803 = vadd.f32 %v801, %v802
      %v804 = vsel %vm621, %v752, 0.0
      %v805 = vadd.f32 %v803, %v804
      %v806 = vsel %vm621, %v753, 0.0
      %v807 = vadd.f32 %v805, %v806
      %v808 = vsel %vm621, %v754, 0.0
      %v809 = vadd.f32 %v807, %v808
      %v810 = vsel %vm621, %v755, 0.0
      %v811 = vadd.f32 %v809, %v810
      %v812 = vsel %vm621, %v756, 0.0
      %v813 = vadd.f32 %v811, %v812
      %v814 = vsel %vm621, %v757, 0.0
      %v815 = vadd.f32 %v813, %v814
      %v816 = vsel %vm621, %v758, 0.0
      %v817 = vadd.f32 %v815, %v816
      %v818 = vsel %vm621, %v759, 0.0
      %v819 = vadd.f32 %v817, %v818
      %v820 = vsel %vm621, %v760, 0.0
      %v821 = vadd.f32 %v819, %v820
      %v822 = vsel %vm621, %v761, 0.0
      %v823 = vadd.f32 %v821, %v822
      %v824 = vsel %vm621, %v762, 0.0
      %v825 = vadd.f32 %v823, %v824
      %v826 = vrot.slane %v825, 4
      %v827 = vadd.f32 %v825, %v826
      %v828 = vrot.slane %v827, 2
      %v829 = vadd.f32 %v827, %v828
      %v830 = vrot.slane %v829, 1
      %v831 = vadd.f32 %v829, %v830
      %v832 = vmul.f32 %v831, %v697
      %v833 = vadd.f32 %v832, 1e-05
      %v834 = vrsqrt.pop %v833
      %v835 = vmul.f32 %v834, %v833
      %v836 = vmul.f32 %v835, %v834
      %v837 = vmul.f32 0.5, %v836
      %v838 = vsub.f32 1.5, %v837
      %v839 = vmul.f32 %v834, %v838
      %vm840 = vweird.f32 %v833
      %vm841 = vweird.f32 %v834
      %vm842 = vmor %vm840, %vm841
      %v843 = vsel %vm842, %v834, %v839
      %v844 = vmul.f32 %v699, %v843
      %v845 = vmul.f32 %v700, %v843
      %v846 = vmul.f32 %v701, %v843
      %v847 = vmul.f32 %v702, %v843
      %v848 = vmul.f32 %v703, %v843
      %v849 = vmul.f32 %v704, %v843
      %v850 = vmul.f32 %v705, %v843
      %v851 = vmul.f32 %v706, %v843
      %v852 = vmul.f32 %v707, %v843
      %v853 = vmul.f32 %v708, %v843
      %v854 = vmul.f32 %v709, %v843
      %v855 = vmul.f32 %v710, %v843
      %v856 = vmul.f32 %v711, %v843
      %v857 = vmul.f32 %v712, %v843
      %v858 = vmul.f32 %v713, %v843
      %v859 = vmul.f32 %v714, %v843
      %v860 = vmul.f32 %v715, %v843
      %v861 = vmul.f32 %v716, %v843
      %v862 = vmul.f32 %v717, %v843
      %v863 = vmul.f32 %v718, %v843
      %v864 = vmul.f32 %v719, %v843
      %v865 = vmul.f32 %v720, %v843
      %v866 = vmul.f32 %v721, %v843
      %v867 = vmul.f32 %v722, %v843
      %v868 = vmul.f32 %v723, %v843
      %v869 = vmul.f32 %v724, %v843
      %v870 = vmul.f32 %v725, %v843
      %v871 = vmul.f32 %v726, %v843
      %v872 = vmul.f32 %v727, %v843
      %v873 = vmul.f32 %v728, %v843
      %v874 = vmul.f32 %v729, %v843
      %v875 = vmul.f32 %v730, %v843
      %v876 = vmax.f32 %v844, 0.0
      %v877 = vmax.f32 %v845, 0.0
      %v878 = vmax.f32 %v846, 0.0
      %v879 = vmax.f32 %v847, 0.0
      %v880 = vmax.f32 %v848, 0.0
      %v881 = vmax.f32 %v849, 0.0
      %v882 = vmax.f32 %v850, 0.0
      %v883 = vmax.f32 %v851, 0.0
      %v884 = vmax.f32 %v852, 0.0
      %v885 = vmax.f32 %v853, 0.0
      %v886 = vmax.f32 %v854, 0.0
      %v887 = vmax.f32 %v855, 0.0
      %v888 = vmax.f32 %v856, 0.0
      %v889 = vmax.f32 %v857, 0.0
      %v890 = vmax.f32 %v858, 0.0
      %v891 = vmax.f32 %v859, 0.0
      %v892 = vmax.f32 %v860, 0.0
      %v893 = vmax.f32 %v861, 0.0
      %v894 = vmax.f32 %v862, 0.0
      %v895 = vmax.f32 %v863, 0.0
      %v896 = vmax.f32 %v864, 0.0
      %v897 = vmax.f32 %v865, 0.0
      %v898 = vmax.f32 %v866, 0.0
      %v899 = vmax.f32 %v867, 0.0
      %v900 = vmax.f32 %v868, 0.0
      %v901 = vmax.f32 %v869, 0.0
      %v902 = vmax.f32 %v870, 0.0
      %v903 = vmax.f32 %v871, 0.0
      %v904 = vmax.f32 %v872, 0.0
      %v905 = vmax.f32 %v873, 0.0
      %v906 = vmax.f32 %v874, 0.0
      %v907 = vmax.f32 %v875, 0.0
      %v908 = vpack.c.bf16 %v877, %v876
      %v909 = vpack.c.bf16 %v879, %v878
      %v910 = vpack.c.bf16 %v881, %v880
      %v911 = vpack.c.bf16 %v883, %v882
      %v912 = vpack.c.bf16 %v885, %v884
      %v913 = vpack.c.bf16 %v887, %v886
      %v914 = vpack.c.bf16 %v889, %v888
      %v915 = vpack.c.bf16 %v891, %v890
      %v916 = vpack.c.bf16 %v893, %v892
      %v917 = vpack.c.bf16 %v895, %v894
      %v918 = vpack.c.bf16 %v897, %v896
      %v919 = vpack.c.bf16 %v899, %v898
      %v920 = vpack.c.bf16 %v901, %v900
      %v921 = vpack.c.bf16 %v903, %v902
      %v922 = vpack.c.bf16 %v905, %v904
      %v923 = vpack.c.bf16 %v907, %v906
      %v924 = vld [vmem:[%s1] sm:$0xf]
      %v926 = vsel %vm621, %v908, 0
      %v929 = vsel %vm621, %v909, 0
      %v932 = vsel %vm621, %v910, 0
      %v935 = vsel %vm621, %v911, 0
      %v938 = vsel %vm621, %v912, 0
      %v941 = vsel %vm621, %v913, 0
      %v944 = vsel %vm621, %v914, 0
      %v947 = vsel %vm621, %v915, 0
      %v950 = vsel %vm621, %v916, 0
      %v953 = vsel %vm621, %v917, 0
      %v956 = vsel %vm621, %v918, 0
      %v959 = vsel %vm621, %v919, 0
      %v962 = vsel %vm621, %v920, 0
      %v965 = vsel %vm621, %v921, 0
      %v968 = vsel %vm621, %v922, 0
      %v971 = vsel %vm621, %v923, 0
      %vm973 = vcmask 1041408
      %v975 = vsel %vm973, %v924, 0
      %977 = vmatpush.bf16.msra.mxu0 0
      %978 = vmatpush.bf16.msra.mxu0 0
      %979 = vmatpush.bf16.msra.mxu0 0
      %980 = vmatpush.bf16.msra.mxu0 0
      %981 = vmatpush.bf16.msra.mxu0 0
      %982 = vmatpush.bf16.msra.mxu0 0
      %983 = vmatpush.bf16.msra.mxu0 0
      %984 = vmatpush.bf16.msra.mxu0 %v975
      %985 = vmatmul.bf16.gmra.mxu0 %v926
      %v986 = vpop.f32.mrf.mxu0
      %v987 = vadd.f32 0.0, %v986
      %v988 = vpop.f32.mrf.mxu0
      %v989 = vadd.f32 0.0, %v988
      %990 = vmatmul.bf16.gmra.mxu0 %v929
      %v991 = vpop.f32.mrf.mxu0
      %v992 = vadd.f32 0.0, %v991
      %v993 = vpop.f32.mrf.mxu0
      %v994 = vadd.f32 0.0, %v993
      %995 = vmatmul.bf16.gmra.mxu0 %v932
      %v996 = vpop.f32.mrf.mxu0
      %v997 = vadd.f32 0.0, %v996
      %v998 = vpop.f32.mrf.mxu0
      %v999 = vadd.f32 0.0, %v998
      %1000 = vmatmul.bf16.gmra.mxu0 %v935
      %v1001 = vpop.f32.mrf.mxu0
      %v1002 = vadd.f32 0.0, %v1001
      %v1003 = vpop.f32.mrf.mxu0
      %v1004 = vadd.f32 0.0, %v1003
      %1005 = vmatmul.bf16.gmra.mxu0 %v938
      %v1006 = vpop.f32.mrf.mxu0
      %v1007 = vadd.f32 0.0, %v1006
      %v1008 = vpop.f32.mrf.mxu0
      %v1009 = vadd.f32 0.0, %v1008
      %1010 = vmatmul.bf16.gmra.mxu0 %v941
      %v1011 = vpop.f32.mrf.mxu0
      %v1012 = vadd.f32 0.0, %v1011
      %v1013 = vpop.f32.mrf.mxu0
      %v1014 = vadd.f32 0.0, %v1013
      %1015 = vmatmul.bf16.gmra.mxu0 %v944
      %v1016 = vpop.f32.mrf.mxu0
      %v1017 = vadd.f32 0.0, %v1016
      %v1018 = vpop.f32.mrf.mxu0
      %v1019 = vadd.f32 0.0, %v1018
      %1020 = vmatmul.bf16.gmra.mxu0 %v947
      %v1021 = vpop.f32.mrf.mxu0
      %v1022 = vadd.f32 0.0, %v1021
      %v1023 = vpop.f32.mrf.mxu0
      %v1024 = vadd.f32 0.0, %v1023
      %1025 = vmatmul.bf16.gmra.mxu0 %v950
      %v1026 = vpop.f32.mrf.mxu0
      %v1027 = vadd.f32 0.0, %v1026
      %v1028 = vpop.f32.mrf.mxu0
      %v1029 = vadd.f32 0.0, %v1028
      %1030 = vmatmul.bf16.gmra.mxu0 %v953
      %v1031 = vpop.f32.mrf.mxu0
      %v1032 = vadd.f32 0.0, %v1031
      %v1033 = vpop.f32.mrf.mxu0
      %v1034 = vadd.f32 0.0, %v1033
      %1035 = vmatmul.bf16.gmra.mxu0 %v956
      %v1036 = vpop.f32.mrf.mxu0
      %v1037 = vadd.f32 0.0, %v1036
      %v1038 = vpop.f32.mrf.mxu0
      %v1039 = vadd.f32 0.0, %v1038
      %1040 = vmatmul.bf16.gmra.mxu0 %v959
      %v1041 = vpop.f32.mrf.mxu0
      %v1042 = vadd.f32 0.0, %v1041
      %v1043 = vpop.f32.mrf.mxu0
      %v1044 = vadd.f32 0.0, %v1043
      %1045 = vmatmul.bf16.gmra.mxu0 %v962
      %v1046 = vpop.f32.mrf.mxu0
      %v1047 = vadd.f32 0.0, %v1046
      %v1048 = vpop.f32.mrf.mxu0
      %v1049 = vadd.f32 0.0, %v1048
      %1050 = vmatmul.bf16.gmra.mxu0 %v965
      %v1051 = vpop.f32.mrf.mxu0
      %v1052 = vadd.f32 0.0, %v1051
      %v1053 = vpop.f32.mrf.mxu0
      %v1054 = vadd.f32 0.0, %v1053
      %1055 = vmatmul.bf16.gmra.mxu0 %v968
      %v1056 = vpop.f32.mrf.mxu0
      %v1057 = vadd.f32 0.0, %v1056
      %v1058 = vpop.f32.mrf.mxu0
      %v1059 = vadd.f32 0.0, %v1058
      %1060 = vmatmul.bf16.gmra.mxu0 %v971
      %v1061 = vpop.f32.mrf.mxu0
      %v1062 = vadd.f32 0.0, %v1061
      %v1063 = vpop.f32.mrf.mxu0
      %v1064 = vadd.f32 0.0, %v1063
      %1065 = vdwg.mxu0
      %vm1066 = vcmask 130048
      %v1067 = vsel %vm1066, %v987, 0.0
      %v1068 = vsel %vm1066, %v989, 0.0
      %v1069 = vadd.f32 %v1067, %v1068
      %v1070 = vsel %vm1066, %v992, 0.0
      %v1071 = vadd.f32 %v1069, %v1070
      %v1072 = vsel %vm1066, %v994, 0.0
      %v1073 = vadd.f32 %v1071, %v1072
      %v1074 = vsel %vm1066, %v997, 0.0
      %v1075 = vadd.f32 %v1073, %v1074
      %v1076 = vsel %vm1066, %v999, 0.0
      %v1077 = vadd.f32 %v1075, %v1076
      %v1078 = vsel %vm1066, %v1002, 0.0
      %v1079 = vadd.f32 %v1077, %v1078
      %v1080 = vsel %vm1066, %v1004, 0.0
      %v1081 = vadd.f32 %v1079, %v1080
      %v1082 = vsel %vm1066, %v1007, 0.0
      %v1083 = vadd.f32 %v1081, %v1082
      %v1084 = vsel %vm1066, %v1009, 0.0
      %v1085 = vadd.f32 %v1083, %v1084
      %v1086 = vsel %vm1066, %v1012, 0.0
      %v1087 = vadd.f32 %v1085, %v1086
      %v1088 = vsel %vm1066, %v1014, 0.0
      %v1089 = vadd.f32 %v1087, %v1088
      %v1090 = vsel %vm1066, %v1017, 0.0
      %v1091 = vadd.f32 %v1089, %v1090
      %v1092 = vsel %vm1066, %v1019, 0.0
      %v1093 = vadd.f32 %v1091, %v1092
      %v1094 = vsel %vm1066, %v1022, 0.0
      %v1095 = vadd.f32 %v1093, %v1094
      %v1096 = vsel %vm1066, %v1024, 0.0
      %v1097 = vadd.f32 %v1095, %v1096
      %v1098 = vsel %vm1066, %v1027, 0.0
      %v1099 = vadd.f32 %v1097, %v1098
      %v1100 = vsel %vm1066, %v1029, 0.0
      %v1101 = vadd.f32 %v1099, %v1100
      %v1102 = vsel %vm1066, %v1032, 0.0
      %v1103 = vadd.f32 %v1101, %v1102
      %v1104 = vsel %vm1066, %v1034, 0.0
      %v1105 = vadd.f32 %v1103, %v1104
      %v1106 = vsel %vm1066, %v1037, 0.0
      %v1107 = vadd.f32 %v1105, %v1106
      %v1108 = vsel %vm1066, %v1039, 0.0
      %v1109 = vadd.f32 %v1107, %v1108
      %v1110 = vsel %vm1066, %v1042, 0.0
      %v1111 = vadd.f32 %v1109, %v1110
      %v1112 = vsel %vm1066, %v1044, 0.0
      %v1113 = vadd.f32 %v1111, %v1112
      %v1114 = vsel %vm1066, %v1047, 0.0
      %v1115 = vadd.f32 %v1113, %v1114
      %v1116 = vsel %vm1066, %v1049, 0.0
      %v1117 = vadd.f32 %v1115, %v1116
      %v1118 = vsel %vm1066, %v1052, 0.0
      %v1119 = vadd.f32 %v1117, %v1118
      %v1120 = vsel %vm1066, %v1054, 0.0
      %v1121 = vadd.f32 %v1119, %v1120
      %v1122 = vsel %vm1066, %v1057, 0.0
      %v1123 = vadd.f32 %v1121, %v1122
      %v1124 = vsel %vm1066, %v1059, 0.0
      %v1125 = vadd.f32 %v1123, %v1124
      %v1126 = vsel %vm1066, %v1062, 0.0
      %v1127 = vadd.f32 %v1125, %v1126
      %v1128 = vsel %vm1066, %v1064, 0.0
      %v1129 = vadd.f32 %v1127, %v1128
      %v1130 = vrot.slane %v1129, 4
      %v1131 = vadd.f32 %v1129, %v1130
      %v1132 = vrot.slane %v1131, 2
      %v1133 = vadd.f32 %v1131, %v1132
      %v1134 = vrot.slane %v1133, 1
      %v1135 = vadd.f32 %v1133, %v1134
      %v1136 = vmul.f32 %v1135, %v697
      %v1137 = vsub.f32 %v987, %v1136
      %v1138 = vsub.f32 %v989, %v1136
      %v1139 = vsub.f32 %v992, %v1136
      %v1140 = vsub.f32 %v994, %v1136
      %v1141 = vsub.f32 %v997, %v1136
      %v1142 = vsub.f32 %v999, %v1136
      %v1143 = vsub.f32 %v1002, %v1136
      %v1144 = vsub.f32 %v1004, %v1136
      %v1145 = vsub.f32 %v1007, %v1136
      %v1146 = vsub.f32 %v1009, %v1136
      %v1147 = vsub.f32 %v1012, %v1136
      %v1148 = vsub.f32 %v1014, %v1136
      %v1149 = vsub.f32 %v1017, %v1136
      %v1150 = vsub.f32 %v1019, %v1136
      %v1151 = vsub.f32 %v1022, %v1136
      %v1152 = vsub.f32 %v1024, %v1136
      %v1153 = vsub.f32 %v1027, %v1136
      %v1154 = vsub.f32 %v1029, %v1136
      %v1155 = vsub.f32 %v1032, %v1136
      %v1156 = vsub.f32 %v1034, %v1136
      %v1157 = vsub.f32 %v1037, %v1136
      %v1158 = vsub.f32 %v1039, %v1136
      %v1159 = vsub.f32 %v1042, %v1136
      %v1160 = vsub.f32 %v1044, %v1136
      %v1161 = vsub.f32 %v1047, %v1136
      %v1162 = vsub.f32 %v1049, %v1136
      %v1163 = vsub.f32 %v1052, %v1136
      %v1164 = vsub.f32 %v1054, %v1136
      %v1165 = vsub.f32 %v1057, %v1136
      %v1166 = vsub.f32 %v1059, %v1136
      %v1167 = vsub.f32 %v1062, %v1136
      %v1168 = vsub.f32 %v1064, %v1136
      %v1169 = vmul.f32 %v1137, %v1137
      %v1170 = vmul.f32 %v1138, %v1138
      %v1171 = vmul.f32 %v1139, %v1139
      %v1172 = vmul.f32 %v1140, %v1140
      %v1173 = vmul.f32 %v1141, %v1141
      %v1174 = vmul.f32 %v1142, %v1142
      %v1175 = vmul.f32 %v1143, %v1143
      %v1176 = vmul.f32 %v1144, %v1144
      %v1177 = vmul.f32 %v1145, %v1145
      %v1178 = vmul.f32 %v1146, %v1146
      %v1179 = vmul.f32 %v1147, %v1147
      %v1180 = vmul.f32 %v1148, %v1148
      %v1181 = vmul.f32 %v1149, %v1149
      %v1182 = vmul.f32 %v1150, %v1150
      %v1183 = vmul.f32 %v1151, %v1151
      %v1184 = vmul.f32 %v1152, %v1152
      %v1185 = vmul.f32 %v1153, %v1153
      %v1186 = vmul.f32 %v1154, %v1154
      %v1187 = vmul.f32 %v1155, %v1155
      %v1188 = vmul.f32 %v1156, %v1156
      %v1189 = vmul.f32 %v1157, %v1157
      %v1190 = vmul.f32 %v1158, %v1158
      %v1191 = vmul.f32 %v1159, %v1159
      %v1192 = vmul.f32 %v1160, %v1160
      %v1193 = vmul.f32 %v1161, %v1161
      %v1194 = vmul.f32 %v1162, %v1162
      %v1195 = vmul.f32 %v1163, %v1163
      %v1196 = vmul.f32 %v1164, %v1164
      %v1197 = vmul.f32 %v1165, %v1165
      %v1198 = vmul.f32 %v1166, %v1166
      %v1199 = vmul.f32 %v1167, %v1167
      %v1200 = vmul.f32 %v1168, %v1168
      %v1201 = vsel %vm1066, %v1169, 0.0
      %v1202 = vsel %vm1066, %v1170, 0.0
      %v1203 = vadd.f32 %v1201, %v1202
      %v1204 = vsel %vm1066, %v1171, 0.0
      %v1205 = vadd.f32 %v1203, %v1204
      %v1206 = vsel %vm1066, %v1172, 0.0
      %v1207 = vadd.f32 %v1205, %v1206
      %v1208 = vsel %vm1066, %v1173, 0.0
      %v1209 = vadd.f32 %v1207, %v1208
      %v1210 = vsel %vm1066, %v1174, 0.0
      %v1211 = vadd.f32 %v1209, %v1210
      %v1212 = vsel %vm1066, %v1175, 0.0
      %v1213 = vadd.f32 %v1211, %v1212
      %v1214 = vsel %vm1066, %v1176, 0.0
      %v1215 = vadd.f32 %v1213, %v1214
      %v1216 = vsel %vm1066, %v1177, 0.0
      %v1217 = vadd.f32 %v1215, %v1216
      %v1218 = vsel %vm1066, %v1178, 0.0
      %v1219 = vadd.f32 %v1217, %v1218
      %v1220 = vsel %vm1066, %v1179, 0.0
      %v1221 = vadd.f32 %v1219, %v1220
      %v1222 = vsel %vm1066, %v1180, 0.0
      %v1223 = vadd.f32 %v1221, %v1222
      %v1224 = vsel %vm1066, %v1181, 0.0
      %v1225 = vadd.f32 %v1223, %v1224
      %v1226 = vsel %vm1066, %v1182, 0.0
      %v1227 = vadd.f32 %v1225, %v1226
      %v1228 = vsel %vm1066, %v1183, 0.0
      %v1229 = vadd.f32 %v1227, %v1228
      %v1230 = vsel %vm1066, %v1184, 0.0
      %v1231 = vadd.f32 %v1229, %v1230
      %v1232 = vsel %vm1066, %v1185, 0.0
      %v1233 = vadd.f32 %v1231, %v1232
      %v1234 = vsel %vm1066, %v1186, 0.0
      %v1235 = vadd.f32 %v1233, %v1234
      %v1236 = vsel %vm1066, %v1187, 0.0
      %v1237 = vadd.f32 %v1235, %v1236
      %v1238 = vsel %vm1066, %v1188, 0.0
      %v1239 = vadd.f32 %v1237, %v1238
      %v1240 = vsel %vm1066, %v1189, 0.0
      %v1241 = vadd.f32 %v1239, %v1240
      %v1242 = vsel %vm1066, %v1190, 0.0
      %v1243 = vadd.f32 %v1241, %v1242
      %v1244 = vsel %vm1066, %v1191, 0.0
      %v1245 = vadd.f32 %v1243, %v1244
      %v1246 = vsel %vm1066, %v1192, 0.0
      %v1247 = vadd.f32 %v1245, %v1246
      %v1248 = vsel %vm1066, %v1193, 0.0
      %v1249 = vadd.f32 %v1247, %v1248
      %v1250 = vsel %vm1066, %v1194, 0.0
      %v1251 = vadd.f32 %v1249, %v1250
      %v1252 = vsel %vm1066, %v1195, 0.0
      %v1253 = vadd.f32 %v1251, %v1252
      %v1254 = vsel %vm1066, %v1196, 0.0
      %v1255 = vadd.f32 %v1253, %v1254
      %v1256 = vsel %vm1066, %v1197, 0.0
      %v1257 = vadd.f32 %v1255, %v1256
      %v1258 = vsel %vm1066, %v1198, 0.0
      %v1259 = vadd.f32 %v1257, %v1258
      %v1260 = vsel %vm1066, %v1199, 0.0
      %v1261 = vadd.f32 %v1259, %v1260
      %v1262 = vsel %vm1066, %v1200, 0.0
      %v1263 = vadd.f32 %v1261, %v1262
      %v1264 = vrot.slane %v1263, 4
      %v1265 = vadd.f32 %v1263, %v1264
      %v1266 = vrot.slane %v1265, 2
      %v1267 = vadd.f32 %v1265, %v1266
      %v1268 = vrot.slane %v1267, 1
      %v1269 = vadd.f32 %v1267, %v1268
      %v1270 = vmul.f32 %v1269, %v697
      %v1271 = vadd.f32 %v1270, 1e-05
      %v1272 = vrsqrt.pop %v1271
      %v1273 = vmul.f32 %v1272, %v1271
      %v1274 = vmul.f32 %v1273, %v1272
      %v1275 = vmul.f32 0.5, %v1274
      %v1276 = vsub.f32 1.5, %v1275
      %v1277 = vmul.f32 %v1272, %v1276
      %vm1278 = vweird.f32 %v1271
      %vm1279 = vweird.f32 %v1272
      %vm1280 = vmor %vm1278, %vm1279
      %v1281 = vsel %vm1280, %v1272, %v1277
      %v1282 = vmul.f32 %v1137, %v1281
      %v1283 = vmul.f32 %v1138, %v1281
      %v1284 = vmul.f32 %v1139, %v1281
      %v1285 = vmul.f32 %v1140, %v1281
      %v1286 = vmul.f32 %v1141, %v1281
      %v1287 = vmul.f32 %v1142, %v1281
      %v1288 = vmul.f32 %v1143, %v1281
      %v1289 = vmul.f32 %v1144, %v1281
      %v1290 = vmul.f32 %v1145, %v1281
      %v1291 = vmul.f32 %v1146, %v1281
      %v1292 = vmul.f32 %v1147, %v1281
      %v1293 = vmul.f32 %v1148, %v1281
      %v1294 = vmul.f32 %v1149, %v1281
      %v1295 = vmul.f32 %v1150, %v1281
      %v1296 = vmul.f32 %v1151, %v1281
      %v1297 = vmul.f32 %v1152, %v1281
      %v1298 = vmul.f32 %v1153, %v1281
      %v1299 = vmul.f32 %v1154, %v1281
      %v1300 = vmul.f32 %v1155, %v1281
      %v1301 = vmul.f32 %v1156, %v1281
      %v1302 = vmul.f32 %v1157, %v1281
      %v1303 = vmul.f32 %v1158, %v1281
      %v1304 = vmul.f32 %v1159, %v1281
      %v1305 = vmul.f32 %v1160, %v1281
      %v1306 = vmul.f32 %v1161, %v1281
      %v1307 = vmul.f32 %v1162, %v1281
      %v1308 = vmul.f32 %v1163, %v1281
      %v1309 = vmul.f32 %v1164, %v1281
      %v1310 = vmul.f32 %v1165, %v1281
      %v1311 = vmul.f32 %v1166, %v1281
      %v1312 = vmul.f32 %v1167, %v1281
      %v1313 = vmul.f32 %v1168, %v1281
      %v1314 = vmax.f32 %v1282, 0.0
      %v1315 = vmax.f32 %v1283, 0.0
      %v1316 = vmax.f32 %v1284, 0.0
      %v1317 = vmax.f32 %v1285, 0.0
      %v1318 = vmax.f32 %v1286, 0.0
      %v1319 = vmax.f32 %v1287, 0.0
      %v1320 = vmax.f32 %v1288, 0.0
      %v1321 = vmax.f32 %v1289, 0.0
      %v1322 = vmax.f32 %v1290, 0.0
      %v1323 = vmax.f32 %v1291, 0.0
      %v1324 = vmax.f32 %v1292, 0.0
      %v1325 = vmax.f32 %v1293, 0.0
      %v1326 = vmax.f32 %v1294, 0.0
      %v1327 = vmax.f32 %v1295, 0.0
      %v1328 = vmax.f32 %v1296, 0.0
      %v1329 = vmax.f32 %v1297, 0.0
      %v1330 = vmax.f32 %v1298, 0.0
      %v1331 = vmax.f32 %v1299, 0.0
      %v1332 = vmax.f32 %v1300, 0.0
      %v1333 = vmax.f32 %v1301, 0.0
      %v1334 = vmax.f32 %v1302, 0.0
      %v1335 = vmax.f32 %v1303, 0.0
      %v1336 = vmax.f32 %v1304, 0.0
      %v1337 = vmax.f32 %v1305, 0.0
      %v1338 = vmax.f32 %v1306, 0.0
      %v1339 = vmax.f32 %v1307, 0.0
      %v1340 = vmax.f32 %v1308, 0.0
      %v1341 = vmax.f32 %v1309, 0.0
      %v1342 = vmax.f32 %v1310, 0.0
      %v1343 = vmax.f32 %v1311, 0.0
      %v1344 = vmax.f32 %v1312, 0.0
      %v1345 = vmax.f32 %v1313, 0.0
      %v1346 = vpack.c.bf16 %v1315, %v1314
      %v1347 = vpack.c.bf16 %v1317, %v1316
      %v1348 = vpack.c.bf16 %v1319, %v1318
      %v1349 = vpack.c.bf16 %v1321, %v1320
      %v1350 = vpack.c.bf16 %v1323, %v1322
      %v1351 = vpack.c.bf16 %v1325, %v1324
      %v1352 = vpack.c.bf16 %v1327, %v1326
      %v1353 = vpack.c.bf16 %v1329, %v1328
      %v1354 = vpack.c.bf16 %v1331, %v1330
      %v1355 = vpack.c.bf16 %v1333, %v1332
      %v1356 = vpack.c.bf16 %v1335, %v1334
      %v1357 = vpack.c.bf16 %v1337, %v1336
      %v1358 = vpack.c.bf16 %v1339, %v1338
      %v1359 = vpack.c.bf16 %v1341, %v1340
      %v1360 = vpack.c.bf16 %v1343, %v1342
      %v1361 = vpack.c.bf16 %v1345, %v1344
      %v1362 = vld [vmem:[%s2] sm:$0xf]
      %v1363 = vld [vmem:[%s2 + $0x4] sm:$0xf]
      %v1366 = vunpack.c.l.b16 %v1362
      %v1367 = vunpack.c.l.b16 %v1363
      %v1368 = vpack.c.b16 %v1367, %v1366
      %v1371 = vsel %vm1066, %v1346, 0
      %v1374 = vsel %vm1066, %v1347, 0
      %v1377 = vsel %vm1066, %v1348, 0
      %v1380 = vsel %vm1066, %v1349, 0
      %v1383 = vsel %vm1066, %v1350, 0
      %v1386 = vsel %vm1066, %v1351, 0
      %v1389 = vsel %vm1066, %v1352, 0
      %v1392 = vsel %vm1066, %v1353, 0
      %v1395 = vsel %vm1066, %v1354, 0
      %v1398 = vsel %vm1066, %v1355, 0
      %v1401 = vsel %vm1066, %v1356, 0
      %v1404 = vsel %vm1066, %v1357, 0
      %v1407 = vsel %vm1066, %v1358, 0
      %v1410 = vsel %vm1066, %v1359, 0
      %v1413 = vsel %vm1066, %v1360, 0
      %v1416 = vsel %vm1066, %v1361, 0
      %1418 = vmatpush.bf16.msra.mxu0 0
      %1419 = vmatpush.bf16.msra.mxu0 0
      %1420 = vmatpush.bf16.msra.mxu0 0
      %1421 = vmatpush.bf16.msra.mxu0 0
      %1422 = vmatpush.bf16.msra.mxu0 0
      %1423 = vmatpush.bf16.msra.mxu0 0
      %1424 = vmatpush.bf16.msra.mxu0 0
      %1425 = vmatpush.bf16.msra.mxu0 %v1368
      %1426 = vmatmul.bf16.gmra.mxu0 %v1371
      %v1427 = vpop.f32.mrf.mxu0
      %v1428 = vadd.f32 0.0, %v1427
      %v1429 = vpop.f32.mrf.mxu0
      %v1430 = vadd.f32 0.0, %v1429
      %1431 = vmatmul.bf16.gmra.mxu0 %v1374
      %v1432 = vpop.f32.mrf.mxu0
      %v1433 = vadd.f32 0.0, %v1432
      %v1434 = vpop.f32.mrf.mxu0
      %v1435 = vadd.f32 0.0, %v1434
      %1436 = vmatmul.bf16.gmra.mxu0 %v1377
      %v1437 = vpop.f32.mrf.mxu0
      %v1438 = vadd.f32 0.0, %v1437
      %v1439 = vpop.f32.mrf.mxu0
      %v1440 = vadd.f32 0.0, %v1439
      %1441 = vmatmul.bf16.gmra.mxu0 %v1380
      %v1442 = vpop.f32.mrf.mxu0
      %v1443 = vadd.f32 0.0, %v1442
      %v1444 = vpop.f32.mrf.mxu0
      %v1445 = vadd.f32 0.0, %v1444
      %1446 = vmatmul.bf16.gmra.mxu0 %v1383
      %v1447 = vpop.f32.mrf.mxu0
      %v1448 = vadd.f32 0.0, %v1447
      %v1449 = vpop.f32.mrf.mxu0
      %v1450 = vadd.f32 0.0, %v1449
      %1451 = vmatmul.bf16.gmra.mxu0 %v1386
      %v1452 = vpop.f32.mrf.mxu0
      %v1453 = vadd.f32 0.0, %v1452
      %v1454 = vpop.f32.mrf.mxu0
      %v1455 = vadd.f32 0.0, %v1454
      %1456 = vmatmul.bf16.gmra.mxu0 %v1389
      %v1457 = vpop.f32.mrf.mxu0
      %v1458 = vadd.f32 0.0, %v1457
      %v1459 = vpop.f32.mrf.mxu0
      %v1460 = vadd.f32 0.0, %v1459
      %1461 = vmatmul.bf16.gmra.mxu0 %v1392
      %v1462 = vpop.f32.mrf.mxu0
      %v1463 = vadd.f32 0.0, %v1462
      %v1464 = vpop.f32.mrf.mxu0
      %v1465 = vadd.f32 0.0, %v1464
      %1466 = vmatmul.bf16.gmra.mxu0 %v1395
      %v1467 = vpop.f32.mrf.mxu0
      %v1468 = vadd.f32 0.0, %v1467
      %v1469 = vpop.f32.mrf.mxu0
      %v1470 = vadd.f32 0.0, %v1469
      %1471 = vmatmul.bf16.gmra.mxu0 %v1398
      %v1472 = vpop.f32.mrf.mxu0
      %v1473 = vadd.f32 0.0, %v1472
      %v1474 = vpop.f32.mrf.mxu0
      %v1475 = vadd.f32 0.0, %v1474
      %1476 = vmatmul.bf16.gmra.mxu0 %v1401
      %v1477 = vpop.f32.mrf.mxu0
      %v1478 = vadd.f32 0.0, %v1477
      %v1479 = vpop.f32.mrf.mxu0
      %v1480 = vadd.f32 0.0, %v1479
      %1481 = vmatmul.bf16.gmra.mxu0 %v1404
      %v1482 = vpop.f32.mrf.mxu0
      %v1483 = vadd.f32 0.0, %v1482
      %v1484 = vpop.f32.mrf.mxu0
      %v1485 = vadd.f32 0.0, %v1484
      %1486 = vmatmul.bf16.gmra.mxu0 %v1407
      %v1487 = vpop.f32.mrf.mxu0
      %v1488 = vadd.f32 0.0, %v1487
      %v1489 = vpop.f32.mrf.mxu0
      %v1490 = vadd.f32 0.0, %v1489
      %1491 = vmatmul.bf16.gmra.mxu0 %v1410
      %v1492 = vpop.f32.mrf.mxu0
      %v1493 = vadd.f32 0.0, %v1492
      %v1494 = vpop.f32.mrf.mxu0
      %v1495 = vadd.f32 0.0, %v1494
      %1496 = vmatmul.bf16.gmra.mxu0 %v1413
      %v1497 = vpop.f32.mrf.mxu0
      %v1498 = vadd.f32 0.0, %v1497
      %v1499 = vpop.f32.mrf.mxu0
      %v1500 = vadd.f32 0.0, %v1499
      %1501 = vmatmul.bf16.gmra.mxu0 %v1416
      %v1502 = vpop.f32.mrf.mxu0
      %v1503 = vadd.f32 0.0, %v1502
      %v1504 = vpop.f32.mrf.mxu0
      %v1505 = vadd.f32 0.0, %v1504
      %1506 = vdwg.mxu0
      %v1507 = vrot.slane %v1428, 7
      %v1508 = vrot.slane %v1430, 7
      %v1509 = vrot.slane %v1433, 7
      %v1510 = vrot.slane %v1435, 7
      %v1511 = vrot.slane %v1438, 7
      %v1512 = vrot.slane %v1440, 7
      %v1513 = vrot.slane %v1443, 7
      %v1514 = vrot.slane %v1445, 7
      %v1515 = vrot.slane %v1448, 7
      %v1516 = vrot.slane %v1450, 7
      %v1517 = vrot.slane %v1453, 7
      %v1518 = vrot.slane %v1455, 7
      %v1519 = vrot.slane %v1458, 7
      %v1520 = vrot.slane %v1460, 7
      %v1521 = vrot.slane %v1463, 7
      %v1522 = vrot.slane %v1465, 7
      %v1523 = vrot.slane %v1468, 7
      %v1524 = vrot.slane %v1470, 7
      %v1525 = vrot.slane %v1473, 7
      %v1526 = vrot.slane %v1475, 7
      %v1527 = vrot.slane %v1478, 7
      %v1528 = vrot.slane %v1480, 7
      %v1529 = vrot.slane %v1483, 7
      %v1530 = vrot.slane %v1485, 7
      %v1531 = vrot.slane %v1488, 7
      %v1532 = vrot.slane %v1490, 7
      %v1533 = vrot.slane %v1493, 7
      %v1534 = vrot.slane %v1495, 7
      %v1535 = vrot.slane %v1498, 7
      %v1536 = vrot.slane %v1500, 7
      %v1537 = vrot.slane %v1503, 7
      %v1538 = vrot.slane %v1505, 7
      %vm1539 = vcmp.lt.s32.totalorder %v173, 1
      %v1540 = vsel %vm1539, %v1537, %v1538
      %v1541 = vsel %vm1539, %v1536, %v1537
      %v1542 = vsel %vm1539, %v1535, %v1536
      %v1543 = vsel %vm1539, %v1534, %v1535
      %v1544 = vsel %vm1539, %v1533, %v1534
      %v1545 = vsel %vm1539, %v1532, %v1533
      %v1546 = vsel %vm1539, %v1531, %v1532
      %v1547 = vsel %vm1539, %v1530, %v1531
      %v1548 = vsel %vm1539, %v1529, %v1530
      %v1549 = vsel %vm1539, %v1528, %v1529
      %v1550 = vsel %vm1539, %v1527, %v1528
      %v1551 = vsel %vm1539, %v1526, %v1527
      %v1552 = vsel %vm1539, %v1525, %v1526
      %v1553 = vsel %vm1539, %v1524, %v1525
      %v1554 = vsel %vm1539, %v1523, %v1524
      %v1555 = vsel %vm1539, %v1522, %v1523
      %v1556 = vsel %vm1539, %v1521, %v1522
      %v1557 = vsel %vm1539, %v1520, %v1521
      %v1558 = vsel %vm1539, %v1519, %v1520
      %v1559 = vsel %vm1539, %v1518, %v1519
      %v1560 = vsel %vm1539, %v1517, %v1518
      %v1561 = vsel %vm1539, %v1516, %v1517
      %v1562 = vsel %vm1539, %v1515, %v1516
      %v1563 = vsel %vm1539, %v1514, %v1515
      %v1564 = vsel %vm1539, %v1513, %v1514
      %v1565 = vsel %vm1539, %v1512, %v1513
      %v1566 = vsel %vm1539, %v1511, %v1512
      %v1567 = vsel %vm1539, %v1510, %v1511
      %v1568 = vsel %vm1539, %v1509, %v1510
      %v1569 = vsel %vm1539, %v1508, %v1509
      %v1570 = vsel %vm1539, %v1507, %v1508
      %v1571 = vsel %vm1539, %v1538, %v1507
      %vm1572 = vcmp.ge.s32.totalorder %v173, 16
      %vm1573 = vcmp.ge.s32.totalorder %v174, 16
      %vm1574 = vcmp.ge.s32.totalorder %v175, 16
      %vm1575 = vcmp.ge.s32.totalorder %v176, 16
      %vm1576 = vcmp.ge.s32.totalorder %v177, 16
      %vm1577 = vcmp.ge.s32.totalorder %v178, 16
      %vm1578 = vcmp.ge.s32.totalorder %v179, 16
      %vm1579 = vcmp.ge.s32.totalorder %v180, 16
      %vm1580 = vcmp.ge.s32.totalorder %v181, 16
      %vm1581 = vcmp.ge.s32.totalorder %v182, 16
      %vm1582 = vcmp.ge.s32.totalorder %v183, 16
      %vm1583 = vcmp.ge.s32.totalorder %v184, 16
      %vm1584 = vcmp.ge.s32.totalorder %v185, 16
      %vm1585 = vcmp.ge.s32.totalorder %v186, 16
      %vm1586 = vcmp.ge.s32.totalorder %v187, 16
      %vm1587 = vcmp.ge.s32.totalorder %v188, 16
      %vm1588 = vcmp.ge.s32.totalorder %v189, 16
      %vm1589 = vcmp.ge.s32.totalorder %v190, 16
      %vm1590 = vcmp.ge.s32.totalorder %v191, 16
      %vm1591 = vcmp.ge.s32.totalorder %v192, 16
      %vm1592 = vcmp.ge.s32.totalorder %v193, 16
      %vm1593 = vcmp.ge.s32.totalorder %v194, 16
      %vm1594 = vcmp.ge.s32.totalorder %v195, 16
      %vm1595 = vcmp.ge.s32.totalorder %v196, 16
      %vm1596 = vcmp.ge.s32.totalorder %v197, 16
      %vm1597 = vcmp.ge.s32.totalorder %v198, 16
      %vm1598 = vcmp.ge.s32.totalorder %v199, 16
      %vm1599 = vcmp.ge.s32.totalorder %v200, 16
      %vm1600 = vcmp.ge.s32.totalorder %v201, 16
      %vm1601 = vcmp.ge.s32.totalorder %v202, 16
      %vm1602 = vcmp.ge.s32.totalorder %v203, 16
      %vm1603 = vcmp.ge.s32.totalorder %v204, 16
      %vm1604 = vcmp.ge.s32.totalorder %v557, 1
      %vm1605 = vcmp.ge.s32.totalorder %v558, 1
      %vm1606 = vcmp.ge.s32.totalorder %v559, 1
      %vm1607 = vcmp.ge.s32.totalorder %v560, 1
      %vm1608 = vcmp.ge.s32.totalorder %v561, 1
      %vm1609 = vcmp.ge.s32.totalorder %v562, 1
      %vm1610 = vcmp.ge.s32.totalorder %v563, 1
      %vm1611 = vcmp.ge.s32.totalorder %v564, 1
      %vm1612 = vcmp.ge.s32.totalorder %v565, 1
      %vm1613 = vcmp.ge.s32.totalorder %v566, 1
      %vm1614 = vcmp.ge.s32.totalorder %v567, 1
      %vm1615 = vcmp.ge.s32.totalorder %v568, 1
      %vm1616 = vcmp.ge.s32.totalorder %v569, 1
      %vm1617 = vcmp.ge.s32.totalorder %v570, 1
      %vm1618 = vcmp.ge.s32.totalorder %v571, 1
      %vm1619 = vcmp.ge.s32.totalorder %v572, 1
      %vm1620 = vcmp.ge.s32.totalorder %v573, 1
      %vm1621 = vcmp.ge.s32.totalorder %v574, 1
      %vm1622 = vcmp.ge.s32.totalorder %v575, 1
      %vm1623 = vcmp.ge.s32.totalorder %v576, 1
      %vm1624 = vcmp.ge.s32.totalorder %v577, 1
      %vm1625 = vcmp.ge.s32.totalorder %v578, 1
      %vm1626 = vcmp.ge.s32.totalorder %v579, 1
      %vm1627 = vcmp.ge.s32.totalorder %v580, 1
      %vm1628 = vcmp.ge.s32.totalorder %v581, 1
      %vm1629 = vcmp.ge.s32.totalorder %v582, 1
      %vm1630 = vcmp.ge.s32.totalorder %v583, 1
      %vm1631 = vcmp.ge.s32.totalorder %v584, 1
      %vm1632 = vcmp.ge.s32.totalorder %v585, 1
      %vm1633 = vcmp.ge.s32.totalorder %v586, 1
      %vm1634 = vcmp.ge.s32.totalorder %v587, 1
      %vm1635 = vcmp.ge.s32.totalorder %v588, 1
      %vm1636 = vmand %vm1572, %vm1604
      %vm1637 = vmand %vm1573, %vm1605
      %vm1638 = vmand %vm1574, %vm1606
      %vm1639 = vmand %vm1575, %vm1607
      %vm1640 = vmand %vm1576, %vm1608
      %vm1641 = vmand %vm1577, %vm1609
      %vm1642 = vmand %vm1578, %vm1610
      %vm1643 = vmand %vm1579, %vm1611
      %vm1644 = vmand %vm1580, %vm1612
      %vm1645 = vmand %vm1581, %vm1613
      %vm1646 = vmand %vm1582, %vm1614
      %vm1647 = vmand %vm1583, %vm1615
      %vm1648 = vmand %vm1584, %vm1616
      %vm1649 = vmand %vm1585, %vm1617
      %vm1650 = vmand %vm1586, %vm1618
      %vm1651 = vmand %vm1587, %vm1619
      %vm1652 = vmand %vm1588, %vm1620
      %vm1653 = vmand %vm1589, %vm1621
      %vm1654 = vmand %vm1590, %vm1622
      %vm1655 = vmand %vm1591, %vm1623
      %vm1656 = vmand %vm1592, %vm1624
      %vm1657 = vmand %vm1593, %vm1625
      %vm1658 = vmand %vm1594, %vm1626
      %vm1659 = vmand %vm1595, %vm1627
      %vm1660 = vmand %vm1596, %vm1628
      %vm1661 = vmand %vm1597, %vm1629
      %vm1662 = vmand %vm1598, %vm1630
      %vm1663 = vmand %vm1599, %vm1631
      %vm1664 = vmand %vm1600, %vm1632
      %vm1665 = vmand %vm1601, %vm1633
      %vm1666 = vmand %vm1602, %vm1634
      %vm1667 = vmand %vm1603, %vm1635
      %v1668 = vsel %vm1636, 1, 0
      %v1669 = vsel %vm1637, 1, 0
      %v1670 = vsel %vm1638, 1, 0
      %v1671 = vsel %vm1639, 1, 0
      %v1672 = vsel %vm1640, 1, 0
      %v1673 = vsel %vm1641, 1, 0
      %v1674 = vsel %vm1642, 1, 0
      %v1675 = vsel %vm1643, 1, 0
      %v1676 = vsel %vm1644, 1, 0
      %v1677 = vsel %vm1645, 1, 0
      %v1678 = vsel %vm1646, 1, 0
      %v1679 = vsel %vm1647, 1, 0
      %v1680 = vsel %vm1648, 1, 0
      %v1681 = vsel %vm1649, 1, 0
      %v1682 = vsel %vm1650, 1, 0
      %v1683 = vsel %vm1651, 1, 0
      %v1684 = vsel %vm1652, 1, 0
      %v1685 = vsel %vm1653, 1, 0
      %v1686 = vsel %vm1654, 1, 0
      %v1687 = vsel %vm1655, 1, 0
      %v1688 = vsel %vm1656, 1, 0
      %v1689 = vsel %vm1657, 1, 0
      %v1690 = vsel %vm1658, 1, 0
      %v1691 = vsel %vm1659, 1, 0
      %v1692 = vsel %vm1660, 1, 0
      %v1693 = vsel %vm1661, 1, 0
      %v1694 = vsel %vm1662, 1, 0
      %v1695 = vsel %vm1663, 1, 0
      %v1696 = vsel %vm1664, 1, 0
      %v1697 = vsel %vm1665, 1, 0
      %v1698 = vsel %vm1666, 1, 0
      %v1699 = vsel %vm1667, 1, 0
      %vm1700 = vcmp.eq.s32.totalorder %v1668, 1
      %vm1701 = vcmp.eq.s32.totalorder %v1669, 1
      %vm1702 = vcmp.eq.s32.totalorder %v1670, 1
      %vm1703 = vcmp.eq.s32.totalorder %v1671, 1
      %vm1704 = vcmp.eq.s32.totalorder %v1672, 1
      %vm1705 = vcmp.eq.s32.totalorder %v1673, 1
      %vm1706 = vcmp.eq.s32.totalorder %v1674, 1
      %vm1707 = vcmp.eq.s32.totalorder %v1675, 1
      %vm1708 = vcmp.eq.s32.totalorder %v1676, 1
      %vm1709 = vcmp.eq.s32.totalorder %v1677, 1
      %vm1710 = vcmp.eq.s32.totalorder %v1678, 1
      %vm1711 = vcmp.eq.s32.totalorder %v1679, 1
      %vm1712 = vcmp.eq.s32.totalorder %v1680, 1
      %vm1713 = vcmp.eq.s32.totalorder %v1681, 1
      %vm1714 = vcmp.eq.s32.totalorder %v1682, 1
      %vm1715 = vcmp.eq.s32.totalorder %v1683, 1
      %vm1716 = vcmp.eq.s32.totalorder %v1684, 1
      %vm1717 = vcmp.eq.s32.totalorder %v1685, 1
      %vm1718 = vcmp.eq.s32.totalorder %v1686, 1
      %vm1719 = vcmp.eq.s32.totalorder %v1687, 1
      %vm1720 = vcmp.eq.s32.totalorder %v1688, 1
      %vm1721 = vcmp.eq.s32.totalorder %v1689, 1
      %vm1722 = vcmp.eq.s32.totalorder %v1690, 1
      %vm1723 = vcmp.eq.s32.totalorder %v1691, 1
      %vm1724 = vcmp.eq.s32.totalorder %v1692, 1
      %vm1725 = vcmp.eq.s32.totalorder %v1693, 1
      %vm1726 = vcmp.eq.s32.totalorder %v1694, 1
      %vm1727 = vcmp.eq.s32.totalorder %v1695, 1
      %vm1728 = vcmp.eq.s32.totalorder %v1696, 1
      %vm1729 = vcmp.eq.s32.totalorder %v1697, 1
      %vm1730 = vcmp.eq.s32.totalorder %v1698, 1
      %vm1731 = vcmp.eq.s32.totalorder %v1699, 1
      %v1732 = vsel %vm1700, %v1541, 0.0
      %v1733 = vsel %vm1701, %v1540, 0.0
      %v1734 = vsel %vm1702, %v1571, 0.0
      %v1735 = vsel %vm1703, %v1570, 0.0
      %v1736 = vsel %vm1704, %v1569, 0.0
      %v1737 = vsel %vm1705, %v1568, 0.0
      %v1738 = vsel %vm1706, %v1567, 0.0
      %v1739 = vsel %vm1707, %v1566, 0.0
      %v1740 = vsel %vm1708, %v1565, 0.0
      %v1741 = vsel %vm1709, %v1564, 0.0
      %v1742 = vsel %vm1710, %v1563, 0.0
      %v1743 = vsel %vm1711, %v1562, 0.0
      %v1744 = vsel %vm1712, %v1561, 0.0
      %v1745 = vsel %vm1713, %v1560, 0.0
      %v1746 = vsel %vm1714, %v1559, 0.0
      %v1747 = vsel %vm1715, %v1558, 0.0
      %v1748 = vsel %vm1716, %v1557, 0.0
      %v1749 = vsel %vm1717, %v1556, 0.0
      %v1750 = vsel %vm1718, %v1555, 0.0
      %v1751 = vsel %vm1719, %v1554, 0.0
      %v1752 = vsel %vm1720, %v1553, 0.0
      %v1753 = vsel %vm1721, %v1552, 0.0
      %v1754 = vsel %vm1722, %v1551, 0.0
      %v1755 = vsel %vm1723, %v1550, 0.0
      %v1756 = vsel %vm1724, %v1549, 0.0
      %v1757 = vsel %vm1725, %v1548, 0.0
      %v1758 = vsel %vm1726, %v1547, 0.0
      %v1759 = vsel %vm1727, %v1546, 0.0
      %v1760 = vsel %vm1728, %v1545, 0.0
      %v1761 = vsel %vm1729, %v1544, 0.0
      %v1762 = vsel %vm1730, %v1543, 0.0
      %v1763 = vsel %vm1731, %v1542, 0.0
      %v1764 = vadd.f32 %v1732, 0.0
      %v1765 = vadd.f32 %v1733, 0.0
      %v1766 = vadd.f32 %v1734, 0.0
      %v1767 = vadd.f32 %v1735, 0.0
      %v1768 = vadd.f32 %v1736, 0.0
      %v1769 = vadd.f32 %v1737, 0.0
      %v1770 = vadd.f32 %v1738, 0.0
      %v1771 = vadd.f32 %v1739, 0.0
      %v1772 = vadd.f32 %v1740, 0.0
      %v1773 = vadd.f32 %v1741, 0.0
      %v1774 = vadd.f32 %v1742, 0.0
      %v1775 = vadd.f32 %v1743, 0.0
      %v1776 = vadd.f32 %v1744, 0.0
      %v1777 = vadd.f32 %v1745, 0.0
      %v1778 = vadd.f32 %v1746, 0.0
      %v1779 = vadd.f32 %v1747, 0.0
      %v1780 = vadd.f32 %v1748, 0.0
      %v1781 = vadd.f32 %v1749, 0.0
      %v1782 = vadd.f32 %v1750, 0.0
      %v1783 = vadd.f32 %v1751, 0.0
      %v1784 = vadd.f32 %v1752, 0.0
      %v1785 = vadd.f32 %v1753, 0.0
      %v1786 = vadd.f32 %v1754, 0.0
      %v1787 = vadd.f32 %v1755, 0.0
      %v1788 = vadd.f32 %v1756, 0.0
      %v1789 = vadd.f32 %v1757, 0.0
      %v1790 = vadd.f32 %v1758, 0.0
      %v1791 = vadd.f32 %v1759, 0.0
      %v1792 = vadd.f32 %v1760, 0.0
      %v1793 = vadd.f32 %v1761, 0.0
      %v1794 = vadd.f32 %v1762, 0.0
      %v1795 = vadd.f32 %v1763, 0.0
      %1828 = vrot.lane.b32.xlu0 %v1428, 124
      %v1829 = vpop.permute.xlu0 %1828
      %1830 = vrot.lane.b32.xlu0 %v1430, 124
      %v1831 = vpop.permute.xlu0 %1830
      %1832 = vrot.lane.b32.xlu0 %v1433, 124
      %v1833 = vpop.permute.xlu0 %1832
      %1834 = vrot.lane.b32.xlu0 %v1435, 124
      %v1835 = vpop.permute.xlu0 %1834
      %1836 = vrot.lane.b32.xlu0 %v1438, 124
      %v1837 = vpop.permute.xlu0 %1836
      %1838 = vrot.lane.b32.xlu0 %v1440, 124
      %v1839 = vpop.permute.xlu0 %1838
      %1840 = vrot.lane.b32.xlu0 %v1443, 124
      %v1841 = vpop.permute.xlu0 %1840
      %1842 = vrot.lane.b32.xlu0 %v1445, 124
      %v1843 = vpop.permute.xlu0 %1842
      %1844 = vrot.lane.b32.xlu0 %v1448, 124
      %v1845 = vpop.permute.xlu0 %1844
      %1846 = vrot.lane.b32.xlu0 %v1450, 124
      %v1847 = vpop.permute.xlu0 %1846
      %1848 = vrot.lane.b32.xlu0 %v1453, 124
      %v1849 = vpop.permute.xlu0 %1848
      %1850 = vrot.lane.b32.xlu0 %v1455, 124
      %v1851 = vpop.permute.xlu0 %1850
      %1852 = vrot.lane.b32.xlu0 %v1458, 124
      %v1853 = vpop.permute.xlu0 %1852
      %1854 = vrot.lane.b32.xlu0 %v1460, 124
      %v1855 = vpop.permute.xlu0 %1854
      %1856 = vrot.lane.b32.xlu0 %v1463, 124
      %v1857 = vpop.permute.xlu0 %1856
      %1858 = vrot.lane.b32.xlu0 %v1465, 124
      %v1859 = vpop.permute.xlu0 %1858
      %1860 = vrot.lane.b32.xlu0 %v1468, 124
      %v1861 = vpop.permute.xlu0 %1860
      %1862 = vrot.lane.b32.xlu0 %v1470, 124
      %v1863 = vpop.permute.xlu0 %1862
      %1864 = vrot.lane.b32.xlu0 %v1473, 124
      %v1865 = vpop.permute.xlu0 %1864
      %1866 = vrot.lane.b32.xlu0 %v1475, 124
      %v1867 = vpop.permute.xlu0 %1866
      %1868 = vrot.lane.b32.xlu0 %v1478, 124
      %v1869 = vpop.permute.xlu0 %1868
      %1870 = vrot.lane.b32.xlu0 %v1480, 124
      %v1871 = vpop.permute.xlu0 %1870
      %1872 = vrot.lane.b32.xlu0 %v1483, 124
      %v1873 = vpop.permute.xlu0 %1872
      %1874 = vrot.lane.b32.xlu0 %v1485, 124
      %v1875 = vpop.permute.xlu0 %1874
      %1876 = vrot.lane.b32.xlu0 %v1488, 124
      %v1877 = vpop.permute.xlu0 %1876
      %1878 = vrot.lane.b32.xlu0 %v1490, 124
      %v1879 = vpop.permute.xlu0 %1878
      %1880 = vrot.lane.b32.xlu0 %v1493, 124
      %v1881 = vpop.permute.xlu0 %1880
      %1882 = vrot.lane.b32.xlu0 %v1495, 124
      %v1883 = vpop.permute.xlu0 %1882
      %1884 = vrot.lane.b32.xlu0 %v1498, 124
      %v1885 = vpop.permute.xlu0 %1884
      %1886 = vrot.lane.b32.xlu0 %v1500, 124
      %v1887 = vpop.permute.xlu0 %1886
      %1888 = vrot.lane.b32.xlu0 %v1503, 124
      %v1889 = vpop.permute.xlu0 %1888
      %1890 = vrot.lane.b32.xlu0 %v1505, 124
      %v1891 = vpop.permute.xlu0 %1890
      %v1924 = vsel %vm1572, 1, 0
      %v1925 = vsel %vm1573, 1, 0
      %v1926 = vsel %vm1574, 1, 0
      %v1927 = vsel %vm1575, 1, 0
      %v1928 = vsel %vm1576, 1, 0
      %v1929 = vsel %vm1577, 1, 0
      %v1930 = vsel %vm1578, 1, 0
      %v1931 = vsel %vm1579, 1, 0
      %v1932 = vsel %vm1580, 1, 0
      %v1933 = vsel %vm1581, 1, 0
      %v1934 = vsel %vm1582, 1, 0
      %v1935 = vsel %vm1583, 1, 0
      %v1936 = vsel %vm1584, 1, 0
      %v1937 = vsel %vm1585, 1, 0
      %v1938 = vsel %vm1586, 1, 0
      %v1939 = vsel %vm1587, 1, 0
      %v1940 = vsel %vm1588, 1, 0
      %v1941 = vsel %vm1589, 1, 0
      %v1942 = vsel %vm1590, 1, 0
      %v1943 = vsel %vm1591, 1, 0
      %v1944 = vsel %vm1592, 1, 0
      %v1945 = vsel %vm1593, 1, 0
      %v1946 = vsel %vm1594, 1, 0
      %v1947 = vsel %vm1595, 1, 0
      %v1948 = vsel %vm1596, 1, 0
      %v1949 = vsel %vm1597, 1, 0
      %v1950 = vsel %vm1598, 1, 0
      %v1951 = vsel %vm1599, 1, 0
      %v1952 = vsel %vm1600, 1, 0
      %v1953 = vsel %vm1601, 1, 0
      %v1954 = vsel %vm1602, 1, 0
      %v1955 = vsel %vm1603, 1, 0
      %vm1956 = vcmp.eq.s32.totalorder %v1924, 1
      %vm1957 = vcmp.eq.s32.totalorder %v1925, 1
      %vm1958 = vcmp.eq.s32.totalorder %v1926, 1
      %vm1959 = vcmp.eq.s32.totalorder %v1927, 1
      %vm1960 = vcmp.eq.s32.totalorder %v1928, 1
      %vm1961 = vcmp.eq.s32.totalorder %v1929, 1
      %vm1962 = vcmp.eq.s32.totalorder %v1930, 1
      %vm1963 = vcmp.eq.s32.totalorder %v1931, 1
      %vm1964 = vcmp.eq.s32.totalorder %v1932, 1
      %vm1965 = vcmp.eq.s32.totalorder %v1933, 1
      %vm1966 = vcmp.eq.s32.totalorder %v1934, 1
      %vm1967 = vcmp.eq.s32.totalorder %v1935, 1
      %vm1968 = vcmp.eq.s32.totalorder %v1936, 1
      %vm1969 = vcmp.eq.s32.totalorder %v1937, 1
      %vm1970 = vcmp.eq.s32.totalorder %v1938, 1
      %vm1971 = vcmp.eq.s32.totalorder %v1939, 1
      %vm1972 = vcmp.eq.s32.totalorder %v1940, 1
      %vm1973 = vcmp.eq.s32.totalorder %v1941, 1
      %vm1974 = vcmp.eq.s32.totalorder %v1942, 1
      %vm1975 = vcmp.eq.s32.totalorder %v1943, 1
      %vm1976 = vcmp.eq.s32.totalorder %v1944, 1
      %vm1977 = vcmp.eq.s32.totalorder %v1945, 1
      %vm1978 = vcmp.eq.s32.totalorder %v1946, 1
      %vm1979 = vcmp.eq.s32.totalorder %v1947, 1
      %vm1980 = vcmp.eq.s32.totalorder %v1948, 1
      %vm1981 = vcmp.eq.s32.totalorder %v1949, 1
      %vm1982 = vcmp.eq.s32.totalorder %v1950, 1
      %vm1983 = vcmp.eq.s32.totalorder %v1951, 1
      %vm1984 = vcmp.eq.s32.totalorder %v1952, 1
      %vm1985 = vcmp.eq.s32.totalorder %v1953, 1
      %vm1986 = vcmp.eq.s32.totalorder %v1954, 1
      %vm1987 = vcmp.eq.s32.totalorder %v1955, 1
      %v1988 = vsel %vm1956, %v1889, 0.0
      %v1989 = vsel %vm1957, %v1891, 0.0
      %v1990 = vsel %vm1958, %v1829, 0.0
      %v1991 = vsel %vm1959, %v1831, 0.0
      %v1992 = vsel %vm1960, %v1833, 0.0
      %v1993 = vsel %vm1961, %v1835, 0.0
      %v1994 = vsel %vm1962, %v1837, 0.0
      %v1995 = vsel %vm1963, %v1839, 0.0
      %v1996 = vsel %vm1964, %v1841, 0.0
      %v1997 = vsel %vm1965, %v1843, 0.0
      %v1998 = vsel %vm1966, %v1845, 0.0
      %v1999 = vsel %vm1967, %v1847, 0.0
      %v2000 = vsel %vm1968, %v1849, 0.0
      %v2001 = vsel %vm1969, %v1851, 0.0
      %v2002 = vsel %vm1970, %v1853, 0.0
      %v2003 = vsel %vm1971, %v1855, 0.0
      %v2004 = vsel %vm1972, %v1857, 0.0
      %v2005 = vsel %vm1973, %v1859, 0.0
      %v2006 = vsel %vm1974, %v1861, 0.0
      %v2007 = vsel %vm1975, %v1863, 0.0
      %v2008 = vsel %vm1976, %v1865, 0.0
      %v2009 = vsel %vm1977, %v1867, 0.0
      %v2010 = vsel %vm1978, %v1869, 0.0
      %v2011 = vsel %vm1979, %v1871, 0.0
      %v2012 = vsel %vm1980, %v1873, 0.0
      %v2013 = vsel %vm1981, %v1875, 0.0
      %v2014 = vsel %vm1982, %v1877, 0.0
      %v2015 = vsel %vm1983, %v1879, 0.0
      %v2016 = vsel %vm1984, %v1881, 0.0
      %v2017 = vsel %vm1985, %v1883, 0.0
      %v2018 = vsel %vm1986, %v1885, 0.0
      %v2019 = vsel %vm1987, %v1887, 0.0
      %v2020 = vadd.f32 %v1764, %v1988
      %v2021 = vadd.f32 %v1765, %v1989
      %v2022 = vadd.f32 %v1766, %v1990
      %v2023 = vadd.f32 %v1767, %v1991
      %v2024 = vadd.f32 %v1768, %v1992
      %v2025 = vadd.f32 %v1769, %v1993
      %v2026 = vadd.f32 %v1770, %v1994
      %v2027 = vadd.f32 %v1771, %v1995
      %v2028 = vadd.f32 %v1772, %v1996
      %v2029 = vadd.f32 %v1773, %v1997
      %v2030 = vadd.f32 %v1774, %v1998
      %v2031 = vadd.f32 %v1775, %v1999
      %v2032 = vadd.f32 %v1776, %v2000
      %v2033 = vadd.f32 %v1777, %v2001
      %v2034 = vadd.f32 %v1778, %v2002
      %v2035 = vadd.f32 %v1779, %v2003
      %v2036 = vadd.f32 %v1780, %v2004
      %v2037 = vadd.f32 %v1781, %v2005
      %v2038 = vadd.f32 %v1782, %v2006
      %v2039 = vadd.f32 %v1783, %v2007
      %v2040 = vadd.f32 %v1784, %v2008
      %v2041 = vadd.f32 %v1785, %v2009
      %v2042 = vadd.f32 %v1786, %v2010
      %v2043 = vadd.f32 %v1787, %v2011
      %v2044 = vadd.f32 %v1788, %v2012
      %v2045 = vadd.f32 %v1789, %v2013
      %v2046 = vadd.f32 %v1790, %v2014
      %v2047 = vadd.f32 %v1791, %v2015
      %v2048 = vadd.f32 %v1792, %v2016
      %v2049 = vadd.f32 %v1793, %v2017
      %v2050 = vadd.f32 %v1794, %v2018
      %v2051 = vadd.f32 %v1795, %v2019
      %2052 = vrot.lane.b32.xlu0 %v1428, 120
      %v2053 = vpop.permute.xlu0 %2052
      %2054 = vrot.lane.b32.xlu0 %v1430, 120
      %v2055 = vpop.permute.xlu0 %2054
      %2056 = vrot.lane.b32.xlu0 %v1433, 120
      %v2057 = vpop.permute.xlu0 %2056
      %2058 = vrot.lane.b32.xlu0 %v1435, 120
      %v2059 = vpop.permute.xlu0 %2058
      %2060 = vrot.lane.b32.xlu0 %v1438, 120
      %v2061 = vpop.permute.xlu0 %2060
      %2062 = vrot.lane.b32.xlu0 %v1440, 120
      %v2063 = vpop.permute.xlu0 %2062
      %2064 = vrot.lane.b32.xlu0 %v1443, 120
      %v2065 = vpop.permute.xlu0 %2064
      %2066 = vrot.lane.b32.xlu0 %v1445, 120
      %v2067 = vpop.permute.xlu0 %2066
      %2068 = vrot.lane.b32.xlu0 %v1448, 120
      %v2069 = vpop.permute.xlu0 %2068
      %2070 = vrot.lane.b32.xlu0 %v1450, 120
      %v2071 = vpop.permute.xlu0 %2070
      %2072 = vrot.lane.b32.xlu0 %v1453, 120
      %v2073 = vpop.permute.xlu0 %2072
      %2074 = vrot.lane.b32.xlu0 %v1455, 120
      %v2075 = vpop.permute.xlu0 %2074
      %2076 = vrot.lane.b32.xlu0 %v1458, 120
      %v2077 = vpop.permute.xlu0 %2076
      %2078 = vrot.lane.b32.xlu0 %v1460, 120
      %v2079 = vpop.permute.xlu0 %2078
      %2080 = vrot.lane.b32.xlu0 %v1463, 120
      %v2081 = vpop.permute.xlu0 %2080
      %2082 = vrot.lane.b32.xlu0 %v1465, 120
      %v2083 = vpop.permute.xlu0 %2082
      %2084 = vrot.lane.b32.xlu0 %v1468, 120
      %v2085 = vpop.permute.xlu0 %2084
      %2086 = vrot.lane.b32.xlu0 %v1470, 120
      %v2087 = vpop.permute.xlu0 %2086
      %2088 = vrot.lane.b32.xlu0 %v1473, 120
      %v2089 = vpop.permute.xlu0 %2088
      %2090 = vrot.lane.b32.xlu0 %v1475, 120
      %v2091 = vpop.permute.xlu0 %2090
      %2092 = vrot.lane.b32.xlu0 %v1478, 120
      %v2093 = vpop.permute.xlu0 %2092
      %2094 = vrot.lane.b32.xlu0 %v1480, 120
      %v2095 = vpop.permute.xlu0 %2094
      %2096 = vrot.lane.b32.xlu0 %v1483, 120
      %v2097 = vpop.permute.xlu0 %2096
      %2098 = vrot.lane.b32.xlu0 %v1485, 120
      %v2099 = vpop.permute.xlu0 %2098
      %2100 = vrot.lane.b32.xlu0 %v1488, 120
      %v2101 = vpop.permute.xlu0 %2100
      %2102 = vrot.lane.b32.xlu0 %v1490, 120
      %v2103 = vpop.permute.xlu0 %2102
      %2104 = vrot.lane.b32.xlu0 %v1493, 120
      %v2105 = vpop.permute.xlu0 %2104
      %2106 = vrot.lane.b32.xlu0 %v1495, 120
      %v2107 = vpop.permute.xlu0 %2106
      %2108 = vrot.lane.b32.xlu0 %v1498, 120
      %v2109 = vpop.permute.xlu0 %2108
      %2110 = vrot.lane.b32.xlu0 %v1500, 120
      %v2111 = vpop.permute.xlu0 %2110
      %2112 = vrot.lane.b32.xlu0 %v1503, 120
      %v2113 = vpop.permute.xlu0 %2112
      %2114 = vrot.lane.b32.xlu0 %v1505, 120
      %v2115 = vpop.permute.xlu0 %2114
      %v2148 = vrot.slane %v2053, 1
      %v2149 = vrot.slane %v2055, 1
      %v2150 = vrot.slane %v2057, 1
      %v2151 = vrot.slane %v2059, 1
      %v2152 = vrot.slane %v2061, 1
      %v2153 = vrot.slane %v2063, 1
      %v2154 = vrot.slane %v2065, 1
      %v2155 = vrot.slane %v2067, 1
      %v2156 = vrot.slane %v2069, 1
      %v2157 = vrot.slane %v2071, 1
      %v2158 = vrot.slane %v2073, 1
      %v2159 = vrot.slane %v2075, 1
      %v2160 = vrot.slane %v2077, 1
      %v2161 = vrot.slane %v2079, 1
      %v2162 = vrot.slane %v2081, 1
      %v2163 = vrot.slane %v2083, 1
      %v2164 = vrot.slane %v2085, 1
      %v2165 = vrot.slane %v2087, 1
      %v2166 = vrot.slane %v2089, 1
      %v2167 = vrot.slane %v2091, 1
      %v2168 = vrot.slane %v2093, 1
      %v2169 = vrot.slane %v2095, 1
      %v2170 = vrot.slane %v2097, 1
      %v2171 = vrot.slane %v2099, 1
      %v2172 = vrot.slane %v2101, 1
      %v2173 = vrot.slane %v2103, 1
      %v2174 = vrot.slane %v2105, 1
      %v2175 = vrot.slane %v2107, 1
      %v2176 = vrot.slane %v2109, 1
      %v2177 = vrot.slane %v2111, 1
      %v2178 = vrot.slane %v2113, 1
      %v2179 = vrot.slane %v2115, 1
      %vm2180 = vcmp.lt.s32.totalorder %v173, 7
      %v2181 = vsel %vm2180, %v2178, %v2179
      %v2182 = vsel %vm2180, %v2177, %v2178
      %v2183 = vsel %vm2180, %v2176, %v2177
      %v2184 = vsel %vm2180, %v2175, %v2176
      %v2185 = vsel %vm2180, %v2174, %v2175
      %v2186 = vsel %vm2180, %v2173, %v2174
      %v2187 = vsel %vm2180, %v2172, %v2173
      %v2188 = vsel %vm2180, %v2171, %v2172
      %v2189 = vsel %vm2180, %v2170, %v2171
      %v2190 = vsel %vm2180, %v2169, %v2170
      %v2191 = vsel %vm2180, %v2168, %v2169
      %v2192 = vsel %vm2180, %v2167, %v2168
      %v2193 = vsel %vm2180, %v2166, %v2167
      %v2194 = vsel %vm2180, %v2165, %v2166
      %v2195 = vsel %vm2180, %v2164, %v2165
      %v2196 = vsel %vm2180, %v2163, %v2164
      %v2197 = vsel %vm2180, %v2162, %v2163
      %v2198 = vsel %vm2180, %v2161, %v2162
      %v2199 = vsel %vm2180, %v2160, %v2161
      %v2200 = vsel %vm2180, %v2159, %v2160
      %v2201 = vsel %vm2180, %v2158, %v2159
      %v2202 = vsel %vm2180, %v2157, %v2158
      %v2203 = vsel %vm2180, %v2156, %v2157
      %v2204 = vsel %vm2180, %v2155, %v2156
      %v2205 = vsel %vm2180, %v2154, %v2155
      %v2206 = vsel %vm2180, %v2153, %v2154
      %v2207 = vsel %vm2180, %v2152, %v2153
      %v2208 = vsel %vm2180, %v2151, %v2152
      %v2209 = vsel %vm2180, %v2150, %v2151
      %v2210 = vsel %vm2180, %v2149, %v2150
      %v2211 = vsel %vm2180, %v2148, %v2149
      %v2212 = vsel %vm2180, %v2179, %v2148
      %vm2213 = vcmp.le.s32.totalorder %v557, 14
      %vm2214 = vcmp.le.s32.totalorder %v558, 14
      %vm2215 = vcmp.le.s32.totalorder %v559, 14
      %vm2216 = vcmp.le.s32.totalorder %v560, 14
      %vm2217 = vcmp.le.s32.totalorder %v561, 14
      %vm2218 = vcmp.le.s32.totalorder %v562, 14
      %vm2219 = vcmp.le.s32.totalorder %v563, 14
      %vm2220 = vcmp.le.s32.totalorder %v564, 14
      %vm2221 = vcmp.le.s32.totalorder %v565, 14
      %vm2222 = vcmp.le.s32.totalorder %v566, 14
      %vm2223 = vcmp.le.s32.totalorder %v567, 14
      %vm2224 = vcmp.le.s32.totalorder %v568, 14
      %vm2225 = vcmp.le.s32.totalorder %v569, 14
      %vm2226 = vcmp.le.s32.totalorder %v570, 14
      %vm2227 = vcmp.le.s32.totalorder %v571, 14
      %vm2228 = vcmp.le.s32.totalorder %v572, 14
      %vm2229 = vcmp.le.s32.totalorder %v573, 14
      %vm2230 = vcmp.le.s32.totalorder %v574, 14
      %vm2231 = vcmp.le.s32.totalorder %v575, 14
      %vm2232 = vcmp.le.s32.totalorder %v576, 14
      %vm2233 = vcmp.le.s32.totalorder %v577, 14
      %vm2234 = vcmp.le.s32.totalorder %v578, 14
      %vm2235 = vcmp.le.s32.totalorder %v579, 14
      %vm2236 = vcmp.le.s32.totalorder %v580, 14
      %vm2237 = vcmp.le.s32.totalorder %v581, 14
      %vm2238 = vcmp.le.s32.totalorder %v582, 14
      %vm2239 = vcmp.le.s32.totalorder %v583, 14
      %vm2240 = vcmp.le.s32.totalorder %v584, 14
      %vm2241 = vcmp.le.s32.totalorder %v585, 14
      %vm2242 = vcmp.le.s32.totalorder %v586, 14
      %vm2243 = vcmp.le.s32.totalorder %v587, 14
      %vm2244 = vcmp.le.s32.totalorder %v588, 14
      %vm2245 = vmand %vm1572, %vm2213
      %vm2246 = vmand %vm1573, %vm2214
      %vm2247 = vmand %vm1574, %vm2215
      %vm2248 = vmand %vm1575, %vm2216
      %vm2249 = vmand %vm1576, %vm2217
      %vm2250 = vmand %vm1577, %vm2218
      %vm2251 = vmand %vm1578, %vm2219
      %vm2252 = vmand %vm1579, %vm2220
      %vm2253 = vmand %vm1580, %vm2221
      %vm2254 = vmand %vm1581, %vm2222
      %vm2255 = vmand %vm1582, %vm2223
      %vm2256 = vmand %vm1583, %vm2224
      %vm2257 = vmand %vm1584, %vm2225
      %vm2258 = vmand %vm1585, %vm2226
      %vm2259 = vmand %vm1586, %vm2227
      %vm2260 = vmand %vm1587, %vm2228
      %vm2261 = vmand %vm1588, %vm2229
      %vm2262 = vmand %vm1589, %vm2230
      %vm2263 = vmand %vm1590, %vm2231
      %vm2264 = vmand %vm1591, %vm2232
      %vm2265 = vmand %vm1592, %vm2233
      %vm2266 = vmand %vm1593, %vm2234
      %vm2267 = vmand %vm1594, %vm2235
      %vm2268 = vmand %vm1595, %vm2236
      %vm2269 = vmand %vm1596, %vm2237
      %vm2270 = vmand %vm1597, %vm2238
      %vm2271 = vmand %vm1598, %vm2239
      %vm2272 = vmand %vm1599, %vm2240
      %vm2273 = vmand %vm1600, %vm2241
      %vm2274 = vmand %vm1601, %vm2242
      %vm2275 = vmand %vm1602, %vm2243
      %vm2276 = vmand %vm1603, %vm2244
      %v2277 = vsel %vm2245, 1, 0
      %v2278 = vsel %vm2246, 1, 0
      %v2279 = vsel %vm2247, 1, 0
      %v2280 = vsel %vm2248, 1, 0
      %v2281 = vsel %vm2249, 1, 0
      %v2282 = vsel %vm2250, 1, 0
      %v2283 = vsel %vm2251, 1, 0
      %v2284 = vsel %vm2252, 1, 0
      %v2285 = vsel %vm2253, 1, 0
      %v2286 = vsel %vm2254, 1, 0
      %v2287 = vsel %vm2255, 1, 0
      %v2288 = vsel %vm2256, 1, 0
      %v2289 = vsel %vm2257, 1, 0
      %v2290 = vsel %vm2258, 1, 0
      %v2291 = vsel %vm2259, 1, 0
      %v2292 = vsel %vm2260, 1, 0
      %v2293 = vsel %vm2261, 1, 0
      %v2294 = vsel %vm2262, 1, 0
      %v2295 = vsel %vm2263, 1, 0
      %v2296 = vsel %vm2264, 1, 0
      %v2297 = vsel %vm2265, 1, 0
      %v2298 = vsel %vm2266, 1, 0
      %v2299 = vsel %vm2267, 1, 0
      %v2300 = vsel %vm2268, 1, 0
      %v2301 = vsel %vm2269, 1, 0
      %v2302 = vsel %vm2270, 1, 0
      %v2303 = vsel %vm2271, 1, 0
      %v2304 = vsel %vm2272, 1, 0
      %v2305 = vsel %vm2273, 1, 0
      %v2306 = vsel %vm2274, 1, 0
      %v2307 = vsel %vm2275, 1, 0
      %v2308 = vsel %vm2276, 1, 0
      %vm2309 = vcmp.eq.s32.totalorder %v2277, 1
      %vm2310 = vcmp.eq.s32.totalorder %v2278, 1
      %vm2311 = vcmp.eq.s32.totalorder %v2279, 1
      %vm2312 = vcmp.eq.s32.totalorder %v2280, 1
      %vm2313 = vcmp.eq.s32.totalorder %v2281, 1
      %vm2314 = vcmp.eq.s32.totalorder %v2282, 1
      %vm2315 = vcmp.eq.s32.totalorder %v2283, 1
      %vm2316 = vcmp.eq.s32.totalorder %v2284, 1
      %vm2317 = vcmp.eq.s32.totalorder %v2285, 1
      %vm2318 = vcmp.eq.s32.totalorder %v2286, 1
      %vm2319 = vcmp.eq.s32.totalorder %v2287, 1
      %vm2320 = vcmp.eq.s32.totalorder %v2288, 1
      %vm2321 = vcmp.eq.s32.totalorder %v2289, 1
      %vm2322 = vcmp.eq.s32.totalorder %v2290, 1
      %vm2323 = vcmp.eq.s32.totalorder %v2291, 1
      %vm2324 = vcmp.eq.s32.totalorder %v2292, 1
      %vm2325 = vcmp.eq.s32.totalorder %v2293, 1
      %vm2326 = vcmp.eq.s32.totalorder %v2294, 1
      %vm2327 = vcmp.eq.s32.totalorder %v2295, 1
      %vm2328 = vcmp.eq.s32.totalorder %v2296, 1
      %vm2329 = vcmp.eq.s32.totalorder %v2297, 1
      %vm2330 = vcmp.eq.s32.totalorder %v2298, 1
      %vm2331 = vcmp.eq.s32.totalorder %v2299, 1
      %vm2332 = vcmp.eq.s32.totalorder %v2300, 1
      %vm2333 = vcmp.eq.s32.totalorder %v2301, 1
      %vm2334 = vcmp.eq.s32.totalorder %v2302, 1
      %vm2335 = vcmp.eq.s32.totalorder %v2303, 1
      %vm2336 = vcmp.eq.s32.totalorder %v2304, 1
      %vm2337 = vcmp.eq.s32.totalorder %v2305, 1
      %vm2338 = vcmp.eq.s32.totalorder %v2306, 1
      %vm2339 = vcmp.eq.s32.totalorder %v2307, 1
      %vm2340 = vcmp.eq.s32.totalorder %v2308, 1
      %v2341 = vsel %vm2309, %v2181, 0.0
      %v2342 = vsel %vm2310, %v2212, 0.0
      %v2343 = vsel %vm2311, %v2211, 0.0
      %v2344 = vsel %vm2312, %v2210, 0.0
      %v2345 = vsel %vm2313, %v2209, 0.0
      %v2346 = vsel %vm2314, %v2208, 0.0
      %v2347 = vsel %vm2315, %v2207, 0.0
      %v2348 = vsel %vm2316, %v2206, 0.0
      %v2349 = vsel %vm2317, %v2205, 0.0
      %v2350 = vsel %vm2318, %v2204, 0.0
      %v2351 = vsel %vm2319, %v2203, 0.0
      %v2352 = vsel %vm2320, %v2202, 0.0
      %v2353 = vsel %vm2321, %v2201, 0.0
      %v2354 = vsel %vm2322, %v2200, 0.0
      %v2355 = vsel %vm2323, %v2199, 0.0
      %v2356 = vsel %vm2324, %v2198, 0.0
      %v2357 = vsel %vm2325, %v2197, 0.0
      %v2358 = vsel %vm2326, %v2196, 0.0
      %v2359 = vsel %vm2327, %v2195, 0.0
      %v2360 = vsel %vm2328, %v2194, 0.0
      %v2361 = vsel %vm2329, %v2193, 0.0
      %v2362 = vsel %vm2330, %v2192, 0.0
      %v2363 = vsel %vm2331, %v2191, 0.0
      %v2364 = vsel %vm2332, %v2190, 0.0
      %v2365 = vsel %vm2333, %v2189, 0.0
      %v2366 = vsel %vm2334, %v2188, 0.0
      %v2367 = vsel %vm2335, %v2187, 0.0
      %v2368 = vsel %vm2336, %v2186, 0.0
      %v2369 = vsel %vm2337, %v2185, 0.0
      %v2370 = vsel %vm2338, %v2184, 0.0
      %v2371 = vsel %vm2339, %v2183, 0.0
      %v2372 = vsel %vm2340, %v2182, 0.0
      %v2373 = vadd.f32 %v2020, %v2341
      %v2374 = vadd.f32 %v2021, %v2342
      %v2375 = vadd.f32 %v2022, %v2343
      %v2376 = vadd.f32 %v2023, %v2344
      %v2377 = vadd.f32 %v2024, %v2345
      %v2378 = vadd.f32 %v2025, %v2346
      %v2379 = vadd.f32 %v2026, %v2347
      %v2380 = vadd.f32 %v2027, %v2348
      %v2381 = vadd.f32 %v2028, %v2349
      %v2382 = vadd.f32 %v2029, %v2350
      %v2383 = vadd.f32 %v2030, %v2351
      %v2384 = vadd.f32 %v2031, %v2352
      %v2385 = vadd.f32 %v2032, %v2353
      %v2386 = vadd.f32 %v2033, %v2354
      %v2387 = vadd.f32 %v2034, %v2355
      %v2388 = vadd.f32 %v2035, %v2356
      %v2389 = vadd.f32 %v2036, %v2357
      %v2390 = vadd.f32 %v2037, %v2358
      %v2391 = vadd.f32 %v2038, %v2359
      %v2392 = vadd.f32 %v2039, %v2360
      %v2393 = vadd.f32 %v2040, %v2361
      %v2394 = vadd.f32 %v2041, %v2362
      %v2395 = vadd.f32 %v2042, %v2363
      %v2396 = vadd.f32 %v2043, %v2364
      %v2397 = vadd.f32 %v2044, %v2365
      %v2398 = vadd.f32 %v2045, %v2366
      %v2399 = vadd.f32 %v2046, %v2367
      %v2400 = vadd.f32 %v2047, %v2368
      %v2401 = vadd.f32 %v2048, %v2369
      %v2402 = vadd.f32 %v2049, %v2370
      %v2403 = vadd.f32 %v2050, %v2371
      %v2404 = vadd.f32 %v2051, %v2372
      %2405 = vrot.lane.b32.xlu0 %v1428, 116
      %v2406 = vpop.permute.xlu0 %2405
      %2407 = vrot.lane.b32.xlu0 %v1430, 116
      %v2408 = vpop.permute.xlu0 %2407
      %2409 = vrot.lane.b32.xlu0 %v1433, 116
      %v2410 = vpop.permute.xlu0 %2409
      %2411 = vrot.lane.b32.xlu0 %v1435, 116
      %v2412 = vpop.permute.xlu0 %2411
      %2413 = vrot.lane.b32.xlu0 %v1438, 116
      %v2414 = vpop.permute.xlu0 %2413
      %2415 = vrot.lane.b32.xlu0 %v1440, 116
      %v2416 = vpop.permute.xlu0 %2415
      %2417 = vrot.lane.b32.xlu0 %v1443, 116
      %v2418 = vpop.permute.xlu0 %2417
      %2419 = vrot.lane.b32.xlu0 %v1445, 116
      %v2420 = vpop.permute.xlu0 %2419
      %2421 = vrot.lane.b32.xlu0 %v1448, 116
      %v2422 = vpop.permute.xlu0 %2421
      %2423 = vrot.lane.b32.xlu0 %v1450, 116
      %v2424 = vpop.permute.xlu0 %2423
      %2425 = vrot.lane.b32.xlu0 %v1453, 116
      %v2426 = vpop.permute.xlu0 %2425
      %2427 = vrot.lane.b32.xlu0 %v1455, 116
      %v2428 = vpop.permute.xlu0 %2427
      %2429 = vrot.lane.b32.xlu0 %v1458, 116
      %v2430 = vpop.permute.xlu0 %2429
      %2431 = vrot.lane.b32.xlu0 %v1460, 116
      %v2432 = vpop.permute.xlu0 %2431
      %2433 = vrot.lane.b32.xlu0 %v1463, 116
      %v2434 = vpop.permute.xlu0 %2433
      %2435 = vrot.lane.b32.xlu0 %v1465, 116
      %v2436 = vpop.permute.xlu0 %2435
      %2437 = vrot.lane.b32.xlu0 %v1468, 116
      %v2438 = vpop.permute.xlu0 %2437
      %2439 = vrot.lane.b32.xlu0 %v1470, 116
      %v2440 = vpop.permute.xlu0 %2439
      %2441 = vrot.lane.b32.xlu0 %v1473, 116
      %v2442 = vpop.permute.xlu0 %2441
      %2443 = vrot.lane.b32.xlu0 %v1475, 116
      %v2444 = vpop.permute.xlu0 %2443
      %2445 = vrot.lane.b32.xlu0 %v1478, 116
      %v2446 = vpop.permute.xlu0 %2445
      %2447 = vrot.lane.b32.xlu0 %v1480, 116
      %v2448 = vpop.permute.xlu0 %2447
      %2449 = vrot.lane.b32.xlu0 %v1483, 116
      %v2450 = vpop.permute.xlu0 %2449
      %2451 = vrot.lane.b32.xlu0 %v1485, 116
      %v2452 = vpop.permute.xlu0 %2451
      %2453 = vrot.lane.b32.xlu0 %v1488, 116
      %v2454 = vpop.permute.xlu0 %2453
      %2455 = vrot.lane.b32.xlu0 %v1490, 116
      %v2456 = vpop.permute.xlu0 %2455
      %2457 = vrot.lane.b32.xlu0 %v1493, 116
      %v2458 = vpop.permute.xlu0 %2457
      %2459 = vrot.lane.b32.xlu0 %v1495, 116
      %v2460 = vpop.permute.xlu0 %2459
      %2461 = vrot.lane.b32.xlu0 %v1498, 116
      %v2462 = vpop.permute.xlu0 %2461
      %2463 = vrot.lane.b32.xlu0 %v1500, 116
      %v2464 = vpop.permute.xlu0 %2463
      %2465 = vrot.lane.b32.xlu0 %v1503, 116
      %v2466 = vpop.permute.xlu0 %2465
      %2467 = vrot.lane.b32.xlu0 %v1505, 116
      %v2468 = vpop.permute.xlu0 %2467
      %v2501 = vrot.slane %v2406, 7
      %v2502 = vrot.slane %v2408, 7
      %v2503 = vrot.slane %v2410, 7
      %v2504 = vrot.slane %v2412, 7
      %v2505 = vrot.slane %v2414, 7
      %v2506 = vrot.slane %v2416, 7
      %v2507 = vrot.slane %v2418, 7
      %v2508 = vrot.slane %v2420, 7
      %v2509 = vrot.slane %v2422, 7
      %v2510 = vrot.slane %v2424, 7
      %v2511 = vrot.slane %v2426, 7
      %v2512 = vrot.slane %v2428, 7
      %v2513 = vrot.slane %v2430, 7
      %v2514 = vrot.slane %v2432, 7
      %v2515 = vrot.slane %v2434, 7
      %v2516 = vrot.slane %v2436, 7
      %v2517 = vrot.slane %v2438, 7
      %v2518 = vrot.slane %v2440, 7
      %v2519 = vrot.slane %v2442, 7
      %v2520 = vrot.slane %v2444, 7
      %v2521 = vrot.slane %v2446, 7
      %v2522 = vrot.slane %v2448, 7
      %v2523 = vrot.slane %v2450, 7
      %v2524 = vrot.slane %v2452, 7
      %v2525 = vrot.slane %v2454, 7
      %v2526 = vrot.slane %v2456, 7
      %v2527 = vrot.slane %v2458, 7
      %v2528 = vrot.slane %v2460, 7
      %v2529 = vrot.slane %v2462, 7
      %v2530 = vrot.slane %v2464, 7
      %v2531 = vrot.slane %v2466, 7
      %v2532 = vrot.slane %v2468, 7
      %v2533 = vsel %vm1539, %v2531, %v2532
      %v2534 = vsel %vm1539, %v2530, %v2531
      %v2535 = vsel %vm1539, %v2529, %v2530
      %v2536 = vsel %vm1539, %v2528, %v2529
      %v2537 = vsel %vm1539, %v2527, %v2528
      %v2538 = vsel %vm1539, %v2526, %v2527
      %v2539 = vsel %vm1539, %v2525, %v2526
      %v2540 = vsel %vm1539, %v2524, %v2525
      %v2541 = vsel %vm1539, %v2523, %v2524
      %v2542 = vsel %vm1539, %v2522, %v2523
      %v2543 = vsel %vm1539, %v2521, %v2522
      %v2544 = vsel %vm1539, %v2520, %v2521
      %v2545 = vsel %vm1539, %v2519, %v2520
      %v2546 = vsel %vm1539, %v2518, %v2519
      %v2547 = vsel %vm1539, %v2517, %v2518
      %v2548 = vsel %vm1539, %v2516, %v2517
      %v2549 = vsel %vm1539, %v2515, %v2516
      %v2550 = vsel %vm1539, %v2514, %v2515
      %v2551 = vsel %vm1539, %v2513, %v2514
      %v2552 = vsel %vm1539, %v2512, %v2513
      %v2553 = vsel %vm1539, %v2511, %v2512
      %v2554 = vsel %vm1539, %v2510, %v2511
      %v2555 = vsel %vm1539, %v2509, %v2510
      %v2556 = vsel %vm1539, %v2508, %v2509
      %v2557 = vsel %vm1539, %v2507, %v2508
      %v2558 = vsel %vm1539, %v2506, %v2507
      %v2559 = vsel %vm1539, %v2505, %v2506
      %v2560 = vsel %vm1539, %v2504, %v2505
      %v2561 = vsel %vm1539, %v2503, %v2504
      %v2562 = vsel %vm1539, %v2502, %v2503
      %v2563 = vsel %vm1539, %v2501, %v2502
      %v2564 = vsel %vm1539, %v2532, %v2501
      %v2565 = vsel %vm1604, 1, 0
      %v2566 = vsel %vm1605, 1, 0
      %v2567 = vsel %vm1606, 1, 0
      %v2568 = vsel %vm1607, 1, 0
      %v2569 = vsel %vm1608, 1, 0
      %v2570 = vsel %vm1609, 1, 0
      %v2571 = vsel %vm1610, 1, 0
      %v2572 = vsel %vm1611, 1, 0
      %v2573 = vsel %vm1612, 1, 0
      %v2574 = vsel %vm1613, 1, 0
      %v2575 = vsel %vm1614, 1, 0
      %v2576 = vsel %vm1615, 1, 0
      %v2577 = vsel %vm1616, 1, 0
      %v2578 = vsel %vm1617, 1, 0
      %v2579 = vsel %vm1618, 1, 0
      %v2580 = vsel %vm1619, 1, 0
      %v2581 = vsel %vm1620, 1, 0
      %v2582 = vsel %vm1621, 1, 0
      %v2583 = vsel %vm1622, 1, 0
      %v2584 = vsel %vm1623, 1, 0
      %v2585 = vsel %vm1624, 1, 0
      %v2586 = vsel %vm1625, 1, 0
      %v2587 = vsel %vm1626, 1, 0
      %v2588 = vsel %vm1627, 1, 0
      %v2589 = vsel %vm1628, 1, 0
      %v2590 = vsel %vm1629, 1, 0
      %v2591 = vsel %vm1630, 1, 0
      %v2592 = vsel %vm1631, 1, 0
      %v2593 = vsel %vm1632, 1, 0
      %v2594 = vsel %vm1633, 1, 0
      %v2595 = vsel %vm1634, 1, 0
      %v2596 = vsel %vm1635, 1, 0
      %vm2597 = vcmp.eq.s32.totalorder %v2565, 1
      %vm2598 = vcmp.eq.s32.totalorder %v2566, 1
      %vm2599 = vcmp.eq.s32.totalorder %v2567, 1
      %vm2600 = vcmp.eq.s32.totalorder %v2568, 1
      %vm2601 = vcmp.eq.s32.totalorder %v2569, 1
      %vm2602 = vcmp.eq.s32.totalorder %v2570, 1
      %vm2603 = vcmp.eq.s32.totalorder %v2571, 1
      %vm2604 = vcmp.eq.s32.totalorder %v2572, 1
      %vm2605 = vcmp.eq.s32.totalorder %v2573, 1
      %vm2606 = vcmp.eq.s32.totalorder %v2574, 1
      %vm2607 = vcmp.eq.s32.totalorder %v2575, 1
      %vm2608 = vcmp.eq.s32.totalorder %v2576, 1
      %vm2609 = vcmp.eq.s32.totalorder %v2577, 1
      %vm2610 = vcmp.eq.s32.totalorder %v2578, 1
      %vm2611 = vcmp.eq.s32.totalorder %v2579, 1
      %vm2612 = vcmp.eq.s32.totalorder %v2580, 1
      %vm2613 = vcmp.eq.s32.totalorder %v2581, 1
      %vm2614 = vcmp.eq.s32.totalorder %v2582, 1
      %vm2615 = vcmp.eq.s32.totalorder %v2583, 1
      %vm2616 = vcmp.eq.s32.totalorder %v2584, 1
      %vm2617 = vcmp.eq.s32.totalorder %v2585, 1
      %vm2618 = vcmp.eq.s32.totalorder %v2586, 1
      %vm2619 = vcmp.eq.s32.totalorder %v2587, 1
      %vm2620 = vcmp.eq.s32.totalorder %v2588, 1
      %vm2621 = vcmp.eq.s32.totalorder %v2589, 1
      %vm2622 = vcmp.eq.s32.totalorder %v2590, 1
      %vm2623 = vcmp.eq.s32.totalorder %v2591, 1
      %vm2624 = vcmp.eq.s32.totalorder %v2592, 1
      %vm2625 = vcmp.eq.s32.totalorder %v2593, 1
      %vm2626 = vcmp.eq.s32.totalorder %v2594, 1
      %vm2627 = vcmp.eq.s32.totalorder %v2595, 1
      %vm2628 = vcmp.eq.s32.totalorder %v2596, 1
      %v2629 = vsel %vm2597, %v2564, 0.0
      %v2630 = vsel %vm2598, %v2563, 0.0
      %v2631 = vsel %vm2599, %v2562, 0.0
      %v2632 = vsel %vm2600, %v2561, 0.0
      %v2633 = vsel %vm2601, %v2560, 0.0
      %v2634 = vsel %vm2602, %v2559, 0.0
      %v2635 = vsel %vm2603, %v2558, 0.0
      %v2636 = vsel %vm2604, %v2557, 0.0
      %v2637 = vsel %vm2605, %v2556, 0.0
      %v2638 = vsel %vm2606, %v2555, 0.0
      %v2639 = vsel %vm2607, %v2554, 0.0
      %v2640 = vsel %vm2608, %v2553, 0.0
      %v2641 = vsel %vm2609, %v2552, 0.0
      %v2642 = vsel %vm2610, %v2551, 0.0
      %v2643 = vsel %vm2611, %v2550, 0.0
      %v2644 = vsel %vm2612, %v2549, 0.0
      %v2645 = vsel %vm2613, %v2548, 0.0
      %v2646 = vsel %vm2614, %v2547, 0.0
      %v2647 = vsel %vm2615, %v2546, 0.0
      %v2648 = vsel %vm2616, %v2545, 0.0
      %v2649 = vsel %vm2617, %v2544, 0.0
      %v2650 = vsel %vm2618, %v2543, 0.0
      %v2651 = vsel %vm2619, %v2542, 0.0
      %v2652 = vsel %vm2620, %v2541, 0.0
      %v2653 = vsel %vm2621, %v2540, 0.0
      %v2654 = vsel %vm2622, %v2539, 0.0
      %v2655 = vsel %vm2623, %v2538, 0.0
      %v2656 = vsel %vm2624, %v2537, 0.0
      %v2657 = vsel %vm2625, %v2536, 0.0
      %v2658 = vsel %vm2626, %v2535, 0.0
      %v2659 = vsel %vm2627, %v2534, 0.0
      %v2660 = vsel %vm2628, %v2533, 0.0
      %v2661 = vadd.f32 %v2373, %v2629
      %v2662 = vadd.f32 %v2374, %v2630
      %v2663 = vadd.f32 %v2375, %v2631
      %v2664 = vadd.f32 %v2376, %v2632
      %v2665 = vadd.f32 %v2377, %v2633
      %v2666 = vadd.f32 %v2378, %v2634
      %v2667 = vadd.f32 %v2379, %v2635
      %v2668 = vadd.f32 %v2380, %v2636
      %v2669 = vadd.f32 %v2381, %v2637
      %v2670 = vadd.f32 %v2382, %v2638
      %v2671 = vadd.f32 %v2383, %v2639
      %v2672 = vadd.f32 %v2384, %v2640
      %v2673 = vadd.f32 %v2385, %v2641
      %v2674 = vadd.f32 %v2386, %v2642
      %v2675 = vadd.f32 %v2387, %v2643
      %v2676 = vadd.f32 %v2388, %v2644
      %v2677 = vadd.f32 %v2389, %v2645
      %v2678 = vadd.f32 %v2390, %v2646
      %v2679 = vadd.f32 %v2391, %v2647
      %v2680 = vadd.f32 %v2392, %v2648
      %v2681 = vadd.f32 %v2393, %v2649
      %v2682 = vadd.f32 %v2394, %v2650
      %v2683 = vadd.f32 %v2395, %v2651
      %v2684 = vadd.f32 %v2396, %v2652
      %v2685 = vadd.f32 %v2397, %v2653
      %v2686 = vadd.f32 %v2398, %v2654
      %v2687 = vadd.f32 %v2399, %v2655
      %v2688 = vadd.f32 %v2400, %v2656
      %v2689 = vadd.f32 %v2401, %v2657
      %v2690 = vadd.f32 %v2402, %v2658
      %v2691 = vadd.f32 %v2403, %v2659
      %v2692 = vadd.f32 %v2404, %v2660
      %2693 = vrot.lane.b32.xlu0 %v1428, 112
      %v2694 = vpop.permute.xlu0 %2693
      %2695 = vrot.lane.b32.xlu0 %v1430, 112
      %v2696 = vpop.permute.xlu0 %2695
      %2697 = vrot.lane.b32.xlu0 %v1433, 112
      %v2698 = vpop.permute.xlu0 %2697
      %2699 = vrot.lane.b32.xlu0 %v1435, 112
      %v2700 = vpop.permute.xlu0 %2699
      %2701 = vrot.lane.b32.xlu0 %v1438, 112
      %v2702 = vpop.permute.xlu0 %2701
      %2703 = vrot.lane.b32.xlu0 %v1440, 112
      %v2704 = vpop.permute.xlu0 %2703
      %2705 = vrot.lane.b32.xlu0 %v1443, 112
      %v2706 = vpop.permute.xlu0 %2705
      %2707 = vrot.lane.b32.xlu0 %v1445, 112
      %v2708 = vpop.permute.xlu0 %2707
      %2709 = vrot.lane.b32.xlu0 %v1448, 112
      %v2710 = vpop.permute.xlu0 %2709
      %2711 = vrot.lane.b32.xlu0 %v1450, 112
      %v2712 = vpop.permute.xlu0 %2711
      %2713 = vrot.lane.b32.xlu0 %v1453, 112
      %v2714 = vpop.permute.xlu0 %2713
      %2715 = vrot.lane.b32.xlu0 %v1455, 112
      %v2716 = vpop.permute.xlu0 %2715
      %2717 = vrot.lane.b32.xlu0 %v1458, 112
      %v2718 = vpop.permute.xlu0 %2717
      %2719 = vrot.lane.b32.xlu0 %v1460, 112
      %v2720 = vpop.permute.xlu0 %2719
      %2721 = vrot.lane.b32.xlu0 %v1463, 112
      %v2722 = vpop.permute.xlu0 %2721
      %2723 = vrot.lane.b32.xlu0 %v1465, 112
      %v2724 = vpop.permute.xlu0 %2723
      %2725 = vrot.lane.b32.xlu0 %v1468, 112
      %v2726 = vpop.permute.xlu0 %2725
      %2727 = vrot.lane.b32.xlu0 %v1470, 112
      %v2728 = vpop.permute.xlu0 %2727
      %2729 = vrot.lane.b32.xlu0 %v1473, 112
      %v2730 = vpop.permute.xlu0 %2729
      %2731 = vrot.lane.b32.xlu0 %v1475, 112
      %v2732 = vpop.permute.xlu0 %2731
      %2733 = vrot.lane.b32.xlu0 %v1478, 112
      %v2734 = vpop.permute.xlu0 %2733
      %2735 = vrot.lane.b32.xlu0 %v1480, 112
      %v2736 = vpop.permute.xlu0 %2735
      %2737 = vrot.lane.b32.xlu0 %v1483, 112
      %v2738 = vpop.permute.xlu0 %2737
      %2739 = vrot.lane.b32.xlu0 %v1485, 112
      %v2740 = vpop.permute.xlu0 %2739
      %2741 = vrot.lane.b32.xlu0 %v1488, 112
      %v2742 = vpop.permute.xlu0 %2741
      %2743 = vrot.lane.b32.xlu0 %v1490, 112
      %v2744 = vpop.permute.xlu0 %2743
      %2745 = vrot.lane.b32.xlu0 %v1493, 112
      %v2746 = vpop.permute.xlu0 %2745
      %2747 = vrot.lane.b32.xlu0 %v1495, 112
      %v2748 = vpop.permute.xlu0 %2747
      %2749 = vrot.lane.b32.xlu0 %v1498, 112
      %v2750 = vpop.permute.xlu0 %2749
      %2751 = vrot.lane.b32.xlu0 %v1500, 112
      %v2752 = vpop.permute.xlu0 %2751
      %2753 = vrot.lane.b32.xlu0 %v1503, 112
      %v2754 = vpop.permute.xlu0 %2753
      %2755 = vrot.lane.b32.xlu0 %v1505, 112
      %v2756 = vpop.permute.xlu0 %2755
      %v2789 = vadd.f32 %v2661, %v2694
      %v2790 = vadd.f32 %v2662, %v2696
      %v2791 = vadd.f32 %v2663, %v2698
      %v2792 = vadd.f32 %v2664, %v2700
      %v2793 = vadd.f32 %v2665, %v2702
      %v2794 = vadd.f32 %v2666, %v2704
      %v2795 = vadd.f32 %v2667, %v2706
      %v2796 = vadd.f32 %v2668, %v2708
      %v2797 = vadd.f32 %v2669, %v2710
      %v2798 = vadd.f32 %v2670, %v2712
      %v2799 = vadd.f32 %v2671, %v2714
      %v2800 = vadd.f32 %v2672, %v2716
      %v2801 = vadd.f32 %v2673, %v2718
      %v2802 = vadd.f32 %v2674, %v2720
      %v2803 = vadd.f32 %v2675, %v2722
      %v2804 = vadd.f32 %v2676, %v2724
      %v2805 = vadd.f32 %v2677, %v2726
      %v2806 = vadd.f32 %v2678, %v2728
      %v2807 = vadd.f32 %v2679, %v2730
      %v2808 = vadd.f32 %v2680, %v2732
      %v2809 = vadd.f32 %v2681, %v2734
      %v2810 = vadd.f32 %v2682, %v2736
      %v2811 = vadd.f32 %v2683, %v2738
      %v2812 = vadd.f32 %v2684, %v2740
      %v2813 = vadd.f32 %v2685, %v2742
      %v2814 = vadd.f32 %v2686, %v2744
      %v2815 = vadd.f32 %v2687, %v2746
      %v2816 = vadd.f32 %v2688, %v2748
      %v2817 = vadd.f32 %v2689, %v2750
      %v2818 = vadd.f32 %v2690, %v2752
      %v2819 = vadd.f32 %v2691, %v2754
      %v2820 = vadd.f32 %v2692, %v2756
      %2821 = vrot.lane.b32.xlu0 %v1428, 108
      %v2822 = vpop.permute.xlu0 %2821
      %2823 = vrot.lane.b32.xlu0 %v1430, 108
      %v2824 = vpop.permute.xlu0 %2823
      %2825 = vrot.lane.b32.xlu0 %v1433, 108
      %v2826 = vpop.permute.xlu0 %2825
      %2827 = vrot.lane.b32.xlu0 %v1435, 108
      %v2828 = vpop.permute.xlu0 %2827
      %2829 = vrot.lane.b32.xlu0 %v1438, 108
      %v2830 = vpop.permute.xlu0 %2829
      %2831 = vrot.lane.b32.xlu0 %v1440, 108
      %v2832 = vpop.permute.xlu0 %2831
      %2833 = vrot.lane.b32.xlu0 %v1443, 108
      %v2834 = vpop.permute.xlu0 %2833
      %2835 = vrot.lane.b32.xlu0 %v1445, 108
      %v2836 = vpop.permute.xlu0 %2835
      %2837 = vrot.lane.b32.xlu0 %v1448, 108
      %v2838 = vpop.permute.xlu0 %2837
      %2839 = vrot.lane.b32.xlu0 %v1450, 108
      %v2840 = vpop.permute.xlu0 %2839
      %2841 = vrot.lane.b32.xlu0 %v1453, 108
      %v2842 = vpop.permute.xlu0 %2841
      %2843 = vrot.lane.b32.xlu0 %v1455, 108
      %v2844 = vpop.permute.xlu0 %2843
      %2845 = vrot.lane.b32.xlu0 %v1458, 108
      %v2846 = vpop.permute.xlu0 %2845
      %2847 = vrot.lane.b32.xlu0 %v1460, 108
      %v2848 = vpop.permute.xlu0 %2847
      %2849 = vrot.lane.b32.xlu0 %v1463, 108
      %v2850 = vpop.permute.xlu0 %2849
      %2851 = vrot.lane.b32.xlu0 %v1465, 108
      %v2852 = vpop.permute.xlu0 %2851
      %2853 = vrot.lane.b32.xlu0 %v1468, 108
      %v2854 = vpop.permute.xlu0 %2853
      %2855 = vrot.lane.b32.xlu0 %v1470, 108
      %v2856 = vpop.permute.xlu0 %2855
      %2857 = vrot.lane.b32.xlu0 %v1473, 108
      %v2858 = vpop.permute.xlu0 %2857
      %2859 = vrot.lane.b32.xlu0 %v1475, 108
      %v2860 = vpop.permute.xlu0 %2859
      %2861 = vrot.lane.b32.xlu0 %v1478, 108
      %v2862 = vpop.permute.xlu0 %2861
      %2863 = vrot.lane.b32.xlu0 %v1480, 108
      %v2864 = vpop.permute.xlu0 %2863
      %2865 = vrot.lane.b32.xlu0 %v1483, 108
      %v2866 = vpop.permute.xlu0 %2865
      %2867 = vrot.lane.b32.xlu0 %v1485, 108
      %v2868 = vpop.permute.xlu0 %2867
      %2869 = vrot.lane.b32.xlu0 %v1488, 108
      %v2870 = vpop.permute.xlu0 %2869
      %2871 = vrot.lane.b32.xlu0 %v1490, 108
      %v2872 = vpop.permute.xlu0 %2871
      %2873 = vrot.lane.b32.xlu0 %v1493, 108
      %v2874 = vpop.permute.xlu0 %2873
      %2875 = vrot.lane.b32.xlu0 %v1495, 108
      %v2876 = vpop.permute.xlu0 %2875
      %2877 = vrot.lane.b32.xlu0 %v1498, 108
      %v2878 = vpop.permute.xlu0 %2877
      %2879 = vrot.lane.b32.xlu0 %v1500, 108
      %v2880 = vpop.permute.xlu0 %2879
      %2881 = vrot.lane.b32.xlu0 %v1503, 108
      %v2882 = vpop.permute.xlu0 %2881
      %2883 = vrot.lane.b32.xlu0 %v1505, 108
      %v2884 = vpop.permute.xlu0 %2883
      %v2917 = vrot.slane %v2822, 1
      %v2918 = vrot.slane %v2824, 1
      %v2919 = vrot.slane %v2826, 1
      %v2920 = vrot.slane %v2828, 1
      %v2921 = vrot.slane %v2830, 1
      %v2922 = vrot.slane %v2832, 1
      %v2923 = vrot.slane %v2834, 1
      %v2924 = vrot.slane %v2836, 1
      %v2925 = vrot.slane %v2838, 1
      %v2926 = vrot.slane %v2840, 1
      %v2927 = vrot.slane %v2842, 1
      %v2928 = vrot.slane %v2844, 1
      %v2929 = vrot.slane %v2846, 1
      %v2930 = vrot.slane %v2848, 1
      %v2931 = vrot.slane %v2850, 1
      %v2932 = vrot.slane %v2852, 1
      %v2933 = vrot.slane %v2854, 1
      %v2934 = vrot.slane %v2856, 1
      %v2935 = vrot.slane %v2858, 1
      %v2936 = vrot.slane %v2860, 1
      %v2937 = vrot.slane %v2862, 1
      %v2938 = vrot.slane %v2864, 1
      %v2939 = vrot.slane %v2866, 1
      %v2940 = vrot.slane %v2868, 1
      %v2941 = vrot.slane %v2870, 1
      %v2942 = vrot.slane %v2872, 1
      %v2943 = vrot.slane %v2874, 1
      %v2944 = vrot.slane %v2876, 1
      %v2945 = vrot.slane %v2878, 1
      %v2946 = vrot.slane %v2880, 1
      %v2947 = vrot.slane %v2882, 1
      %v2948 = vrot.slane %v2884, 1
      %v2949 = vsel %vm2180, %v2947, %v2948
      %v2950 = vsel %vm2180, %v2946, %v2947
      %v2951 = vsel %vm2180, %v2945, %v2946
      %v2952 = vsel %vm2180, %v2944, %v2945
      %v2953 = vsel %vm2180, %v2943, %v2944
      %v2954 = vsel %vm2180, %v2942, %v2943
      %v2955 = vsel %vm2180, %v2941, %v2942
      %v2956 = vsel %vm2180, %v2940, %v2941
      %v2957 = vsel %vm2180, %v2939, %v2940
      %v2958 = vsel %vm2180, %v2938, %v2939
      %v2959 = vsel %vm2180, %v2937, %v2938
      %v2960 = vsel %vm2180, %v2936, %v2937
      %v2961 = vsel %vm2180, %v2935, %v2936
      %v2962 = vsel %vm2180, %v2934, %v2935
      %v2963 = vsel %vm2180, %v2933, %v2934
      %v2964 = vsel %vm2180, %v2932, %v2933
      %v2965 = vsel %vm2180, %v2931, %v2932
      %v2966 = vsel %vm2180, %v2930, %v2931
      %v2967 = vsel %vm2180, %v2929, %v2930
      %v2968 = vsel %vm2180, %v2928, %v2929
      %v2969 = vsel %vm2180, %v2927, %v2928
      %v2970 = vsel %vm2180, %v2926, %v2927
      %v2971 = vsel %vm2180, %v2925, %v2926
      %v2972 = vsel %vm2180, %v2924, %v2925
      %v2973 = vsel %vm2180, %v2923, %v2924
      %v2974 = vsel %vm2180, %v2922, %v2923
      %v2975 = vsel %vm2180, %v2921, %v2922
      %v2976 = vsel %vm2180, %v2920, %v2921
      %v2977 = vsel %vm2180, %v2919, %v2920
      %v2978 = vsel %vm2180, %v2918, %v2919
      %v2979 = vsel %vm2180, %v2917, %v2918
      %v2980 = vsel %vm2180, %v2948, %v2917
      %v2981 = vsel %vm2213, 1, 0
      %v2982 = vsel %vm2214, 1, 0
      %v2983 = vsel %vm2215, 1, 0
      %v2984 = vsel %vm2216, 1, 0
      %v2985 = vsel %vm2217, 1, 0
      %v2986 = vsel %vm2218, 1, 0
      %v2987 = vsel %vm2219, 1, 0
      %v2988 = vsel %vm2220, 1, 0
      %v2989 = vsel %vm2221, 1, 0
      %v2990 = vsel %vm2222, 1, 0
      %v2991 = vsel %vm2223, 1, 0
      %v2992 = vsel %vm2224, 1, 0
      %v2993 = vsel %vm2225, 1, 0
      %v2994 = vsel %vm2226, 1, 0
      %v2995 = vsel %vm2227, 1, 0
      %v2996 = vsel %vm2228, 1, 0
      %v2997 = vsel %vm2229, 1, 0
      %v2998 = vsel %vm2230, 1, 0
      %v2999 = vsel %vm2231, 1, 0
      %v3000 = vsel %vm2232, 1, 0
      %v3001 = vsel %vm2233, 1, 0
      %v3002 = vsel %vm2234, 1, 0
      %v3003 = vsel %vm2235, 1, 0
      %v3004 = vsel %vm2236, 1, 0
      %v3005 = vsel %vm2237, 1, 0
      %v3006 = vsel %vm2238, 1, 0
      %v3007 = vsel %vm2239, 1, 0
      %v3008 = vsel %vm2240, 1, 0
      %v3009 = vsel %vm2241, 1, 0
      %v3010 = vsel %vm2242, 1, 0
      %v3011 = vsel %vm2243, 1, 0
      %v3012 = vsel %vm2244, 1, 0
      %vm3013 = vcmp.eq.s32.totalorder %v2981, 1
      %vm3014 = vcmp.eq.s32.totalorder %v2982, 1
      %vm3015 = vcmp.eq.s32.totalorder %v2983, 1
      %vm3016 = vcmp.eq.s32.totalorder %v2984, 1
      %vm3017 = vcmp.eq.s32.totalorder %v2985, 1
      %vm3018 = vcmp.eq.s32.totalorder %v2986, 1
      %vm3019 = vcmp.eq.s32.totalorder %v2987, 1
      %vm3020 = vcmp.eq.s32.totalorder %v2988, 1
      %vm3021 = vcmp.eq.s32.totalorder %v2989, 1
      %vm3022 = vcmp.eq.s32.totalorder %v2990, 1
      %vm3023 = vcmp.eq.s32.totalorder %v2991, 1
      %vm3024 = vcmp.eq.s32.totalorder %v2992, 1
      %vm3025 = vcmp.eq.s32.totalorder %v2993, 1
      %vm3026 = vcmp.eq.s32.totalorder %v2994, 1
      %vm3027 = vcmp.eq.s32.totalorder %v2995, 1
      %vm3028 = vcmp.eq.s32.totalorder %v2996, 1
      %vm3029 = vcmp.eq.s32.totalorder %v2997, 1
      %vm3030 = vcmp.eq.s32.totalorder %v2998, 1
      %vm3031 = vcmp.eq.s32.totalorder %v2999, 1
      %vm3032 = vcmp.eq.s32.totalorder %v3000, 1
      %vm3033 = vcmp.eq.s32.totalorder %v3001, 1
      %vm3034 = vcmp.eq.s32.totalorder %v3002, 1
      %vm3035 = vcmp.eq.s32.totalorder %v3003, 1
      %vm3036 = vcmp.eq.s32.totalorder %v3004, 1
      %vm3037 = vcmp.eq.s32.totalorder %v3005, 1
      %vm3038 = vcmp.eq.s32.totalorder %v3006, 1
      %vm3039 = vcmp.eq.s32.totalorder %v3007, 1
      %vm3040 = vcmp.eq.s32.totalorder %v3008, 1
      %vm3041 = vcmp.eq.s32.totalorder %v3009, 1
      %vm3042 = vcmp.eq.s32.totalorder %v3010, 1
      %vm3043 = vcmp.eq.s32.totalorder %v3011, 1
      %vm3044 = vcmp.eq.s32.totalorder %v3012, 1
      %v3045 = vsel %vm3013, %v2979, 0.0
      %v3046 = vsel %vm3014, %v2978, 0.0
      %v3047 = vsel %vm3015, %v2977, 0.0
      %v3048 = vsel %vm3016, %v2976, 0.0
      %v3049 = vsel %vm3017, %v2975, 0.0
      %v3050 = vsel %vm3018, %v2974, 0.0
      %v3051 = vsel %vm3019, %v2973, 0.0
      %v3052 = vsel %vm3020, %v2972, 0.0
      %v3053 = vsel %vm3021, %v2971, 0.0
      %v3054 = vsel %vm3022, %v2970, 0.0
      %v3055 = vsel %vm3023, %v2969, 0.0
      %v3056 = vsel %vm3024, %v2968, 0.0
      %v3057 = vsel %vm3025, %v2967, 0.0
      %v3058 = vsel %vm3026, %v2966, 0.0
      %v3059 = vsel %vm3027, %v2965, 0.0
      %v3060 = vsel %vm3028, %v2964, 0.0
      %v3061 = vsel %vm3029, %v2963, 0.0
      %v3062 = vsel %vm3030, %v2962, 0.0
      %v3063 = vsel %vm3031, %v2961, 0.0
      %v3064 = vsel %vm3032, %v2960, 0.0
      %v3065 = vsel %vm3033, %v2959, 0.0
      %v3066 = vsel %vm3034, %v2958, 0.0
      %v3067 = vsel %vm3035, %v2957, 0.0
      %v3068 = vsel %vm3036, %v2956, 0.0
      %v3069 = vsel %vm3037, %v2955, 0.0
      %v3070 = vsel %vm3038, %v2954, 0.0
      %v3071 = vsel %vm3039, %v2953, 0.0
      %v3072 = vsel %vm3040, %v2952, 0.0
      %v3073 = vsel %vm3041, %v2951, 0.0
      %v3074 = vsel %vm3042, %v2950, 0.0
      %v3075 = vsel %vm3043, %v2949, 0.0
      %v3076 = vsel %vm3044, %v2980, 0.0
      %v3077 = vadd.f32 %v2789, %v3045
      %v3078 = vadd.f32 %v2790, %v3046
      %v3079 = vadd.f32 %v2791, %v3047
      %v3080 = vadd.f32 %v2792, %v3048
      %v3081 = vadd.f32 %v2793, %v3049
      %v3082 = vadd.f32 %v2794, %v3050
      %v3083 = vadd.f32 %v2795, %v3051
      %v3084 = vadd.f32 %v2796, %v3052
      %v3085 = vadd.f32 %v2797, %v3053
      %v3086 = vadd.f32 %v2798, %v3054
      %v3087 = vadd.f32 %v2799, %v3055
      %v3088 = vadd.f32 %v2800, %v3056
      %v3089 = vadd.f32 %v2801, %v3057
      %v3090 = vadd.f32 %v2802, %v3058
      %v3091 = vadd.f32 %v2803, %v3059
      %v3092 = vadd.f32 %v2804, %v3060
      %v3093 = vadd.f32 %v2805, %v3061
      %v3094 = vadd.f32 %v2806, %v3062
      %v3095 = vadd.f32 %v2807, %v3063
      %v3096 = vadd.f32 %v2808, %v3064
      %v3097 = vadd.f32 %v2809, %v3065
      %v3098 = vadd.f32 %v2810, %v3066
      %v3099 = vadd.f32 %v2811, %v3067
      %v3100 = vadd.f32 %v2812, %v3068
      %v3101 = vadd.f32 %v2813, %v3069
      %v3102 = vadd.f32 %v2814, %v3070
      %v3103 = vadd.f32 %v2815, %v3071
      %v3104 = vadd.f32 %v2816, %v3072
      %v3105 = vadd.f32 %v2817, %v3073
      %v3106 = vadd.f32 %v2818, %v3074
      %v3107 = vadd.f32 %v2819, %v3075
      %v3108 = vadd.f32 %v2820, %v3076
      %3109 = vrot.lane.b32.xlu0 %v1428, 104
      %v3110 = vpop.permute.xlu0 %3109
      %3111 = vrot.lane.b32.xlu0 %v1430, 104
      %v3112 = vpop.permute.xlu0 %3111
      %3113 = vrot.lane.b32.xlu0 %v1433, 104
      %v3114 = vpop.permute.xlu0 %3113
      %3115 = vrot.lane.b32.xlu0 %v1435, 104
      %v3116 = vpop.permute.xlu0 %3115
      %3117 = vrot.lane.b32.xlu0 %v1438, 104
      %v3118 = vpop.permute.xlu0 %3117
      %3119 = vrot.lane.b32.xlu0 %v1440, 104
      %v3120 = vpop.permute.xlu0 %3119
      %3121 = vrot.lane.b32.xlu0 %v1443, 104
      %v3122 = vpop.permute.xlu0 %3121
      %3123 = vrot.lane.b32.xlu0 %v1445, 104
      %v3124 = vpop.permute.xlu0 %3123
      %3125 = vrot.lane.b32.xlu0 %v1448, 104
      %v3126 = vpop.permute.xlu0 %3125
      %3127 = vrot.lane.b32.xlu0 %v1450, 104
      %v3128 = vpop.permute.xlu0 %3127
      %3129 = vrot.lane.b32.xlu0 %v1453, 104
      %v3130 = vpop.permute.xlu0 %3129
      %3131 = vrot.lane.b32.xlu0 %v1455, 104
      %v3132 = vpop.permute.xlu0 %3131
      %3133 = vrot.lane.b32.xlu0 %v1458, 104
      %v3134 = vpop.permute.xlu0 %3133
      %3135 = vrot.lane.b32.xlu0 %v1460, 104
      %v3136 = vpop.permute.xlu0 %3135
      %3137 = vrot.lane.b32.xlu0 %v1463, 104
      %v3138 = vpop.permute.xlu0 %3137
      %3139 = vrot.lane.b32.xlu0 %v1465, 104
      %v3140 = vpop.permute.xlu0 %3139
      %3141 = vrot.lane.b32.xlu0 %v1468, 104
      %v3142 = vpop.permute.xlu0 %3141
      %3143 = vrot.lane.b32.xlu0 %v1470, 104
      %v3144 = vpop.permute.xlu0 %3143
      %3145 = vrot.lane.b32.xlu0 %v1473, 104
      %v3146 = vpop.permute.xlu0 %3145
      %3147 = vrot.lane.b32.xlu0 %v1475, 104
      %v3148 = vpop.permute.xlu0 %3147
      %3149 = vrot.lane.b32.xlu0 %v1478, 104
      %v3150 = vpop.permute.xlu0 %3149
      %3151 = vrot.lane.b32.xlu0 %v1480, 104
      %v3152 = vpop.permute.xlu0 %3151
      %3153 = vrot.lane.b32.xlu0 %v1483, 104
      %v3154 = vpop.permute.xlu0 %3153
      %3155 = vrot.lane.b32.xlu0 %v1485, 104
      %v3156 = vpop.permute.xlu0 %3155
      %3157 = vrot.lane.b32.xlu0 %v1488, 104
      %v3158 = vpop.permute.xlu0 %3157
      %3159 = vrot.lane.b32.xlu0 %v1490, 104
      %v3160 = vpop.permute.xlu0 %3159
      %3161 = vrot.lane.b32.xlu0 %v1493, 104
      %v3162 = vpop.permute.xlu0 %3161
      %3163 = vrot.lane.b32.xlu0 %v1495, 104
      %v3164 = vpop.permute.xlu0 %3163
      %3165 = vrot.lane.b32.xlu0 %v1498, 104
      %v3166 = vpop.permute.xlu0 %3165
      %3167 = vrot.lane.b32.xlu0 %v1500, 104
      %v3168 = vpop.permute.xlu0 %3167
      %3169 = vrot.lane.b32.xlu0 %v1503, 104
      %v3170 = vpop.permute.xlu0 %3169
      %3171 = vrot.lane.b32.xlu0 %v1505, 104
      %v3172 = vpop.permute.xlu0 %3171
      %v3205 = vrot.slane %v3110, 7
      %v3206 = vrot.slane %v3112, 7
      %v3207 = vrot.slane %v3114, 7
      %v3208 = vrot.slane %v3116, 7
      %v3209 = vrot.slane %v3118, 7
      %v3210 = vrot.slane %v3120, 7
      %v3211 = vrot.slane %v3122, 7
      %v3212 = vrot.slane %v3124, 7
      %v3213 = vrot.slane %v3126, 7
      %v3214 = vrot.slane %v3128, 7
      %v3215 = vrot.slane %v3130, 7
      %v3216 = vrot.slane %v3132, 7
      %v3217 = vrot.slane %v3134, 7
      %v3218 = vrot.slane %v3136, 7
      %v3219 = vrot.slane %v3138, 7
      %v3220 = vrot.slane %v3140, 7
      %v3221 = vrot.slane %v3142, 7
      %v3222 = vrot.slane %v3144, 7
      %v3223 = vrot.slane %v3146, 7
      %v3224 = vrot.slane %v3148, 7
      %v3225 = vrot.slane %v3150, 7
      %v3226 = vrot.slane %v3152, 7
      %v3227 = vrot.slane %v3154, 7
      %v3228 = vrot.slane %v3156, 7
      %v3229 = vrot.slane %v3158, 7
      %v3230 = vrot.slane %v3160, 7
      %v3231 = vrot.slane %v3162, 7
      %v3232 = vrot.slane %v3164, 7
      %v3233 = vrot.slane %v3166, 7
      %v3234 = vrot.slane %v3168, 7
      %v3235 = vrot.slane %v3170, 7
      %v3236 = vrot.slane %v3172, 7
      %v3237 = vsel %vm1539, %v3235, %v3236
      %v3238 = vsel %vm1539, %v3234, %v3235
      %v3239 = vsel %vm1539, %v3233, %v3234
      %v3240 = vsel %vm1539, %v3232, %v3233
      %v3241 = vsel %vm1539, %v3231, %v3232
      %v3242 = vsel %vm1539, %v3230, %v3231
      %v3243 = vsel %vm1539, %v3229, %v3230
      %v3244 = vsel %vm1539, %v3228, %v3229
      %v3245 = vsel %vm1539, %v3227, %v3228
      %v3246 = vsel %vm1539, %v3226, %v3227
      %v3247 = vsel %vm1539, %v3225, %v3226
      %v3248 = vsel %vm1539, %v3224, %v3225
      %v3249 = vsel %vm1539, %v3223, %v3224
      %v3250 = vsel %vm1539, %v3222, %v3223
      %v3251 = vsel %vm1539, %v3221, %v3222
      %v3252 = vsel %vm1539, %v3220, %v3221
      %v3253 = vsel %vm1539, %v3219, %v3220
      %v3254 = vsel %vm1539, %v3218, %v3219
      %v3255 = vsel %vm1539, %v3217, %v3218
      %v3256 = vsel %vm1539, %v3216, %v3217
      %v3257 = vsel %vm1539, %v3215, %v3216
      %v3258 = vsel %vm1539, %v3214, %v3215
      %v3259 = vsel %vm1539, %v3213, %v3214
      %v3260 = vsel %vm1539, %v3212, %v3213
      %v3261 = vsel %vm1539, %v3211, %v3212
      %v3262 = vsel %vm1539, %v3210, %v3211
      %v3263 = vsel %vm1539, %v3209, %v3210
      %v3264 = vsel %vm1539, %v3208, %v3209
      %v3265 = vsel %vm1539, %v3207, %v3208
      %v3266 = vsel %vm1539, %v3206, %v3207
      %v3267 = vsel %vm1539, %v3205, %v3206
      %v3268 = vsel %vm1539, %v3236, %v3205
      %vm3269 = vcmp.lt.s32.totalorder %v173, 240
      %vm3270 = vcmp.lt.s32.totalorder %v174, 240
      %vm3271 = vcmp.lt.s32.totalorder %v175, 240
      %vm3272 = vcmp.lt.s32.totalorder %v176, 240
      %vm3273 = vcmp.lt.s32.totalorder %v177, 240
      %vm3274 = vcmp.lt.s32.totalorder %v178, 240
      %vm3275 = vcmp.lt.s32.totalorder %v179, 240
      %vm3276 = vcmp.lt.s32.totalorder %v180, 240
      %vm3277 = vcmp.lt.s32.totalorder %v181, 240
      %vm3278 = vcmp.lt.s32.totalorder %v182, 240
      %vm3279 = vcmp.lt.s32.totalorder %v183, 240
      %vm3280 = vcmp.lt.s32.totalorder %v184, 240
      %vm3281 = vcmp.lt.s32.totalorder %v185, 240
      %vm3282 = vcmp.lt.s32.totalorder %v186, 240
      %vm3283 = vcmp.lt.s32.totalorder %v187, 240
      %vm3284 = vcmp.lt.s32.totalorder %v188, 240
      %vm3285 = vcmp.lt.s32.totalorder %v189, 240
      %vm3286 = vcmp.lt.s32.totalorder %v190, 240
      %vm3287 = vcmp.lt.s32.totalorder %v191, 240
      %vm3288 = vcmp.lt.s32.totalorder %v192, 240
      %vm3289 = vcmp.lt.s32.totalorder %v193, 240
      %vm3290 = vcmp.lt.s32.totalorder %v194, 240
      %vm3291 = vcmp.lt.s32.totalorder %v195, 240
      %vm3292 = vcmp.lt.s32.totalorder %v196, 240
      %vm3293 = vcmp.lt.s32.totalorder %v197, 240
      %vm3294 = vcmp.lt.s32.totalorder %v198, 240
      %vm3295 = vcmp.lt.s32.totalorder %v199, 240
      %vm3296 = vcmp.lt.s32.totalorder %v200, 240
      %vm3297 = vcmp.lt.s32.totalorder %v201, 240
      %vm3298 = vcmp.lt.s32.totalorder %v202, 240
      %vm3299 = vcmp.lt.s32.totalorder %v203, 240
      %vm3300 = vcmp.lt.s32.totalorder %v204, 240
      %vm3301 = vmand %vm3269, %vm1604
      %vm3302 = vmand %vm3270, %vm1605
      %vm3303 = vmand %vm3271, %vm1606
      %vm3304 = vmand %vm3272, %vm1607
      %vm3305 = vmand %vm3273, %vm1608
      %vm3306 = vmand %vm3274, %vm1609
      %vm3307 = vmand %vm3275, %vm1610
      %vm3308 = vmand %vm3276, %vm1611
      %vm3309 = vmand %vm3277, %vm1612
      %vm3310 = vmand %vm3278, %vm1613
      %vm3311 = vmand %vm3279, %vm1614
      %vm3312 = vmand %vm3280, %vm1615
      %vm3313 = vmand %vm3281, %vm1616
      %vm3314 = vmand %vm3282, %vm1617
      %vm3315 = vmand %vm3283, %vm1618
      %vm3316 = vmand %vm3284, %vm1619
      %vm3317 = vmand %vm3285, %vm1620
      %vm3318 = vmand %vm3286, %vm1621
      %vm3319 = vmand %vm3287, %vm1622
      %vm3320 = vmand %vm3288, %vm1623
      %vm3321 = vmand %vm3289, %vm1624
      %vm3322 = vmand %vm3290, %vm1625
      %vm3323 = vmand %vm3291, %vm1626
      %vm3324 = vmand %vm3292, %vm1627
      %vm3325 = vmand %vm3293, %vm1628
      %vm3326 = vmand %vm3294, %vm1629
      %vm3327 = vmand %vm3295, %vm1630
      %vm3328 = vmand %vm3296, %vm1631
      %vm3329 = vmand %vm3297, %vm1632
      %vm3330 = vmand %vm3298, %vm1633
      %vm3331 = vmand %vm3299, %vm1634
      %vm3332 = vmand %vm3300, %vm1635
      %v3333 = vsel %vm3301, 1, 0
      %v3334 = vsel %vm3302, 1, 0
      %v3335 = vsel %vm3303, 1, 0
      %v3336 = vsel %vm3304, 1, 0
      %v3337 = vsel %vm3305, 1, 0
      %v3338 = vsel %vm3306, 1, 0
      %v3339 = vsel %vm3307, 1, 0
      %v3340 = vsel %vm3308, 1, 0
      %v3341 = vsel %vm3309, 1, 0
      %v3342 = vsel %vm3310, 1, 0
      %v3343 = vsel %vm3311, 1, 0
      %v3344 = vsel %vm3312, 1, 0
      %v3345 = vsel %vm3313, 1, 0
      %v3346 = vsel %vm3314, 1, 0
      %v3347 = vsel %vm3315, 1, 0
      %v3348 = vsel %vm3316, 1, 0
      %v3349 = vsel %vm3317, 1, 0
      %v3350 = vsel %vm3318, 1, 0
      %v3351 = vsel %vm3319, 1, 0
      %v3352 = vsel %vm3320, 1, 0
      %v3353 = vsel %vm3321, 1, 0
      %v3354 = vsel %vm3322, 1, 0
      %v3355 = vsel %vm3323, 1, 0
      %v3356 = vsel %vm3324, 1, 0
      %v3357 = vsel %vm3325, 1, 0
      %v3358 = vsel %vm3326, 1, 0
      %v3359 = vsel %vm3327, 1, 0
      %v3360 = vsel %vm3328, 1, 0
      %v3361 = vsel %vm3329, 1, 0
      %v3362 = vsel %vm3330, 1, 0
      %v3363 = vsel %vm3331, 1, 0
      %v3364 = vsel %vm3332, 1, 0
      %vm3365 = vcmp.eq.s32.totalorder %v3333, 1
      %vm3366 = vcmp.eq.s32.totalorder %v3334, 1
      %vm3367 = vcmp.eq.s32.totalorder %v3335, 1
      %vm3368 = vcmp.eq.s32.totalorder %v3336, 1
      %vm3369 = vcmp.eq.s32.totalorder %v3337, 1
      %vm3370 = vcmp.eq.s32.totalorder %v3338, 1
      %vm3371 = vcmp.eq.s32.totalorder %v3339, 1
      %vm3372 = vcmp.eq.s32.totalorder %v3340, 1
      %vm3373 = vcmp.eq.s32.totalorder %v3341, 1
      %vm3374 = vcmp.eq.s32.totalorder %v3342, 1
      %vm3375 = vcmp.eq.s32.totalorder %v3343, 1
      %vm3376 = vcmp.eq.s32.totalorder %v3344, 1
      %vm3377 = vcmp.eq.s32.totalorder %v3345, 1
      %vm3378 = vcmp.eq.s32.totalorder %v3346, 1
      %vm3379 = vcmp.eq.s32.totalorder %v3347, 1
      %vm3380 = vcmp.eq.s32.totalorder %v3348, 1
      %vm3381 = vcmp.eq.s32.totalorder %v3349, 1
      %vm3382 = vcmp.eq.s32.totalorder %v3350, 1
      %vm3383 = vcmp.eq.s32.totalorder %v3351, 1
      %vm3384 = vcmp.eq.s32.totalorder %v3352, 1
      %vm3385 = vcmp.eq.s32.totalorder %v3353, 1
      %vm3386 = vcmp.eq.s32.totalorder %v3354, 1
      %vm3387 = vcmp.eq.s32.totalorder %v3355, 1
      %vm3388 = vcmp.eq.s32.totalorder %v3356, 1
      %vm3389 = vcmp.eq.s32.totalorder %v3357, 1
      %vm3390 = vcmp.eq.s32.totalorder %v3358, 1
      %vm3391 = vcmp.eq.s32.totalorder %v3359, 1
      %vm3392 = vcmp.eq.s32.totalorder %v3360, 1
      %vm3393 = vcmp.eq.s32.totalorder %v3361, 1
      %vm3394 = vcmp.eq.s32.totalorder %v3362, 1
      %vm3395 = vcmp.eq.s32.totalorder %v3363, 1
      %vm3396 = vcmp.eq.s32.totalorder %v3364, 1
      %v3397 = vsel %vm3365, %v3266, 0.0
      %v3398 = vsel %vm3366, %v3265, 0.0
      %v3399 = vsel %vm3367, %v3264, 0.0
      %v3400 = vsel %vm3368, %v3263, 0.0
      %v3401 = vsel %vm3369, %v3262, 0.0
      %v3402 = vsel %vm3370, %v3261, 0.0
      %v3403 = vsel %vm3371, %v3260, 0.0
      %v3404 = vsel %vm3372, %v3259, 0.0
      %v3405 = vsel %vm3373, %v3258, 0.0
      %v3406 = vsel %vm3374, %v3257, 0.0
      %v3407 = vsel %vm3375, %v3256, 0.0
      %v3408 = vsel %vm3376, %v3255, 0.0
      %v3409 = vsel %vm3377, %v3254, 0.0
      %v3410 = vsel %vm3378, %v3253, 0.0
      %v3411 = vsel %vm3379, %v3252, 0.0
      %v3412 = vsel %vm3380, %v3251, 0.0
      %v3413 = vsel %vm3381, %v3250, 0.0
      %v3414 = vsel %vm3382, %v3249, 0.0
      %v3415 = vsel %vm3383, %v3248, 0.0
      %v3416 = vsel %vm3384, %v3247, 0.0
      %v3417 = vsel %vm3385, %v3246, 0.0
      %v3418 = vsel %vm3386, %v3245, 0.0
      %v3419 = vsel %vm3387, %v3244, 0.0
      %v3420 = vsel %vm3388, %v3243, 0.0
      %v3421 = vsel %vm3389, %v3242, 0.0
      %v3422 = vsel %vm3390, %v3241, 0.0
      %v3423 = vsel %vm3391, %v3240, 0.0
      %v3424 = vsel %vm3392, %v3239, 0.0
      %v3425 = vsel %vm3393, %v3238, 0.0
      %v3426 = vsel %vm3394, %v3237, 0.0
      %v3427 = vsel %vm3395, %v3268, 0.0
      %v3428 = vsel %vm3396, %v3267, 0.0
      %v3429 = vadd.f32 %v3077, %v3397
      %v3430 = vadd.f32 %v3078, %v3398
      %v3431 = vadd.f32 %v3079, %v3399
      %v3432 = vadd.f32 %v3080, %v3400
      %v3433 = vadd.f32 %v3081, %v3401
      %v3434 = vadd.f32 %v3082, %v3402
      %v3435 = vadd.f32 %v3083, %v3403
      %v3436 = vadd.f32 %v3084, %v3404
      %v3437 = vadd.f32 %v3085, %v3405
      %v3438 = vadd.f32 %v3086, %v3406
      %v3439 = vadd.f32 %v3087, %v3407
      %v3440 = vadd.f32 %v3088, %v3408
      %v3441 = vadd.f32 %v3089, %v3409
      %v3442 = vadd.f32 %v3090, %v3410
      %v3443 = vadd.f32 %v3091, %v3411
      %v3444 = vadd.f32 %v3092, %v3412
      %v3445 = vadd.f32 %v3093, %v3413
      %v3446 = vadd.f32 %v3094, %v3414
      %v3447 = vadd.f32 %v3095, %v3415
      %v3448 = vadd.f32 %v3096, %v3416
      %v3449 = vadd.f32 %v3097, %v3417
      %v3450 = vadd.f32 %v3098, %v3418
      %v3451 = vadd.f32 %v3099, %v3419
      %v3452 = vadd.f32 %v3100, %v3420
      %v3453 = vadd.f32 %v3101, %v3421
      %v3454 = vadd.f32 %v3102, %v3422
      %v3455 = vadd.f32 %v3103, %v3423
      %v3456 = vadd.f32 %v3104, %v3424
      %v3457 = vadd.f32 %v3105, %v3425
      %v3458 = vadd.f32 %v3106, %v3426
      %v3459 = vadd.f32 %v3107, %v3427
      %v3460 = vadd.f32 %v3108, %v3428
      %3461 = vrot.lane.b32.xlu0 %v1428, 100
      %v3462 = vpop.permute.xlu0 %3461
      %3463 = vrot.lane.b32.xlu0 %v1430, 100
      %v3464 = vpop.permute.xlu0 %3463
      %3465 = vrot.lane.b32.xlu0 %v1433, 100
      %v3466 = vpop.permute.xlu0 %3465
      %3467 = vrot.lane.b32.xlu0 %v1435, 100
      %v3468 = vpop.permute.xlu0 %3467
      %3469 = vrot.lane.b32.xlu0 %v1438, 100
      %v3470 = vpop.permute.xlu0 %3469
      %3471 = vrot.lane.b32.xlu0 %v1440, 100
      %v3472 = vpop.permute.xlu0 %3471
      %3473 = vrot.lane.b32.xlu0 %v1443, 100
      %v3474 = vpop.permute.xlu0 %3473
      %3475 = vrot.lane.b32.xlu0 %v1445, 100
      %v3476 = vpop.permute.xlu0 %3475
      %3477 = vrot.lane.b32.xlu0 %v1448, 100
      %v3478 = vpop.permute.xlu0 %3477
      %3479 = vrot.lane.b32.xlu0 %v1450, 100
      %v3480 = vpop.permute.xlu0 %3479
      %3481 = vrot.lane.b32.xlu0 %v1453, 100
      %v3482 = vpop.permute.xlu0 %3481
      %3483 = vrot.lane.b32.xlu0 %v1455, 100
      %v3484 = vpop.permute.xlu0 %3483
      %3485 = vrot.lane.b32.xlu0 %v1458, 100
      %v3486 = vpop.permute.xlu0 %3485
      %3487 = vrot.lane.b32.xlu0 %v1460, 100
      %v3488 = vpop.permute.xlu0 %3487
      %3489 = vrot.lane.b32.xlu0 %v1463, 100
      %v3490 = vpop.permute.xlu0 %3489
      %3491 = vrot.lane.b32.xlu0 %v1465, 100
      %v3492 = vpop.permute.xlu0 %3491
      %3493 = vrot.lane.b32.xlu0 %v1468, 100
      %v3494 = vpop.permute.xlu0 %3493
      %3495 = vrot.lane.b32.xlu0 %v1470, 100
      %v3496 = vpop.permute.xlu0 %3495
      %3497 = vrot.lane.b32.xlu0 %v1473, 100
      %v3498 = vpop.permute.xlu0 %3497
      %3499 = vrot.lane.b32.xlu0 %v1475, 100
      %v3500 = vpop.permute.xlu0 %3499
      %3501 = vrot.lane.b32.xlu0 %v1478, 100
      %v3502 = vpop.permute.xlu0 %3501
      %3503 = vrot.lane.b32.xlu0 %v1480, 100
      %v3504 = vpop.permute.xlu0 %3503
      %3505 = vrot.lane.b32.xlu0 %v1483, 100
      %v3506 = vpop.permute.xlu0 %3505
      %3507 = vrot.lane.b32.xlu0 %v1485, 100
      %v3508 = vpop.permute.xlu0 %3507
      %3509 = vrot.lane.b32.xlu0 %v1488, 100
      %v3510 = vpop.permute.xlu0 %3509
      %3511 = vrot.lane.b32.xlu0 %v1490, 100
      %v3512 = vpop.permute.xlu0 %3511
      %3513 = vrot.lane.b32.xlu0 %v1493, 100
      %v3514 = vpop.permute.xlu0 %3513
      %3515 = vrot.lane.b32.xlu0 %v1495, 100
      %v3516 = vpop.permute.xlu0 %3515
      %3517 = vrot.lane.b32.xlu0 %v1498, 100
      %v3518 = vpop.permute.xlu0 %3517
      %3519 = vrot.lane.b32.xlu0 %v1500, 100
      %v3520 = vpop.permute.xlu0 %3519
      %3521 = vrot.lane.b32.xlu0 %v1503, 100
      %v3522 = vpop.permute.xlu0 %3521
      %3523 = vrot.lane.b32.xlu0 %v1505, 100
      %v3524 = vpop.permute.xlu0 %3523
      %v3557 = vsel %vm3269, 1, 0
      %v3558 = vsel %vm3270, 1, 0
      %v3559 = vsel %vm3271, 1, 0
      %v3560 = vsel %vm3272, 1, 0
      %v3561 = vsel %vm3273, 1, 0
      %v3562 = vsel %vm3274, 1, 0
      %v3563 = vsel %vm3275, 1, 0
      %v3564 = vsel %vm3276, 1, 0
      %v3565 = vsel %vm3277, 1, 0
      %v3566 = vsel %vm3278, 1, 0
      %v3567 = vsel %vm3279, 1, 0
      %v3568 = vsel %vm3280, 1, 0
      %v3569 = vsel %vm3281, 1, 0
      %v3570 = vsel %vm3282, 1, 0
      %v3571 = vsel %vm3283, 1, 0
      %v3572 = vsel %vm3284, 1, 0
      %v3573 = vsel %vm3285, 1, 0
      %v3574 = vsel %vm3286, 1, 0
      %v3575 = vsel %vm3287, 1, 0
      %v3576 = vsel %vm3288, 1, 0
      %v3577 = vsel %vm3289, 1, 0
      %v3578 = vsel %vm3290, 1, 0
      %v3579 = vsel %vm3291, 1, 0
      %v3580 = vsel %vm3292, 1, 0
      %v3581 = vsel %vm3293, 1, 0
      %v3582 = vsel %vm3294, 1, 0
      %v3583 = vsel %vm3295, 1, 0
      %v3584 = vsel %vm3296, 1, 0
      %v3585 = vsel %vm3297, 1, 0
      %v3586 = vsel %vm3298, 1, 0
      %v3587 = vsel %vm3299, 1, 0
      %v3588 = vsel %vm3300, 1, 0
      %vm3589 = vcmp.eq.s32.totalorder %v3557, 1
      %vm3590 = vcmp.eq.s32.totalorder %v3558, 1
      %vm3591 = vcmp.eq.s32.totalorder %v3559, 1
      %vm3592 = vcmp.eq.s32.totalorder %v3560, 1
      %vm3593 = vcmp.eq.s32.totalorder %v3561, 1
      %vm3594 = vcmp.eq.s32.totalorder %v3562, 1
      %vm3595 = vcmp.eq.s32.totalorder %v3563, 1
      %vm3596 = vcmp.eq.s32.totalorder %v3564, 1
      %vm3597 = vcmp.eq.s32.totalorder %v3565, 1
      %vm3598 = vcmp.eq.s32.totalorder %v3566, 1
      %vm3599 = vcmp.eq.s32.totalorder %v3567, 1
      %vm3600 = vcmp.eq.s32.totalorder %v3568, 1
      %vm3601 = vcmp.eq.s32.totalorder %v3569, 1
      %vm3602 = vcmp.eq.s32.totalorder %v3570, 1
      %vm3603 = vcmp.eq.s32.totalorder %v3571, 1
      %vm3604 = vcmp.eq.s32.totalorder %v3572, 1
      %vm3605 = vcmp.eq.s32.totalorder %v3573, 1
      %vm3606 = vcmp.eq.s32.totalorder %v3574, 1
      %vm3607 = vcmp.eq.s32.totalorder %v3575, 1
      %vm3608 = vcmp.eq.s32.totalorder %v3576, 1
      %vm3609 = vcmp.eq.s32.totalorder %v3577, 1
      %vm3610 = vcmp.eq.s32.totalorder %v3578, 1
      %vm3611 = vcmp.eq.s32.totalorder %v3579, 1
      %vm3612 = vcmp.eq.s32.totalorder %v3580, 1
      %vm3613 = vcmp.eq.s32.totalorder %v3581, 1
      %vm3614 = vcmp.eq.s32.totalorder %v3582, 1
      %vm3615 = vcmp.eq.s32.totalorder %v3583, 1
      %vm3616 = vcmp.eq.s32.totalorder %v3584, 1
      %vm3617 = vcmp.eq.s32.totalorder %v3585, 1
      %vm3618 = vcmp.eq.s32.totalorder %v3586, 1
      %vm3619 = vcmp.eq.s32.totalorder %v3587, 1
      %vm3620 = vcmp.eq.s32.totalorder %v3588, 1
      %v3621 = vsel %vm3589, %v3466, 0.0
      %v3622 = vsel %vm3590, %v3468, 0.0
      %v3623 = vsel %vm3591, %v3470, 0.0
      %v3624 = vsel %vm3592, %v3472, 0.0
      %v3625 = vsel %vm3593, %v3474, 0.0
      %v3626 = vsel %vm3594, %v3476, 0.0
      %v3627 = vsel %vm3595, %v3478, 0.0
      %v3628 = vsel %vm3596, %v3480, 0.0
      %v3629 = vsel %vm3597, %v3482, 0.0
      %v3630 = vsel %vm3598, %v3484, 0.0
      %v3631 = vsel %vm3599, %v3486, 0.0
      %v3632 = vsel %vm3600, %v3488, 0.0
      %v3633 = vsel %vm3601, %v3490, 0.0
      %v3634 = vsel %vm3602, %v3492, 0.0
      %v3635 = vsel %vm3603, %v3494, 0.0
      %v3636 = vsel %vm3604, %v3496, 0.0
      %v3637 = vsel %vm3605, %v3498, 0.0
      %v3638 = vsel %vm3606, %v3500, 0.0
      %v3639 = vsel %vm3607, %v3502, 0.0
      %v3640 = vsel %vm3608, %v3504, 0.0
      %v3641 = vsel %vm3609, %v3506, 0.0
      %v3642 = vsel %vm3610, %v3508, 0.0
      %v3643 = vsel %vm3611, %v3510, 0.0
      %v3644 = vsel %vm3612, %v3512, 0.0
      %v3645 = vsel %vm3613, %v3514, 0.0
      %v3646 = vsel %vm3614, %v3516, 0.0
      %v3647 = vsel %vm3615, %v3518, 0.0
      %v3648 = vsel %vm3616, %v3520, 0.0
      %v3649 = vsel %vm3617, %v3522, 0.0
      %v3650 = vsel %vm3618, %v3524, 0.0
      %v3651 = vsel %vm3619, %v3462, 0.0
      %v3652 = vsel %vm3620, %v3464, 0.0
      %v3653 = vadd.f32 %v3429, %v3621
      %v3654 = vadd.f32 %v3430, %v3622
      %v3655 = vadd.f32 %v3431, %v3623
      %v3656 = vadd.f32 %v3432, %v3624
      %v3657 = vadd.f32 %v3433, %v3625
      %v3658 = vadd.f32 %v3434, %v3626
      %v3659 = vadd.f32 %v3435, %v3627
      %v3660 = vadd.f32 %v3436, %v3628
      %v3661 = vadd.f32 %v3437, %v3629
      %v3662 = vadd.f32 %v3438, %v3630
      %v3663 = vadd.f32 %v3439, %v3631
      %v3664 = vadd.f32 %v3440, %v3632
      %v3665 = vadd.f32 %v3441, %v3633
      %v3666 = vadd.f32 %v3442, %v3634
      %v3667 = vadd.f32 %v3443, %v3635
      %v3668 = vadd.f32 %v3444, %v3636
      %v3669 = vadd.f32 %v3445, %v3637
      %v3670 = vadd.f32 %v3446, %v3638
      %v3671 = vadd.f32 %v3447, %v3639
      %v3672 = vadd.f32 %v3448, %v3640
      %v3673 = vadd.f32 %v3449, %v3641
      %v3674 = vadd.f32 %v3450, %v3642
      %v3675 = vadd.f32 %v3451, %v3643
      %v3676 = vadd.f32 %v3452, %v3644
      %v3677 = vadd.f32 %v3453, %v3645
      %v3678 = vadd.f32 %v3454, %v3646
      %v3679 = vadd.f32 %v3455, %v3647
      %v3680 = vadd.f32 %v3456, %v3648
      %v3681 = vadd.f32 %v3457, %v3649
      %v3682 = vadd.f32 %v3458, %v3650
      %v3683 = vadd.f32 %v3459, %v3651
      %v3684 = vadd.f32 %v3460, %v3652
      %3685 = vrot.lane.b32.xlu0 %v1428, 96
      %v3686 = vpop.permute.xlu0 %3685
      %3687 = vrot.lane.b32.xlu0 %v1430, 96
      %v3688 = vpop.permute.xlu0 %3687
      %3689 = vrot.lane.b32.xlu0 %v1433, 96
      %v3690 = vpop.permute.xlu0 %3689
      %3691 = vrot.lane.b32.xlu0 %v1435, 96
      %v3692 = vpop.permute.xlu0 %3691
      %3693 = vrot.lane.b32.xlu0 %v1438, 96
      %v3694 = vpop.permute.xlu0 %3693
      %3695 = vrot.lane.b32.xlu0 %v1440, 96
      %v3696 = vpop.permute.xlu0 %3695
      %3697 = vrot.lane.b32.xlu0 %v1443, 96
      %v3698 = vpop.permute.xlu0 %3697
      %3699 = vrot.lane.b32.xlu0 %v1445, 96
      %v3700 = vpop.permute.xlu0 %3699
      %3701 = vrot.lane.b32.xlu0 %v1448, 96
      %v3702 = vpop.permute.xlu0 %3701
      %3703 = vrot.lane.b32.xlu0 %v1450, 96
      %v3704 = vpop.permute.xlu0 %3703
      %3705 = vrot.lane.b32.xlu0 %v1453, 96
      %v3706 = vpop.permute.xlu0 %3705
      %3707 = vrot.lane.b32.xlu0 %v1455, 96
      %v3708 = vpop.permute.xlu0 %3707
      %3709 = vrot.lane.b32.xlu0 %v1458, 96
      %v3710 = vpop.permute.xlu0 %3709
      %3711 = vrot.lane.b32.xlu0 %v1460, 96
      %v3712 = vpop.permute.xlu0 %3711
      %3713 = vrot.lane.b32.xlu0 %v1463, 96
      %v3714 = vpop.permute.xlu0 %3713
      %3715 = vrot.lane.b32.xlu0 %v1465, 96
      %v3716 = vpop.permute.xlu0 %3715
      %3717 = vrot.lane.b32.xlu0 %v1468, 96
      %v3718 = vpop.permute.xlu0 %3717
      %3719 = vrot.lane.b32.xlu0 %v1470, 96
      %v3720 = vpop.permute.xlu0 %3719
      %3721 = vrot.lane.b32.xlu0 %v1473, 96
      %v3722 = vpop.permute.xlu0 %3721
      %3723 = vrot.lane.b32.xlu0 %v1475, 96
      %v3724 = vpop.permute.xlu0 %3723
      %3725 = vrot.lane.b32.xlu0 %v1478, 96
      %v3726 = vpop.permute.xlu0 %3725
      %3727 = vrot.lane.b32.xlu0 %v1480, 96
      %v3728 = vpop.permute.xlu0 %3727
      %3729 = vrot.lane.b32.xlu0 %v1483, 96
      %v3730 = vpop.permute.xlu0 %3729
      %3731 = vrot.lane.b32.xlu0 %v1485, 96
      %v3732 = vpop.permute.xlu0 %3731
      %3733 = vrot.lane.b32.xlu0 %v1488, 96
      %v3734 = vpop.permute.xlu0 %3733
      %3735 = vrot.lane.b32.xlu0 %v1490, 96
      %v3736 = vpop.permute.xlu0 %3735
      %3737 = vrot.lane.b32.xlu0 %v1493, 96
      %v3738 = vpop.permute.xlu0 %3737
      %3739 = vrot.lane.b32.xlu0 %v1495, 96
      %v3740 = vpop.permute.xlu0 %3739
      %3741 = vrot.lane.b32.xlu0 %v1498, 96
      %v3742 = vpop.permute.xlu0 %3741
      %3743 = vrot.lane.b32.xlu0 %v1500, 96
      %v3744 = vpop.permute.xlu0 %3743
      %3745 = vrot.lane.b32.xlu0 %v1503, 96
      %v3746 = vpop.permute.xlu0 %3745
      %3747 = vrot.lane.b32.xlu0 %v1505, 96
      %v3748 = vpop.permute.xlu0 %3747
      %v3781 = vrot.slane %v3686, 1
      %v3782 = vrot.slane %v3688, 1
      %v3783 = vrot.slane %v3690, 1
      %v3784 = vrot.slane %v3692, 1
      %v3785 = vrot.slane %v3694, 1
      %v3786 = vrot.slane %v3696, 1
      %v3787 = vrot.slane %v3698, 1
      %v3788 = vrot.slane %v3700, 1
      %v3789 = vrot.slane %v3702, 1
      %v3790 = vrot.slane %v3704, 1
      %v3791 = vrot.slane %v3706, 1
      %v3792 = vrot.slane %v3708, 1
      %v3793 = vrot.slane %v3710, 1
      %v3794 = vrot.slane %v3712, 1
      %v3795 = vrot.slane %v3714, 1
      %v3796 = vrot.slane %v3716, 1
      %v3797 = vrot.slane %v3718, 1
      %v3798 = vrot.slane %v3720, 1
      %v3799 = vrot.slane %v3722, 1
      %v3800 = vrot.slane %v3724, 1
      %v3801 = vrot.slane %v3726, 1
      %v3802 = vrot.slane %v3728, 1
      %v3803 = vrot.slane %v3730, 1
      %v3804 = vrot.slane %v3732, 1
      %v3805 = vrot.slane %v3734, 1
      %v3806 = vrot.slane %v3736, 1
      %v3807 = vrot.slane %v3738, 1
      %v3808 = vrot.slane %v3740, 1
      %v3809 = vrot.slane %v3742, 1
      %v3810 = vrot.slane %v3744, 1
      %v3811 = vrot.slane %v3746, 1
      %v3812 = vrot.slane %v3748, 1
      %v3813 = vsel %vm2180, %v3811, %v3812
      %v3814 = vsel %vm2180, %v3810, %v3811
      %v3815 = vsel %vm2180, %v3809, %v3810
      %v3816 = vsel %vm2180, %v3808, %v3809
      %v3817 = vsel %vm2180, %v3807, %v3808
      %v3818 = vsel %vm2180, %v3806, %v3807
      %v3819 = vsel %vm2180, %v3805, %v3806
      %v3820 = vsel %vm2180, %v3804, %v3805
      %v3821 = vsel %vm2180, %v3803, %v3804
      %v3822 = vsel %vm2180, %v3802, %v3803
      %v3823 = vsel %vm2180, %v3801, %v3802
      %v3824 = vsel %vm2180, %v3800, %v3801
      %v3825 = vsel %vm2180, %v3799, %v3800
      %v3826 = vsel %vm2180, %v3798, %v3799
      %v3827 = vsel %vm2180, %v3797, %v3798
      %v3828 = vsel %vm2180, %v3796, %v3797
      %v3829 = vsel %vm2180, %v3795, %v3796
      %v3830 = vsel %vm2180, %v3794, %v3795
      %v3831 = vsel %vm2180, %v3793, %v3794
      %v3832 = vsel %vm2180, %v3792, %v3793
      %v3833 = vsel %vm2180, %v3791, %v3792
      %v3834 = vsel %vm2180, %v3790, %v3791
      %v3835 = vsel %vm2180, %v3789, %v3790
      %v3836 = vsel %vm2180, %v3788, %v3789
      %v3837 = vsel %vm2180, %v3787, %v3788
      %v3838 = vsel %vm2180, %v3786, %v3787
      %v3839 = vsel %vm2180, %v3785, %v3786
      %v3840 = vsel %vm2180, %v3784, %v3785
      %v3841 = vsel %vm2180, %v3783, %v3784
      %v3842 = vsel %vm2180, %v3782, %v3783
      %v3843 = vsel %vm2180, %v3781, %v3782
      %v3844 = vsel %vm2180, %v3812, %v3781
      %vm3845 = vmand %vm3269, %vm2213
      %vm3846 = vmand %vm3270, %vm2214
      %vm3847 = vmand %vm3271, %vm2215
      %vm3848 = vmand %vm3272, %vm2216
      %vm3849 = vmand %vm3273, %vm2217
      %vm3850 = vmand %vm3274, %vm2218
      %vm3851 = vmand %vm3275, %vm2219
      %vm3852 = vmand %vm3276, %vm2220
      %vm3853 = vmand %vm3277, %vm2221
      %vm3854 = vmand %vm3278, %vm2222
      %vm3855 = vmand %vm3279, %vm2223
      %vm3856 = vmand %vm3280, %vm2224
      %vm3857 = vmand %vm3281, %vm2225
      %vm3858 = vmand %vm3282, %vm2226
      %vm3859 = vmand %vm3283, %vm2227
      %vm3860 = vmand %vm3284, %vm2228
      %vm3861 = vmand %vm3285, %vm2229
      %vm3862 = vmand %vm3286, %vm2230
      %vm3863 = vmand %vm3287, %vm2231
      %vm3864 = vmand %vm3288, %vm2232
      %vm3865 = vmand %vm3289, %vm2233
      %vm3866 = vmand %vm3290, %vm2234
      %vm3867 = vmand %vm3291, %vm2235
      %vm3868 = vmand %vm3292, %vm2236
      %vm3869 = vmand %vm3293, %vm2237
      %vm3870 = vmand %vm3294, %vm2238
      %vm3871 = vmand %vm3295, %vm2239
      %vm3872 = vmand %vm3296, %vm2240
      %vm3873 = vmand %vm3297, %vm2241
      %vm3874 = vmand %vm3298, %vm2242
      %vm3875 = vmand %vm3299, %vm2243
      %vm3876 = vmand %vm3300, %vm2244
      %v3877 = vsel %vm3845, 1, 0
      %v3878 = vsel %vm3846, 1, 0
      %v3879 = vsel %vm3847, 1, 0
      %v3880 = vsel %vm3848, 1, 0
      %v3881 = vsel %vm3849, 1, 0
      %v3882 = vsel %vm3850, 1, 0
      %v3883 = vsel %vm3851, 1, 0
      %v3884 = vsel %vm3852, 1, 0
      %v3885 = vsel %vm3853, 1, 0
      %v3886 = vsel %vm3854, 1, 0
      %v3887 = vsel %vm3855, 1, 0
      %v3888 = vsel %vm3856, 1, 0
      %v3889 = vsel %vm3857, 1, 0
      %v3890 = vsel %vm3858, 1, 0
      %v3891 = vsel %vm3859, 1, 0
      %v3892 = vsel %vm3860, 1, 0
      %v3893 = vsel %vm3861, 1, 0
      %v3894 = vsel %vm3862, 1, 0
      %v3895 = vsel %vm3863, 1, 0
      %v3896 = vsel %vm3864, 1, 0
      %v3897 = vsel %vm3865, 1, 0
      %v3898 = vsel %vm3866, 1, 0
      %v3899 = vsel %vm3867, 1, 0
      %v3900 = vsel %vm3868, 1, 0
      %v3901 = vsel %vm3869, 1, 0
      %v3902 = vsel %vm3870, 1, 0
      %v3903 = vsel %vm3871, 1, 0
      %v3904 = vsel %vm3872, 1, 0
      %v3905 = vsel %vm3873, 1, 0
      %v3906 = vsel %vm3874, 1, 0
      %v3907 = vsel %vm3875, 1, 0
      %v3908 = vsel %vm3876, 1, 0
      %vm3909 = vcmp.eq.s32.totalorder %v3877, 1
      %vm3910 = vcmp.eq.s32.totalorder %v3878, 1
      %vm3911 = vcmp.eq.s32.totalorder %v3879, 1
      %vm3912 = vcmp.eq.s32.totalorder %v3880, 1
      %vm3913 = vcmp.eq.s32.totalorder %v3881, 1
      %vm3914 = vcmp.eq.s32.totalorder %v3882, 1
      %vm3915 = vcmp.eq.s32.totalorder %v3883, 1
      %vm3916 = vcmp.eq.s32.totalorder %v3884, 1
      %vm3917 = vcmp.eq.s32.totalorder %v3885, 1
      %vm3918 = vcmp.eq.s32.totalorder %v3886, 1
      %vm3919 = vcmp.eq.s32.totalorder %v3887, 1
      %vm3920 = vcmp.eq.s32.totalorder %v3888, 1
      %vm3921 = vcmp.eq.s32.totalorder %v3889, 1
      %vm3922 = vcmp.eq.s32.totalorder %v3890, 1
      %vm3923 = vcmp.eq.s32.totalorder %v3891, 1
      %vm3924 = vcmp.eq.s32.totalorder %v3892, 1
      %vm3925 = vcmp.eq.s32.totalorder %v3893, 1
      %vm3926 = vcmp.eq.s32.totalorder %v3894, 1
      %vm3927 = vcmp.eq.s32.totalorder %v3895, 1
      %vm3928 = vcmp.eq.s32.totalorder %v3896, 1
      %vm3929 = vcmp.eq.s32.totalorder %v3897, 1
      %vm3930 = vcmp.eq.s32.totalorder %v3898, 1
      %vm3931 = vcmp.eq.s32.totalorder %v3899, 1
      %vm3932 = vcmp.eq.s32.totalorder %v3900, 1
      %vm3933 = vcmp.eq.s32.totalorder %v3901, 1
      %vm3934 = vcmp.eq.s32.totalorder %v3902, 1
      %vm3935 = vcmp.eq.s32.totalorder %v3903, 1
      %vm3936 = vcmp.eq.s32.totalorder %v3904, 1
      %vm3937 = vcmp.eq.s32.totalorder %v3905, 1
      %vm3938 = vcmp.eq.s32.totalorder %v3906, 1
      %vm3939 = vcmp.eq.s32.totalorder %v3907, 1
      %vm3940 = vcmp.eq.s32.totalorder %v3908, 1
      %v3941 = vsel %vm3909, %v3841, 0.0
      %v3942 = vsel %vm3910, %v3840, 0.0
      %v3943 = vsel %vm3911, %v3839, 0.0
      %v3944 = vsel %vm3912, %v3838, 0.0
      %v3945 = vsel %vm3913, %v3837, 0.0
      %v3946 = vsel %vm3914, %v3836, 0.0
      %v3947 = vsel %vm3915, %v3835, 0.0
      %v3948 = vsel %vm3916, %v3834, 0.0
      %v3949 = vsel %vm3917, %v3833, 0.0
      %v3950 = vsel %vm3918, %v3832, 0.0
      %v3951 = vsel %vm3919, %v3831, 0.0
      %v3952 = vsel %vm3920, %v3830, 0.0
      %v3953 = vsel %vm3921, %v3829, 0.0
      %v3954 = vsel %vm3922, %v3828, 0.0
      %v3955 = vsel %vm3923, %v3827, 0.0
      %v3956 = vsel %vm3924, %v3826, 0.0
      %v3957 = vsel %vm3925, %v3825, 0.0
      %v3958 = vsel %vm3926, %v3824, 0.0
      %v3959 = vsel %vm3927, %v3823, 0.0
      %v3960 = vsel %vm3928, %v3822, 0.0
      %v3961 = vsel %vm3929, %v3821, 0.0
      %v3962 = vsel %vm3930, %v3820, 0.0
      %v3963 = vsel %vm3931, %v3819, 0.0
      %v3964 = vsel %vm3932, %v3818, 0.0
      %v3965 = vsel %vm3933, %v3817, 0.0
      %v3966 = vsel %vm3934, %v3816, 0.0
      %v3967 = vsel %vm3935, %v3815, 0.0
      %v3968 = vsel %vm3936, %v3814, 0.0
      %v3969 = vsel %vm3937, %v3813, 0.0
      %v3970 = vsel %vm3938, %v3844, 0.0
      %v3971 = vsel %vm3939, %v3843, 0.0
      %v3972 = vsel %vm3940, %v3842, 0.0
      %v3973 = vadd.f32 %v3653, %v3941
      %v3974 = vadd.f32 %v3654, %v3942
      %v3975 = vadd.f32 %v3655, %v3943
      %v3976 = vadd.f32 %v3656, %v3944
      %v3977 = vadd.f32 %v3657, %v3945
      %v3978 = vadd.f32 %v3658, %v3946
      %v3979 = vadd.f32 %v3659, %v3947
      %v3980 = vadd.f32 %v3660, %v3948
      %v3981 = vadd.f32 %v3661, %v3949
      %v3982 = vadd.f32 %v3662, %v3950
      %v3983 = vadd.f32 %v3663, %v3951
      %v3984 = vadd.f32 %v3664, %v3952
      %v3985 = vadd.f32 %v3665, %v3953
      %v3986 = vadd.f32 %v3666, %v3954
      %v3987 = vadd.f32 %v3667, %v3955
      %v3988 = vadd.f32 %v3668, %v3956
      %v3989 = vadd.f32 %v3669, %v3957
      %v3990 = vadd.f32 %v3670, %v3958
      %v3991 = vadd.f32 %v3671, %v3959
      %v3992 = vadd.f32 %v3672, %v3960
      %v3993 = vadd.f32 %v3673, %v3961
      %v3994 = vadd.f32 %v3674, %v3962
      %v3995 = vadd.f32 %v3675, %v3963
      %v3996 = vadd.f32 %v3676, %v3964
      %v3997 = vadd.f32 %v3677, %v3965
      %v3998 = vadd.f32 %v3678, %v3966
      %v3999 = vadd.f32 %v3679, %v3967
      %v4000 = vadd.f32 %v3680, %v3968
      %v4001 = vadd.f32 %v3681, %v3969
      %v4002 = vadd.f32 %v3682, %v3970
      %v4003 = vadd.f32 %v3683, %v3971
      %v4004 = vadd.f32 %v3684, %v3972
      %v4005 = vsel %vm621, %v3973, 0.0
      %v4006 = vsel %vm621, %v3974, 0.0
      %v4007 = vadd.f32 %v4005, %v4006
      %v4008 = vsel %vm621, %v3975, 0.0
      %v4009 = vadd.f32 %v4007, %v4008
      %v4010 = vsel %vm621, %v3976, 0.0
      %v4011 = vadd.f32 %v4009, %v4010
      %v4012 = vsel %vm621, %v3977, 0.0
      %v4013 = vadd.f32 %v4011, %v4012
      %v4014 = vsel %vm621, %v3978, 0.0
      %v4015 = vadd.f32 %v4013, %v4014
      %v4016 = vsel %vm621, %v3979, 0.0
      %v4017 = vadd.f32 %v4015, %v4016
      %v4018 = vsel %vm621, %v3980, 0.0
      %v4019 = vadd.f32 %v4017, %v4018
      %v4020 = vsel %vm621, %v3981, 0.0
      %v4021 = vadd.f32 %v4019, %v4020
      %v4022 = vsel %vm621, %v3982, 0.0
      %v4023 = vadd.f32 %v4021, %v4022
      %v4024 = vsel %vm621, %v3983, 0.0
      %v4025 = vadd.f32 %v4023, %v4024
      %v4026 = vsel %vm621, %v3984, 0.0
      %v4027 = vadd.f32 %v4025, %v4026
      %v4028 = vsel %vm621, %v3985, 0.0
      %v4029 = vadd.f32 %v4027, %v4028
      %v4030 = vsel %vm621, %v3986, 0.0
      %v4031 = vadd.f32 %v4029, %v4030
      %v4032 = vsel %vm621, %v3987, 0.0
      %v4033 = vadd.f32 %v4031, %v4032
      %v4034 = vsel %vm621, %v3988, 0.0
      %v4035 = vadd.f32 %v4033, %v4034
      %v4036 = vsel %vm621, %v3989, 0.0
      %v4037 = vadd.f32 %v4035, %v4036
      %v4038 = vsel %vm621, %v3990, 0.0
      %v4039 = vadd.f32 %v4037, %v4038
      %v4040 = vsel %vm621, %v3991, 0.0
      %v4041 = vadd.f32 %v4039, %v4040
      %v4042 = vsel %vm621, %v3992, 0.0
      %v4043 = vadd.f32 %v4041, %v4042
      %v4044 = vsel %vm621, %v3993, 0.0
      %v4045 = vadd.f32 %v4043, %v4044
      %v4046 = vsel %vm621, %v3994, 0.0
      %v4047 = vadd.f32 %v4045, %v4046
      %v4048 = vsel %vm621, %v3995, 0.0
      %v4049 = vadd.f32 %v4047, %v4048
      %v4050 = vsel %vm621, %v3996, 0.0
      %v4051 = vadd.f32 %v4049, %v4050
      %v4052 = vsel %vm621, %v3997, 0.0
      %v4053 = vadd.f32 %v4051, %v4052
      %v4054 = vsel %vm621, %v3998, 0.0
      %v4055 = vadd.f32 %v4053, %v4054
      %v4056 = vsel %vm621, %v3999, 0.0
      %v4057 = vadd.f32 %v4055, %v4056
      %v4058 = vsel %vm621, %v4000, 0.0
      %v4059 = vadd.f32 %v4057, %v4058
      %v4060 = vsel %vm621, %v4001, 0.0
      %v4061 = vadd.f32 %v4059, %v4060
      %v4062 = vsel %vm621, %v4002, 0.0
      %v4063 = vadd.f32 %v4061, %v4062
      %v4064 = vsel %vm621, %v4003, 0.0
      %v4065 = vadd.f32 %v4063, %v4064
      %v4066 = vsel %vm621, %v4004, 0.0
      %v4067 = vadd.f32 %v4065, %v4066
      %v4068 = vrot.slane %v4067, 4
      %v4069 = vadd.f32 %v4067, %v4068
      %v4070 = vrot.slane %v4069, 2
      %v4071 = vadd.f32 %v4069, %v4070
      %v4072 = vrot.slane %v4071, 1
      %v4073 = vadd.f32 %v4071, %v4072
      %v4074 = vmul.f32 %v4073, %v697
      %v4075 = vsub.f32 %v3973, %v4074
      %v4076 = vsub.f32 %v3974, %v4074
      %v4077 = vsub.f32 %v3975, %v4074
      %v4078 = vsub.f32 %v3976, %v4074
      %v4079 = vsub.f32 %v3977, %v4074
      %v4080 = vsub.f32 %v3978, %v4074
      %v4081 = vsub.f32 %v3979, %v4074
      %v4082 = vsub.f32 %v3980, %v4074
      %v4083 = vsub.f32 %v3981, %v4074
      %v4084 = vsub.f32 %v3982, %v4074
      %v4085 = vsub.f32 %v3983, %v4074
      %v4086 = vsub.f32 %v3984, %v4074
      %v4087 = vsub.f32 %v3985, %v4074
      %v4088 = vsub.f32 %v3986, %v4074
      %v4089 = vsub.f32 %v3987, %v4074
      %v4090 = vsub.f32 %v3988, %v4074
      %v4091 = vsub.f32 %v3989, %v4074
      %v4092 = vsub.f32 %v3990, %v4074
      %v4093 = vsub.f32 %v3991, %v4074
      %v4094 = vsub.f32 %v3992, %v4074
      %v4095 = vsub.f32 %v3993, %v4074
      %v4096 = vsub.f32 %v3994, %v4074
      %v4097 = vsub.f32 %v3995, %v4074
      %v4098 = vsub.f32 %v3996, %v4074
      %v4099 = vsub.f32 %v3997, %v4074
      %v4100 = vsub.f32 %v3998, %v4074
      %v4101 = vsub.f32 %v3999, %v4074
      %v4102 = vsub.f32 %v4000, %v4074
      %v4103 = vsub.f32 %v4001, %v4074
      %v4104 = vsub.f32 %v4002, %v4074
      %v4105 = vsub.f32 %v4003, %v4074
      %v4106 = vsub.f32 %v4004, %v4074
      %v4107 = vmul.f32 %v4075, %v4075
      %v4108 = vmul.f32 %v4076, %v4076
      %v4109 = vmul.f32 %v4077, %v4077
      %v4110 = vmul.f32 %v4078, %v4078
      %v4111 = vmul.f32 %v4079, %v4079
      %v4112 = vmul.f32 %v4080, %v4080
      %v4113 = vmul.f32 %v4081, %v4081
      %v4114 = vmul.f32 %v4082, %v4082
      %v4115 = vmul.f32 %v4083, %v4083
      %v4116 = vmul.f32 %v4084, %v4084
      %v4117 = vmul.f32 %v4085, %v4085
      %v4118 = vmul.f32 %v4086, %v4086
      %v4119 = vmul.f32 %v4087, %v4087
      %v4120 = vmul.f32 %v4088, %v4088
      %v4121 = vmul.f32 %v4089, %v4089
      %v4122 = vmul.f32 %v4090, %v4090
      %v4123 = vmul.f32 %v4091, %v4091
      %v4124 = vmul.f32 %v4092, %v4092
      %v4125 = vmul.f32 %v4093, %v4093
      %v4126 = vmul.f32 %v4094, %v4094
      %v4127 = vmul.f32 %v4095, %v4095
      %v4128 = vmul.f32 %v4096, %v4096
      %v4129 = vmul.f32 %v4097, %v4097
      %v4130 = vmul.f32 %v4098, %v4098
      %v4131 = vmul.f32 %v4099, %v4099
      %v4132 = vmul.f32 %v4100, %v4100
      %v4133 = vmul.f32 %v4101, %v4101
      %v4134 = vmul.f32 %v4102, %v4102
      %v4135 = vmul.f32 %v4103, %v4103
      %v4136 = vmul.f32 %v4104, %v4104
      %v4137 = vmul.f32 %v4105, %v4105
      %v4138 = vmul.f32 %v4106, %v4106
      %v4139 = vsel %vm621, %v4107, 0.0
      %v4140 = vsel %vm621, %v4108, 0.0
      %v4141 = vadd.f32 %v4139, %v4140
      %v4142 = vsel %vm621, %v4109, 0.0
      %v4143 = vadd.f32 %v4141, %v4142
      %v4144 = vsel %vm621, %v4110, 0.0
      %v4145 = vadd.f32 %v4143, %v4144
      %v4146 = vsel %vm621, %v4111, 0.0
      %v4147 = vadd.f32 %v4145, %v4146
      %v4148 = vsel %vm621, %v4112, 0.0
      %v4149 = vadd.f32 %v4147, %v4148
      %v4150 = vsel %vm621, %v4113, 0.0
      %v4151 = vadd.f32 %v4149, %v4150
      %v4152 = vsel %vm621, %v4114, 0.0
      %v4153 = vadd.f32 %v4151, %v4152
      %v4154 = vsel %vm621, %v4115, 0.0
      %v4155 = vadd.f32 %v4153, %v4154
      %v4156 = vsel %vm621, %v4116, 0.0
      %v4157 = vadd.f32 %v4155, %v4156
      %v4158 = vsel %vm621, %v4117, 0.0
      %v4159 = vadd.f32 %v4157, %v4158
      %v4160 = vsel %vm621, %v4118, 0.0
      %v4161 = vadd.f32 %v4159, %v4160
      %v4162 = vsel %vm621, %v4119, 0.0
      %v4163 = vadd.f32 %v4161, %v4162
      %v4164 = vsel %vm621, %v4120, 0.0
      %v4165 = vadd.f32 %v4163, %v4164
      %v4166 = vsel %vm621, %v4121, 0.0
      %v4167 = vadd.f32 %v4165, %v4166
      %v4168 = vsel %vm621, %v4122, 0.0
      %v4169 = vadd.f32 %v4167, %v4168
      %v4170 = vsel %vm621, %v4123, 0.0
      %v4171 = vadd.f32 %v4169, %v4170
      %v4172 = vsel %vm621, %v4124, 0.0
      %v4173 = vadd.f32 %v4171, %v4172
      %v4174 = vsel %vm621, %v4125, 0.0
      %v4175 = vadd.f32 %v4173, %v4174
      %v4176 = vsel %vm621, %v4126, 0.0
      %v4177 = vadd.f32 %v4175, %v4176
      %v4178 = vsel %vm621, %v4127, 0.0
      %v4179 = vadd.f32 %v4177, %v4178
      %v4180 = vsel %vm621, %v4128, 0.0
      %v4181 = vadd.f32 %v4179, %v4180
      %v4182 = vsel %vm621, %v4129, 0.0
      %v4183 = vadd.f32 %v4181, %v4182
      %v4184 = vsel %vm621, %v4130, 0.0
      %v4185 = vadd.f32 %v4183, %v4184
      %v4186 = vsel %vm621, %v4131, 0.0
      %v4187 = vadd.f32 %v4185, %v4186
      %v4188 = vsel %vm621, %v4132, 0.0
      %v4189 = vadd.f32 %v4187, %v4188
      %v4190 = vsel %vm621, %v4133, 0.0
      %v4191 = vadd.f32 %v4189, %v4190
      %v4192 = vsel %vm621, %v4134, 0.0
      %v4193 = vadd.f32 %v4191, %v4192
      %v4194 = vsel %vm621, %v4135, 0.0
      %v4195 = vadd.f32 %v4193, %v4194
      %v4196 = vsel %vm621, %v4136, 0.0
      %v4197 = vadd.f32 %v4195, %v4196
      %v4198 = vsel %vm621, %v4137, 0.0
      %v4199 = vadd.f32 %v4197, %v4198
      %v4200 = vsel %vm621, %v4138, 0.0
      %v4201 = vadd.f32 %v4199, %v4200
      %v4202 = vrot.slane %v4201, 4
      %v4203 = vadd.f32 %v4201, %v4202
      %v4204 = vrot.slane %v4203, 2
      %v4205 = vadd.f32 %v4203, %v4204
      %v4206 = vrot.slane %v4205, 1
      %v4207 = vadd.f32 %v4205, %v4206
      %v4208 = vmul.f32 %v4207, %v697
      %v4209 = vadd.f32 %v4208, 1e-05
      %v4210 = vrsqrt.pop %v4209
      %v4211 = vmul.f32 %v4210, %v4209
      %v4212 = vmul.f32 %v4211, %v4210
      %v4213 = vmul.f32 0.5, %v4212
      %v4214 = vsub.f32 1.5, %v4213
      %v4215 = vmul.f32 %v4210, %v4214
      %vm4216 = vweird.f32 %v4209
      %vm4217 = vweird.f32 %v4210
      %vm4218 = vmor %vm4216, %vm4217
      %v4219 = vsel %vm4218, %v4210, %v4215
      %v4220 = vmul.f32 %v4075, %v4219
      %v4221 = vmul.f32 %v4076, %v4219
      %v4222 = vmul.f32 %v4077, %v4219
      %v4223 = vmul.f32 %v4078, %v4219
      %v4224 = vmul.f32 %v4079, %v4219
      %v4225 = vmul.f32 %v4080, %v4219
      %v4226 = vmul.f32 %v4081, %v4219
      %v4227 = vmul.f32 %v4082, %v4219
      %v4228 = vmul.f32 %v4083, %v4219
      %v4229 = vmul.f32 %v4084, %v4219
      %v4230 = vmul.f32 %v4085, %v4219
      %v4231 = vmul.f32 %v4086, %v4219
      %v4232 = vmul.f32 %v4087, %v4219
      %v4233 = vmul.f32 %v4088, %v4219
      %v4234 = vmul.f32 %v4089, %v4219
      %v4235 = vmul.f32 %v4090, %v4219
      %v4236 = vmul.f32 %v4091, %v4219
      %v4237 = vmul.f32 %v4092, %v4219
      %v4238 = vmul.f32 %v4093, %v4219
      %v4239 = vmul.f32 %v4094, %v4219
      %v4240 = vmul.f32 %v4095, %v4219
      %v4241 = vmul.f32 %v4096, %v4219
      %v4242 = vmul.f32 %v4097, %v4219
      %v4243 = vmul.f32 %v4098, %v4219
      %v4244 = vmul.f32 %v4099, %v4219
      %v4245 = vmul.f32 %v4100, %v4219
      %v4246 = vmul.f32 %v4101, %v4219
      %v4247 = vmul.f32 %v4102, %v4219
      %v4248 = vmul.f32 %v4103, %v4219
      %v4249 = vmul.f32 %v4104, %v4219
      %v4250 = vmul.f32 %v4105, %v4219
      %v4251 = vmul.f32 %v4106, %v4219
      %v4252 = vmax.f32 %v4220, 0.0
      %v4253 = vmax.f32 %v4221, 0.0
      %v4254 = vmax.f32 %v4222, 0.0
      %v4255 = vmax.f32 %v4223, 0.0
      %v4256 = vmax.f32 %v4224, 0.0
      %v4257 = vmax.f32 %v4225, 0.0
      %v4258 = vmax.f32 %v4226, 0.0
      %v4259 = vmax.f32 %v4227, 0.0
      %v4260 = vmax.f32 %v4228, 0.0
      %v4261 = vmax.f32 %v4229, 0.0
      %v4262 = vmax.f32 %v4230, 0.0
      %v4263 = vmax.f32 %v4231, 0.0
      %v4264 = vmax.f32 %v4232, 0.0
      %v4265 = vmax.f32 %v4233, 0.0
      %v4266 = vmax.f32 %v4234, 0.0
      %v4267 = vmax.f32 %v4235, 0.0
      %v4268 = vmax.f32 %v4236, 0.0
      %v4269 = vmax.f32 %v4237, 0.0
      %v4270 = vmax.f32 %v4238, 0.0
      %v4271 = vmax.f32 %v4239, 0.0
      %v4272 = vmax.f32 %v4240, 0.0
      %v4273 = vmax.f32 %v4241, 0.0
      %v4274 = vmax.f32 %v4242, 0.0
      %v4275 = vmax.f32 %v4243, 0.0
      %v4276 = vmax.f32 %v4244, 0.0
      %v4277 = vmax.f32 %v4245, 0.0
      %v4278 = vmax.f32 %v4246, 0.0
      %v4279 = vmax.f32 %v4247, 0.0
      %v4280 = vmax.f32 %v4248, 0.0
      %v4281 = vmax.f32 %v4249, 0.0
      %v4282 = vmax.f32 %v4250, 0.0
      %v4283 = vmax.f32 %v4251, 0.0
      %v4284 = vpack.c.bf16 %v4253, %v4252
      %v4285 = vpack.c.bf16 %v4255, %v4254
      %v4286 = vpack.c.bf16 %v4257, %v4256
      %v4287 = vpack.c.bf16 %v4259, %v4258
      %v4288 = vpack.c.bf16 %v4261, %v4260
      %v4289 = vpack.c.bf16 %v4263, %v4262
      %v4290 = vpack.c.bf16 %v4265, %v4264
      %v4291 = vpack.c.bf16 %v4267, %v4266
      %v4292 = vpack.c.bf16 %v4269, %v4268
      %v4293 = vpack.c.bf16 %v4271, %v4270
      %v4294 = vpack.c.bf16 %v4273, %v4272
      %v4295 = vpack.c.bf16 %v4275, %v4274
      %v4296 = vpack.c.bf16 %v4277, %v4276
      %v4297 = vpack.c.bf16 %v4279, %v4278
      %v4298 = vpack.c.bf16 %v4281, %v4280
      %v4299 = vpack.c.bf16 %v4283, %v4282
      %s4300 = scalar_lea.vmem %s1, 8
      %v4301 = vld [vmem:[%s4300] sm:$0xf]
      %v4303 = vunpack.c.l.b16 %v4301
      %v4304 = vpack.c.b16 %v4303, %v4303
      %v4305 = vrot.slane %v4304, 2
      %v4307 = vsel %vm621, %v4284, 0
      %v4310 = vsel %vm621, %v4285, 0
      %v4313 = vsel %vm621, %v4286, 0
      %v4316 = vsel %vm621, %v4287, 0
      %v4319 = vsel %vm621, %v4288, 0
      %v4322 = vsel %vm621, %v4289, 0
      %v4325 = vsel %vm621, %v4290, 0
      %v4328 = vsel %vm621, %v4291, 0
      %v4331 = vsel %vm621, %v4292, 0
      %v4334 = vsel %vm621, %v4293, 0
      %v4337 = vsel %vm621, %v4294, 0
      %v4340 = vsel %vm621, %v4295, 0
      %v4343 = vsel %vm621, %v4296, 0
      %v4346 = vsel %vm621, %v4297, 0
      %v4349 = vsel %vm621, %v4298, 0
      %v4352 = vsel %vm621, %v4299, 0
      %v4355 = vsel %vm973, %v4305, 0
      %4357 = vmatpush.bf16.msra.mxu0 0
      %4358 = vmatpush.bf16.msra.mxu0 0
      %4359 = vmatpush.bf16.msra.mxu0 0
      %4360 = vmatpush.bf16.msra.mxu0 0
      %4361 = vmatpush.bf16.msra.mxu0 0
      %4362 = vmatpush.bf16.msra.mxu0 0
      %4363 = vmatpush.bf16.msra.mxu0 0
      %4364 = vmatpush.bf16.msra.mxu0 %v4355
      %4365 = vmatmul.bf16.gmra.mxu0 %v4307
      %v4366 = vpop.f32.mrf.mxu0
      %v4367 = vadd.f32 0.0, %v4366
      %v4368 = vpop.f32.mrf.mxu0
      %v4369 = vadd.f32 0.0, %v4368
      %4370 = vmatmul.bf16.gmra.mxu0 %v4310
      %v4371 = vpop.f32.mrf.mxu0
      %v4372 = vadd.f32 0.0, %v4371
      %v4373 = vpop.f32.mrf.mxu0
      %v4374 = vadd.f32 0.0, %v4373
      %4375 = vmatmul.bf16.gmra.mxu0 %v4313
      %v4376 = vpop.f32.mrf.mxu0
      %v4377 = vadd.f32 0.0, %v4376
      %v4378 = vpop.f32.mrf.mxu0
      %v4379 = vadd.f32 0.0, %v4378
      %4380 = vmatmul.bf16.gmra.mxu0 %v4316
      %v4381 = vpop.f32.mrf.mxu0
      %v4382 = vadd.f32 0.0, %v4381
      %v4383 = vpop.f32.mrf.mxu0
      %v4384 = vadd.f32 0.0, %v4383
      %4385 = vmatmul.bf16.gmra.mxu0 %v4319
      %v4386 = vpop.f32.mrf.mxu0
      %v4387 = vadd.f32 0.0, %v4386
      %v4388 = vpop.f32.mrf.mxu0
      %v4389 = vadd.f32 0.0, %v4388
      %4390 = vmatmul.bf16.gmra.mxu0 %v4322
      %v4391 = vpop.f32.mrf.mxu0
      %v4392 = vadd.f32 0.0, %v4391
      %v4393 = vpop.f32.mrf.mxu0
      %v4394 = vadd.f32 0.0, %v4393
      %4395 = vmatmul.bf16.gmra.mxu0 %v4325
      %v4396 = vpop.f32.mrf.mxu0
      %v4397 = vadd.f32 0.0, %v4396
      %v4398 = vpop.f32.mrf.mxu0
      %v4399 = vadd.f32 0.0, %v4398
      %4400 = vmatmul.bf16.gmra.mxu0 %v4328
      %v4401 = vpop.f32.mrf.mxu0
      %v4402 = vadd.f32 0.0, %v4401
      %v4403 = vpop.f32.mrf.mxu0
      %v4404 = vadd.f32 0.0, %v4403
      %4405 = vmatmul.bf16.gmra.mxu0 %v4331
      %v4406 = vpop.f32.mrf.mxu0
      %v4407 = vadd.f32 0.0, %v4406
      %v4408 = vpop.f32.mrf.mxu0
      %v4409 = vadd.f32 0.0, %v4408
      %4410 = vmatmul.bf16.gmra.mxu0 %v4334
      %v4411 = vpop.f32.mrf.mxu0
      %v4412 = vadd.f32 0.0, %v4411
      %v4413 = vpop.f32.mrf.mxu0
      %v4414 = vadd.f32 0.0, %v4413
      %4415 = vmatmul.bf16.gmra.mxu0 %v4337
      %v4416 = vpop.f32.mrf.mxu0
      %v4417 = vadd.f32 0.0, %v4416
      %v4418 = vpop.f32.mrf.mxu0
      %v4419 = vadd.f32 0.0, %v4418
      %4420 = vmatmul.bf16.gmra.mxu0 %v4340
      %v4421 = vpop.f32.mrf.mxu0
      %v4422 = vadd.f32 0.0, %v4421
      %v4423 = vpop.f32.mrf.mxu0
      %v4424 = vadd.f32 0.0, %v4423
      %4425 = vmatmul.bf16.gmra.mxu0 %v4343
      %v4426 = vpop.f32.mrf.mxu0
      %v4427 = vadd.f32 0.0, %v4426
      %v4428 = vpop.f32.mrf.mxu0
      %v4429 = vadd.f32 0.0, %v4428
      %4430 = vmatmul.bf16.gmra.mxu0 %v4346
      %v4431 = vpop.f32.mrf.mxu0
      %v4432 = vadd.f32 0.0, %v4431
      %v4433 = vpop.f32.mrf.mxu0
      %v4434 = vadd.f32 0.0, %v4433
      %4435 = vmatmul.bf16.gmra.mxu0 %v4349
      %v4436 = vpop.f32.mrf.mxu0
      %v4437 = vadd.f32 0.0, %v4436
      %v4438 = vpop.f32.mrf.mxu0
      %v4439 = vadd.f32 0.0, %v4438
      %4440 = vmatmul.bf16.gmra.mxu0 %v4352
      %v4441 = vpop.f32.mrf.mxu0
      %v4442 = vadd.f32 0.0, %v4441
      %v4443 = vpop.f32.mrf.mxu0
      %v4444 = vadd.f32 0.0, %v4443
      %4445 = vdwg.mxu0
      %v4447 = vsel %vm973, %v4301, 0
      %4449 = vmatpush.bf16.msra.mxu0 0
      %4450 = vmatpush.bf16.msra.mxu0 0
      %4451 = vmatpush.bf16.msra.mxu0 0
      %4452 = vmatpush.bf16.msra.mxu0 0
      %4453 = vmatpush.bf16.msra.mxu0 0
      %4454 = vmatpush.bf16.msra.mxu0 0
      %4455 = vmatpush.bf16.msra.mxu0 0
      %4456 = vmatpush.bf16.msra.mxu0 %v4447
      %4457 = vmatmul.bf16.gmra.mxu0 %v926
      %v4458 = vpop.f32.mrf.mxu0
      %v4459 = vadd.f32 %v4367, %v4458
      %v4460 = vpop.f32.mrf.mxu0
      %v4461 = vadd.f32 %v4369, %v4460
      %4462 = vmatmul.bf16.gmra.mxu0 %v929
      %v4463 = vpop.f32.mrf.mxu0
      %v4464 = vadd.f32 %v4372, %v4463
      %v4465 = vpop.f32.mrf.mxu0
      %v4466 = vadd.f32 %v4374, %v4465
      %4467 = vmatmul.bf16.gmra.mxu0 %v932
      %v4468 = vpop.f32.mrf.mxu0
      %v4469 = vadd.f32 %v4377, %v4468
      %v4470 = vpop.f32.mrf.mxu0
      %v4471 = vadd.f32 %v4379, %v4470
      %4472 = vmatmul.bf16.gmra.mxu0 %v935
      %v4473 = vpop.f32.mrf.mxu0
      %v4474 = vadd.f32 %v4382, %v4473
      %v4475 = vpop.f32.mrf.mxu0
      %v4476 = vadd.f32 %v4384, %v4475
      %4477 = vmatmul.bf16.gmra.mxu0 %v938
      %v4478 = vpop.f32.mrf.mxu0
      %v4479 = vadd.f32 %v4387, %v4478
      %v4480 = vpop.f32.mrf.mxu0
      %v4481 = vadd.f32 %v4389, %v4480
      %4482 = vmatmul.bf16.gmra.mxu0 %v941
      %v4483 = vpop.f32.mrf.mxu0
      %v4484 = vadd.f32 %v4392, %v4483
      %v4485 = vpop.f32.mrf.mxu0
      %v4486 = vadd.f32 %v4394, %v4485
      %4487 = vmatmul.bf16.gmra.mxu0 %v944
      %v4488 = vpop.f32.mrf.mxu0
      %v4489 = vadd.f32 %v4397, %v4488
      %v4490 = vpop.f32.mrf.mxu0
      %v4491 = vadd.f32 %v4399, %v4490
      %4492 = vmatmul.bf16.gmra.mxu0 %v947
      %v4493 = vpop.f32.mrf.mxu0
      %v4494 = vadd.f32 %v4402, %v4493
      %v4495 = vpop.f32.mrf.mxu0
      %v4496 = vadd.f32 %v4404, %v4495
      %4497 = vmatmul.bf16.gmra.mxu0 %v950
      %v4498 = vpop.f32.mrf.mxu0
      %v4499 = vadd.f32 %v4407, %v4498
      %v4500 = vpop.f32.mrf.mxu0
      %v4501 = vadd.f32 %v4409, %v4500
      %4502 = vmatmul.bf16.gmra.mxu0 %v953
      %v4503 = vpop.f32.mrf.mxu0
      %v4504 = vadd.f32 %v4412, %v4503
      %v4505 = vpop.f32.mrf.mxu0
      %v4506 = vadd.f32 %v4414, %v4505
      %4507 = vmatmul.bf16.gmra.mxu0 %v956
      %v4508 = vpop.f32.mrf.mxu0
      %v4509 = vadd.f32 %v4417, %v4508
      %v4510 = vpop.f32.mrf.mxu0
      %v4511 = vadd.f32 %v4419, %v4510
      %4512 = vmatmul.bf16.gmra.mxu0 %v959
      %v4513 = vpop.f32.mrf.mxu0
      %v4514 = vadd.f32 %v4422, %v4513
      %v4515 = vpop.f32.mrf.mxu0
      %v4516 = vadd.f32 %v4424, %v4515
      %4517 = vmatmul.bf16.gmra.mxu0 %v962
      %v4518 = vpop.f32.mrf.mxu0
      %v4519 = vadd.f32 %v4427, %v4518
      %v4520 = vpop.f32.mrf.mxu0
      %v4521 = vadd.f32 %v4429, %v4520
      %4522 = vmatmul.bf16.gmra.mxu0 %v965
      %v4523 = vpop.f32.mrf.mxu0
      %v4524 = vadd.f32 %v4432, %v4523
      %v4525 = vpop.f32.mrf.mxu0
      %v4526 = vadd.f32 %v4434, %v4525
      %4527 = vmatmul.bf16.gmra.mxu0 %v968
      %v4528 = vpop.f32.mrf.mxu0
      %v4529 = vadd.f32 %v4437, %v4528
      %v4530 = vpop.f32.mrf.mxu0
      %v4531 = vadd.f32 %v4439, %v4530
      %4532 = vmatmul.bf16.gmra.mxu0 %v971
      %v4533 = vpop.f32.mrf.mxu0
      %v4534 = vadd.f32 %v4442, %v4533
      %v4535 = vpop.f32.mrf.mxu0
      %v4536 = vadd.f32 %v4444, %v4535
      %4537 = vdwg.mxu0
      %v4538 = vsel %vm1066, %v4459, 0.0
      %v4539 = vsel %vm1066, %v4461, 0.0
      %v4540 = vadd.f32 %v4538, %v4539
      %v4541 = vsel %vm1066, %v4464, 0.0
      %v4542 = vadd.f32 %v4540, %v4541
      %v4543 = vsel %vm1066, %v4466, 0.0
      %v4544 = vadd.f32 %v4542, %v4543
      %v4545 = vsel %vm1066, %v4469, 0.0
      %v4546 = vadd.f32 %v4544, %v4545
      %v4547 = vsel %vm1066, %v4471, 0.0
      %v4548 = vadd.f32 %v4546, %v4547
      %v4549 = vsel %vm1066, %v4474, 0.0
      %v4550 = vadd.f32 %v4548, %v4549
      %v4551 = vsel %vm1066, %v4476, 0.0
      %v4552 = vadd.f32 %v4550, %v4551
      %v4553 = vsel %vm1066, %v4479, 0.0
      %v4554 = vadd.f32 %v4552, %v4553
      %v4555 = vsel %vm1066, %v4481, 0.0
      %v4556 = vadd.f32 %v4554, %v4555
      %v4557 = vsel %vm1066, %v4484, 0.0
      %v4558 = vadd.f32 %v4556, %v4557
      %v4559 = vsel %vm1066, %v4486, 0.0
      %v4560 = vadd.f32 %v4558, %v4559
      %v4561 = vsel %vm1066, %v4489, 0.0
      %v4562 = vadd.f32 %v4560, %v4561
      %v4563 = vsel %vm1066, %v4491, 0.0
      %v4564 = vadd.f32 %v4562, %v4563
      %v4565 = vsel %vm1066, %v4494, 0.0
      %v4566 = vadd.f32 %v4564, %v4565
      %v4567 = vsel %vm1066, %v4496, 0.0
      %v4568 = vadd.f32 %v4566, %v4567
      %v4569 = vsel %vm1066, %v4499, 0.0
      %v4570 = vadd.f32 %v4568, %v4569
      %v4571 = vsel %vm1066, %v4501, 0.0
      %v4572 = vadd.f32 %v4570, %v4571
      %v4573 = vsel %vm1066, %v4504, 0.0
      %v4574 = vadd.f32 %v4572, %v4573
      %v4575 = vsel %vm1066, %v4506, 0.0
      %v4576 = vadd.f32 %v4574, %v4575
      %v4577 = vsel %vm1066, %v4509, 0.0
      %v4578 = vadd.f32 %v4576, %v4577
      %v4579 = vsel %vm1066, %v4511, 0.0
      %v4580 = vadd.f32 %v4578, %v4579
      %v4581 = vsel %vm1066, %v4514, 0.0
      %v4582 = vadd.f32 %v4580, %v4581
      %v4583 = vsel %vm1066, %v4516, 0.0
      %v4584 = vadd.f32 %v4582, %v4583
      %v4585 = vsel %vm1066, %v4519, 0.0
      %v4586 = vadd.f32 %v4584, %v4585
      %v4587 = vsel %vm1066, %v4521, 0.0
      %v4588 = vadd.f32 %v4586, %v4587
      %v4589 = vsel %vm1066, %v4524, 0.0
      %v4590 = vadd.f32 %v4588, %v4589
      %v4591 = vsel %vm1066, %v4526, 0.0
      %v4592 = vadd.f32 %v4590, %v4591
      %v4593 = vsel %vm1066, %v4529, 0.0
      %v4594 = vadd.f32 %v4592, %v4593
      %v4595 = vsel %vm1066, %v4531, 0.0
      %v4596 = vadd.f32 %v4594, %v4595
      %v4597 = vsel %vm1066, %v4534, 0.0
      %v4598 = vadd.f32 %v4596, %v4597
      %v4599 = vsel %vm1066, %v4536, 0.0
      %v4600 = vadd.f32 %v4598, %v4599
      %v4601 = vrot.slane %v4600, 4
      %v4602 = vadd.f32 %v4600, %v4601
      %v4603 = vrot.slane %v4602, 2
      %v4604 = vadd.f32 %v4602, %v4603
      %v4605 = vrot.slane %v4604, 1
      %v4606 = vadd.f32 %v4604, %v4605
      %v4607 = vmul.f32 %v4606, %v697
      %v4608 = vsub.f32 %v4459, %v4607
      %v4609 = vsub.f32 %v4461, %v4607
      %v4610 = vsub.f32 %v4464, %v4607
      %v4611 = vsub.f32 %v4466, %v4607
      %v4612 = vsub.f32 %v4469, %v4607
      %v4613 = vsub.f32 %v4471, %v4607
      %v4614 = vsub.f32 %v4474, %v4607
      %v4615 = vsub.f32 %v4476, %v4607
      %v4616 = vsub.f32 %v4479, %v4607
      %v4617 = vsub.f32 %v4481, %v4607
      %v4618 = vsub.f32 %v4484, %v4607
      %v4619 = vsub.f32 %v4486, %v4607
      %v4620 = vsub.f32 %v4489, %v4607
      %v4621 = vsub.f32 %v4491, %v4607
      %v4622 = vsub.f32 %v4494, %v4607
      %v4623 = vsub.f32 %v4496, %v4607
      %v4624 = vsub.f32 %v4499, %v4607
      %v4625 = vsub.f32 %v4501, %v4607
      %v4626 = vsub.f32 %v4504, %v4607
      %v4627 = vsub.f32 %v4506, %v4607
      %v4628 = vsub.f32 %v4509, %v4607
      %v4629 = vsub.f32 %v4511, %v4607
      %v4630 = vsub.f32 %v4514, %v4607
      %v4631 = vsub.f32 %v4516, %v4607
      %v4632 = vsub.f32 %v4519, %v4607
      %v4633 = vsub.f32 %v4521, %v4607
      %v4634 = vsub.f32 %v4524, %v4607
      %v4635 = vsub.f32 %v4526, %v4607
      %v4636 = vsub.f32 %v4529, %v4607
      %v4637 = vsub.f32 %v4531, %v4607
      %v4638 = vsub.f32 %v4534, %v4607
      %v4639 = vsub.f32 %v4536, %v4607
      %v4640 = vmul.f32 %v4608, %v4608
      %v4641 = vmul.f32 %v4609, %v4609
      %v4642 = vmul.f32 %v4610, %v4610
      %v4643 = vmul.f32 %v4611, %v4611
      %v4644 = vmul.f32 %v4612, %v4612
      %v4645 = vmul.f32 %v4613, %v4613
      %v4646 = vmul.f32 %v4614, %v4614
      %v4647 = vmul.f32 %v4615, %v4615
      %v4648 = vmul.f32 %v4616, %v4616
      %v4649 = vmul.f32 %v4617, %v4617
      %v4650 = vmul.f32 %v4618, %v4618
      %v4651 = vmul.f32 %v4619, %v4619
      %v4652 = vmul.f32 %v4620, %v4620
      %v4653 = vmul.f32 %v4621, %v4621
      %v4654 = vmul.f32 %v4622, %v4622
      %v4655 = vmul.f32 %v4623, %v4623
      %v4656 = vmul.f32 %v4624, %v4624
      %v4657 = vmul.f32 %v4625, %v4625
      %v4658 = vmul.f32 %v4626, %v4626
      %v4659 = vmul.f32 %v4627, %v4627
      %v4660 = vmul.f32 %v4628, %v4628
      %v4661 = vmul.f32 %v4629, %v4629
      %v4662 = vmul.f32 %v4630, %v4630
      %v4663 = vmul.f32 %v4631, %v4631
      %v4664 = vmul.f32 %v4632, %v4632
      %v4665 = vmul.f32 %v4633, %v4633
      %v4666 = vmul.f32 %v4634, %v4634
      %v4667 = vmul.f32 %v4635, %v4635
      %v4668 = vmul.f32 %v4636, %v4636
      %v4669 = vmul.f32 %v4637, %v4637
      %v4670 = vmul.f32 %v4638, %v4638
      %v4671 = vmul.f32 %v4639, %v4639
      %v4672 = vsel %vm1066, %v4640, 0.0
      %v4673 = vsel %vm1066, %v4641, 0.0
      %v4674 = vadd.f32 %v4672, %v4673
      %v4675 = vsel %vm1066, %v4642, 0.0
      %v4676 = vadd.f32 %v4674, %v4675
      %v4677 = vsel %vm1066, %v4643, 0.0
      %v4678 = vadd.f32 %v4676, %v4677
      %v4679 = vsel %vm1066, %v4644, 0.0
      %v4680 = vadd.f32 %v4678, %v4679
      %v4681 = vsel %vm1066, %v4645, 0.0
      %v4682 = vadd.f32 %v4680, %v4681
      %v4683 = vsel %vm1066, %v4646, 0.0
      %v4684 = vadd.f32 %v4682, %v4683
      %v4685 = vsel %vm1066, %v4647, 0.0
      %v4686 = vadd.f32 %v4684, %v4685
      %v4687 = vsel %vm1066, %v4648, 0.0
      %v4688 = vadd.f32 %v4686, %v4687
      %v4689 = vsel %vm1066, %v4649, 0.0
      %v4690 = vadd.f32 %v4688, %v4689
      %v4691 = vsel %vm1066, %v4650, 0.0
      %v4692 = vadd.f32 %v4690, %v4691
      %v4693 = vsel %vm1066, %v4651, 0.0
      %v4694 = vadd.f32 %v4692, %v4693
      %v4695 = vsel %vm1066, %v4652, 0.0
      %v4696 = vadd.f32 %v4694, %v4695
      %v4697 = vsel %vm1066, %v4653, 0.0
      %v4698 = vadd.f32 %v4696, %v4697
      %v4699 = vsel %vm1066, %v4654, 0.0
      %v4700 = vadd.f32 %v4698, %v4699
      %v4701 = vsel %vm1066, %v4655, 0.0
      %v4702 = vadd.f32 %v4700, %v4701
      %v4703 = vsel %vm1066, %v4656, 0.0
      %v4704 = vadd.f32 %v4702, %v4703
      %v4705 = vsel %vm1066, %v4657, 0.0
      %v4706 = vadd.f32 %v4704, %v4705
      %v4707 = vsel %vm1066, %v4658, 0.0
      %v4708 = vadd.f32 %v4706, %v4707
      %v4709 = vsel %vm1066, %v4659, 0.0
      %v4710 = vadd.f32 %v4708, %v4709
      %v4711 = vsel %vm1066, %v4660, 0.0
      %v4712 = vadd.f32 %v4710, %v4711
      %v4713 = vsel %vm1066, %v4661, 0.0
      %v4714 = vadd.f32 %v4712, %v4713
      %v4715 = vsel %vm1066, %v4662, 0.0
      %v4716 = vadd.f32 %v4714, %v4715
      %v4717 = vsel %vm1066, %v4663, 0.0
      %v4718 = vadd.f32 %v4716, %v4717
      %v4719 = vsel %vm1066, %v4664, 0.0
      %v4720 = vadd.f32 %v4718, %v4719
      %v4721 = vsel %vm1066, %v4665, 0.0
      %v4722 = vadd.f32 %v4720, %v4721
      %v4723 = vsel %vm1066, %v4666, 0.0
      %v4724 = vadd.f32 %v4722, %v4723
      %v4725 = vsel %vm1066, %v4667, 0.0
      %v4726 = vadd.f32 %v4724, %v4725
      %v4727 = vsel %vm1066, %v4668, 0.0
      %v4728 = vadd.f32 %v4726, %v4727
      %v4729 = vsel %vm1066, %v4669, 0.0
      %v4730 = vadd.f32 %v4728, %v4729
      %v4731 = vsel %vm1066, %v4670, 0.0
      %v4732 = vadd.f32 %v4730, %v4731
      %v4733 = vsel %vm1066, %v4671, 0.0
      %v4734 = vadd.f32 %v4732, %v4733
      %v4735 = vrot.slane %v4734, 4
      %v4736 = vadd.f32 %v4734, %v4735
      %v4737 = vrot.slane %v4736, 2
      %v4738 = vadd.f32 %v4736, %v4737
      %v4739 = vrot.slane %v4738, 1
      %v4740 = vadd.f32 %v4738, %v4739
      %v4741 = vmul.f32 %v4740, %v697
      %v4742 = vadd.f32 %v4741, 1e-05
      %v4743 = vrsqrt.pop %v4742
      %v4744 = vmul.f32 %v4743, %v4742
      %v4745 = vmul.f32 %v4744, %v4743
      %v4746 = vmul.f32 0.5, %v4745
      %v4747 = vsub.f32 1.5, %v4746
      %v4748 = vmul.f32 %v4743, %v4747
      %vm4749 = vweird.f32 %v4742
      %vm4750 = vweird.f32 %v4743
      %vm4751 = vmor %vm4749, %vm4750
      %v4752 = vsel %vm4751, %v4743, %v4748
      %v4753 = vmul.f32 %v4608, %v4752
      %v4754 = vmul.f32 %v4609, %v4752
      %v4755 = vmul.f32 %v4610, %v4752
      %v4756 = vmul.f32 %v4611, %v4752
      %v4757 = vmul.f32 %v4612, %v4752
      %v4758 = vmul.f32 %v4613, %v4752
      %v4759 = vmul.f32 %v4614, %v4752
      %v4760 = vmul.f32 %v4615, %v4752
      %v4761 = vmul.f32 %v4616, %v4752
      %v4762 = vmul.f32 %v4617, %v4752
      %v4763 = vmul.f32 %v4618, %v4752
      %v4764 = vmul.f32 %v4619, %v4752
      %v4765 = vmul.f32 %v4620, %v4752
      %v4766 = vmul.f32 %v4621, %v4752
      %v4767 = vmul.f32 %v4622, %v4752
      %v4768 = vmul.f32 %v4623, %v4752
      %v4769 = vmul.f32 %v4624, %v4752
      %v4770 = vmul.f32 %v4625, %v4752
      %v4771 = vmul.f32 %v4626, %v4752
      %v4772 = vmul.f32 %v4627, %v4752
      %v4773 = vmul.f32 %v4628, %v4752
      %v4774 = vmul.f32 %v4629, %v4752
      %v4775 = vmul.f32 %v4630, %v4752
      %v4776 = vmul.f32 %v4631, %v4752
      %v4777 = vmul.f32 %v4632, %v4752
      %v4778 = vmul.f32 %v4633, %v4752
      %v4779 = vmul.f32 %v4634, %v4752
      %v4780 = vmul.f32 %v4635, %v4752
      %v4781 = vmul.f32 %v4636, %v4752
      %v4782 = vmul.f32 %v4637, %v4752
      %v4783 = vmul.f32 %v4638, %v4752
      %v4784 = vmul.f32 %v4639, %v4752
      %v4785 = vmax.f32 %v4753, 0.0
      %v4786 = vmax.f32 %v4754, 0.0
      %v4787 = vmax.f32 %v4755, 0.0
      %v4788 = vmax.f32 %v4756, 0.0
      %v4789 = vmax.f32 %v4757, 0.0
      %v4790 = vmax.f32 %v4758, 0.0
      %v4791 = vmax.f32 %v4759, 0.0
      %v4792 = vmax.f32 %v4760, 0.0
      %v4793 = vmax.f32 %v4761, 0.0
      %v4794 = vmax.f32 %v4762, 0.0
      %v4795 = vmax.f32 %v4763, 0.0
      %v4796 = vmax.f32 %v4764, 0.0
      %v4797 = vmax.f32 %v4765, 0.0
      %v4798 = vmax.f32 %v4766, 0.0
      %v4799 = vmax.f32 %v4767, 0.0
      %v4800 = vmax.f32 %v4768, 0.0
      %v4801 = vmax.f32 %v4769, 0.0
      %v4802 = vmax.f32 %v4770, 0.0
      %v4803 = vmax.f32 %v4771, 0.0
      %v4804 = vmax.f32 %v4772, 0.0
      %v4805 = vmax.f32 %v4773, 0.0
      %v4806 = vmax.f32 %v4774, 0.0
      %v4807 = vmax.f32 %v4775, 0.0
      %v4808 = vmax.f32 %v4776, 0.0
      %v4809 = vmax.f32 %v4777, 0.0
      %v4810 = vmax.f32 %v4778, 0.0
      %v4811 = vmax.f32 %v4779, 0.0
      %v4812 = vmax.f32 %v4780, 0.0
      %v4813 = vmax.f32 %v4781, 0.0
      %v4814 = vmax.f32 %v4782, 0.0
      %v4815 = vmax.f32 %v4783, 0.0
      %v4816 = vmax.f32 %v4784, 0.0
      %v4817 = vpack.c.bf16 %v4786, %v4785
      %v4818 = vpack.c.bf16 %v4788, %v4787
      %v4819 = vpack.c.bf16 %v4790, %v4789
      %v4820 = vpack.c.bf16 %v4792, %v4791
      %v4821 = vpack.c.bf16 %v4794, %v4793
      %v4822 = vpack.c.bf16 %v4796, %v4795
      %v4823 = vpack.c.bf16 %v4798, %v4797
      %v4824 = vpack.c.bf16 %v4800, %v4799
      %v4825 = vpack.c.bf16 %v4802, %v4801
      %v4826 = vpack.c.bf16 %v4804, %v4803
      %v4827 = vpack.c.bf16 %v4806, %v4805
      %v4828 = vpack.c.bf16 %v4808, %v4807
      %v4829 = vpack.c.bf16 %v4810, %v4809
      %v4830 = vpack.c.bf16 %v4812, %v4811
      %v4831 = vpack.c.bf16 %v4814, %v4813
      %v4832 = vpack.c.bf16 %v4816, %v4815
      %s4833 = scalar_lea.vmem %s2, 8
      %v4834 = vld [vmem:[%s4833] sm:$0xf]
      %v4835 = vld [vmem:[%s4833 + $0x4] sm:$0xf]
      %v4838 = vunpack.c.l.b16 %v4834
      %v4839 = vunpack.c.l.b16 %v4835
      %v4840 = vpack.c.b16 %v4839, %v4838
      %v4843 = vsel %vm1066, %v4817, 0
      %v4846 = vsel %vm1066, %v4818, 0
      %v4849 = vsel %vm1066, %v4819, 0
      %v4852 = vsel %vm1066, %v4820, 0
      %v4855 = vsel %vm1066, %v4821, 0
      %v4858 = vsel %vm1066, %v4822, 0
      %v4861 = vsel %vm1066, %v4823, 0
      %v4864 = vsel %vm1066, %v4824, 0
      %v4867 = vsel %vm1066, %v4825, 0
      %v4870 = vsel %vm1066, %v4826, 0
      %v4873 = vsel %vm1066, %v4827, 0
      %v4876 = vsel %vm1066, %v4828, 0
      %v4879 = vsel %vm1066, %v4829, 0
      %v4882 = vsel %vm1066, %v4830, 0
      %v4885 = vsel %vm1066, %v4831, 0
      %v4888 = vsel %vm1066, %v4832, 0
      %4890 = vmatpush.bf16.msra.mxu0 0
      %4891 = vmatpush.bf16.msra.mxu0 0
      %4892 = vmatpush.bf16.msra.mxu0 0
      %4893 = vmatpush.bf16.msra.mxu0 0
      %4894 = vmatpush.bf16.msra.mxu0 0
      %4895 = vmatpush.bf16.msra.mxu0 0
      %4896 = vmatpush.bf16.msra.mxu0 0
      %4897 = vmatpush.bf16.msra.mxu0 %v4840
      %4898 = vmatmul.bf16.gmra.mxu0 %v4843
      %v4899 = vpop.f32.mrf.mxu0
      %v4900 = vadd.f32 0.0, %v4899
      %v4901 = vpop.f32.mrf.mxu0
      %v4902 = vadd.f32 0.0, %v4901
      %4903 = vmatmul.bf16.gmra.mxu0 %v4846
      %v4904 = vpop.f32.mrf.mxu0
      %v4905 = vadd.f32 0.0, %v4904
      %v4906 = vpop.f32.mrf.mxu0
      %v4907 = vadd.f32 0.0, %v4906
      %4908 = vmatmul.bf16.gmra.mxu0 %v4849
      %v4909 = vpop.f32.mrf.mxu0
      %v4910 = vadd.f32 0.0, %v4909
      %v4911 = vpop.f32.mrf.mxu0
      %v4912 = vadd.f32 0.0, %v4911
      %4913 = vmatmul.bf16.gmra.mxu0 %v4852
      %v4914 = vpop.f32.mrf.mxu0
      %v4915 = vadd.f32 0.0, %v4914
      %v4916 = vpop.f32.mrf.mxu0
      %v4917 = vadd.f32 0.0, %v4916
      %4918 = vmatmul.bf16.gmra.mxu0 %v4855
      %v4919 = vpop.f32.mrf.mxu0
      %v4920 = vadd.f32 0.0, %v4919
      %v4921 = vpop.f32.mrf.mxu0
      %v4922 = vadd.f32 0.0, %v4921
      %4923 = vmatmul.bf16.gmra.mxu0 %v4858
      %v4924 = vpop.f32.mrf.mxu0
      %v4925 = vadd.f32 0.0, %v4924
      %v4926 = vpop.f32.mrf.mxu0
      %v4927 = vadd.f32 0.0, %v4926
      %4928 = vmatmul.bf16.gmra.mxu0 %v4861
      %v4929 = vpop.f32.mrf.mxu0
      %v4930 = vadd.f32 0.0, %v4929
      %v4931 = vpop.f32.mrf.mxu0
      %v4932 = vadd.f32 0.0, %v4931
      %4933 = vmatmul.bf16.gmra.mxu0 %v4864
      %v4934 = vpop.f32.mrf.mxu0
      %v4935 = vadd.f32 0.0, %v4934
      %v4936 = vpop.f32.mrf.mxu0
      %v4937 = vadd.f32 0.0, %v4936
      %4938 = vmatmul.bf16.gmra.mxu0 %v4867
      %v4939 = vpop.f32.mrf.mxu0
      %v4940 = vadd.f32 0.0, %v4939
      %v4941 = vpop.f32.mrf.mxu0
      %v4942 = vadd.f32 0.0, %v4941
      %4943 = vmatmul.bf16.gmra.mxu0 %v4870
      %v4944 = vpop.f32.mrf.mxu0
      %v4945 = vadd.f32 0.0, %v4944
      %v4946 = vpop.f32.mrf.mxu0
      %v4947 = vadd.f32 0.0, %v4946
      %4948 = vmatmul.bf16.gmra.mxu0 %v4873
      %v4949 = vpop.f32.mrf.mxu0
      %v4950 = vadd.f32 0.0, %v4949
      %v4951 = vpop.f32.mrf.mxu0
      %v4952 = vadd.f32 0.0, %v4951
      %4953 = vmatmul.bf16.gmra.mxu0 %v4876
      %v4954 = vpop.f32.mrf.mxu0
      %v4955 = vadd.f32 0.0, %v4954
      %v4956 = vpop.f32.mrf.mxu0
      %v4957 = vadd.f32 0.0, %v4956
      %4958 = vmatmul.bf16.gmra.mxu0 %v4879
      %v4959 = vpop.f32.mrf.mxu0
      %v4960 = vadd.f32 0.0, %v4959
      %v4961 = vpop.f32.mrf.mxu0
      %v4962 = vadd.f32 0.0, %v4961
      %4963 = vmatmul.bf16.gmra.mxu0 %v4882
      %v4964 = vpop.f32.mrf.mxu0
      %v4965 = vadd.f32 0.0, %v4964
      %v4966 = vpop.f32.mrf.mxu0
      %v4967 = vadd.f32 0.0, %v4966
      %4968 = vmatmul.bf16.gmra.mxu0 %v4885
      %v4969 = vpop.f32.mrf.mxu0
      %v4970 = vadd.f32 0.0, %v4969
      %v4971 = vpop.f32.mrf.mxu0
      %v4972 = vadd.f32 0.0, %v4971
      %4973 = vmatmul.bf16.gmra.mxu0 %v4888
      %v4974 = vpop.f32.mrf.mxu0
      %v4975 = vadd.f32 0.0, %v4974
      %v4976 = vpop.f32.mrf.mxu0
      %v4977 = vadd.f32 0.0, %v4976
      %4978 = vdwg.mxu0
      %v4979 = vrot.slane %v4900, 7
      %v4980 = vrot.slane %v4902, 7
      %v4981 = vrot.slane %v4905, 7
      %v4982 = vrot.slane %v4907, 7
      %v4983 = vrot.slane %v4910, 7
      %v4984 = vrot.slane %v4912, 7
      %v4985 = vrot.slane %v4915, 7
      %v4986 = vrot.slane %v4917, 7
      %v4987 = vrot.slane %v4920, 7
      %v4988 = vrot.slane %v4922, 7
      %v4989 = vrot.slane %v4925, 7
      %v4990 = vrot.slane %v4927, 7
      %v4991 = vrot.slane %v4930, 7
      %v4992 = vrot.slane %v4932, 7
      %v4993 = vrot.slane %v4935, 7
      %v4994 = vrot.slane %v4937, 7
      %v4995 = vrot.slane %v4940, 7
      %v4996 = vrot.slane %v4942, 7
      %v4997 = vrot.slane %v4945, 7
      %v4998 = vrot.slane %v4947, 7
      %v4999 = vrot.slane %v4950, 7
      %v5000 = vrot.slane %v4952, 7
      %v5001 = vrot.slane %v4955, 7
      %v5002 = vrot.slane %v4957, 7
      %v5003 = vrot.slane %v4960, 7
      %v5004 = vrot.slane %v4962, 7
      %v5005 = vrot.slane %v4965, 7
      %v5006 = vrot.slane %v4967, 7
      %v5007 = vrot.slane %v4970, 7
      %v5008 = vrot.slane %v4972, 7
      %v5009 = vrot.slane %v4975, 7
      %v5010 = vrot.slane %v4977, 7
      %v5011 = vsel %vm1539, %v5009, %v5010
      %v5012 = vsel %vm1539, %v5008, %v5009
      %v5013 = vsel %vm1539, %v5007, %v5008
      %v5014 = vsel %vm1539, %v5006, %v5007
      %v5015 = vsel %vm1539, %v5005, %v5006
      %v5016 = vsel %vm1539, %v5004, %v5005
      %v5017 = vsel %vm1539, %v5003, %v5004
      %v5018 = vsel %vm1539, %v5002, %v5003
      %v5019 = vsel %vm1539, %v5001, %v5002
      %v5020 = vsel %vm1539, %v5000, %v5001
      %v5021 = vsel %vm1539, %v4999, %v5000
      %v5022 = vsel %vm1539, %v4998, %v4999
      %v5023 = vsel %vm1539, %v4997, %v4998
      %v5024 = vsel %vm1539, %v4996, %v4997
      %v5025 = vsel %vm1539, %v4995, %v4996
      %v5026 = vsel %vm1539, %v4994, %v4995
      %v5027 = vsel %vm1539, %v4993, %v4994
      %v5028 = vsel %vm1539, %v4992, %v4993
      %v5029 = vsel %vm1539, %v4991, %v4992
      %v5030 = vsel %vm1539, %v4990, %v4991
      %v5031 = vsel %vm1539, %v4989, %v4990
      %v5032 = vsel %vm1539, %v4988, %v4989
      %v5033 = vsel %vm1539, %v4987, %v4988
      %v5034 = vsel %vm1539, %v4986, %v4987
      %v5035 = vsel %vm1539, %v4985, %v4986
      %v5036 = vsel %vm1539, %v4984, %v4985
      %v5037 = vsel %vm1539, %v4983, %v4984
      %v5038 = vsel %vm1539, %v4982, %v4983
      %v5039 = vsel %vm1539, %v4981, %v4982
      %v5040 = vsel %vm1539, %v4980, %v4981
      %v5041 = vsel %vm1539, %v4979, %v4980
      %v5042 = vsel %vm1539, %v5010, %v4979
      %v5043 = vsel %vm1700, %v5012, 0.0
      %v5044 = vsel %vm1701, %v5011, 0.0
      %v5045 = vsel %vm1702, %v5042, 0.0
      %v5046 = vsel %vm1703, %v5041, 0.0
      %v5047 = vsel %vm1704, %v5040, 0.0
      %v5048 = vsel %vm1705, %v5039, 0.0
      %v5049 = vsel %vm1706, %v5038, 0.0
      %v5050 = vsel %vm1707, %v5037, 0.0
      %v5051 = vsel %vm1708, %v5036, 0.0
      %v5052 = vsel %vm1709, %v5035, 0.0
      %v5053 = vsel %vm1710, %v5034, 0.0
      %v5054 = vsel %vm1711, %v5033, 0.0
      %v5055 = vsel %vm1712, %v5032, 0.0
      %v5056 = vsel %vm1713, %v5031, 0.0
      %v5057 = vsel %vm1714, %v5030, 0.0
      %v5058 = vsel %vm1715, %v5029, 0.0
      %v5059 = vsel %vm1716, %v5028, 0.0
      %v5060 = vsel %vm1717, %v5027, 0.0
      %v5061 = vsel %vm1718, %v5026, 0.0
      %v5062 = vsel %vm1719, %v5025, 0.0
      %v5063 = vsel %vm1720, %v5024, 0.0
      %v5064 = vsel %vm1721, %v5023, 0.0
      %v5065 = vsel %vm1722, %v5022, 0.0
      %v5066 = vsel %vm1723, %v5021, 0.0
      %v5067 = vsel %vm1724, %v5020, 0.0
      %v5068 = vsel %vm1725, %v5019, 0.0
      %v5069 = vsel %vm1726, %v5018, 0.0
      %v5070 = vsel %vm1727, %v5017, 0.0
      %v5071 = vsel %vm1728, %v5016, 0.0
      %v5072 = vsel %vm1729, %v5015, 0.0
      %v5073 = vsel %vm1730, %v5014, 0.0
      %v5074 = vsel %vm1731, %v5013, 0.0
      %v5075 = vadd.f32 %v5043, 0.0
      %v5076 = vadd.f32 %v5044, 0.0
      %v5077 = vadd.f32 %v5045, 0.0
      %v5078 = vadd.f32 %v5046, 0.0
      %v5079 = vadd.f32 %v5047, 0.0
      %v5080 = vadd.f32 %v5048, 0.0
      %v5081 = vadd.f32 %v5049, 0.0
      %v5082 = vadd.f32 %v5050, 0.0
      %v5083 = vadd.f32 %v5051, 0.0
      %v5084 = vadd.f32 %v5052, 0.0
      %v5085 = vadd.f32 %v5053, 0.0
      %v5086 = vadd.f32 %v5054, 0.0
      %v5087 = vadd.f32 %v5055, 0.0
      %v5088 = vadd.f32 %v5056, 0.0
      %v5089 = vadd.f32 %v5057, 0.0
      %v5090 = vadd.f32 %v5058, 0.0
      %v5091 = vadd.f32 %v5059, 0.0
      %v5092 = vadd.f32 %v5060, 0.0
      %v5093 = vadd.f32 %v5061, 0.0
      %v5094 = vadd.f32 %v5062, 0.0
      %v5095 = vadd.f32 %v5063, 0.0
      %v5096 = vadd.f32 %v5064, 0.0
      %v5097 = vadd.f32 %v5065, 0.0
      %v5098 = vadd.f32 %v5066, 0.0
      %v5099 = vadd.f32 %v5067, 0.0
      %v5100 = vadd.f32 %v5068, 0.0
      %v5101 = vadd.f32 %v5069, 0.0
      %v5102 = vadd.f32 %v5070, 0.0
      %v5103 = vadd.f32 %v5071, 0.0
      %v5104 = vadd.f32 %v5072, 0.0
      %v5105 = vadd.f32 %v5073, 0.0
      %v5106 = vadd.f32 %v5074, 0.0
      %5139 = vrot.lane.b32.xlu0 %v4900, 124
      %v5140 = vpop.permute.xlu0 %5139
      %5141 = vrot.lane.b32.xlu0 %v4902, 124
      %v5142 = vpop.permute.xlu0 %5141
      %5143 = vrot.lane.b32.xlu0 %v4905, 124
      %v5144 = vpop.permute.xlu0 %5143
      %5145 = vrot.lane.b32.xlu0 %v4907, 124
      %v5146 = vpop.permute.xlu0 %5145
      %5147 = vrot.lane.b32.xlu0 %v4910, 124
      %v5148 = vpop.permute.xlu0 %5147
      %5149 = vrot.lane.b32.xlu0 %v4912, 124
      %v5150 = vpop.permute.xlu0 %5149
      %5151 = vrot.lane.b32.xlu0 %v4915, 124
      %v5152 = vpop.permute.xlu0 %5151
      %5153 = vrot.lane.b32.xlu0 %v4917, 124
      %v5154 = vpop.permute.xlu0 %5153
      %5155 = vrot.lane.b32.xlu0 %v4920, 124
      %v5156 = vpop.permute.xlu0 %5155
      %5157 = vrot.lane.b32.xlu0 %v4922, 124
      %v5158 = vpop.permute.xlu0 %5157
      %5159 = vrot.lane.b32.xlu0 %v4925, 124
      %v5160 = vpop.permute.xlu0 %5159
      %5161 = vrot.lane.b32.xlu0 %v4927, 124
      %v5162 = vpop.permute.xlu0 %5161
      %5163 = vrot.lane.b32.xlu0 %v4930, 124
      %v5164 = vpop.permute.xlu0 %5163
      %5165 = vrot.lane.b32.xlu0 %v4932, 124
      %v5166 = vpop.permute.xlu0 %5165
      %5167 = vrot.lane.b32.xlu0 %v4935, 124
      %v5168 = vpop.permute.xlu0 %5167
      %5169 = vrot.lane.b32.xlu0 %v4937, 124
      %v5170 = vpop.permute.xlu0 %5169
      %5171 = vrot.lane.b32.xlu0 %v4940, 124
      %v5172 = vpop.permute.xlu0 %5171
      %5173 = vrot.lane.b32.xlu0 %v4942, 124
      %v5174 = vpop.permute.xlu0 %5173
      %5175 = vrot.lane.b32.xlu0 %v4945, 124
      %v5176 = vpop.permute.xlu0 %5175
      %5177 = vrot.lane.b32.xlu0 %v4947, 124
      %v5178 = vpop.permute.xlu0 %5177
      %5179 = vrot.lane.b32.xlu0 %v4950, 124
      %v5180 = vpop.permute.xlu0 %5179
      %5181 = vrot.lane.b32.xlu0 %v4952, 124
      %v5182 = vpop.permute.xlu0 %5181
      %5183 = vrot.lane.b32.xlu0 %v4955, 124
      %v5184 = vpop.permute.xlu0 %5183
      %5185 = vrot.lane.b32.xlu0 %v4957, 124
      %v5186 = vpop.permute.xlu0 %5185
      %5187 = vrot.lane.b32.xlu0 %v4960, 124
      %v5188 = vpop.permute.xlu0 %5187
      %5189 = vrot.lane.b32.xlu0 %v4962, 124
      %v5190 = vpop.permute.xlu0 %5189
      %5191 = vrot.lane.b32.xlu0 %v4965, 124
      %v5192 = vpop.permute.xlu0 %5191
      %5193 = vrot.lane.b32.xlu0 %v4967, 124
      %v5194 = vpop.permute.xlu0 %5193
      %5195 = vrot.lane.b32.xlu0 %v4970, 124
      %v5196 = vpop.permute.xlu0 %5195
      %5197 = vrot.lane.b32.xlu0 %v4972, 124
      %v5198 = vpop.permute.xlu0 %5197
      %5199 = vrot.lane.b32.xlu0 %v4975, 124
      %v5200 = vpop.permute.xlu0 %5199
      %5201 = vrot.lane.b32.xlu0 %v4977, 124
      %v5202 = vpop.permute.xlu0 %5201
      %v5235 = vsel %vm1956, %v5200, 0.0
      %v5236 = vsel %vm1957, %v5202, 0.0
      %v5237 = vsel %vm1958, %v5140, 0.0
      %v5238 = vsel %vm1959, %v5142, 0.0
      %v5239 = vsel %vm1960, %v5144, 0.0
      %v5240 = vsel %vm1961, %v5146, 0.0
      %v5241 = vsel %vm1962, %v5148, 0.0
      %v5242 = vsel %vm1963, %v5150, 0.0
      %v5243 = vsel %vm1964, %v5152, 0.0
      %v5244 = vsel %vm1965, %v5154, 0.0
      %v5245 = vsel %vm1966, %v5156, 0.0
      %v5246 = vsel %vm1967, %v5158, 0.0
      %v5247 = vsel %vm1968, %v5160, 0.0
      %v5248 = vsel %vm1969, %v5162, 0.0
      %v5249 = vsel %vm1970, %v5164, 0.0
      %v5250 = vsel %vm1971, %v5166, 0.0
      %v5251 = vsel %vm1972, %v5168, 0.0
      %v5252 = vsel %vm1973, %v5170, 0.0
      %v5253 = vsel %vm1974, %v5172, 0.0
      %v5254 = vsel %vm1975, %v5174, 0.0
      %v5255 = vsel %vm1976, %v5176, 0.0
      %v5256 = vsel %vm1977, %v5178, 0.0
      %v5257 = vsel %vm1978, %v5180, 0.0
      %v5258 = vsel %vm1979, %v5182, 0.0
      %v5259 = vsel %vm1980, %v5184, 0.0
      %v5260 = vsel %vm1981, %v5186, 0.0
      %v5261 = vsel %vm1982, %v5188, 0.0
      %v5262 = vsel %vm1983, %v5190, 0.0
      %v5263 = vsel %vm1984, %v5192, 0.0
      %v5264 = vsel %vm1985, %v5194, 0.0
      %v5265 = vsel %vm1986, %v5196, 0.0
      %v5266 = vsel %vm1987, %v5198, 0.0
      %v5267 = vadd.f32 %v5075, %v5235
      %v5268 = vadd.f32 %v5076, %v5236
      %v5269 = vadd.f32 %v5077, %v5237
      %v5270 = vadd.f32 %v5078, %v5238
      %v5271 = vadd.f32 %v5079, %v5239
      %v5272 = vadd.f32 %v5080, %v5240
      %v5273 = vadd.f32 %v5081, %v5241
      %v5274 = vadd.f32 %v5082, %v5242
      %v5275 = vadd.f32 %v5083, %v5243
      %v5276 = vadd.f32 %v5084, %v5244
      %v5277 = vadd.f32 %v5085, %v5245
      %v5278 = vadd.f32 %v5086, %v5246
      %v5279 = vadd.f32 %v5087, %v5247
      %v5280 = vadd.f32 %v5088, %v5248
      %v5281 = vadd.f32 %v5089, %v5249
      %v5282 = vadd.f32 %v5090, %v5250
      %v5283 = vadd.f32 %v5091, %v5251
      %v5284 = vadd.f32 %v5092, %v5252
      %v5285 = vadd.f32 %v5093, %v5253
      %v5286 = vadd.f32 %v5094, %v5254
      %v5287 = vadd.f32 %v5095, %v5255
      %v5288 = vadd.f32 %v5096, %v5256
      %v5289 = vadd.f32 %v5097, %v5257
      %v5290 = vadd.f32 %v5098, %v5258
      %v5291 = vadd.f32 %v5099, %v5259
      %v5292 = vadd.f32 %v5100, %v5260
      %v5293 = vadd.f32 %v5101, %v5261
      %v5294 = vadd.f32 %v5102, %v5262
      %v5295 = vadd.f32 %v5103, %v5263
      %v5296 = vadd.f32 %v5104, %v5264
      %v5297 = vadd.f32 %v5105, %v5265
      %v5298 = vadd.f32 %v5106, %v5266
      %5299 = vrot.lane.b32.xlu0 %v4900, 120
      %v5300 = vpop.permute.xlu0 %5299
      %5301 = vrot.lane.b32.xlu0 %v4902, 120
      %v5302 = vpop.permute.xlu0 %5301
      %5303 = vrot.lane.b32.xlu0 %v4905, 120
      %v5304 = vpop.permute.xlu0 %5303
      %5305 = vrot.lane.b32.xlu0 %v4907, 120
      %v5306 = vpop.permute.xlu0 %5305
      %5307 = vrot.lane.b32.xlu0 %v4910, 120
      %v5308 = vpop.permute.xlu0 %5307
      %5309 = vrot.lane.b32.xlu0 %v4912, 120
      %v5310 = vpop.permute.xlu0 %5309
      %5311 = vrot.lane.b32.xlu0 %v4915, 120
      %v5312 = vpop.permute.xlu0 %5311
      %5313 = vrot.lane.b32.xlu0 %v4917, 120
      %v5314 = vpop.permute.xlu0 %5313
      %5315 = vrot.lane.b32.xlu0 %v4920, 120
      %v5316 = vpop.permute.xlu0 %5315
      %5317 = vrot.lane.b32.xlu0 %v4922, 120
      %v5318 = vpop.permute.xlu0 %5317
      %5319 = vrot.lane.b32.xlu0 %v4925, 120
      %v5320 = vpop.permute.xlu0 %5319
      %5321 = vrot.lane.b32.xlu0 %v4927, 120
      %v5322 = vpop.permute.xlu0 %5321
      %5323 = vrot.lane.b32.xlu0 %v4930, 120
      %v5324 = vpop.permute.xlu0 %5323
      %5325 = vrot.lane.b32.xlu0 %v4932, 120
      %v5326 = vpop.permute.xlu0 %5325
      %5327 = vrot.lane.b32.xlu0 %v4935, 120
      %v5328 = vpop.permute.xlu0 %5327
      %5329 = vrot.lane.b32.xlu0 %v4937, 120
      %v5330 = vpop.permute.xlu0 %5329
      %5331 = vrot.lane.b32.xlu0 %v4940, 120
      %v5332 = vpop.permute.xlu0 %5331
      %5333 = vrot.lane.b32.xlu0 %v4942, 120
      %v5334 = vpop.permute.xlu0 %5333
      %5335 = vrot.lane.b32.xlu0 %v4945, 120
      %v5336 = vpop.permute.xlu0 %5335
      %5337 = vrot.lane.b32.xlu0 %v4947, 120
      %v5338 = vpop.permute.xlu0 %5337
      %5339 = vrot.lane.b32.xlu0 %v4950, 120
      %v5340 = vpop.permute.xlu0 %5339
      %5341 = vrot.lane.b32.xlu0 %v4952, 120
      %v5342 = vpop.permute.xlu0 %5341
      %5343 = vrot.lane.b32.xlu0 %v4955, 120
      %v5344 = vpop.permute.xlu0 %5343
      %5345 = vrot.lane.b32.xlu0 %v4957, 120
      %v5346 = vpop.permute.xlu0 %5345
      %5347 = vrot.lane.b32.xlu0 %v4960, 120
      %v5348 = vpop.permute.xlu0 %5347
      %5349 = vrot.lane.b32.xlu0 %v4962, 120
      %v5350 = vpop.permute.xlu0 %5349
      %5351 = vrot.lane.b32.xlu0 %v4965, 120
      %v5352 = vpop.permute.xlu0 %5351
      %5353 = vrot.lane.b32.xlu0 %v4967, 120
      %v5354 = vpop.permute.xlu0 %5353
      %5355 = vrot.lane.b32.xlu0 %v4970, 120
      %v5356 = vpop.permute.xlu0 %5355
      %5357 = vrot.lane.b32.xlu0 %v4972, 120
      %v5358 = vpop.permute.xlu0 %5357
      %5359 = vrot.lane.b32.xlu0 %v4975, 120
      %v5360 = vpop.permute.xlu0 %5359
      %5361 = vrot.lane.b32.xlu0 %v4977, 120
      %v5362 = vpop.permute.xlu0 %5361
      %v5395 = vrot.slane %v5300, 1
      %v5396 = vrot.slane %v5302, 1
      %v5397 = vrot.slane %v5304, 1
      %v5398 = vrot.slane %v5306, 1
      %v5399 = vrot.slane %v5308, 1
      %v5400 = vrot.slane %v5310, 1
      %v5401 = vrot.slane %v5312, 1
      %v5402 = vrot.slane %v5314, 1
      %v5403 = vrot.slane %v5316, 1
      %v5404 = vrot.slane %v5318, 1
      %v5405 = vrot.slane %v5320, 1
      %v5406 = vrot.slane %v5322, 1
      %v5407 = vrot.slane %v5324, 1
      %v5408 = vrot.slane %v5326, 1
      %v5409 = vrot.slane %v5328, 1
      %v5410 = vrot.slane %v5330, 1
      %v5411 = vrot.slane %v5332, 1
      %v5412 = vrot.slane %v5334, 1
      %v5413 = vrot.slane %v5336, 1
      %v5414 = vrot.slane %v5338, 1
      %v5415 = vrot.slane %v5340, 1
      %v5416 = vrot.slane %v5342, 1
      %v5417 = vrot.slane %v5344, 1
      %v5418 = vrot.slane %v5346, 1
      %v5419 = vrot.slane %v5348, 1
      %v5420 = vrot.slane %v5350, 1
      %v5421 = vrot.slane %v5352, 1
      %v5422 = vrot.slane %v5354, 1
      %v5423 = vrot.slane %v5356, 1
      %v5424 = vrot.slane %v5358, 1
      %v5425 = vrot.slane %v5360, 1
      %v5426 = vrot.slane %v5362, 1
      %v5427 = vsel %vm2180, %v5425, %v5426
      %v5428 = vsel %vm2180, %v5424, %v5425
      %v5429 = vsel %vm2180, %v5423, %v5424
      %v5430 = vsel %vm2180, %v5422, %v5423
      %v5431 = vsel %vm2180, %v5421, %v5422
      %v5432 = vsel %vm2180, %v5420, %v5421
      %v5433 = vsel %vm2180, %v5419, %v5420
      %v5434 = vsel %vm2180, %v5418, %v5419
      %v5435 = vsel %vm2180, %v5417, %v5418
      %v5436 = vsel %vm2180, %v5416, %v5417
      %v5437 = vsel %vm2180, %v5415, %v5416
      %v5438 = vsel %vm2180, %v5414, %v5415
      %v5439 = vsel %vm2180, %v5413, %v5414
      %v5440 = vsel %vm2180, %v5412, %v5413
      %v5441 = vsel %vm2180, %v5411, %v5412
      %v5442 = vsel %vm2180, %v5410, %v5411
      %v5443 = vsel %vm2180, %v5409, %v5410
      %v5444 = vsel %vm2180, %v5408, %v5409
      %v5445 = vsel %vm2180, %v5407, %v5408
      %v5446 = vsel %vm2180, %v5406, %v5407
      %v5447 = vsel %vm2180, %v5405, %v5406
      %v5448 = vsel %vm2180, %v5404, %v5405
      %v5449 = vsel %vm2180, %v5403, %v5404
      %v5450 = vsel %vm2180, %v5402, %v5403
      %v5451 = vsel %vm2180, %v5401, %v5402
      %v5452 = vsel %vm2180, %v5400, %v5401
      %v5453 = vsel %vm2180, %v5399, %v5400
      %v5454 = vsel %vm2180, %v5398, %v5399
      %v5455 = vsel %vm2180, %v5397, %v5398
      %v5456 = vsel %vm2180, %v5396, %v5397
      %v5457 = vsel %vm2180, %v5395, %v5396
      %v5458 = vsel %vm2180, %v5426, %v5395
      %v5459 = vsel %vm2309, %v5427, 0.0
      %v5460 = vsel %vm2310, %v5458, 0.0
      %v5461 = vsel %vm2311, %v5457, 0.0
      %v5462 = vsel %vm2312, %v5456, 0.0
      %v5463 = vsel %vm2313, %v5455, 0.0
      %v5464 = vsel %vm2314, %v5454, 0.0
      %v5465 = vsel %vm2315, %v5453, 0.0
      %v5466 = vsel %vm2316, %v5452, 0.0
      %v5467 = vsel %vm2317, %v5451, 0.0
      %v5468 = vsel %vm2318, %v5450, 0.0
      %v5469 = vsel %vm2319, %v5449, 0.0
      %v5470 = vsel %vm2320, %v5448, 0.0
      %v5471 = vsel %vm2321, %v5447, 0.0
      %v5472 = vsel %vm2322, %v5446, 0.0
      %v5473 = vsel %vm2323, %v5445, 0.0
      %v5474 = vsel %vm2324, %v5444, 0.0
      %v5475 = vsel %vm2325, %v5443, 0.0
      %v5476 = vsel %vm2326, %v5442, 0.0
      %v5477 = vsel %vm2327, %v5441, 0.0
      %v5478 = vsel %vm2328, %v5440, 0.0
      %v5479 = vsel %vm2329, %v5439, 0.0
      %v5480 = vsel %vm2330, %v5438, 0.0
      %v5481 = vsel %vm2331, %v5437, 0.0
      %v5482 = vsel %vm2332, %v5436, 0.0
      %v5483 = vsel %vm2333, %v5435, 0.0
      %v5484 = vsel %vm2334, %v5434, 0.0
      %v5485 = vsel %vm2335, %v5433, 0.0
      %v5486 = vsel %vm2336, %v5432, 0.0
      %v5487 = vsel %vm2337, %v5431, 0.0
      %v5488 = vsel %vm2338, %v5430, 0.0
      %v5489 = vsel %vm2339, %v5429, 0.0
      %v5490 = vsel %vm2340, %v5428, 0.0
      %v5491 = vadd.f32 %v5267, %v5459
      %v5492 = vadd.f32 %v5268, %v5460
      %v5493 = vadd.f32 %v5269, %v5461
      %v5494 = vadd.f32 %v5270, %v5462
      %v5495 = vadd.f32 %v5271, %v5463
      %v5496 = vadd.f32 %v5272, %v5464
      %v5497 = vadd.f32 %v5273, %v5465
      %v5498 = vadd.f32 %v5274, %v5466
      %v5499 = vadd.f32 %v5275, %v5467
      %v5500 = vadd.f32 %v5276, %v5468
      %v5501 = vadd.f32 %v5277, %v5469
      %v5502 = vadd.f32 %v5278, %v5470
      %v5503 = vadd.f32 %v5279, %v5471
      %v5504 = vadd.f32 %v5280, %v5472
      %v5505 = vadd.f32 %v5281, %v5473
      %v5506 = vadd.f32 %v5282, %v5474
      %v5507 = vadd.f32 %v5283, %v5475
      %v5508 = vadd.f32 %v5284, %v5476
      %v5509 = vadd.f32 %v5285, %v5477
      %v5510 = vadd.f32 %v5286, %v5478
      %v5511 = vadd.f32 %v5287, %v5479
      %v5512 = vadd.f32 %v5288, %v5480
      %v5513 = vadd.f32 %v5289, %v5481
      %v5514 = vadd.f32 %v5290, %v5482
      %v5515 = vadd.f32 %v5291, %v5483
      %v5516 = vadd.f32 %v5292, %v5484
      %v5517 = vadd.f32 %v5293, %v5485
      %v5518 = vadd.f32 %v5294, %v5486
      %v5519 = vadd.f32 %v5295, %v5487
      %v5520 = vadd.f32 %v5296, %v5488
      %v5521 = vadd.f32 %v5297, %v5489
      %v5522 = vadd.f32 %v5298, %v5490
      %5523 = vrot.lane.b32.xlu0 %v4900, 116
      %v5524 = vpop.permute.xlu0 %5523
      %5525 = vrot.lane.b32.xlu0 %v4902, 116
      %v5526 = vpop.permute.xlu0 %5525
      %5527 = vrot.lane.b32.xlu0 %v4905, 116
      %v5528 = vpop.permute.xlu0 %5527
      %5529 = vrot.lane.b32.xlu0 %v4907, 116
      %v5530 = vpop.permute.xlu0 %5529
      %5531 = vrot.lane.b32.xlu0 %v4910, 116
      %v5532 = vpop.permute.xlu0 %5531
      %5533 = vrot.lane.b32.xlu0 %v4912, 116
      %v5534 = vpop.permute.xlu0 %5533
      %5535 = vrot.lane.b32.xlu0 %v4915, 116
      %v5536 = vpop.permute.xlu0 %5535
      %5537 = vrot.lane.b32.xlu0 %v4917, 116
      %v5538 = vpop.permute.xlu0 %5537
      %5539 = vrot.lane.b32.xlu0 %v4920, 116
      %v5540 = vpop.permute.xlu0 %5539
      %5541 = vrot.lane.b32.xlu0 %v4922, 116
      %v5542 = vpop.permute.xlu0 %5541
      %5543 = vrot.lane.b32.xlu0 %v4925, 116
      %v5544 = vpop.permute.xlu0 %5543
      %5545 = vrot.lane.b32.xlu0 %v4927, 116
      %v5546 = vpop.permute.xlu0 %5545
      %5547 = vrot.lane.b32.xlu0 %v4930, 116
      %v5548 = vpop.permute.xlu0 %5547
      %5549 = vrot.lane.b32.xlu0 %v4932, 116
      %v5550 = vpop.permute.xlu0 %5549
      %5551 = vrot.lane.b32.xlu0 %v4935, 116
      %v5552 = vpop.permute.xlu0 %5551
      %5553 = vrot.lane.b32.xlu0 %v4937, 116
      %v5554 = vpop.permute.xlu0 %5553
      %5555 = vrot.lane.b32.xlu0 %v4940, 116
      %v5556 = vpop.permute.xlu0 %5555
      %5557 = vrot.lane.b32.xlu0 %v4942, 116
      %v5558 = vpop.permute.xlu0 %5557
      %5559 = vrot.lane.b32.xlu0 %v4945, 116
      %v5560 = vpop.permute.xlu0 %5559
      %5561 = vrot.lane.b32.xlu0 %v4947, 116
      %v5562 = vpop.permute.xlu0 %5561
      %5563 = vrot.lane.b32.xlu0 %v4950, 116
      %v5564 = vpop.permute.xlu0 %5563
      %5565 = vrot.lane.b32.xlu0 %v4952, 116
      %v5566 = vpop.permute.xlu0 %5565
      %5567 = vrot.lane.b32.xlu0 %v4955, 116
      %v5568 = vpop.permute.xlu0 %5567
      %5569 = vrot.lane.b32.xlu0 %v4957, 116
      %v5570 = vpop.permute.xlu0 %5569
      %5571 = vrot.lane.b32.xlu0 %v4960, 116
      %v5572 = vpop.permute.xlu0 %5571
      %5573 = vrot.lane.b32.xlu0 %v4962, 116
      %v5574 = vpop.permute.xlu0 %5573
      %5575 = vrot.lane.b32.xlu0 %v4965, 116
      %v5576 = vpop.permute.xlu0 %5575
      %5577 = vrot.lane.b32.xlu0 %v4967, 116
      %v5578 = vpop.permute.xlu0 %5577
      %5579 = vrot.lane.b32.xlu0 %v4970, 116
      %v5580 = vpop.permute.xlu0 %5579
      %5581 = vrot.lane.b32.xlu0 %v4972, 116
      %v5582 = vpop.permute.xlu0 %5581
      %5583 = vrot.lane.b32.xlu0 %v4975, 116
      %v5584 = vpop.permute.xlu0 %5583
      %5585 = vrot.lane.b32.xlu0 %v4977, 116
      %v5586 = vpop.permute.xlu0 %5585
      %v5619 = vrot.slane %v5524, 7
      %v5620 = vrot.slane %v5526, 7
      %v5621 = vrot.slane %v5528, 7
      %v5622 = vrot.slane %v5530, 7
      %v5623 = vrot.slane %v5532, 7
      %v5624 = vrot.slane %v5534, 7
      %v5625 = vrot.slane %v5536, 7
      %v5626 = vrot.slane %v5538, 7
      %v5627 = vrot.slane %v5540, 7
      %v5628 = vrot.slane %v5542, 7
      %v5629 = vrot.slane %v5544, 7
      %v5630 = vrot.slane %v5546, 7
      %v5631 = vrot.slane %v5548, 7
      %v5632 = vrot.slane %v5550, 7
      %v5633 = vrot.slane %v5552, 7
      %v5634 = vrot.slane %v5554, 7
      %v5635 = vrot.slane %v5556, 7
      %v5636 = vrot.slane %v5558, 7
      %v5637 = vrot.slane %v5560, 7
      %v5638 = vrot.slane %v5562, 7
      %v5639 = vrot.slane %v5564, 7
      %v5640 = vrot.slane %v5566, 7
      %v5641 = vrot.slane %v5568, 7
      %v5642 = vrot.slane %v5570, 7
      %v5643 = vrot.slane %v5572, 7
      %v5644 = vrot.slane %v5574, 7
      %v5645 = vrot.slane %v5576, 7
      %v5646 = vrot.slane %v5578, 7
      %v5647 = vrot.slane %v5580, 7
      %v5648 = vrot.slane %v5582, 7
      %v5649 = vrot.slane %v5584, 7
      %v5650 = vrot.slane %v5586, 7
      %v5651 = vsel %vm1539, %v5649, %v5650
      %v5652 = vsel %vm1539, %v5648, %v5649
      %v5653 = vsel %vm1539, %v5647, %v5648
      %v5654 = vsel %vm1539, %v5646, %v5647
      %v5655 = vsel %vm1539, %v5645, %v5646
      %v5656 = vsel %vm1539, %v5644, %v5645
      %v5657 = vsel %vm1539, %v5643, %v5644
      %v5658 = vsel %vm1539, %v5642, %v5643
      %v5659 = vsel %vm1539, %v5641, %v5642
      %v5660 = vsel %vm1539, %v5640, %v5641
      %v5661 = vsel %vm1539, %v5639, %v5640
      %v5662 = vsel %vm1539, %v5638, %v5639
      %v5663 = vsel %vm1539, %v5637, %v5638
      %v5664 = vsel %vm1539, %v5636, %v5637
      %v5665 = vsel %vm1539, %v5635, %v5636
      %v5666 = vsel %vm1539, %v5634, %v5635
      %v5667 = vsel %vm1539, %v5633, %v5634
      %v5668 = vsel %vm1539, %v5632, %v5633
      %v5669 = vsel %vm1539, %v5631, %v5632
      %v5670 = vsel %vm1539, %v5630, %v5631
      %v5671 = vsel %vm1539, %v5629, %v5630
      %v5672 = vsel %vm1539, %v5628, %v5629
      %v5673 = vsel %vm1539, %v5627, %v5628
      %v5674 = vsel %vm1539, %v5626, %v5627
      %v5675 = vsel %vm1539, %v5625, %v5626
      %v5676 = vsel %vm1539, %v5624, %v5625
      %v5677 = vsel %vm1539, %v5623, %v5624
      %v5678 = vsel %vm1539, %v5622, %v5623
      %v5679 = vsel %vm1539, %v5621, %v5622
      %v5680 = vsel %vm1539, %v5620, %v5621
      %v5681 = vsel %vm1539, %v5619, %v5620
      %v5682 = vsel %vm1539, %v5650, %v5619
      %v5683 = vsel %vm2597, %v5682, 0.0
      %v5684 = vsel %vm2598, %v5681, 0.0
      %v5685 = vsel %vm2599, %v5680, 0.0
      %v5686 = vsel %vm2600, %v5679, 0.0
      %v5687 = vsel %vm2601, %v5678, 0.0
      %v5688 = vsel %vm2602, %v5677, 0.0
      %v5689 = vsel %vm2603, %v5676, 0.0
      %v5690 = vsel %vm2604, %v5675, 0.0
      %v5691 = vsel %vm2605, %v5674, 0.0
      %v5692 = vsel %vm2606, %v5673, 0.0
      %v5693 = vsel %vm2607, %v5672, 0.0
      %v5694 = vsel %vm2608, %v5671, 0.0
      %v5695 = vsel %vm2609, %v5670, 0.0
      %v5696 = vsel %vm2610, %v5669, 0.0
      %v5697 = vsel %vm2611, %v5668, 0.0
      %v5698 = vsel %vm2612, %v5667, 0.0
      %v5699 = vsel %vm2613, %v5666, 0.0
      %v5700 = vsel %vm2614, %v5665, 0.0
      %v5701 = vsel %vm2615, %v5664, 0.0
      %v5702 = vsel %vm2616, %v5663, 0.0
      %v5703 = vsel %vm2617, %v5662, 0.0
      %v5704 = vsel %vm2618, %v5661, 0.0
      %v5705 = vsel %vm2619, %v5660, 0.0
      %v5706 = vsel %vm2620, %v5659, 0.0
      %v5707 = vsel %vm2621, %v5658, 0.0
      %v5708 = vsel %vm2622, %v5657, 0.0
      %v5709 = vsel %vm2623, %v5656, 0.0
      %v5710 = vsel %vm2624, %v5655, 0.0
      %v5711 = vsel %vm2625, %v5654, 0.0
      %v5712 = vsel %vm2626, %v5653, 0.0
      %v5713 = vsel %vm2627, %v5652, 0.0
      %v5714 = vsel %vm2628, %v5651, 0.0
      %v5715 = vadd.f32 %v5491, %v5683
      %v5716 = vadd.f32 %v5492, %v5684
      %v5717 = vadd.f32 %v5493, %v5685
      %v5718 = vadd.f32 %v5494, %v5686
      %v5719 = vadd.f32 %v5495, %v5687
      %v5720 = vadd.f32 %v5496, %v5688
      %v5721 = vadd.f32 %v5497, %v5689
      %v5722 = vadd.f32 %v5498, %v5690
      %v5723 = vadd.f32 %v5499, %v5691
      %v5724 = vadd.f32 %v5500, %v5692
      %v5725 = vadd.f32 %v5501, %v5693
      %v5726 = vadd.f32 %v5502, %v5694
      %v5727 = vadd.f32 %v5503, %v5695
      %v5728 = vadd.f32 %v5504, %v5696
      %v5729 = vadd.f32 %v5505, %v5697
      %v5730 = vadd.f32 %v5506, %v5698
      %v5731 = vadd.f32 %v5507, %v5699
      %v5732 = vadd.f32 %v5508, %v5700
      %v5733 = vadd.f32 %v5509, %v5701
      %v5734 = vadd.f32 %v5510, %v5702
      %v5735 = vadd.f32 %v5511, %v5703
      %v5736 = vadd.f32 %v5512, %v5704
      %v5737 = vadd.f32 %v5513, %v5705
      %v5738 = vadd.f32 %v5514, %v5706
      %v5739 = vadd.f32 %v5515, %v5707
      %v5740 = vadd.f32 %v5516, %v5708
      %v5741 = vadd.f32 %v5517, %v5709
      %v5742 = vadd.f32 %v5518, %v5710
      %v5743 = vadd.f32 %v5519, %v5711
      %v5744 = vadd.f32 %v5520, %v5712
      %v5745 = vadd.f32 %v5521, %v5713
      %v5746 = vadd.f32 %v5522, %v5714
      %5747 = vrot.lane.b32.xlu0 %v4900, 112
      %v5748 = vpop.permute.xlu0 %5747
      %5749 = vrot.lane.b32.xlu0 %v4902, 112
      %v5750 = vpop.permute.xlu0 %5749
      %5751 = vrot.lane.b32.xlu0 %v4905, 112
      %v5752 = vpop.permute.xlu0 %5751
      %5753 = vrot.lane.b32.xlu0 %v4907, 112
      %v5754 = vpop.permute.xlu0 %5753
      %5755 = vrot.lane.b32.xlu0 %v4910, 112
      %v5756 = vpop.permute.xlu0 %5755
      %5757 = vrot.lane.b32.xlu0 %v4912, 112
      %v5758 = vpop.permute.xlu0 %5757
      %5759 = vrot.lane.b32.xlu0 %v4915, 112
      %v5760 = vpop.permute.xlu0 %5759
      %5761 = vrot.lane.b32.xlu0 %v4917, 112
      %v5762 = vpop.permute.xlu0 %5761
      %5763 = vrot.lane.b32.xlu0 %v4920, 112
      %v5764 = vpop.permute.xlu0 %5763
      %5765 = vrot.lane.b32.xlu0 %v4922, 112
      %v5766 = vpop.permute.xlu0 %5765
      %5767 = vrot.lane.b32.xlu0 %v4925, 112
      %v5768 = vpop.permute.xlu0 %5767
      %5769 = vrot.lane.b32.xlu0 %v4927, 112
      %v5770 = vpop.permute.xlu0 %5769
      %5771 = vrot.lane.b32.xlu0 %v4930, 112
      %v5772 = vpop.permute.xlu0 %5771
      %5773 = vrot.lane.b32.xlu0 %v4932, 112
      %v5774 = vpop.permute.xlu0 %5773
      %5775 = vrot.lane.b32.xlu0 %v4935, 112
      %v5776 = vpop.permute.xlu0 %5775
      %5777 = vrot.lane.b32.xlu0 %v4937, 112
      %v5778 = vpop.permute.xlu0 %5777
      %5779 = vrot.lane.b32.xlu0 %v4940, 112
      %v5780 = vpop.permute.xlu0 %5779
      %5781 = vrot.lane.b32.xlu0 %v4942, 112
      %v5782 = vpop.permute.xlu0 %5781
      %5783 = vrot.lane.b32.xlu0 %v4945, 112
      %v5784 = vpop.permute.xlu0 %5783
      %5785 = vrot.lane.b32.xlu0 %v4947, 112
      %v5786 = vpop.permute.xlu0 %5785
      %5787 = vrot.lane.b32.xlu0 %v4950, 112
      %v5788 = vpop.permute.xlu0 %5787
      %5789 = vrot.lane.b32.xlu0 %v4952, 112
      %v5790 = vpop.permute.xlu0 %5789
      %5791 = vrot.lane.b32.xlu0 %v4955, 112
      %v5792 = vpop.permute.xlu0 %5791
      %5793 = vrot.lane.b32.xlu0 %v4957, 112
      %v5794 = vpop.permute.xlu0 %5793
      %5795 = vrot.lane.b32.xlu0 %v4960, 112
      %v5796 = vpop.permute.xlu0 %5795
      %5797 = vrot.lane.b32.xlu0 %v4962, 112
      %v5798 = vpop.permute.xlu0 %5797
      %5799 = vrot.lane.b32.xlu0 %v4965, 112
      %v5800 = vpop.permute.xlu0 %5799
      %5801 = vrot.lane.b32.xlu0 %v4967, 112
      %v5802 = vpop.permute.xlu0 %5801
      %5803 = vrot.lane.b32.xlu0 %v4970, 112
      %v5804 = vpop.permute.xlu0 %5803
      %5805 = vrot.lane.b32.xlu0 %v4972, 112
      %v5806 = vpop.permute.xlu0 %5805
      %5807 = vrot.lane.b32.xlu0 %v4975, 112
      %v5808 = vpop.permute.xlu0 %5807
      %5809 = vrot.lane.b32.xlu0 %v4977, 112
      %v5810 = vpop.permute.xlu0 %5809
      %v5843 = vadd.f32 %v5715, %v5748
      %v5844 = vadd.f32 %v5716, %v5750
      %v5845 = vadd.f32 %v5717, %v5752
      %v5846 = vadd.f32 %v5718, %v5754
      %v5847 = vadd.f32 %v5719, %v5756
      %v5848 = vadd.f32 %v5720, %v5758
      %v5849 = vadd.f32 %v5721, %v5760
      %v5850 = vadd.f32 %v5722, %v5762
      %v5851 = vadd.f32 %v5723, %v5764
      %v5852 = vadd.f32 %v5724, %v5766
      %v5853 = vadd.f32 %v5725, %v5768
      %v5854 = vadd.f32 %v5726, %v5770
      %v5855 = vadd.f32 %v5727, %v5772
      %v5856 = vadd.f32 %v5728, %v5774
      %v5857 = vadd.f32 %v5729, %v5776
      %v5858 = vadd.f32 %v5730, %v5778
      %v5859 = vadd.f32 %v5731, %v5780
      %v5860 = vadd.f32 %v5732, %v5782
      %v5861 = vadd.f32 %v5733, %v5784
      %v5862 = vadd.f32 %v5734, %v5786
      %v5863 = vadd.f32 %v5735, %v5788
      %v5864 = vadd.f32 %v5736, %v5790
      %v5865 = vadd.f32 %v5737, %v5792
      %v5866 = vadd.f32 %v5738, %v5794
      %v5867 = vadd.f32 %v5739, %v5796
      %v5868 = vadd.f32 %v5740, %v5798
      %v5869 = vadd.f32 %v5741, %v5800
      %v5870 = vadd.f32 %v5742, %v5802
      %v5871 = vadd.f32 %v5743, %v5804
      %v5872 = vadd.f32 %v5744, %v5806
      %v5873 = vadd.f32 %v5745, %v5808
      %v5874 = vadd.f32 %v5746, %v5810
      %5875 = vrot.lane.b32.xlu0 %v4900, 108
      %v5876 = vpop.permute.xlu0 %5875
      %5877 = vrot.lane.b32.xlu0 %v4902, 108
      %v5878 = vpop.permute.xlu0 %5877
      %5879 = vrot.lane.b32.xlu0 %v4905, 108
      %v5880 = vpop.permute.xlu0 %5879
      %5881 = vrot.lane.b32.xlu0 %v4907, 108
      %v5882 = vpop.permute.xlu0 %5881
      %5883 = vrot.lane.b32.xlu0 %v4910, 108
      %v5884 = vpop.permute.xlu0 %5883
      %5885 = vrot.lane.b32.xlu0 %v4912, 108
      %v5886 = vpop.permute.xlu0 %5885
      %5887 = vrot.lane.b32.xlu0 %v4915, 108
      %v5888 = vpop.permute.xlu0 %5887
      %5889 = vrot.lane.b32.xlu0 %v4917, 108
      %v5890 = vpop.permute.xlu0 %5889
      %5891 = vrot.lane.b32.xlu0 %v4920, 108
      %v5892 = vpop.permute.xlu0 %5891
      %5893 = vrot.lane.b32.xlu0 %v4922, 108
      %v5894 = vpop.permute.xlu0 %5893
      %5895 = vrot.lane.b32.xlu0 %v4925, 108
      %v5896 = vpop.permute.xlu0 %5895
      %5897 = vrot.lane.b32.xlu0 %v4927, 108
      %v5898 = vpop.permute.xlu0 %5897
      %5899 = vrot.lane.b32.xlu0 %v4930, 108
      %v5900 = vpop.permute.xlu0 %5899
      %5901 = vrot.lane.b32.xlu0 %v4932, 108
      %v5902 = vpop.permute.xlu0 %5901
      %5903 = vrot.lane.b32.xlu0 %v4935, 108
      %v5904 = vpop.permute.xlu0 %5903
      %5905 = vrot.lane.b32.xlu0 %v4937, 108
      %v5906 = vpop.permute.xlu0 %5905
      %5907 = vrot.lane.b32.xlu0 %v4940, 108
      %v5908 = vpop.permute.xlu0 %5907
      %5909 = vrot.lane.b32.xlu0 %v4942, 108
      %v5910 = vpop.permute.xlu0 %5909
      %5911 = vrot.lane.b32.xlu0 %v4945, 108
      %v5912 = vpop.permute.xlu0 %5911
      %5913 = vrot.lane.b32.xlu0 %v4947, 108
      %v5914 = vpop.permute.xlu0 %5913
      %5915 = vrot.lane.b32.xlu0 %v4950, 108
      %v5916 = vpop.permute.xlu0 %5915
      %5917 = vrot.lane.b32.xlu0 %v4952, 108
      %v5918 = vpop.permute.xlu0 %5917
      %5919 = vrot.lane.b32.xlu0 %v4955, 108
      %v5920 = vpop.permute.xlu0 %5919
      %5921 = vrot.lane.b32.xlu0 %v4957, 108
      %v5922 = vpop.permute.xlu0 %5921
      %5923 = vrot.lane.b32.xlu0 %v4960, 108
      %v5924 = vpop.permute.xlu0 %5923
      %5925 = vrot.lane.b32.xlu0 %v4962, 108
      %v5926 = vpop.permute.xlu0 %5925
      %5927 = vrot.lane.b32.xlu0 %v4965, 108
      %v5928 = vpop.permute.xlu0 %5927
      %5929 = vrot.lane.b32.xlu0 %v4967, 108
      %v5930 = vpop.permute.xlu0 %5929
      %5931 = vrot.lane.b32.xlu0 %v4970, 108
      %v5932 = vpop.permute.xlu0 %5931
      %5933 = vrot.lane.b32.xlu0 %v4972, 108
      %v5934 = vpop.permute.xlu0 %5933
      %5935 = vrot.lane.b32.xlu0 %v4975, 108
      %v5936 = vpop.permute.xlu0 %5935
      %5937 = vrot.lane.b32.xlu0 %v4977, 108
      %v5938 = vpop.permute.xlu0 %5937
      %v5971 = vrot.slane %v5876, 1
      %v5972 = vrot.slane %v5878, 1
      %v5973 = vrot.slane %v5880, 1
      %v5974 = vrot.slane %v5882, 1
      %v5975 = vrot.slane %v5884, 1
      %v5976 = vrot.slane %v5886, 1
      %v5977 = vrot.slane %v5888, 1
      %v5978 = vrot.slane %v5890, 1
      %v5979 = vrot.slane %v5892, 1
      %v5980 = vrot.slane %v5894, 1
      %v5981 = vrot.slane %v5896, 1
      %v5982 = vrot.slane %v5898, 1
      %v5983 = vrot.slane %v5900, 1
      %v5984 = vrot.slane %v5902, 1
      %v5985 = vrot.slane %v5904, 1
      %v5986 = vrot.slane %v5906, 1
      %v5987 = vrot.slane %v5908, 1
      %v5988 = vrot.slane %v5910, 1
      %v5989 = vrot.slane %v5912, 1
      %v5990 = vrot.slane %v5914, 1
      %v5991 = vrot.slane %v5916, 1
      %v5992 = vrot.slane %v5918, 1
      %v5993 = vrot.slane %v5920, 1
      %v5994 = vrot.slane %v5922, 1
      %v5995 = vrot.slane %v5924, 1
      %v5996 = vrot.slane %v5926, 1
      %v5997 = vrot.slane %v5928, 1
      %v5998 = vrot.slane %v5930, 1
      %v5999 = vrot.slane %v5932, 1
      %v6000 = vrot.slane %v5934, 1
      %v6001 = vrot.slane %v5936, 1
      %v6002 = vrot.slane %v5938, 1
      %v6003 = vsel %vm2180, %v6001, %v6002
      %v6004 = vsel %vm2180, %v6000, %v6001
      %v6005 = vsel %vm2180, %v5999, %v6000
      %v6006 = vsel %vm2180, %v5998, %v5999
      %v6007 = vsel %vm2180, %v5997, %v5998
      %v6008 = vsel %vm2180, %v5996, %v5997
      %v6009 = vsel %vm2180, %v5995, %v5996
      %v6010 = vsel %vm2180, %v5994, %v5995
      %v6011 = vsel %vm2180, %v5993, %v5994
      %v6012 = vsel %vm2180, %v5992, %v5993
      %v6013 = vsel %vm2180, %v5991, %v5992
      %v6014 = vsel %vm2180, %v5990, %v5991
      %v6015 = vsel %vm2180, %v5989, %v5990
      %v6016 = vsel %vm2180, %v5988, %v5989
      %v6017 = vsel %vm2180, %v5987, %v5988
      %v6018 = vsel %vm2180, %v5986, %v5987
      %v6019 = vsel %vm2180, %v5985, %v5986
      %v6020 = vsel %vm2180, %v5984, %v5985
      %v6021 = vsel %vm2180, %v5983, %v5984
      %v6022 = vsel %vm2180, %v5982, %v5983
      %v6023 = vsel %vm2180, %v5981, %v5982
      %v6024 = vsel %vm2180, %v5980, %v5981
      %v6025 = vsel %vm2180, %v5979, %v5980
      %v6026 = vsel %vm2180, %v5978, %v5979
      %v6027 = vsel %vm2180, %v5977, %v5978
      %v6028 = vsel %vm2180, %v5976, %v5977
      %v6029 = vsel %vm2180, %v5975, %v5976
      %v6030 = vsel %vm2180, %v5974, %v5975
      %v6031 = vsel %vm2180, %v5973, %v5974
      %v6032 = vsel %vm2180, %v5972, %v5973
      %v6033 = vsel %vm2180, %v5971, %v5972
      %v6034 = vsel %vm2180, %v6002, %v5971
      %v6035 = vsel %vm3013, %v6033, 0.0
      %v6036 = vsel %vm3014, %v6032, 0.0
      %v6037 = vsel %vm3015, %v6031, 0.0
      %v6038 = vsel %vm3016, %v6030, 0.0
      %v6039 = vsel %vm3017, %v6029, 0.0
      %v6040 = vsel %vm3018, %v6028, 0.0
      %v6041 = vsel %vm3019, %v6027, 0.0
      %v6042 = vsel %vm3020, %v6026, 0.0
      %v6043 = vsel %vm3021, %v6025, 0.0
      %v6044 = vsel %vm3022, %v6024, 0.0
      %v6045 = vsel %vm3023, %v6023, 0.0
      %v6046 = vsel %vm3024, %v6022, 0.0
      %v6047 = vsel %vm3025, %v6021, 0.0
      %v6048 = vsel %vm3026, %v6020, 0.0
      %v6049 = vsel %vm3027, %v6019, 0.0
      %v6050 = vsel %vm3028, %v6018, 0.0
      %v6051 = vsel %vm3029, %v6017, 0.0
      %v6052 = vsel %vm3030, %v6016, 0.0
      %v6053 = vsel %vm3031, %v6015, 0.0
      %v6054 = vsel %vm3032, %v6014, 0.0
      %v6055 = vsel %vm3033, %v6013, 0.0
      %v6056 = vsel %vm3034, %v6012, 0.0
      %v6057 = vsel %vm3035, %v6011, 0.0
      %v6058 = vsel %vm3036, %v6010, 0.0
      %v6059 = vsel %vm3037, %v6009, 0.0
      %v6060 = vsel %vm3038, %v6008, 0.0
      %v6061 = vsel %vm3039, %v6007, 0.0
      %v6062 = vsel %vm3040, %v6006, 0.0
      %v6063 = vsel %vm3041, %v6005, 0.0
      %v6064 = vsel %vm3042, %v6004, 0.0
      %v6065 = vsel %vm3043, %v6003, 0.0
      %v6066 = vsel %vm3044, %v6034, 0.0
      %v6067 = vadd.f32 %v5843, %v6035
      %v6068 = vadd.f32 %v5844, %v6036
      %v6069 = vadd.f32 %v5845, %v6037
      %v6070 = vadd.f32 %v5846, %v6038
      %v6071 = vadd.f32 %v5847, %v6039
      %v6072 = vadd.f32 %v5848, %v6040
      %v6073 = vadd.f32 %v5849, %v6041
      %v6074 = vadd.f32 %v5850, %v6042
      %v6075 = vadd.f32 %v5851, %v6043
      %v6076 = vadd.f32 %v5852, %v6044
      %v6077 = vadd.f32 %v5853, %v6045
      %v6078 = vadd.f32 %v5854, %v6046
      %v6079 = vadd.f32 %v5855, %v6047
      %v6080 = vadd.f32 %v5856, %v6048
      %v6081 = vadd.f32 %v5857, %v6049
      %v6082 = vadd.f32 %v5858, %v6050
      %v6083 = vadd.f32 %v5859, %v6051
      %v6084 = vadd.f32 %v5860, %v6052
      %v6085 = vadd.f32 %v5861, %v6053
      %v6086 = vadd.f32 %v5862, %v6054
      %v6087 = vadd.f32 %v5863, %v6055
      %v6088 = vadd.f32 %v5864, %v6056
      %v6089 = vadd.f32 %v5865, %v6057
      %v6090 = vadd.f32 %v5866, %v6058
      %v6091 = vadd.f32 %v5867, %v6059
      %v6092 = vadd.f32 %v5868, %v6060
      %v6093 = vadd.f32 %v5869, %v6061
      %v6094 = vadd.f32 %v5870, %v6062
      %v6095 = vadd.f32 %v5871, %v6063
      %v6096 = vadd.f32 %v5872, %v6064
      %v6097 = vadd.f32 %v5873, %v6065
      %v6098 = vadd.f32 %v5874, %v6066
      %6099 = vrot.lane.b32.xlu0 %v4900, 104
      %v6100 = vpop.permute.xlu0 %6099
      %6101 = vrot.lane.b32.xlu0 %v4902, 104
      %v6102 = vpop.permute.xlu0 %6101
      %6103 = vrot.lane.b32.xlu0 %v4905, 104
      %v6104 = vpop.permute.xlu0 %6103
      %6105 = vrot.lane.b32.xlu0 %v4907, 104
      %v6106 = vpop.permute.xlu0 %6105
      %6107 = vrot.lane.b32.xlu0 %v4910, 104
      %v6108 = vpop.permute.xlu0 %6107
      %6109 = vrot.lane.b32.xlu0 %v4912, 104
      %v6110 = vpop.permute.xlu0 %6109
      %6111 = vrot.lane.b32.xlu0 %v4915, 104
      %v6112 = vpop.permute.xlu0 %6111
      %6113 = vrot.lane.b32.xlu0 %v4917, 104
      %v6114 = vpop.permute.xlu0 %6113
      %6115 = vrot.lane.b32.xlu0 %v4920, 104
      %v6116 = vpop.permute.xlu0 %6115
      %6117 = vrot.lane.b32.xlu0 %v4922, 104
      %v6118 = vpop.permute.xlu0 %6117
      %6119 = vrot.lane.b32.xlu0 %v4925, 104
      %v6120 = vpop.permute.xlu0 %6119
      %6121 = vrot.lane.b32.xlu0 %v4927, 104
      %v6122 = vpop.permute.xlu0 %6121
      %6123 = vrot.lane.b32.xlu0 %v4930, 104
      %v6124 = vpop.permute.xlu0 %6123
      %6125 = vrot.lane.b32.xlu0 %v4932, 104
      %v6126 = vpop.permute.xlu0 %6125
      %6127 = vrot.lane.b32.xlu0 %v4935, 104
      %v6128 = vpop.permute.xlu0 %6127
      %6129 = vrot.lane.b32.xlu0 %v4937, 104
      %v6130 = vpop.permute.xlu0 %6129
      %6131 = vrot.lane.b32.xlu0 %v4940, 104
      %v6132 = vpop.permute.xlu0 %6131
      %6133 = vrot.lane.b32.xlu0 %v4942, 104
      %v6134 = vpop.permute.xlu0 %6133
      %6135 = vrot.lane.b32.xlu0 %v4945, 104
      %v6136 = vpop.permute.xlu0 %6135
      %6137 = vrot.lane.b32.xlu0 %v4947, 104
      %v6138 = vpop.permute.xlu0 %6137
      %6139 = vrot.lane.b32.xlu0 %v4950, 104
      %v6140 = vpop.permute.xlu0 %6139
      %6141 = vrot.lane.b32.xlu0 %v4952, 104
      %v6142 = vpop.permute.xlu0 %6141
      %6143 = vrot.lane.b32.xlu0 %v4955, 104
      %v6144 = vpop.permute.xlu0 %6143
      %6145 = vrot.lane.b32.xlu0 %v4957, 104
      %v6146 = vpop.permute.xlu0 %6145
      %6147 = vrot.lane.b32.xlu0 %v4960, 104
      %v6148 = vpop.permute.xlu0 %6147
      %6149 = vrot.lane.b32.xlu0 %v4962, 104
      %v6150 = vpop.permute.xlu0 %6149
      %6151 = vrot.lane.b32.xlu0 %v4965, 104
      %v6152 = vpop.permute.xlu0 %6151
      %6153 = vrot.lane.b32.xlu0 %v4967, 104
      %v6154 = vpop.permute.xlu0 %6153
      %6155 = vrot.lane.b32.xlu0 %v4970, 104
      %v6156 = vpop.permute.xlu0 %6155
      %6157 = vrot.lane.b32.xlu0 %v4972, 104
      %v6158 = vpop.permute.xlu0 %6157
      %6159 = vrot.lane.b32.xlu0 %v4975, 104
      %v6160 = vpop.permute.xlu0 %6159
      %6161 = vrot.lane.b32.xlu0 %v4977, 104
      %v6162 = vpop.permute.xlu0 %6161
      %v6195 = vrot.slane %v6100, 7
      %v6196 = vrot.slane %v6102, 7
      %v6197 = vrot.slane %v6104, 7
      %v6198 = vrot.slane %v6106, 7
      %v6199 = vrot.slane %v6108, 7
      %v6200 = vrot.slane %v6110, 7
      %v6201 = vrot.slane %v6112, 7
      %v6202 = vrot.slane %v6114, 7
      %v6203 = vrot.slane %v6116, 7
      %v6204 = vrot.slane %v6118, 7
      %v6205 = vrot.slane %v6120, 7
      %v6206 = vrot.slane %v6122, 7
      %v6207 = vrot.slane %v6124, 7
      %v6208 = vrot.slane %v6126, 7
      %v6209 = vrot.slane %v6128, 7
      %v6210 = vrot.slane %v6130, 7
      %v6211 = vrot.slane %v6132, 7
      %v6212 = vrot.slane %v6134, 7
      %v6213 = vrot.slane %v6136, 7
      %v6214 = vrot.slane %v6138, 7
      %v6215 = vrot.slane %v6140, 7
      %v6216 = vrot.slane %v6142, 7
      %v6217 = vrot.slane %v6144, 7
      %v6218 = vrot.slane %v6146, 7
      %v6219 = vrot.slane %v6148, 7
      %v6220 = vrot.slane %v6150, 7
      %v6221 = vrot.slane %v6152, 7
      %v6222 = vrot.slane %v6154, 7
      %v6223 = vrot.slane %v6156, 7
      %v6224 = vrot.slane %v6158, 7
      %v6225 = vrot.slane %v6160, 7
      %v6226 = vrot.slane %v6162, 7
      %v6227 = vsel %vm1539, %v6225, %v6226
      %v6228 = vsel %vm1539, %v6224, %v6225
      %v6229 = vsel %vm1539, %v6223, %v6224
      %v6230 = vsel %vm1539, %v6222, %v6223
      %v6231 = vsel %vm1539, %v6221, %v6222
      %v6232 = vsel %vm1539, %v6220, %v6221
      %v6233 = vsel %vm1539, %v6219, %v6220
      %v6234 = vsel %vm1539, %v6218, %v6219
      %v6235 = vsel %vm1539, %v6217, %v6218
      %v6236 = vsel %vm1539, %v6216, %v6217
      %v6237 = vsel %vm1539, %v6215, %v6216
      %v6238 = vsel %vm1539, %v6214, %v6215
      %v6239 = vsel %vm1539, %v6213, %v6214
      %v6240 = vsel %vm1539, %v6212, %v6213
      %v6241 = vsel %vm1539, %v6211, %v6212
      %v6242 = vsel %vm1539, %v6210, %v6211
      %v6243 = vsel %vm1539, %v6209, %v6210
      %v6244 = vsel %vm1539, %v6208, %v6209
      %v6245 = vsel %vm1539, %v6207, %v6208
      %v6246 = vsel %vm1539, %v6206, %v6207
      %v6247 = vsel %vm1539, %v6205, %v6206
      %v6248 = vsel %vm1539, %v6204, %v6205
      %v6249 = vsel %vm1539, %v6203, %v6204
      %v6250 = vsel %vm1539, %v6202, %v6203
      %v6251 = vsel %vm1539, %v6201, %v6202
      %v6252 = vsel %vm1539, %v6200, %v6201
      %v6253 = vsel %vm1539, %v6199, %v6200
      %v6254 = vsel %vm1539, %v6198, %v6199
      %v6255 = vsel %vm1539, %v6197, %v6198
      %v6256 = vsel %vm1539, %v6196, %v6197
      %v6257 = vsel %vm1539, %v6195, %v6196
      %v6258 = vsel %vm1539, %v6226, %v6195
      %v6259 = vsel %vm3365, %v6256, 0.0
      %v6260 = vsel %vm3366, %v6255, 0.0
      %v6261 = vsel %vm3367, %v6254, 0.0
      %v6262 = vsel %vm3368, %v6253, 0.0
      %v6263 = vsel %vm3369, %v6252, 0.0
      %v6264 = vsel %vm3370, %v6251, 0.0
      %v6265 = vsel %vm3371, %v6250, 0.0
      %v6266 = vsel %vm3372, %v6249, 0.0
      %v6267 = vsel %vm3373, %v6248, 0.0
      %v6268 = vsel %vm3374, %v6247, 0.0
      %v6269 = vsel %vm3375, %v6246, 0.0
      %v6270 = vsel %vm3376, %v6245, 0.0
      %v6271 = vsel %vm3377, %v6244, 0.0
      %v6272 = vsel %vm3378, %v6243, 0.0
      %v6273 = vsel %vm3379, %v6242, 0.0
      %v6274 = vsel %vm3380, %v6241, 0.0
      %v6275 = vsel %vm3381, %v6240, 0.0
      %v6276 = vsel %vm3382, %v6239, 0.0
      %v6277 = vsel %vm3383, %v6238, 0.0
      %v6278 = vsel %vm3384, %v6237, 0.0
      %v6279 = vsel %vm3385, %v6236, 0.0
      %v6280 = vsel %vm3386, %v6235, 0.0
      %v6281 = vsel %vm3387, %v6234, 0.0
      %v6282 = vsel %vm3388, %v6233, 0.0
      %v6283 = vsel %vm3389, %v6232, 0.0
      %v6284 = vsel %vm3390, %v6231, 0.0
      %v6285 = vsel %vm3391, %v6230, 0.0
      %v6286 = vsel %vm3392, %v6229, 0.0
      %v6287 = vsel %vm3393, %v6228, 0.0
      %v6288 = vsel %vm3394, %v6227, 0.0
      %v6289 = vsel %vm3395, %v6258, 0.0
      %v6290 = vsel %vm3396, %v6257, 0.0
      %v6291 = vadd.f32 %v6067, %v6259
      %v6292 = vadd.f32 %v6068, %v6260
      %v6293 = vadd.f32 %v6069, %v6261
      %v6294 = vadd.f32 %v6070, %v6262
      %v6295 = vadd.f32 %v6071, %v6263
      %v6296 = vadd.f32 %v6072, %v6264
      %v6297 = vadd.f32 %v6073, %v6265
      %v6298 = vadd.f32 %v6074, %v6266
      %v6299 = vadd.f32 %v6075, %v6267
      %v6300 = vadd.f32 %v6076, %v6268
      %v6301 = vadd.f32 %v6077, %v6269
      %v6302 = vadd.f32 %v6078, %v6270
      %v6303 = vadd.f32 %v6079, %v6271
      %v6304 = vadd.f32 %v6080, %v6272
      %v6305 = vadd.f32 %v6081, %v6273
      %v6306 = vadd.f32 %v6082, %v6274
      %v6307 = vadd.f32 %v6083, %v6275
      %v6308 = vadd.f32 %v6084, %v6276
      %v6309 = vadd.f32 %v6085, %v6277
      %v6310 = vadd.f32 %v6086, %v6278
      %v6311 = vadd.f32 %v6087, %v6279
      %v6312 = vadd.f32 %v6088, %v6280
      %v6313 = vadd.f32 %v6089, %v6281
      %v6314 = vadd.f32 %v6090, %v6282
      %v6315 = vadd.f32 %v6091, %v6283
      %v6316 = vadd.f32 %v6092, %v6284
      %v6317 = vadd.f32 %v6093, %v6285
      %v6318 = vadd.f32 %v6094, %v6286
      %v6319 = vadd.f32 %v6095, %v6287
      %v6320 = vadd.f32 %v6096, %v6288
      %v6321 = vadd.f32 %v6097, %v6289
      %v6322 = vadd.f32 %v6098, %v6290
      %6323 = vrot.lane.b32.xlu0 %v4900, 100
      %v6324 = vpop.permute.xlu0 %6323
      %6325 = vrot.lane.b32.xlu0 %v4902, 100
      %v6326 = vpop.permute.xlu0 %6325
      %6327 = vrot.lane.b32.xlu0 %v4905, 100
      %v6328 = vpop.permute.xlu0 %6327
      %6329 = vrot.lane.b32.xlu0 %v4907, 100
      %v6330 = vpop.permute.xlu0 %6329
      %6331 = vrot.lane.b32.xlu0 %v4910, 100
      %v6332 = vpop.permute.xlu0 %6331
      %6333 = vrot.lane.b32.xlu0 %v4912, 100
      %v6334 = vpop.permute.xlu0 %6333
      %6335 = vrot.lane.b32.xlu0 %v4915, 100
      %v6336 = vpop.permute.xlu0 %6335
      %6337 = vrot.lane.b32.xlu0 %v4917, 100
      %v6338 = vpop.permute.xlu0 %6337
      %6339 = vrot.lane.b32.xlu0 %v4920, 100
      %v6340 = vpop.permute.xlu0 %6339
      %6341 = vrot.lane.b32.xlu0 %v4922, 100
      %v6342 = vpop.permute.xlu0 %6341
      %6343 = vrot.lane.b32.xlu0 %v4925, 100
      %v6344 = vpop.permute.xlu0 %6343
      %6345 = vrot.lane.b32.xlu0 %v4927, 100
      %v6346 = vpop.permute.xlu0 %6345
      %6347 = vrot.lane.b32.xlu0 %v4930, 100
      %v6348 = vpop.permute.xlu0 %6347
      %6349 = vrot.lane.b32.xlu0 %v4932, 100
      %v6350 = vpop.permute.xlu0 %6349
      %6351 = vrot.lane.b32.xlu0 %v4935, 100
      %v6352 = vpop.permute.xlu0 %6351
      %6353 = vrot.lane.b32.xlu0 %v4937, 100
      %v6354 = vpop.permute.xlu0 %6353
      %6355 = vrot.lane.b32.xlu0 %v4940, 100
      %v6356 = vpop.permute.xlu0 %6355
      %6357 = vrot.lane.b32.xlu0 %v4942, 100
      %v6358 = vpop.permute.xlu0 %6357
      %6359 = vrot.lane.b32.xlu0 %v4945, 100
      %v6360 = vpop.permute.xlu0 %6359
      %6361 = vrot.lane.b32.xlu0 %v4947, 100
      %v6362 = vpop.permute.xlu0 %6361
      %6363 = vrot.lane.b32.xlu0 %v4950, 100
      %v6364 = vpop.permute.xlu0 %6363
      %6365 = vrot.lane.b32.xlu0 %v4952, 100
      %v6366 = vpop.permute.xlu0 %6365
      %6367 = vrot.lane.b32.xlu0 %v4955, 100
      %v6368 = vpop.permute.xlu0 %6367
      %6369 = vrot.lane.b32.xlu0 %v4957, 100
      %v6370 = vpop.permute.xlu0 %6369
      %6371 = vrot.lane.b32.xlu0 %v4960, 100
      %v6372 = vpop.permute.xlu0 %6371
      %6373 = vrot.lane.b32.xlu0 %v4962, 100
      %v6374 = vpop.permute.xlu0 %6373
      %6375 = vrot.lane.b32.xlu0 %v4965, 100
      %v6376 = vpop.permute.xlu0 %6375
      %6377 = vrot.lane.b32.xlu0 %v4967, 100
      %v6378 = vpop.permute.xlu0 %6377
      %6379 = vrot.lane.b32.xlu0 %v4970, 100
      %v6380 = vpop.permute.xlu0 %6379
      %6381 = vrot.lane.b32.xlu0 %v4972, 100
      %v6382 = vpop.permute.xlu0 %6381
      %6383 = vrot.lane.b32.xlu0 %v4975, 100
      %v6384 = vpop.permute.xlu0 %6383
      %6385 = vrot.lane.b32.xlu0 %v4977, 100
      %v6386 = vpop.permute.xlu0 %6385
      %v6419 = vsel %vm3589, %v6328, 0.0
      %v6420 = vsel %vm3590, %v6330, 0.0
      %v6421 = vsel %vm3591, %v6332, 0.0
      %v6422 = vsel %vm3592, %v6334, 0.0
      %v6423 = vsel %vm3593, %v6336, 0.0
      %v6424 = vsel %vm3594, %v6338, 0.0
      %v6425 = vsel %vm3595, %v6340, 0.0
      %v6426 = vsel %vm3596, %v6342, 0.0
      %v6427 = vsel %vm3597, %v6344, 0.0
      %v6428 = vsel %vm3598, %v6346, 0.0
      %v6429 = vsel %vm3599, %v6348, 0.0
      %v6430 = vsel %vm3600, %v6350, 0.0
      %v6431 = vsel %vm3601, %v6352, 0.0
      %v6432 = vsel %vm3602, %v6354, 0.0
      %v6433 = vsel %vm3603, %v6356, 0.0
      %v6434 = vsel %vm3604, %v6358, 0.0
      %v6435 = vsel %vm3605, %v6360, 0.0
      %v6436 = vsel %vm3606, %v6362, 0.0
      %v6437 = vsel %vm3607, %v6364, 0.0
      %v6438 = vsel %vm3608, %v6366, 0.0
      %v6439 = vsel %vm3609, %v6368, 0.0
      %v6440 = vsel %vm3610, %v6370, 0.0
      %v6441 = vsel %vm3611, %v6372, 0.0
      %v6442 = vsel %vm3612, %v6374, 0.0
      %v6443 = vsel %vm3613, %v6376, 0.0
      %v6444 = vsel %vm3614, %v6378, 0.0
      %v6445 = vsel %vm3615, %v6380, 0.0
      %v6446 = vsel %vm3616, %v6382, 0.0
      %v6447 = vsel %vm3617, %v6384, 0.0
      %v6448 = vsel %vm3618, %v6386, 0.0
      %v6449 = vsel %vm3619, %v6324, 0.0
      %v6450 = vsel %vm3620, %v6326, 0.0
      %v6451 = vadd.f32 %v6291, %v6419
      %v6452 = vadd.f32 %v6292, %v6420
      %v6453 = vadd.f32 %v6293, %v6421
      %v6454 = vadd.f32 %v6294, %v6422
      %v6455 = vadd.f32 %v6295, %v6423
      %v6456 = vadd.f32 %v6296, %v6424
      %v6457 = vadd.f32 %v6297, %v6425
      %v6458 = vadd.f32 %v6298, %v6426
      %v6459 = vadd.f32 %v6299, %v6427
      %v6460 = vadd.f32 %v6300, %v6428
      %v6461 = vadd.f32 %v6301, %v6429
      %v6462 = vadd.f32 %v6302, %v6430
      %v6463 = vadd.f32 %v6303, %v6431
      %v6464 = vadd.f32 %v6304, %v6432
      %v6465 = vadd.f32 %v6305, %v6433
      %v6466 = vadd.f32 %v6306, %v6434
      %v6467 = vadd.f32 %v6307, %v6435
      %v6468 = vadd.f32 %v6308, %v6436
      %v6469 = vadd.f32 %v6309, %v6437
      %v6470 = vadd.f32 %v6310, %v6438
      %v6471 = vadd.f32 %v6311, %v6439
      %v6472 = vadd.f32 %v6312, %v6440
      %v6473 = vadd.f32 %v6313, %v6441
      %v6474 = vadd.f32 %v6314, %v6442
      %v6475 = vadd.f32 %v6315, %v6443
      %v6476 = vadd.f32 %v6316, %v6444
      %v6477 = vadd.f32 %v6317, %v6445
      %v6478 = vadd.f32 %v6318, %v6446
      %v6479 = vadd.f32 %v6319, %v6447
      %v6480 = vadd.f32 %v6320, %v6448
      %v6481 = vadd.f32 %v6321, %v6449
      %v6482 = vadd.f32 %v6322, %v6450
      %6483 = vrot.lane.b32.xlu0 %v4900, 96
      %v6484 = vpop.permute.xlu0 %6483
      %6485 = vrot.lane.b32.xlu0 %v4902, 96
      %v6486 = vpop.permute.xlu0 %6485
      %6487 = vrot.lane.b32.xlu0 %v4905, 96
      %v6488 = vpop.permute.xlu0 %6487
      %6489 = vrot.lane.b32.xlu0 %v4907, 96
      %v6490 = vpop.permute.xlu0 %6489
      %6491 = vrot.lane.b32.xlu0 %v4910, 96
      %v6492 = vpop.permute.xlu0 %6491
      %6493 = vrot.lane.b32.xlu0 %v4912, 96
      %v6494 = vpop.permute.xlu0 %6493
      %6495 = vrot.lane.b32.xlu0 %v4915, 96
      %v6496 = vpop.permute.xlu0 %6495
      %6497 = vrot.lane.b32.xlu0 %v4917, 96
      %v6498 = vpop.permute.xlu0 %6497
      %6499 = vrot.lane.b32.xlu0 %v4920, 96
      %v6500 = vpop.permute.xlu0 %6499
      %6501 = vrot.lane.b32.xlu0 %v4922, 96
      %v6502 = vpop.permute.xlu0 %6501
      %6503 = vrot.lane.b32.xlu0 %v4925, 96
      %v6504 = vpop.permute.xlu0 %6503
      %6505 = vrot.lane.b32.xlu0 %v4927, 96
      %v6506 = vpop.permute.xlu0 %6505
      %6507 = vrot.lane.b32.xlu0 %v4930, 96
      %v6508 = vpop.permute.xlu0 %6507
      %6509 = vrot.lane.b32.xlu0 %v4932, 96
      %v6510 = vpop.permute.xlu0 %6509
      %6511 = vrot.lane.b32.xlu0 %v4935, 96
      %v6512 = vpop.permute.xlu0 %6511
      %6513 = vrot.lane.b32.xlu0 %v4937, 96
      %v6514 = vpop.permute.xlu0 %6513
      %6515 = vrot.lane.b32.xlu0 %v4940, 96
      %v6516 = vpop.permute.xlu0 %6515
      %6517 = vrot.lane.b32.xlu0 %v4942, 96
      %v6518 = vpop.permute.xlu0 %6517
      %6519 = vrot.lane.b32.xlu0 %v4945, 96
      %v6520 = vpop.permute.xlu0 %6519
      %6521 = vrot.lane.b32.xlu0 %v4947, 96
      %v6522 = vpop.permute.xlu0 %6521
      %6523 = vrot.lane.b32.xlu0 %v4950, 96
      %v6524 = vpop.permute.xlu0 %6523
      %6525 = vrot.lane.b32.xlu0 %v4952, 96
      %v6526 = vpop.permute.xlu0 %6525
      %6527 = vrot.lane.b32.xlu0 %v4955, 96
      %v6528 = vpop.permute.xlu0 %6527
      %6529 = vrot.lane.b32.xlu0 %v4957, 96
      %v6530 = vpop.permute.xlu0 %6529
      %6531 = vrot.lane.b32.xlu0 %v4960, 96
      %v6532 = vpop.permute.xlu0 %6531
      %6533 = vrot.lane.b32.xlu0 %v4962, 96
      %v6534 = vpop.permute.xlu0 %6533
      %6535 = vrot.lane.b32.xlu0 %v4965, 96
      %v6536 = vpop.permute.xlu0 %6535
      %6537 = vrot.lane.b32.xlu0 %v4967, 96
      %v6538 = vpop.permute.xlu0 %6537
      %6539 = vrot.lane.b32.xlu0 %v4970, 96
      %v6540 = vpop.permute.xlu0 %6539
      %6541 = vrot.lane.b32.xlu0 %v4972, 96
      %v6542 = vpop.permute.xlu0 %6541
      %6543 = vrot.lane.b32.xlu0 %v4975, 96
      %v6544 = vpop.permute.xlu0 %6543
      %6545 = vrot.lane.b32.xlu0 %v4977, 96
      %v6546 = vpop.permute.xlu0 %6545
      %v6579 = vrot.slane %v6484, 1
      %v6580 = vrot.slane %v6486, 1
      %v6581 = vrot.slane %v6488, 1
      %v6582 = vrot.slane %v6490, 1
      %v6583 = vrot.slane %v6492, 1
      %v6584 = vrot.slane %v6494, 1
      %v6585 = vrot.slane %v6496, 1
      %v6586 = vrot.slane %v6498, 1
      %v6587 = vrot.slane %v6500, 1
      %v6588 = vrot.slane %v6502, 1
      %v6589 = vrot.slane %v6504, 1
      %v6590 = vrot.slane %v6506, 1
      %v6591 = vrot.slane %v6508, 1
      %v6592 = vrot.slane %v6510, 1
      %v6593 = vrot.slane %v6512, 1
      %v6594 = vrot.slane %v6514, 1
      %v6595 = vrot.slane %v6516, 1
      %v6596 = vrot.slane %v6518, 1
      %v6597 = vrot.slane %v6520, 1
      %v6598 = vrot.slane %v6522, 1
      %v6599 = vrot.slane %v6524, 1
      %v6600 = vrot.slane %v6526, 1
      %v6601 = vrot.slane %v6528, 1
      %v6602 = vrot.slane %v6530, 1
      %v6603 = vrot.slane %v6532, 1
      %v6604 = vrot.slane %v6534, 1
      %v6605 = vrot.slane %v6536, 1
      %v6606 = vrot.slane %v6538, 1
      %v6607 = vrot.slane %v6540, 1
      %v6608 = vrot.slane %v6542, 1
      %v6609 = vrot.slane %v6544, 1
      %v6610 = vrot.slane %v6546, 1
      %v6611 = vsel %vm2180, %v6609, %v6610
      %v6612 = vsel %vm2180, %v6608, %v6609
      %v6613 = vsel %vm2180, %v6607, %v6608
      %v6614 = vsel %vm2180, %v6606, %v6607
      %v6615 = vsel %vm2180, %v6605, %v6606
      %v6616 = vsel %vm2180, %v6604, %v6605
      %v6617 = vsel %vm2180, %v6603, %v6604
      %v6618 = vsel %vm2180, %v6602, %v6603
      %v6619 = vsel %vm2180, %v6601, %v6602
      %v6620 = vsel %vm2180, %v6600, %v6601
      %v6621 = vsel %vm2180, %v6599, %v6600
      %v6622 = vsel %vm2180, %v6598, %v6599
      %v6623 = vsel %vm2180, %v6597, %v6598
      %v6624 = vsel %vm2180, %v6596, %v6597
      %v6625 = vsel %vm2180, %v6595, %v6596
      %v6626 = vsel %vm2180, %v6594, %v6595
      %v6627 = vsel %vm2180, %v6593, %v6594
      %v6628 = vsel %vm2180, %v6592, %v6593
      %v6629 = vsel %vm2180, %v6591, %v6592
      %v6630 = vsel %vm2180, %v6590, %v6591
      %v6631 = vsel %vm2180, %v6589, %v6590
      %v6632 = vsel %vm2180, %v6588, %v6589
      %v6633 = vsel %vm2180, %v6587, %v6588
      %v6634 = vsel %vm2180, %v6586, %v6587
      %v6635 = vsel %vm2180, %v6585, %v6586
      %v6636 = vsel %vm2180, %v6584, %v6585
      %v6637 = vsel %vm2180, %v6583, %v6584
      %v6638 = vsel %vm2180, %v6582, %v6583
      %v6639 = vsel %vm2180, %v6581, %v6582
      %v6640 = vsel %vm2180, %v6580, %v6581
      %v6641 = vsel %vm2180, %v6579, %v6580
      %v6642 = vsel %vm2180, %v6610, %v6579
      %v6643 = vsel %vm3909, %v6639, 0.0
      %v6644 = vsel %vm3910, %v6638, 0.0
      %v6645 = vsel %vm3911, %v6637, 0.0
      %v6646 = vsel %vm3912, %v6636, 0.0
      %v6647 = vsel %vm3913, %v6635, 0.0
      %v6648 = vsel %vm3914, %v6634, 0.0
      %v6649 = vsel %vm3915, %v6633, 0.0
      %v6650 = vsel %vm3916, %v6632, 0.0
      %v6651 = vsel %vm3917, %v6631, 0.0
      %v6652 = vsel %vm3918, %v6630, 0.0
      %v6653 = vsel %vm3919, %v6629, 0.0
      %v6654 = vsel %vm3920, %v6628, 0.0
      %v6655 = vsel %vm3921, %v6627, 0.0
      %v6656 = vsel %vm3922, %v6626, 0.0
      %v6657 = vsel %vm3923, %v6625, 0.0
      %v6658 = vsel %vm3924, %v6624, 0.0
      %v6659 = vsel %vm3925, %v6623, 0.0
      %v6660 = vsel %vm3926, %v6622, 0.0
      %v6661 = vsel %vm3927, %v6621, 0.0
      %v6662 = vsel %vm3928, %v6620, 0.0
      %v6663 = vsel %vm3929, %v6619, 0.0
      %v6664 = vsel %vm3930, %v6618, 0.0
      %v6665 = vsel %vm3931, %v6617, 0.0
      %v6666 = vsel %vm3932, %v6616, 0.0
      %v6667 = vsel %vm3933, %v6615, 0.0
      %v6668 = vsel %vm3934, %v6614, 0.0
      %v6669 = vsel %vm3935, %v6613, 0.0
      %v6670 = vsel %vm3936, %v6612, 0.0
      %v6671 = vsel %vm3937, %v6611, 0.0
      %v6672 = vsel %vm3938, %v6642, 0.0
      %v6673 = vsel %vm3939, %v6641, 0.0
      %v6674 = vsel %vm3940, %v6640, 0.0
      %v6675 = vadd.f32 %v6451, %v6643
      %v6676 = vadd.f32 %v6452, %v6644
      %v6677 = vadd.f32 %v6453, %v6645
      %v6678 = vadd.f32 %v6454, %v6646
      %v6679 = vadd.f32 %v6455, %v6647
      %v6680 = vadd.f32 %v6456, %v6648
      %v6681 = vadd.f32 %v6457, %v6649
      %v6682 = vadd.f32 %v6458, %v6650
      %v6683 = vadd.f32 %v6459, %v6651
      %v6684 = vadd.f32 %v6460, %v6652
      %v6685 = vadd.f32 %v6461, %v6653
      %v6686 = vadd.f32 %v6462, %v6654
      %v6687 = vadd.f32 %v6463, %v6655
      %v6688 = vadd.f32 %v6464, %v6656
      %v6689 = vadd.f32 %v6465, %v6657
      %v6690 = vadd.f32 %v6466, %v6658
      %v6691 = vadd.f32 %v6467, %v6659
      %v6692 = vadd.f32 %v6468, %v6660
      %v6693 = vadd.f32 %v6469, %v6661
      %v6694 = vadd.f32 %v6470, %v6662
      %v6695 = vadd.f32 %v6471, %v6663
      %v6696 = vadd.f32 %v6472, %v6664
      %v6697 = vadd.f32 %v6473, %v6665
      %v6698 = vadd.f32 %v6474, %v6666
      %v6699 = vadd.f32 %v6475, %v6667
      %v6700 = vadd.f32 %v6476, %v6668
      %v6701 = vadd.f32 %v6477, %v6669
      %v6702 = vadd.f32 %v6478, %v6670
      %v6703 = vadd.f32 %v6479, %v6671
      %v6704 = vadd.f32 %v6480, %v6672
      %v6705 = vadd.f32 %v6481, %v6673
      %v6706 = vadd.f32 %v6482, %v6674
      %v6707 = vsel %vm621, %v6675, 0.0
      %v6708 = vsel %vm621, %v6676, 0.0
      %v6709 = vadd.f32 %v6707, %v6708
      %v6710 = vsel %vm621, %v6677, 0.0
      %v6711 = vadd.f32 %v6709, %v6710
      %v6712 = vsel %vm621, %v6678, 0.0
      %v6713 = vadd.f32 %v6711, %v6712
      %v6714 = vsel %vm621, %v6679, 0.0
      %v6715 = vadd.f32 %v6713, %v6714
      %v6716 = vsel %vm621, %v6680, 0.0
      %v6717 = vadd.f32 %v6715, %v6716
      %v6718 = vsel %vm621, %v6681, 0.0
      %v6719 = vadd.f32 %v6717, %v6718
      %v6720 = vsel %vm621, %v6682, 0.0
      %v6721 = vadd.f32 %v6719, %v6720
      %v6722 = vsel %vm621, %v6683, 0.0
      %v6723 = vadd.f32 %v6721, %v6722
      %v6724 = vsel %vm621, %v6684, 0.0
      %v6725 = vadd.f32 %v6723, %v6724
      %v6726 = vsel %vm621, %v6685, 0.0
      %v6727 = vadd.f32 %v6725, %v6726
      %v6728 = vsel %vm621, %v6686, 0.0
      %v6729 = vadd.f32 %v6727, %v6728
      %v6730 = vsel %vm621, %v6687, 0.0
      %v6731 = vadd.f32 %v6729, %v6730
      %v6732 = vsel %vm621, %v6688, 0.0
      %v6733 = vadd.f32 %v6731, %v6732
      %v6734 = vsel %vm621, %v6689, 0.0
      %v6735 = vadd.f32 %v6733, %v6734
      %v6736 = vsel %vm621, %v6690, 0.0
      %v6737 = vadd.f32 %v6735, %v6736
      %v6738 = vsel %vm621, %v6691, 0.0
      %v6739 = vadd.f32 %v6737, %v6738
      %v6740 = vsel %vm621, %v6692, 0.0
      %v6741 = vadd.f32 %v6739, %v6740
      %v6742 = vsel %vm621, %v6693, 0.0
      %v6743 = vadd.f32 %v6741, %v6742
      %v6744 = vsel %vm621, %v6694, 0.0
      %v6745 = vadd.f32 %v6743, %v6744
      %v6746 = vsel %vm621, %v6695, 0.0
      %v6747 = vadd.f32 %v6745, %v6746
      %v6748 = vsel %vm621, %v6696, 0.0
      %v6749 = vadd.f32 %v6747, %v6748
      %v6750 = vsel %vm621, %v6697, 0.0
      %v6751 = vadd.f32 %v6749, %v6750
      %v6752 = vsel %vm621, %v6698, 0.0
      %v6753 = vadd.f32 %v6751, %v6752
      %v6754 = vsel %vm621, %v6699, 0.0
      %v6755 = vadd.f32 %v6753, %v6754
      %v6756 = vsel %vm621, %v6700, 0.0
      %v6757 = vadd.f32 %v6755, %v6756
      %v6758 = vsel %vm621, %v6701, 0.0
      %v6759 = vadd.f32 %v6757, %v6758
      %v6760 = vsel %vm621, %v6702, 0.0
      %v6761 = vadd.f32 %v6759, %v6760
      %v6762 = vsel %vm621, %v6703, 0.0
      %v6763 = vadd.f32 %v6761, %v6762
      %v6764 = vsel %vm621, %v6704, 0.0
      %v6765 = vadd.f32 %v6763, %v6764
      %v6766 = vsel %vm621, %v6705, 0.0
      %v6767 = vadd.f32 %v6765, %v6766
      %v6768 = vsel %vm621, %v6706, 0.0
      %v6769 = vadd.f32 %v6767, %v6768
      %v6770 = vrot.slane %v6769, 4
      %v6771 = vadd.f32 %v6769, %v6770
      %v6772 = vrot.slane %v6771, 2
      %v6773 = vadd.f32 %v6771, %v6772
      %v6774 = vrot.slane %v6773, 1
      %v6775 = vadd.f32 %v6773, %v6774
      %v6776 = vmul.f32 %v6775, %v697
      %v6777 = vsub.f32 %v6675, %v6776
      %v6778 = vsub.f32 %v6676, %v6776
      %v6779 = vsub.f32 %v6677, %v6776
      %v6780 = vsub.f32 %v6678, %v6776
      %v6781 = vsub.f32 %v6679, %v6776
      %v6782 = vsub.f32 %v6680, %v6776
      %v6783 = vsub.f32 %v6681, %v6776
      %v6784 = vsub.f32 %v6682, %v6776
      %v6785 = vsub.f32 %v6683, %v6776
      %v6786 = vsub.f32 %v6684, %v6776
      %v6787 = vsub.f32 %v6685, %v6776
      %v6788 = vsub.f32 %v6686, %v6776
      %v6789 = vsub.f32 %v6687, %v6776
      %v6790 = vsub.f32 %v6688, %v6776
      %v6791 = vsub.f32 %v6689, %v6776
      %v6792 = vsub.f32 %v6690, %v6776
      %v6793 = vsub.f32 %v6691, %v6776
      %v6794 = vsub.f32 %v6692, %v6776
      %v6795 = vsub.f32 %v6693, %v6776
      %v6796 = vsub.f32 %v6694, %v6776
      %v6797 = vsub.f32 %v6695, %v6776
      %v6798 = vsub.f32 %v6696, %v6776
      %v6799 = vsub.f32 %v6697, %v6776
      %v6800 = vsub.f32 %v6698, %v6776
      %v6801 = vsub.f32 %v6699, %v6776
      %v6802 = vsub.f32 %v6700, %v6776
      %v6803 = vsub.f32 %v6701, %v6776
      %v6804 = vsub.f32 %v6702, %v6776
      %v6805 = vsub.f32 %v6703, %v6776
      %v6806 = vsub.f32 %v6704, %v6776
      %v6807 = vsub.f32 %v6705, %v6776
      %v6808 = vsub.f32 %v6706, %v6776
      %v6809 = vmul.f32 %v6777, %v6777
      %v6810 = vmul.f32 %v6778, %v6778
      %v6811 = vmul.f32 %v6779, %v6779
      %v6812 = vmul.f32 %v6780, %v6780
      %v6813 = vmul.f32 %v6781, %v6781
      %v6814 = vmul.f32 %v6782, %v6782
      %v6815 = vmul.f32 %v6783, %v6783
      %v6816 = vmul.f32 %v6784, %v6784
      %v6817 = vmul.f32 %v6785, %v6785
      %v6818 = vmul.f32 %v6786, %v6786
      %v6819 = vmul.f32 %v6787, %v6787
      %v6820 = vmul.f32 %v6788, %v6788
      %v6821 = vmul.f32 %v6789, %v6789
      %v6822 = vmul.f32 %v6790, %v6790
      %v6823 = vmul.f32 %v6791, %v6791
      %v6824 = vmul.f32 %v6792, %v6792
      %v6825 = vmul.f32 %v6793, %v6793
      %v6826 = vmul.f32 %v6794, %v6794
      %v6827 = vmul.f32 %v6795, %v6795
      %v6828 = vmul.f32 %v6796, %v6796
      %v6829 = vmul.f32 %v6797, %v6797
      %v6830 = vmul.f32 %v6798, %v6798
      %v6831 = vmul.f32 %v6799, %v6799
      %v6832 = vmul.f32 %v6800, %v6800
      %v6833 = vmul.f32 %v6801, %v6801
      %v6834 = vmul.f32 %v6802, %v6802
      %v6835 = vmul.f32 %v6803, %v6803
      %v6836 = vmul.f32 %v6804, %v6804
      %v6837 = vmul.f32 %v6805, %v6805
      %v6838 = vmul.f32 %v6806, %v6806
      %v6839 = vmul.f32 %v6807, %v6807
      %v6840 = vmul.f32 %v6808, %v6808
      %v6841 = vsel %vm621, %v6809, 0.0
      %v6842 = vsel %vm621, %v6810, 0.0
      %v6843 = vadd.f32 %v6841, %v6842
      %v6844 = vsel %vm621, %v6811, 0.0
      %v6845 = vadd.f32 %v6843, %v6844
      %v6846 = vsel %vm621, %v6812, 0.0
      %v6847 = vadd.f32 %v6845, %v6846
      %v6848 = vsel %vm621, %v6813, 0.0
      %v6849 = vadd.f32 %v6847, %v6848
      %v6850 = vsel %vm621, %v6814, 0.0
      %v6851 = vadd.f32 %v6849, %v6850
      %v6852 = vsel %vm621, %v6815, 0.0
      %v6853 = vadd.f32 %v6851, %v6852
      %v6854 = vsel %vm621, %v6816, 0.0
      %v6855 = vadd.f32 %v6853, %v6854
      %v6856 = vsel %vm621, %v6817, 0.0
      %v6857 = vadd.f32 %v6855, %v6856
      %v6858 = vsel %vm621, %v6818, 0.0
      %v6859 = vadd.f32 %v6857, %v6858
      %v6860 = vsel %vm621, %v6819, 0.0
      %v6861 = vadd.f32 %v6859, %v6860
      %v6862 = vsel %vm621, %v6820, 0.0
      %v6863 = vadd.f32 %v6861, %v6862
      %v6864 = vsel %vm621, %v6821, 0.0
      %v6865 = vadd.f32 %v6863, %v6864
      %v6866 = vsel %vm621, %v6822, 0.0
      %v6867 = vadd.f32 %v6865, %v6866
      %v6868 = vsel %vm621, %v6823, 0.0
      %v6869 = vadd.f32 %v6867, %v6868
      %v6870 = vsel %vm621, %v6824, 0.0
      %v6871 = vadd.f32 %v6869, %v6870
      %v6872 = vsel %vm621, %v6825, 0.0
      %v6873 = vadd.f32 %v6871, %v6872
      %v6874 = vsel %vm621, %v6826, 0.0
      %v6875 = vadd.f32 %v6873, %v6874
      %v6876 = vsel %vm621, %v6827, 0.0
      %v6877 = vadd.f32 %v6875, %v6876
      %v6878 = vsel %vm621, %v6828, 0.0
      %v6879 = vadd.f32 %v6877, %v6878
      %v6880 = vsel %vm621, %v6829, 0.0
      %v6881 = vadd.f32 %v6879, %v6880
      %v6882 = vsel %vm621, %v6830, 0.0
      %v6883 = vadd.f32 %v6881, %v6882
      %v6884 = vsel %vm621, %v6831, 0.0
      %v6885 = vadd.f32 %v6883, %v6884
      %v6886 = vsel %vm621, %v6832, 0.0
      %v6887 = vadd.f32 %v6885, %v6886
      %v6888 = vsel %vm621, %v6833, 0.0
      %v6889 = vadd.f32 %v6887, %v6888
      %v6890 = vsel %vm621, %v6834, 0.0
      %v6891 = vadd.f32 %v6889, %v6890
      %v6892 = vsel %vm621, %v6835, 0.0
      %v6893 = vadd.f32 %v6891, %v6892
      %v6894 = vsel %vm621, %v6836, 0.0
      %v6895 = vadd.f32 %v6893, %v6894
      %v6896 = vsel %vm621, %v6837, 0.0
      %v6897 = vadd.f32 %v6895, %v6896
      %v6898 = vsel %vm621, %v6838, 0.0
      %v6899 = vadd.f32 %v6897, %v6898
      %v6900 = vsel %vm621, %v6839, 0.0
      %v6901 = vadd.f32 %v6899, %v6900
      %v6902 = vsel %vm621, %v6840, 0.0
      %v6903 = vadd.f32 %v6901, %v6902
      %v6904 = vrot.slane %v6903, 4
      %v6905 = vadd.f32 %v6903, %v6904
      %v6906 = vrot.slane %v6905, 2
      %v6907 = vadd.f32 %v6905, %v6906
      %v6908 = vrot.slane %v6907, 1
      %v6909 = vadd.f32 %v6907, %v6908
      %v6910 = vmul.f32 %v6909, %v697
      %v6911 = vadd.f32 %v6910, 1e-05
      %v6912 = vrsqrt.pop %v6911
      %v6913 = vmul.f32 %v6912, %v6911
      %v6914 = vmul.f32 %v6913, %v6912
      %v6915 = vmul.f32 0.5, %v6914
      %v6916 = vsub.f32 1.5, %v6915
      %v6917 = vmul.f32 %v6912, %v6916
      %vm6918 = vweird.f32 %v6911
      %vm6919 = vweird.f32 %v6912
      %vm6920 = vmor %vm6918, %vm6919
      %v6921 = vsel %vm6920, %v6912, %v6917
      %v6922 = vmul.f32 %v6777, %v6921
      %v6923 = vmul.f32 %v6778, %v6921
      %v6924 = vmul.f32 %v6779, %v6921
      %v6925 = vmul.f32 %v6780, %v6921
      %v6926 = vmul.f32 %v6781, %v6921
      %v6927 = vmul.f32 %v6782, %v6921
      %v6928 = vmul.f32 %v6783, %v6921
      %v6929 = vmul.f32 %v6784, %v6921
      %v6930 = vmul.f32 %v6785, %v6921
      %v6931 = vmul.f32 %v6786, %v6921
      %v6932 = vmul.f32 %v6787, %v6921
      %v6933 = vmul.f32 %v6788, %v6921
      %v6934 = vmul.f32 %v6789, %v6921
      %v6935 = vmul.f32 %v6790, %v6921
      %v6936 = vmul.f32 %v6791, %v6921
      %v6937 = vmul.f32 %v6792, %v6921
      %v6938 = vmul.f32 %v6793, %v6921
      %v6939 = vmul.f32 %v6794, %v6921
      %v6940 = vmul.f32 %v6795, %v6921
      %v6941 = vmul.f32 %v6796, %v6921
      %v6942 = vmul.f32 %v6797, %v6921
      %v6943 = vmul.f32 %v6798, %v6921
      %v6944 = vmul.f32 %v6799, %v6921
      %v6945 = vmul.f32 %v6800, %v6921
      %v6946 = vmul.f32 %v6801, %v6921
      %v6947 = vmul.f32 %v6802, %v6921
      %v6948 = vmul.f32 %v6803, %v6921
      %v6949 = vmul.f32 %v6804, %v6921
      %v6950 = vmul.f32 %v6805, %v6921
      %v6951 = vmul.f32 %v6806, %v6921
      %v6952 = vmul.f32 %v6807, %v6921
      %v6953 = vmul.f32 %v6808, %v6921
      %v6954 = vmax.f32 %v6922, 0.0
      %v6955 = vmax.f32 %v6923, 0.0
      %v6956 = vmax.f32 %v6924, 0.0
      %v6957 = vmax.f32 %v6925, 0.0
      %v6958 = vmax.f32 %v6926, 0.0
      %v6959 = vmax.f32 %v6927, 0.0
      %v6960 = vmax.f32 %v6928, 0.0
      %v6961 = vmax.f32 %v6929, 0.0
      %v6962 = vmax.f32 %v6930, 0.0
      %v6963 = vmax.f32 %v6931, 0.0
      %v6964 = vmax.f32 %v6932, 0.0
      %v6965 = vmax.f32 %v6933, 0.0
      %v6966 = vmax.f32 %v6934, 0.0
      %v6967 = vmax.f32 %v6935, 0.0
      %v6968 = vmax.f32 %v6936, 0.0
      %v6969 = vmax.f32 %v6937, 0.0
      %v6970 = vmax.f32 %v6938, 0.0
      %v6971 = vmax.f32 %v6939, 0.0
      %v6972 = vmax.f32 %v6940, 0.0
      %v6973 = vmax.f32 %v6941, 0.0
      %v6974 = vmax.f32 %v6942, 0.0
      %v6975 = vmax.f32 %v6943, 0.0
      %v6976 = vmax.f32 %v6944, 0.0
      %v6977 = vmax.f32 %v6945, 0.0
      %v6978 = vmax.f32 %v6946, 0.0
      %v6979 = vmax.f32 %v6947, 0.0
      %v6980 = vmax.f32 %v6948, 0.0
      %v6981 = vmax.f32 %v6949, 0.0
      %v6982 = vmax.f32 %v6950, 0.0
      %v6983 = vmax.f32 %v6951, 0.0
      %v6984 = vmax.f32 %v6952, 0.0
      %v6985 = vmax.f32 %v6953, 0.0
      %v6986 = vpack.c.bf16 %v6955, %v6954
      %v6987 = vpack.c.bf16 %v6957, %v6956
      %v6988 = vpack.c.bf16 %v6959, %v6958
      %v6989 = vpack.c.bf16 %v6961, %v6960
      %v6990 = vpack.c.bf16 %v6963, %v6962
      %v6991 = vpack.c.bf16 %v6965, %v6964
      %v6992 = vpack.c.bf16 %v6967, %v6966
      %v6993 = vpack.c.bf16 %v6969, %v6968
      %v6994 = vpack.c.bf16 %v6971, %v6970
      %v6995 = vpack.c.bf16 %v6973, %v6972
      %v6996 = vpack.c.bf16 %v6975, %v6974
      %v6997 = vpack.c.bf16 %v6977, %v6976
      %v6998 = vpack.c.bf16 %v6979, %v6978
      %v6999 = vpack.c.bf16 %v6981, %v6980
      %v7000 = vpack.c.bf16 %v6983, %v6982
      %v7001 = vpack.c.bf16 %v6985, %v6984
      %s7002 = scalar_lea.vmem %s1, 16
      %v7003 = vld [vmem:[%s7002] sm:$0xf]
      %v7004 = vld [vmem:[%s7002 + $0x4] sm:$0xf]
      %v7006 = vunpack.c.l.b16 %v7003
      %v7007 = vpack.c.b16 %v7006, %v7006
      %v7008 = vrot.slane %v7007, 2
      %v7010 = vsel %vm973, %v7008, 0
      %7012 = vmatpush.bf16.msra.mxu0 0
      %7013 = vmatpush.bf16.msra.mxu0 0
      %7014 = vmatpush.bf16.msra.mxu0 0
      %7015 = vmatpush.bf16.msra.mxu0 0
      %7016 = vmatpush.bf16.msra.mxu0 0
      %7017 = vmatpush.bf16.msra.mxu0 0
      %7018 = vmatpush.bf16.msra.mxu0 0
      %7019 = vmatpush.bf16.msra.mxu0 %v7010
      %7020 = vmatmul.bf16.gmra.mxu0 %v4307
      %v7021 = vpop.f32.mrf.mxu0
      %v7022 = vadd.f32 0.0, %v7021
      %v7023 = vpop.f32.mrf.mxu0
      %v7024 = vadd.f32 0.0, %v7023
      %7025 = vmatmul.bf16.gmra.mxu0 %v4310
      %v7026 = vpop.f32.mrf.mxu0
      %v7027 = vadd.f32 0.0, %v7026
      %v7028 = vpop.f32.mrf.mxu0
      %v7029 = vadd.f32 0.0, %v7028
      %7030 = vmatmul.bf16.gmra.mxu0 %v4313
      %v7031 = vpop.f32.mrf.mxu0
      %v7032 = vadd.f32 0.0, %v7031
      %v7033 = vpop.f32.mrf.mxu0
      %v7034 = vadd.f32 0.0, %v7033
      %7035 = vmatmul.bf16.gmra.mxu0 %v4316
      %v7036 = vpop.f32.mrf.mxu0
      %v7037 = vadd.f32 0.0, %v7036
      %v7038 = vpop.f32.mrf.mxu0
      %v7039 = vadd.f32 0.0, %v7038
      %7040 = vmatmul.bf16.gmra.mxu0 %v4319
      %v7041 = vpop.f32.mrf.mxu0
      %v7042 = vadd.f32 0.0, %v7041
      %v7043 = vpop.f32.mrf.mxu0
      %v7044 = vadd.f32 0.0, %v7043
      %7045 = vmatmul.bf16.gmra.mxu0 %v4322
      %v7046 = vpop.f32.mrf.mxu0
      %v7047 = vadd.f32 0.0, %v7046
      %v7048 = vpop.f32.mrf.mxu0
      %v7049 = vadd.f32 0.0, %v7048
      %7050 = vmatmul.bf16.gmra.mxu0 %v4325
      %v7051 = vpop.f32.mrf.mxu0
      %v7052 = vadd.f32 0.0, %v7051
      %v7053 = vpop.f32.mrf.mxu0
      %v7054 = vadd.f32 0.0, %v7053
      %7055 = vmatmul.bf16.gmra.mxu0 %v4328
      %v7056 = vpop.f32.mrf.mxu0
      %v7057 = vadd.f32 0.0, %v7056
      %v7058 = vpop.f32.mrf.mxu0
      %v7059 = vadd.f32 0.0, %v7058
      %7060 = vmatmul.bf16.gmra.mxu0 %v4331
      %v7061 = vpop.f32.mrf.mxu0
      %v7062 = vadd.f32 0.0, %v7061
      %v7063 = vpop.f32.mrf.mxu0
      %v7064 = vadd.f32 0.0, %v7063
      %7065 = vmatmul.bf16.gmra.mxu0 %v4334
      %v7066 = vpop.f32.mrf.mxu0
      %v7067 = vadd.f32 0.0, %v7066
      %v7068 = vpop.f32.mrf.mxu0
      %v7069 = vadd.f32 0.0, %v7068
      %7070 = vmatmul.bf16.gmra.mxu0 %v4337
      %v7071 = vpop.f32.mrf.mxu0
      %v7072 = vadd.f32 0.0, %v7071
      %v7073 = vpop.f32.mrf.mxu0
      %v7074 = vadd.f32 0.0, %v7073
      %7075 = vmatmul.bf16.gmra.mxu0 %v4340
      %v7076 = vpop.f32.mrf.mxu0
      %v7077 = vadd.f32 0.0, %v7076
      %v7078 = vpop.f32.mrf.mxu0
      %v7079 = vadd.f32 0.0, %v7078
      %7080 = vmatmul.bf16.gmra.mxu0 %v4343
      %v7081 = vpop.f32.mrf.mxu0
      %v7082 = vadd.f32 0.0, %v7081
      %v7083 = vpop.f32.mrf.mxu0
      %v7084 = vadd.f32 0.0, %v7083
      %7085 = vmatmul.bf16.gmra.mxu0 %v4346
      %v7086 = vpop.f32.mrf.mxu0
      %v7087 = vadd.f32 0.0, %v7086
      %v7088 = vpop.f32.mrf.mxu0
      %v7089 = vadd.f32 0.0, %v7088
      %7090 = vmatmul.bf16.gmra.mxu0 %v4349
      %v7091 = vpop.f32.mrf.mxu0
      %v7092 = vadd.f32 0.0, %v7091
      %v7093 = vpop.f32.mrf.mxu0
      %v7094 = vadd.f32 0.0, %v7093
      %7095 = vmatmul.bf16.gmra.mxu0 %v4352
      %v7096 = vpop.f32.mrf.mxu0
      %v7097 = vadd.f32 0.0, %v7096
      %v7098 = vpop.f32.mrf.mxu0
      %v7099 = vadd.f32 0.0, %v7098
      %7100 = vdwg.mxu0
      %v7102 = vsel %vm973, %v7003, 0
      %7104 = vmatpush.bf16.msra.mxu0 0
      %7105 = vmatpush.bf16.msra.mxu0 0
      %7106 = vmatpush.bf16.msra.mxu0 0
      %7107 = vmatpush.bf16.msra.mxu0 0
      %7108 = vmatpush.bf16.msra.mxu0 0
      %7109 = vmatpush.bf16.msra.mxu0 0
      %7110 = vmatpush.bf16.msra.mxu0 0
      %7111 = vmatpush.bf16.msra.mxu0 %v7102
      %7112 = vmatmul.bf16.gmra.mxu0 %v926
      %v7113 = vpop.f32.mrf.mxu0
      %v7114 = vadd.f32 %v7022, %v7113
      %v7115 = vpop.f32.mrf.mxu0
      %v7116 = vadd.f32 %v7024, %v7115
      %7117 = vmatmul.bf16.gmra.mxu0 %v929
      %v7118 = vpop.f32.mrf.mxu0
      %v7119 = vadd.f32 %v7027, %v7118
      %v7120 = vpop.f32.mrf.mxu0
      %v7121 = vadd.f32 %v7029, %v7120
      %7122 = vmatmul.bf16.gmra.mxu0 %v932
      %v7123 = vpop.f32.mrf.mxu0
      %v7124 = vadd.f32 %v7032, %v7123
      %v7125 = vpop.f32.mrf.mxu0
      %v7126 = vadd.f32 %v7034, %v7125
      %7127 = vmatmul.bf16.gmra.mxu0 %v935
      %v7128 = vpop.f32.mrf.mxu0
      %v7129 = vadd.f32 %v7037, %v7128
      %v7130 = vpop.f32.mrf.mxu0
      %v7131 = vadd.f32 %v7039, %v7130
      %7132 = vmatmul.bf16.gmra.mxu0 %v938
      %v7133 = vpop.f32.mrf.mxu0
      %v7134 = vadd.f32 %v7042, %v7133
      %v7135 = vpop.f32.mrf.mxu0
      %v7136 = vadd.f32 %v7044, %v7135
      %7137 = vmatmul.bf16.gmra.mxu0 %v941
      %v7138 = vpop.f32.mrf.mxu0
      %v7139 = vadd.f32 %v7047, %v7138
      %v7140 = vpop.f32.mrf.mxu0
      %v7141 = vadd.f32 %v7049, %v7140
      %7142 = vmatmul.bf16.gmra.mxu0 %v944
      %v7143 = vpop.f32.mrf.mxu0
      %v7144 = vadd.f32 %v7052, %v7143
      %v7145 = vpop.f32.mrf.mxu0
      %v7146 = vadd.f32 %v7054, %v7145
      %7147 = vmatmul.bf16.gmra.mxu0 %v947
      %v7148 = vpop.f32.mrf.mxu0
      %v7149 = vadd.f32 %v7057, %v7148
      %v7150 = vpop.f32.mrf.mxu0
      %v7151 = vadd.f32 %v7059, %v7150
      %7152 = vmatmul.bf16.gmra.mxu0 %v950
      %v7153 = vpop.f32.mrf.mxu0
      %v7154 = vadd.f32 %v7062, %v7153
      %v7155 = vpop.f32.mrf.mxu0
      %v7156 = vadd.f32 %v7064, %v7155
      %7157 = vmatmul.bf16.gmra.mxu0 %v953
      %v7158 = vpop.f32.mrf.mxu0
      %v7159 = vadd.f32 %v7067, %v7158
      %v7160 = vpop.f32.mrf.mxu0
      %v7161 = vadd.f32 %v7069, %v7160
      %7162 = vmatmul.bf16.gmra.mxu0 %v956
      %v7163 = vpop.f32.mrf.mxu0
      %v7164 = vadd.f32 %v7072, %v7163
      %v7165 = vpop.f32.mrf.mxu0
      %v7166 = vadd.f32 %v7074, %v7165
      %7167 = vmatmul.bf16.gmra.mxu0 %v959
      %v7168 = vpop.f32.mrf.mxu0
      %v7169 = vadd.f32 %v7077, %v7168
      %v7170 = vpop.f32.mrf.mxu0
      %v7171 = vadd.f32 %v7079, %v7170
      %7172 = vmatmul.bf16.gmra.mxu0 %v962
      %v7173 = vpop.f32.mrf.mxu0
      %v7174 = vadd.f32 %v7082, %v7173
      %v7175 = vpop.f32.mrf.mxu0
      %v7176 = vadd.f32 %v7084, %v7175
      %7177 = vmatmul.bf16.gmra.mxu0 %v965
      %v7178 = vpop.f32.mrf.mxu0
      %v7179 = vadd.f32 %v7087, %v7178
      %v7180 = vpop.f32.mrf.mxu0
      %v7181 = vadd.f32 %v7089, %v7180
      %7182 = vmatmul.bf16.gmra.mxu0 %v968
      %v7183 = vpop.f32.mrf.mxu0
      %v7184 = vadd.f32 %v7092, %v7183
      %v7185 = vpop.f32.mrf.mxu0
      %v7186 = vadd.f32 %v7094, %v7185
      %7187 = vmatmul.bf16.gmra.mxu0 %v971
      %v7188 = vpop.f32.mrf.mxu0
      %v7189 = vadd.f32 %v7097, %v7188
      %v7190 = vpop.f32.mrf.mxu0
      %v7191 = vadd.f32 %v7099, %v7190
      %7192 = vdwg.mxu0
      %v7194 = vsel %vm621, %v6986, 0
      %v7197 = vsel %vm621, %v6987, 0
      %v7200 = vsel %vm621, %v6988, 0
      %v7203 = vsel %vm621, %v6989, 0
      %v7206 = vsel %vm621, %v6990, 0
      %v7209 = vsel %vm621, %v6991, 0
      %v7212 = vsel %vm621, %v6992, 0
      %v7215 = vsel %vm621, %v6993, 0
      %v7218 = vsel %vm621, %v6994, 0
      %v7221 = vsel %vm621, %v6995, 0
      %v7224 = vsel %vm621, %v6996, 0
      %v7227 = vsel %vm621, %v6997, 0
      %v7230 = vsel %vm621, %v6998, 0
      %v7233 = vsel %vm621, %v6999, 0
      %v7236 = vsel %vm621, %v7000, 0
      %v7239 = vsel %vm621, %v7001, 0
      %v7242 = vsel %vm973, %v7004, 0
      %7244 = vmatpush.bf16.msra.mxu0 0
      %7245 = vmatpush.bf16.msra.mxu0 0
      %7246 = vmatpush.bf16.msra.mxu0 0
      %7247 = vmatpush.bf16.msra.mxu0 0
      %7248 = vmatpush.bf16.msra.mxu0 0
      %7249 = vmatpush.bf16.msra.mxu0 0
      %7250 = vmatpush.bf16.msra.mxu0 0
      %7251 = vmatpush.bf16.msra.mxu0 %v7242
      %7252 = vmatmul.bf16.gmra.mxu0 %v7194
      %v7253 = vpop.f32.mrf.mxu0
      %v7254 = vadd.f32 0.0, %v7253
      %v7255 = vpop.f32.mrf.mxu0
      %v7256 = vadd.f32 0.0, %v7255
      %7257 = vmatmul.bf16.gmra.mxu0 %v7197
      %v7258 = vpop.f32.mrf.mxu0
      %v7259 = vadd.f32 0.0, %v7258
      %v7260 = vpop.f32.mrf.mxu0
      %v7261 = vadd.f32 0.0, %v7260
      %7262 = vmatmul.bf16.gmra.mxu0 %v7200
      %v7263 = vpop.f32.mrf.mxu0
      %v7264 = vadd.f32 0.0, %v7263
      %v7265 = vpop.f32.mrf.mxu0
      %v7266 = vadd.f32 0.0, %v7265
      %7267 = vmatmul.bf16.gmra.mxu0 %v7203
      %v7268 = vpop.f32.mrf.mxu0
      %v7269 = vadd.f32 0.0, %v7268
      %v7270 = vpop.f32.mrf.mxu0
      %v7271 = vadd.f32 0.0, %v7270
      %7272 = vmatmul.bf16.gmra.mxu0 %v7206
      %v7273 = vpop.f32.mrf.mxu0
      %v7274 = vadd.f32 0.0, %v7273
      %v7275 = vpop.f32.mrf.mxu0
      %v7276 = vadd.f32 0.0, %v7275
      %7277 = vmatmul.bf16.gmra.mxu0 %v7209
      %v7278 = vpop.f32.mrf.mxu0
      %v7279 = vadd.f32 0.0, %v7278
      %v7280 = vpop.f32.mrf.mxu0
      %v7281 = vadd.f32 0.0, %v7280
      %7282 = vmatmul.bf16.gmra.mxu0 %v7212
      %v7283 = vpop.f32.mrf.mxu0
      %v7284 = vadd.f32 0.0, %v7283
      %v7285 = vpop.f32.mrf.mxu0
      %v7286 = vadd.f32 0.0, %v7285
      %7287 = vmatmul.bf16.gmra.mxu0 %v7215
      %v7288 = vpop.f32.mrf.mxu0
      %v7289 = vadd.f32 0.0, %v7288
      %v7290 = vpop.f32.mrf.mxu0
      %v7291 = vadd.f32 0.0, %v7290
      %7292 = vmatmul.bf16.gmra.mxu0 %v7218
      %v7293 = vpop.f32.mrf.mxu0
      %v7294 = vadd.f32 0.0, %v7293
      %v7295 = vpop.f32.mrf.mxu0
      %v7296 = vadd.f32 0.0, %v7295
      %7297 = vmatmul.bf16.gmra.mxu0 %v7221
      %v7298 = vpop.f32.mrf.mxu0
      %v7299 = vadd.f32 0.0, %v7298
      %v7300 = vpop.f32.mrf.mxu0
      %v7301 = vadd.f32 0.0, %v7300
      %7302 = vmatmul.bf16.gmra.mxu0 %v7224
      %v7303 = vpop.f32.mrf.mxu0
      %v7304 = vadd.f32 0.0, %v7303
      %v7305 = vpop.f32.mrf.mxu0
      %v7306 = vadd.f32 0.0, %v7305
      %7307 = vmatmul.bf16.gmra.mxu0 %v7227
      %v7308 = vpop.f32.mrf.mxu0
      %v7309 = vadd.f32 0.0, %v7308
      %v7310 = vpop.f32.mrf.mxu0
      %v7311 = vadd.f32 0.0, %v7310
      %7312 = vmatmul.bf16.gmra.mxu0 %v7230
      %v7313 = vpop.f32.mrf.mxu0
      %v7314 = vadd.f32 0.0, %v7313
      %v7315 = vpop.f32.mrf.mxu0
      %v7316 = vadd.f32 0.0, %v7315
      %7317 = vmatmul.bf16.gmra.mxu0 %v7233
      %v7318 = vpop.f32.mrf.mxu0
      %v7319 = vadd.f32 0.0, %v7318
      %v7320 = vpop.f32.mrf.mxu0
      %v7321 = vadd.f32 0.0, %v7320
      %7322 = vmatmul.bf16.gmra.mxu0 %v7236
      %v7323 = vpop.f32.mrf.mxu0
      %v7324 = vadd.f32 0.0, %v7323
      %v7325 = vpop.f32.mrf.mxu0
      %v7326 = vadd.f32 0.0, %v7325
      %7327 = vmatmul.bf16.gmra.mxu0 %v7239
      %v7328 = vpop.f32.mrf.mxu0
      %v7329 = vadd.f32 0.0, %v7328
      %v7330 = vpop.f32.mrf.mxu0
      %v7331 = vadd.f32 0.0, %v7330
      %7332 = vdwg.mxu0
      %v7333 = vadd.f32 %v7114, %v7254
      %v7334 = vadd.f32 %v7116, %v7256
      %v7335 = vadd.f32 %v7119, %v7259
      %v7336 = vadd.f32 %v7121, %v7261
      %v7337 = vadd.f32 %v7124, %v7264
      %v7338 = vadd.f32 %v7126, %v7266
      %v7339 = vadd.f32 %v7129, %v7269
      %v7340 = vadd.f32 %v7131, %v7271
      %v7341 = vadd.f32 %v7134, %v7274
      %v7342 = vadd.f32 %v7136, %v7276
      %v7343 = vadd.f32 %v7139, %v7279
      %v7344 = vadd.f32 %v7141, %v7281
      %v7345 = vadd.f32 %v7144, %v7284
      %v7346 = vadd.f32 %v7146, %v7286
      %v7347 = vadd.f32 %v7149, %v7289
      %v7348 = vadd.f32 %v7151, %v7291
      %v7349 = vadd.f32 %v7154, %v7294
      %v7350 = vadd.f32 %v7156, %v7296
      %v7351 = vadd.f32 %v7159, %v7299
      %v7352 = vadd.f32 %v7161, %v7301
      %v7353 = vadd.f32 %v7164, %v7304
      %v7354 = vadd.f32 %v7166, %v7306
      %v7355 = vadd.f32 %v7169, %v7309
      %v7356 = vadd.f32 %v7171, %v7311
      %v7357 = vadd.f32 %v7174, %v7314
      %v7358 = vadd.f32 %v7176, %v7316
      %v7359 = vadd.f32 %v7179, %v7319
      %v7360 = vadd.f32 %v7181, %v7321
      %v7361 = vadd.f32 %v7184, %v7324
      %v7362 = vadd.f32 %v7186, %v7326
      %v7363 = vadd.f32 %v7189, %v7329
      %v7364 = vadd.f32 %v7191, %v7331
      %v7365 = vsel %vm1066, %v7333, 0.0
      %v7366 = vsel %vm1066, %v7334, 0.0
      %v7367 = vadd.f32 %v7365, %v7366
      %v7368 = vsel %vm1066, %v7335, 0.0
      %v7369 = vadd.f32 %v7367, %v7368
      %v7370 = vsel %vm1066, %v7336, 0.0
      %v7371 = vadd.f32 %v7369, %v7370
      %v7372 = vsel %vm1066, %v7337, 0.0
      %v7373 = vadd.f32 %v7371, %v7372
      %v7374 = vsel %vm1066, %v7338, 0.0
      %v7375 = vadd.f32 %v7373, %v7374
      %v7376 = vsel %vm1066, %v7339, 0.0
      %v7377 = vadd.f32 %v7375, %v7376
      %v7378 = vsel %vm1066, %v7340, 0.0
      %v7379 = vadd.f32 %v7377, %v7378
      %v7380 = vsel %vm1066, %v7341, 0.0
      %v7381 = vadd.f32 %v7379, %v7380
      %v7382 = vsel %vm1066, %v7342, 0.0
      %v7383 = vadd.f32 %v7381, %v7382
      %v7384 = vsel %vm1066, %v7343, 0.0
      %v7385 = vadd.f32 %v7383, %v7384
      %v7386 = vsel %vm1066, %v7344, 0.0
      %v7387 = vadd.f32 %v7385, %v7386
      %v7388 = vsel %vm1066, %v7345, 0.0
      %v7389 = vadd.f32 %v7387, %v7388
      %v7390 = vsel %vm1066, %v7346, 0.0
      %v7391 = vadd.f32 %v7389, %v7390
      %v7392 = vsel %vm1066, %v7347, 0.0
      %v7393 = vadd.f32 %v7391, %v7392
      %v7394 = vsel %vm1066, %v7348, 0.0
      %v7395 = vadd.f32 %v7393, %v7394
      %v7396 = vsel %vm1066, %v7349, 0.0
      %v7397 = vadd.f32 %v7395, %v7396
      %v7398 = vsel %vm1066, %v7350, 0.0
      %v7399 = vadd.f32 %v7397, %v7398
      %v7400 = vsel %vm1066, %v7351, 0.0
      %v7401 = vadd.f32 %v7399, %v7400
      %v7402 = vsel %vm1066, %v7352, 0.0
      %v7403 = vadd.f32 %v7401, %v7402
      %v7404 = vsel %vm1066, %v7353, 0.0
      %v7405 = vadd.f32 %v7403, %v7404
      %v7406 = vsel %vm1066, %v7354, 0.0
      %v7407 = vadd.f32 %v7405, %v7406
      %v7408 = vsel %vm1066, %v7355, 0.0
      %v7409 = vadd.f32 %v7407, %v7408
      %v7410 = vsel %vm1066, %v7356, 0.0
      %v7411 = vadd.f32 %v7409, %v7410
      %v7412 = vsel %vm1066, %v7357, 0.0
      %v7413 = vadd.f32 %v7411, %v7412
      %v7414 = vsel %vm1066, %v7358, 0.0
      %v7415 = vadd.f32 %v7413, %v7414
      %v7416 = vsel %vm1066, %v7359, 0.0
      %v7417 = vadd.f32 %v7415, %v7416
      %v7418 = vsel %vm1066, %v7360, 0.0
      %v7419 = vadd.f32 %v7417, %v7418
      %v7420 = vsel %vm1066, %v7361, 0.0
      %v7421 = vadd.f32 %v7419, %v7420
      %v7422 = vsel %vm1066, %v7362, 0.0
      %v7423 = vadd.f32 %v7421, %v7422
      %v7424 = vsel %vm1066, %v7363, 0.0
      %v7425 = vadd.f32 %v7423, %v7424
      %v7426 = vsel %vm1066, %v7364, 0.0
      %v7427 = vadd.f32 %v7425, %v7426
      %v7428 = vrot.slane %v7427, 4
      %v7429 = vadd.f32 %v7427, %v7428
      %v7430 = vrot.slane %v7429, 2
      %v7431 = vadd.f32 %v7429, %v7430
      %v7432 = vrot.slane %v7431, 1
      %v7433 = vadd.f32 %v7431, %v7432
      %v7434 = vmul.f32 %v7433, %v697
      %v7435 = vsub.f32 %v7333, %v7434
      %v7436 = vsub.f32 %v7334, %v7434
      %v7437 = vsub.f32 %v7335, %v7434
      %v7438 = vsub.f32 %v7336, %v7434
      %v7439 = vsub.f32 %v7337, %v7434
      %v7440 = vsub.f32 %v7338, %v7434
      %v7441 = vsub.f32 %v7339, %v7434
      %v7442 = vsub.f32 %v7340, %v7434
      %v7443 = vsub.f32 %v7341, %v7434
      %v7444 = vsub.f32 %v7342, %v7434
      %v7445 = vsub.f32 %v7343, %v7434
      %v7446 = vsub.f32 %v7344, %v7434
      %v7447 = vsub.f32 %v7345, %v7434
      %v7448 = vsub.f32 %v7346, %v7434
      %v7449 = vsub.f32 %v7347, %v7434
      %v7450 = vsub.f32 %v7348, %v7434
      %v7451 = vsub.f32 %v7349, %v7434
      %v7452 = vsub.f32 %v7350, %v7434
      %v7453 = vsub.f32 %v7351, %v7434
      %v7454 = vsub.f32 %v7352, %v7434
      %v7455 = vsub.f32 %v7353, %v7434
      %v7456 = vsub.f32 %v7354, %v7434
      %v7457 = vsub.f32 %v7355, %v7434
      %v7458 = vsub.f32 %v7356, %v7434
      %v7459 = vsub.f32 %v7357, %v7434
      %v7460 = vsub.f32 %v7358, %v7434
      %v7461 = vsub.f32 %v7359, %v7434
      %v7462 = vsub.f32 %v7360, %v7434
      %v7463 = vsub.f32 %v7361, %v7434
      %v7464 = vsub.f32 %v7362, %v7434
      %v7465 = vsub.f32 %v7363, %v7434
      %v7466 = vsub.f32 %v7364, %v7434
      %v7467 = vmul.f32 %v7435, %v7435
      %v7468 = vmul.f32 %v7436, %v7436
      %v7469 = vmul.f32 %v7437, %v7437
      %v7470 = vmul.f32 %v7438, %v7438
      %v7471 = vmul.f32 %v7439, %v7439
      %v7472 = vmul.f32 %v7440, %v7440
      %v7473 = vmul.f32 %v7441, %v7441
      %v7474 = vmul.f32 %v7442, %v7442
      %v7475 = vmul.f32 %v7443, %v7443
      %v7476 = vmul.f32 %v7444, %v7444
      %v7477 = vmul.f32 %v7445, %v7445
      %v7478 = vmul.f32 %v7446, %v7446
      %v7479 = vmul.f32 %v7447, %v7447
      %v7480 = vmul.f32 %v7448, %v7448
      %v7481 = vmul.f32 %v7449, %v7449
      %v7482 = vmul.f32 %v7450, %v7450
      %v7483 = vmul.f32 %v7451, %v7451
      %v7484 = vmul.f32 %v7452, %v7452
      %v7485 = vmul.f32 %v7453, %v7453
      %v7486 = vmul.f32 %v7454, %v7454
      %v7487 = vmul.f32 %v7455, %v7455
      %v7488 = vmul.f32 %v7456, %v7456
      %v7489 = vmul.f32 %v7457, %v7457
      %v7490 = vmul.f32 %v7458, %v7458
      %v7491 = vmul.f32 %v7459, %v7459
      %v7492 = vmul.f32 %v7460, %v7460
      %v7493 = vmul.f32 %v7461, %v7461
      %v7494 = vmul.f32 %v7462, %v7462
      %v7495 = vmul.f32 %v7463, %v7463
      %v7496 = vmul.f32 %v7464, %v7464
      %v7497 = vmul.f32 %v7465, %v7465
      %v7498 = vmul.f32 %v7466, %v7466
      %v7499 = vsel %vm1066, %v7467, 0.0
      %v7500 = vsel %vm1066, %v7468, 0.0
      %v7501 = vadd.f32 %v7499, %v7500
      %v7502 = vsel %vm1066, %v7469, 0.0
      %v7503 = vadd.f32 %v7501, %v7502
      %v7504 = vsel %vm1066, %v7470, 0.0
      %v7505 = vadd.f32 %v7503, %v7504
      %v7506 = vsel %vm1066, %v7471, 0.0
      %v7507 = vadd.f32 %v7505, %v7506
      %v7508 = vsel %vm1066, %v7472, 0.0
      %v7509 = vadd.f32 %v7507, %v7508
      %v7510 = vsel %vm1066, %v7473, 0.0
      %v7511 = vadd.f32 %v7509, %v7510
      %v7512 = vsel %vm1066, %v7474, 0.0
      %v7513 = vadd.f32 %v7511, %v7512
      %v7514 = vsel %vm1066, %v7475, 0.0
      %v7515 = vadd.f32 %v7513, %v7514
      %v7516 = vsel %vm1066, %v7476, 0.0
      %v7517 = vadd.f32 %v7515, %v7516
      %v7518 = vsel %vm1066, %v7477, 0.0
      %v7519 = vadd.f32 %v7517, %v7518
      %v7520 = vsel %vm1066, %v7478, 0.0
      %v7521 = vadd.f32 %v7519, %v7520
      %v7522 = vsel %vm1066, %v7479, 0.0
      %v7523 = vadd.f32 %v7521, %v7522
      %v7524 = vsel %vm1066, %v7480, 0.0
      %v7525 = vadd.f32 %v7523, %v7524
      %v7526 = vsel %vm1066, %v7481, 0.0
      %v7527 = vadd.f32 %v7525, %v7526
      %v7528 = vsel %vm1066, %v7482, 0.0
      %v7529 = vadd.f32 %v7527, %v7528
      %v7530 = vsel %vm1066, %v7483, 0.0
      %v7531 = vadd.f32 %v7529, %v7530
      %v7532 = vsel %vm1066, %v7484, 0.0
      %v7533 = vadd.f32 %v7531, %v7532
      %v7534 = vsel %vm1066, %v7485, 0.0
      %v7535 = vadd.f32 %v7533, %v7534
      %v7536 = vsel %vm1066, %v7486, 0.0
      %v7537 = vadd.f32 %v7535, %v7536
      %v7538 = vsel %vm1066, %v7487, 0.0
      %v7539 = vadd.f32 %v7537, %v7538
      %v7540 = vsel %vm1066, %v7488, 0.0
      %v7541 = vadd.f32 %v7539, %v7540
      %v7542 = vsel %vm1066, %v7489, 0.0
      %v7543 = vadd.f32 %v7541, %v7542
      %v7544 = vsel %vm1066, %v7490, 0.0
      %v7545 = vadd.f32 %v7543, %v7544
      %v7546 = vsel %vm1066, %v7491, 0.0
      %v7547 = vadd.f32 %v7545, %v7546
      %v7548 = vsel %vm1066, %v7492, 0.0
      %v7549 = vadd.f32 %v7547, %v7548
      %v7550 = vsel %vm1066, %v7493, 0.0
      %v7551 = vadd.f32 %v7549, %v7550
      %v7552 = vsel %vm1066, %v7494, 0.0
      %v7553 = vadd.f32 %v7551, %v7552
      %v7554 = vsel %vm1066, %v7495, 0.0
      %v7555 = vadd.f32 %v7553, %v7554
      %v7556 = vsel %vm1066, %v7496, 0.0
      %v7557 = vadd.f32 %v7555, %v7556
      %v7558 = vsel %vm1066, %v7497, 0.0
      %v7559 = vadd.f32 %v7557, %v7558
      %v7560 = vsel %vm1066, %v7498, 0.0
      %v7561 = vadd.f32 %v7559, %v7560
      %v7562 = vrot.slane %v7561, 4
      %v7563 = vadd.f32 %v7561, %v7562
      %v7564 = vrot.slane %v7563, 2
      %v7565 = vadd.f32 %v7563, %v7564
      %v7566 = vrot.slane %v7565, 1
      %v7567 = vadd.f32 %v7565, %v7566
      %v7568 = vmul.f32 %v7567, %v697
      %v7569 = vadd.f32 %v7568, 1e-05
      %v7570 = vrsqrt.pop %v7569
      %v7571 = vmul.f32 %v7570, %v7569
      %v7572 = vmul.f32 %v7571, %v7570
      %v7573 = vmul.f32 0.5, %v7572
      %v7574 = vsub.f32 1.5, %v7573
      %v7575 = vmul.f32 %v7570, %v7574
      %vm7576 = vweird.f32 %v7569
      %vm7577 = vweird.f32 %v7570
      %vm7578 = vmor %vm7576, %vm7577
      %v7579 = vsel %vm7578, %v7570, %v7575
      %v7580 = vmul.f32 %v7435, %v7579
      %v7581 = vmul.f32 %v7436, %v7579
      %v7582 = vmul.f32 %v7437, %v7579
      %v7583 = vmul.f32 %v7438, %v7579
      %v7584 = vmul.f32 %v7439, %v7579
      %v7585 = vmul.f32 %v7440, %v7579
      %v7586 = vmul.f32 %v7441, %v7579
      %v7587 = vmul.f32 %v7442, %v7579
      %v7588 = vmul.f32 %v7443, %v7579
      %v7589 = vmul.f32 %v7444, %v7579
      %v7590 = vmul.f32 %v7445, %v7579
      %v7591 = vmul.f32 %v7446, %v7579
      %v7592 = vmul.f32 %v7447, %v7579
      %v7593 = vmul.f32 %v7448, %v7579
      %v7594 = vmul.f32 %v7449, %v7579
      %v7595 = vmul.f32 %v7450, %v7579
      %v7596 = vmul.f32 %v7451, %v7579
      %v7597 = vmul.f32 %v7452, %v7579
      %v7598 = vmul.f32 %v7453, %v7579
      %v7599 = vmul.f32 %v7454, %v7579
      %v7600 = vmul.f32 %v7455, %v7579
      %v7601 = vmul.f32 %v7456, %v7579
      %v7602 = vmul.f32 %v7457, %v7579
      %v7603 = vmul.f32 %v7458, %v7579
      %v7604 = vmul.f32 %v7459, %v7579
      %v7605 = vmul.f32 %v7460, %v7579
      %v7606 = vmul.f32 %v7461, %v7579
      %v7607 = vmul.f32 %v7462, %v7579
      %v7608 = vmul.f32 %v7463, %v7579
      %v7609 = vmul.f32 %v7464, %v7579
      %v7610 = vmul.f32 %v7465, %v7579
      %v7611 = vmul.f32 %v7466, %v7579
      %v7612 = vmax.f32 %v7580, 0.0
      %v7613 = vmax.f32 %v7581, 0.0
      %v7614 = vmax.f32 %v7582, 0.0
      %v7615 = vmax.f32 %v7583, 0.0
      %v7616 = vmax.f32 %v7584, 0.0
      %v7617 = vmax.f32 %v7585, 0.0
      %v7618 = vmax.f32 %v7586, 0.0
      %v7619 = vmax.f32 %v7587, 0.0
      %v7620 = vmax.f32 %v7588, 0.0
      %v7621 = vmax.f32 %v7589, 0.0
      %v7622 = vmax.f32 %v7590, 0.0
      %v7623 = vmax.f32 %v7591, 0.0
      %v7624 = vmax.f32 %v7592, 0.0
      %v7625 = vmax.f32 %v7593, 0.0
      %v7626 = vmax.f32 %v7594, 0.0
      %v7627 = vmax.f32 %v7595, 0.0
      %v7628 = vmax.f32 %v7596, 0.0
      %v7629 = vmax.f32 %v7597, 0.0
      %v7630 = vmax.f32 %v7598, 0.0
      %v7631 = vmax.f32 %v7599, 0.0
      %v7632 = vmax.f32 %v7600, 0.0
      %v7633 = vmax.f32 %v7601, 0.0
      %v7634 = vmax.f32 %v7602, 0.0
      %v7635 = vmax.f32 %v7603, 0.0
      %v7636 = vmax.f32 %v7604, 0.0
      %v7637 = vmax.f32 %v7605, 0.0
      %v7638 = vmax.f32 %v7606, 0.0
      %v7639 = vmax.f32 %v7607, 0.0
      %v7640 = vmax.f32 %v7608, 0.0
      %v7641 = vmax.f32 %v7609, 0.0
      %v7642 = vmax.f32 %v7610, 0.0
      %v7643 = vmax.f32 %v7611, 0.0
      %v7644 = vpack.c.bf16 %v7613, %v7612
      %v7645 = vpack.c.bf16 %v7615, %v7614
      %v7646 = vpack.c.bf16 %v7617, %v7616
      %v7647 = vpack.c.bf16 %v7619, %v7618
      %v7648 = vpack.c.bf16 %v7621, %v7620
      %v7649 = vpack.c.bf16 %v7623, %v7622
      %v7650 = vpack.c.bf16 %v7625, %v7624
      %v7651 = vpack.c.bf16 %v7627, %v7626
      %v7652 = vpack.c.bf16 %v7629, %v7628
      %v7653 = vpack.c.bf16 %v7631, %v7630
      %v7654 = vpack.c.bf16 %v7633, %v7632
      %v7655 = vpack.c.bf16 %v7635, %v7634
      %v7656 = vpack.c.bf16 %v7637, %v7636
      %v7657 = vpack.c.bf16 %v7639, %v7638
      %v7658 = vpack.c.bf16 %v7641, %v7640
      %v7659 = vpack.c.bf16 %v7643, %v7642
      %s7660 = scalar_lea.vmem %s2, 16
      %v7661 = vld [vmem:[%s7660] sm:$0xf]
      %v7662 = vld [vmem:[%s7660 + $0x4] sm:$0xf]
      %v7665 = vunpack.c.l.b16 %v7661
      %v7666 = vunpack.c.l.b16 %v7662
      %v7667 = vpack.c.b16 %v7666, %v7665
      %v7670 = vsel %vm1066, %v7644, 0
      %v7673 = vsel %vm1066, %v7645, 0
      %v7676 = vsel %vm1066, %v7646, 0
      %v7679 = vsel %vm1066, %v7647, 0
      %v7682 = vsel %vm1066, %v7648, 0
      %v7685 = vsel %vm1066, %v7649, 0
      %v7688 = vsel %vm1066, %v7650, 0
      %v7691 = vsel %vm1066, %v7651, 0
      %v7694 = vsel %vm1066, %v7652, 0
      %v7697 = vsel %vm1066, %v7653, 0
      %v7700 = vsel %vm1066, %v7654, 0
      %v7703 = vsel %vm1066, %v7655, 0
      %v7706 = vsel %vm1066, %v7656, 0
      %v7709 = vsel %vm1066, %v7657, 0
      %v7712 = vsel %vm1066, %v7658, 0
      %v7715 = vsel %vm1066, %v7659, 0
      %7717 = vmatpush.bf16.msra.mxu0 0
      %7718 = vmatpush.bf16.msra.mxu0 0
      %7719 = vmatpush.bf16.msra.mxu0 0
      %7720 = vmatpush.bf16.msra.mxu0 0
      %7721 = vmatpush.bf16.msra.mxu0 0
      %7722 = vmatpush.bf16.msra.mxu0 0
      %7723 = vmatpush.bf16.msra.mxu0 0
      %7724 = vmatpush.bf16.msra.mxu0 %v7667
      %7725 = vmatmul.bf16.gmra.mxu0 %v7670
      %v7726 = vpop.f32.mrf.mxu0
      %v7727 = vadd.f32 0.0, %v7726
      %v7728 = vpop.f32.mrf.mxu0
      %v7729 = vadd.f32 0.0, %v7728
      %7730 = vmatmul.bf16.gmra.mxu0 %v7673
      %v7731 = vpop.f32.mrf.mxu0
      %v7732 = vadd.f32 0.0, %v7731
      %v7733 = vpop.f32.mrf.mxu0
      %v7734 = vadd.f32 0.0, %v7733
      %7735 = vmatmul.bf16.gmra.mxu0 %v7676
      %v7736 = vpop.f32.mrf.mxu0
      %v7737 = vadd.f32 0.0, %v7736
      %v7738 = vpop.f32.mrf.mxu0
      %v7739 = vadd.f32 0.0, %v7738
      %7740 = vmatmul.bf16.gmra.mxu0 %v7679
      %v7741 = vpop.f32.mrf.mxu0
      %v7742 = vadd.f32 0.0, %v7741
      %v7743 = vpop.f32.mrf.mxu0
      %v7744 = vadd.f32 0.0, %v7743
      %7745 = vmatmul.bf16.gmra.mxu0 %v7682
      %v7746 = vpop.f32.mrf.mxu0
      %v7747 = vadd.f32 0.0, %v7746
      %v7748 = vpop.f32.mrf.mxu0
      %v7749 = vadd.f32 0.0, %v7748
      %7750 = vmatmul.bf16.gmra.mxu0 %v7685
      %v7751 = vpop.f32.mrf.mxu0
      %v7752 = vadd.f32 0.0, %v7751
      %v7753 = vpop.f32.mrf.mxu0
      %v7754 = vadd.f32 0.0, %v7753
      %7755 = vmatmul.bf16.gmra.mxu0 %v7688
      %v7756 = vpop.f32.mrf.mxu0
      %v7757 = vadd.f32 0.0, %v7756
      %v7758 = vpop.f32.mrf.mxu0
      %v7759 = vadd.f32 0.0, %v7758
      %7760 = vmatmul.bf16.gmra.mxu0 %v7691
      %v7761 = vpop.f32.mrf.mxu0
      %v7762 = vadd.f32 0.0, %v7761
      %v7763 = vpop.f32.mrf.mxu0
      %v7764 = vadd.f32 0.0, %v7763
      %7765 = vmatmul.bf16.gmra.mxu0 %v7694
      %v7766 = vpop.f32.mrf.mxu0
      %v7767 = vadd.f32 0.0, %v7766
      %v7768 = vpop.f32.mrf.mxu0
      %v7769 = vadd.f32 0.0, %v7768
      %7770 = vmatmul.bf16.gmra.mxu0 %v7697
      %v7771 = vpop.f32.mrf.mxu0
      %v7772 = vadd.f32 0.0, %v7771
      %v7773 = vpop.f32.mrf.mxu0
      %v7774 = vadd.f32 0.0, %v7773
      %7775 = vmatmul.bf16.gmra.mxu0 %v7700
      %v7776 = vpop.f32.mrf.mxu0
      %v7777 = vadd.f32 0.0, %v7776
      %v7778 = vpop.f32.mrf.mxu0
      %v7779 = vadd.f32 0.0, %v7778
      %7780 = vmatmul.bf16.gmra.mxu0 %v7703
      %v7781 = vpop.f32.mrf.mxu0
      %v7782 = vadd.f32 0.0, %v7781
      %v7783 = vpop.f32.mrf.mxu0
      %v7784 = vadd.f32 0.0, %v7783
      %7785 = vmatmul.bf16.gmra.mxu0 %v7706
      %v7786 = vpop.f32.mrf.mxu0
      %v7787 = vadd.f32 0.0, %v7786
      %v7788 = vpop.f32.mrf.mxu0
      %v7789 = vadd.f32 0.0, %v7788
      %7790 = vmatmul.bf16.gmra.mxu0 %v7709
      %v7791 = vpop.f32.mrf.mxu0
      %v7792 = vadd.f32 0.0, %v7791
      %v7793 = vpop.f32.mrf.mxu0
      %v7794 = vadd.f32 0.0, %v7793
      %7795 = vmatmul.bf16.gmra.mxu0 %v7712
      %v7796 = vpop.f32.mrf.mxu0
      %v7797 = vadd.f32 0.0, %v7796
      %v7798 = vpop.f32.mrf.mxu0
      %v7799 = vadd.f32 0.0, %v7798
      %7800 = vmatmul.bf16.gmra.mxu0 %v7715
      %v7801 = vpop.f32.mrf.mxu0
      %v7802 = vadd.f32 0.0, %v7801
      %v7803 = vpop.f32.mrf.mxu0
      %v7804 = vadd.f32 0.0, %v7803
      %7805 = vdwg.mxu0
      %v7806 = vrot.slane %v7727, 7
      %v7807 = vrot.slane %v7729, 7
      %v7808 = vrot.slane %v7732, 7
      %v7809 = vrot.slane %v7734, 7
      %v7810 = vrot.slane %v7737, 7
      %v7811 = vrot.slane %v7739, 7
      %v7812 = vrot.slane %v7742, 7
      %v7813 = vrot.slane %v7744, 7
      %v7814 = vrot.slane %v7747, 7
      %v7815 = vrot.slane %v7749, 7
      %v7816 = vrot.slane %v7752, 7
      %v7817 = vrot.slane %v7754, 7
      %v7818 = vrot.slane %v7757, 7
      %v7819 = vrot.slane %v7759, 7
      %v7820 = vrot.slane %v7762, 7
      %v7821 = vrot.slane %v7764, 7
      %v7822 = vrot.slane %v7767, 7
      %v7823 = vrot.slane %v7769, 7
      %v7824 = vrot.slane %v7772, 7
      %v7825 = vrot.slane %v7774, 7
      %v7826 = vrot.slane %v7777, 7
      %v7827 = vrot.slane %v7779, 7
      %v7828 = vrot.slane %v7782, 7
      %v7829 = vrot.slane %v7784, 7
      %v7830 = vrot.slane %v7787, 7
      %v7831 = vrot.slane %v7789, 7
      %v7832 = vrot.slane %v7792, 7
      %v7833 = vrot.slane %v7794, 7
      %v7834 = vrot.slane %v7797, 7
      %v7835 = vrot.slane %v7799, 7
      %v7836 = vrot.slane %v7802, 7
      %v7837 = vrot.slane %v7804, 7
      %v7838 = vsel %vm1539, %v7836, %v7837
      %v7839 = vsel %vm1539, %v7835, %v7836
      %v7840 = vsel %vm1539, %v7834, %v7835
      %v7841 = vsel %vm1539, %v7833, %v7834
      %v7842 = vsel %vm1539, %v7832, %v7833
      %v7843 = vsel %vm1539, %v7831, %v7832
      %v7844 = vsel %vm1539, %v7830, %v7831
      %v7845 = vsel %vm1539, %v7829, %v7830
      %v7846 = vsel %vm1539, %v7828, %v7829
      %v7847 = vsel %vm1539, %v7827, %v7828
      %v7848 = vsel %vm1539, %v7826, %v7827
      %v7849 = vsel %vm1539, %v7825, %v7826
      %v7850 = vsel %vm1539, %v7824, %v7825
      %v7851 = vsel %vm1539, %v7823, %v7824
      %v7852 = vsel %vm1539, %v7822, %v7823
      %v7853 = vsel %vm1539, %v7821, %v7822
      %v7854 = vsel %vm1539, %v7820, %v7821
      %v7855 = vsel %vm1539, %v7819, %v7820
      %v7856 = vsel %vm1539, %v7818, %v7819
      %v7857 = vsel %vm1539, %v7817, %v7818
      %v7858 = vsel %vm1539, %v7816, %v7817
      %v7859 = vsel %vm1539, %v7815, %v7816
      %v7860 = vsel %vm1539, %v7814, %v7815
      %v7861 = vsel %vm1539, %v7813, %v7814
      %v7862 = vsel %vm1539, %v7812, %v7813
      %v7863 = vsel %vm1539, %v7811, %v7812
      %v7864 = vsel %vm1539, %v7810, %v7811
      %v7865 = vsel %vm1539, %v7809, %v7810
      %v7866 = vsel %vm1539, %v7808, %v7809
      %v7867 = vsel %vm1539, %v7807, %v7808
      %v7868 = vsel %vm1539, %v7806, %v7807
      %v7869 = vsel %vm1539, %v7837, %v7806
      %v7870 = vsel %vm1700, %v7839, 0.0
      %v7871 = vsel %vm1701, %v7838, 0.0
      %v7872 = vsel %vm1702, %v7869, 0.0
      %v7873 = vsel %vm1703, %v7868, 0.0
      %v7874 = vsel %vm1704, %v7867, 0.0
      %v7875 = vsel %vm1705, %v7866, 0.0
      %v7876 = vsel %vm1706, %v7865, 0.0
      %v7877 = vsel %vm1707, %v7864, 0.0
      %v7878 = vsel %vm1708, %v7863, 0.0
      %v7879 = vsel %vm1709, %v7862, 0.0
      %v7880 = vsel %vm1710, %v7861, 0.0
      %v7881 = vsel %vm1711, %v7860, 0.0
      %v7882 = vsel %vm1712, %v7859, 0.0
      %v7883 = vsel %vm1713, %v7858, 0.0
      %v7884 = vsel %vm1714, %v7857, 0.0
      %v7885 = vsel %vm1715, %v7856, 0.0
      %v7886 = vsel %vm1716, %v7855, 0.0
      %v7887 = vsel %vm1717, %v7854, 0.0
      %v7888 = vsel %vm1718, %v7853, 0.0
      %v7889 = vsel %vm1719, %v7852, 0.0
      %v7890 = vsel %vm1720, %v7851, 0.0
      %v7891 = vsel %vm1721, %v7850, 0.0
      %v7892 = vsel %vm1722, %v7849, 0.0
      %v7893 = vsel %vm1723, %v7848, 0.0
      %v7894 = vsel %vm1724, %v7847, 0.0
      %v7895 = vsel %vm1725, %v7846, 0.0
      %v7896 = vsel %vm1726, %v7845, 0.0
      %v7897 = vsel %vm1727, %v7844, 0.0
      %v7898 = vsel %vm1728, %v7843, 0.0
      %v7899 = vsel %vm1729, %v7842, 0.0
      %v7900 = vsel %vm1730, %v7841, 0.0
      %v7901 = vsel %vm1731, %v7840, 0.0
      %v7902 = vadd.f32 %v7870, 0.0
      %v7903 = vadd.f32 %v7871, 0.0
      %v7904 = vadd.f32 %v7872, 0.0
      %v7905 = vadd.f32 %v7873, 0.0
      %v7906 = vadd.f32 %v7874, 0.0
      %v7907 = vadd.f32 %v7875, 0.0
      %v7908 = vadd.f32 %v7876, 0.0
      %v7909 = vadd.f32 %v7877, 0.0
      %v7910 = vadd.f32 %v7878, 0.0
      %v7911 = vadd.f32 %v7879, 0.0
      %v7912 = vadd.f32 %v7880, 0.0
      %v7913 = vadd.f32 %v7881, 0.0
      %v7914 = vadd.f32 %v7882, 0.0
      %v7915 = vadd.f32 %v7883, 0.0
      %v7916 = vadd.f32 %v7884, 0.0
      %v7917 = vadd.f32 %v7885, 0.0
      %v7918 = vadd.f32 %v7886, 0.0
      %v7919 = vadd.f32 %v7887, 0.0
      %v7920 = vadd.f32 %v7888, 0.0
      %v7921 = vadd.f32 %v7889, 0.0
      %v7922 = vadd.f32 %v7890, 0.0
      %v7923 = vadd.f32 %v7891, 0.0
      %v7924 = vadd.f32 %v7892, 0.0
      %v7925 = vadd.f32 %v7893, 0.0
      %v7926 = vadd.f32 %v7894, 0.0
      %v7927 = vadd.f32 %v7895, 0.0
      %v7928 = vadd.f32 %v7896, 0.0
      %v7929 = vadd.f32 %v7897, 0.0
      %v7930 = vadd.f32 %v7898, 0.0
      %v7931 = vadd.f32 %v7899, 0.0
      %v7932 = vadd.f32 %v7900, 0.0
      %v7933 = vadd.f32 %v7901, 0.0
      %7966 = vrot.lane.b32.xlu0 %v7727, 124
      %v7967 = vpop.permute.xlu0 %7966
      %7968 = vrot.lane.b32.xlu0 %v7729, 124
      %v7969 = vpop.permute.xlu0 %7968
      %7970 = vrot.lane.b32.xlu0 %v7732, 124
      %v7971 = vpop.permute.xlu0 %7970
      %7972 = vrot.lane.b32.xlu0 %v7734, 124
      %v7973 = vpop.permute.xlu0 %7972
      %7974 = vrot.lane.b32.xlu0 %v7737, 124
      %v7975 = vpop.permute.xlu0 %7974
      %7976 = vrot.lane.b32.xlu0 %v7739, 124
      %v7977 = vpop.permute.xlu0 %7976
      %7978 = vrot.lane.b32.xlu0 %v7742, 124
      %v7979 = vpop.permute.xlu0 %7978
      %7980 = vrot.lane.b32.xlu0 %v7744, 124
      %v7981 = vpop.permute.xlu0 %7980
      %7982 = vrot.lane.b32.xlu0 %v7747, 124
      %v7983 = vpop.permute.xlu0 %7982
      %7984 = vrot.lane.b32.xlu0 %v7749, 124
      %v7985 = vpop.permute.xlu0 %7984
      %7986 = vrot.lane.b32.xlu0 %v7752, 124
      %v7987 = vpop.permute.xlu0 %7986
      %7988 = vrot.lane.b32.xlu0 %v7754, 124
      %v7989 = vpop.permute.xlu0 %7988
      %7990 = vrot.lane.b32.xlu0 %v7757, 124
      %v7991 = vpop.permute.xlu0 %7990
      %7992 = vrot.lane.b32.xlu0 %v7759, 124
      %v7993 = vpop.permute.xlu0 %7992
      %7994 = vrot.lane.b32.xlu0 %v7762, 124
      %v7995 = vpop.permute.xlu0 %7994
      %7996 = vrot.lane.b32.xlu0 %v7764, 124
      %v7997 = vpop.permute.xlu0 %7996
      %7998 = vrot.lane.b32.xlu0 %v7767, 124
      %v7999 = vpop.permute.xlu0 %7998
      %8000 = vrot.lane.b32.xlu0 %v7769, 124
      %v8001 = vpop.permute.xlu0 %8000
      %8002 = vrot.lane.b32.xlu0 %v7772, 124
      %v8003 = vpop.permute.xlu0 %8002
      %8004 = vrot.lane.b32.xlu0 %v7774, 124
      %v8005 = vpop.permute.xlu0 %8004
      %8006 = vrot.lane.b32.xlu0 %v7777, 124
      %v8007 = vpop.permute.xlu0 %8006
      %8008 = vrot.lane.b32.xlu0 %v7779, 124
      %v8009 = vpop.permute.xlu0 %8008
      %8010 = vrot.lane.b32.xlu0 %v7782, 124
      %v8011 = vpop.permute.xlu0 %8010
      %8012 = vrot.lane.b32.xlu0 %v7784, 124
      %v8013 = vpop.permute.xlu0 %8012
      %8014 = vrot.lane.b32.xlu0 %v7787, 124
      %v8015 = vpop.permute.xlu0 %8014
      %8016 = vrot.lane.b32.xlu0 %v7789, 124
      %v8017 = vpop.permute.xlu0 %8016
      %8018 = vrot.lane.b32.xlu0 %v7792, 124
      %v8019 = vpop.permute.xlu0 %8018
      %8020 = vrot.lane.b32.xlu0 %v7794, 124
      %v8021 = vpop.permute.xlu0 %8020
      %8022 = vrot.lane.b32.xlu0 %v7797, 124
      %v8023 = vpop.permute.xlu0 %8022
      %8024 = vrot.lane.b32.xlu0 %v7799, 124
      %v8025 = vpop.permute.xlu0 %8024
      %8026 = vrot.lane.b32.xlu0 %v7802, 124
      %v8027 = vpop.permute.xlu0 %8026
      %8028 = vrot.lane.b32.xlu0 %v7804, 124
      %v8029 = vpop.permute.xlu0 %8028
      %v8062 = vsel %vm1956, %v8027, 0.0
      %v8063 = vsel %vm1957, %v8029, 0.0
      %v8064 = vsel %vm1958, %v7967, 0.0
      %v8065 = vsel %vm1959, %v7969, 0.0
      %v8066 = vsel %vm1960, %v7971, 0.0
      %v8067 = vsel %vm1961, %v7973, 0.0
      %v8068 = vsel %vm1962, %v7975, 0.0
      %v8069 = vsel %vm1963, %v7977, 0.0
      %v8070 = vsel %vm1964, %v7979, 0.0
      %v8071 = vsel %vm1965, %v7981, 0.0
      %v8072 = vsel %vm1966, %v7983, 0.0
      %v8073 = vsel %vm1967, %v7985, 0.0
      %v8074 = vsel %vm1968, %v7987, 0.0
      %v8075 = vsel %vm1969, %v7989, 0.0
      %v8076 = vsel %vm1970, %v7991, 0.0
      %v8077 = vsel %vm1971, %v7993, 0.0
      %v8078 = vsel %vm1972, %v7995, 0.0
      %v8079 = vsel %vm1973, %v7997, 0.0
      %v8080 = vsel %vm1974, %v7999, 0.0
      %v8081 = vsel %vm1975, %v8001, 0.0
      %v8082 = vsel %vm1976, %v8003, 0.0
      %v8083 = vsel %vm1977, %v8005, 0.0
      %v8084 = vsel %vm1978, %v8007, 0.0
      %v8085 = vsel %vm1979, %v8009, 0.0
      %v8086 = vsel %vm1980, %v8011, 0.0
      %v8087 = vsel %vm1981, %v8013, 0.0
      %v8088 = vsel %vm1982, %v8015, 0.0
      %v8089 = vsel %vm1983, %v8017, 0.0
      %v8090 = vsel %vm1984, %v8019, 0.0
      %v8091 = vsel %vm1985, %v8021, 0.0
      %v8092 = vsel %vm1986, %v8023, 0.0
      %v8093 = vsel %vm1987, %v8025, 0.0
      %v8094 = vadd.f32 %v7902, %v8062
      %v8095 = vadd.f32 %v7903, %v8063
      %v8096 = vadd.f32 %v7904, %v8064
      %v8097 = vadd.f32 %v7905, %v8065
      %v8098 = vadd.f32 %v7906, %v8066
      %v8099 = vadd.f32 %v7907, %v8067
      %v8100 = vadd.f32 %v7908, %v8068
      %v8101 = vadd.f32 %v7909, %v8069
      %v8102 = vadd.f32 %v7910, %v8070
      %v8103 = vadd.f32 %v7911, %v8071
      %v8104 = vadd.f32 %v7912, %v8072
      %v8105 = vadd.f32 %v7913, %v8073
      %v8106 = vadd.f32 %v7914, %v8074
      %v8107 = vadd.f32 %v7915, %v8075
      %v8108 = vadd.f32 %v7916, %v8076
      %v8109 = vadd.f32 %v7917, %v8077
      %v8110 = vadd.f32 %v7918, %v8078
      %v8111 = vadd.f32 %v7919, %v8079
      %v8112 = vadd.f32 %v7920, %v8080
      %v8113 = vadd.f32 %v7921, %v8081
      %v8114 = vadd.f32 %v7922, %v8082
      %v8115 = vadd.f32 %v7923, %v8083
      %v8116 = vadd.f32 %v7924, %v8084
      %v8117 = vadd.f32 %v7925, %v8085
      %v8118 = vadd.f32 %v7926, %v8086
      %v8119 = vadd.f32 %v7927, %v8087
      %v8120 = vadd.f32 %v7928, %v8088
      %v8121 = vadd.f32 %v7929, %v8089
      %v8122 = vadd.f32 %v7930, %v8090
      %v8123 = vadd.f32 %v7931, %v8091
      %v8124 = vadd.f32 %v7932, %v8092
      %v8125 = vadd.f32 %v7933, %v8093
      %8126 = vrot.lane.b32.xlu0 %v7727, 120
      %v8127 = vpop.permute.xlu0 %8126
      %8128 = vrot.lane.b32.xlu0 %v7729, 120
      %v8129 = vpop.permute.xlu0 %8128
      %8130 = vrot.lane.b32.xlu0 %v7732, 120
      %v8131 = vpop.permute.xlu0 %8130
      %8132 = vrot.lane.b32.xlu0 %v7734, 120
      %v8133 = vpop.permute.xlu0 %8132
      %8134 = vrot.lane.b32.xlu0 %v7737, 120
      %v8135 = vpop.permute.xlu0 %8134
      %8136 = vrot.lane.b32.xlu0 %v7739, 120
      %v8137 = vpop.permute.xlu0 %8136
      %8138 = vrot.lane.b32.xlu0 %v7742, 120
      %v8139 = vpop.permute.xlu0 %8138
      %8140 = vrot.lane.b32.xlu0 %v7744, 120
      %v8141 = vpop.permute.xlu0 %8140
      %8142 = vrot.lane.b32.xlu0 %v7747, 120
      %v8143 = vpop.permute.xlu0 %8142
      %8144 = vrot.lane.b32.xlu0 %v7749, 120
      %v8145 = vpop.permute.xlu0 %8144
      %8146 = vrot.lane.b32.xlu0 %v7752, 120
      %v8147 = vpop.permute.xlu0 %8146
      %8148 = vrot.lane.b32.xlu0 %v7754, 120
      %v8149 = vpop.permute.xlu0 %8148
      %8150 = vrot.lane.b32.xlu0 %v7757, 120
      %v8151 = vpop.permute.xlu0 %8150
      %8152 = vrot.lane.b32.xlu0 %v7759, 120
      %v8153 = vpop.permute.xlu0 %8152
      %8154 = vrot.lane.b32.xlu0 %v7762, 120
      %v8155 = vpop.permute.xlu0 %8154
      %8156 = vrot.lane.b32.xlu0 %v7764, 120
      %v8157 = vpop.permute.xlu0 %8156
      %8158 = vrot.lane.b32.xlu0 %v7767, 120
      %v8159 = vpop.permute.xlu0 %8158
      %8160 = vrot.lane.b32.xlu0 %v7769, 120
      %v8161 = vpop.permute.xlu0 %8160
      %8162 = vrot.lane.b32.xlu0 %v7772, 120
      %v8163 = vpop.permute.xlu0 %8162
      %8164 = vrot.lane.b32.xlu0 %v7774, 120
      %v8165 = vpop.permute.xlu0 %8164
      %8166 = vrot.lane.b32.xlu0 %v7777, 120
      %v8167 = vpop.permute.xlu0 %8166
      %8168 = vrot.lane.b32.xlu0 %v7779, 120
      %v8169 = vpop.permute.xlu0 %8168
      %8170 = vrot.lane.b32.xlu0 %v7782, 120
      %v8171 = vpop.permute.xlu0 %8170
      %8172 = vrot.lane.b32.xlu0 %v7784, 120
      %v8173 = vpop.permute.xlu0 %8172
      %8174 = vrot.lane.b32.xlu0 %v7787, 120
      %v8175 = vpop.permute.xlu0 %8174
      %8176 = vrot.lane.b32.xlu0 %v7789, 120
      %v8177 = vpop.permute.xlu0 %8176
      %8178 = vrot.lane.b32.xlu0 %v7792, 120
      %v8179 = vpop.permute.xlu0 %8178
      %8180 = vrot.lane.b32.xlu0 %v7794, 120
      %v8181 = vpop.permute.xlu0 %8180
      %8182 = vrot.lane.b32.xlu0 %v7797, 120
      %v8183 = vpop.permute.xlu0 %8182
      %8184 = vrot.lane.b32.xlu0 %v7799, 120
      %v8185 = vpop.permute.xlu0 %8184
      %8186 = vrot.lane.b32.xlu0 %v7802, 120
      %v8187 = vpop.permute.xlu0 %8186
      %8188 = vrot.lane.b32.xlu0 %v7804, 120
      %v8189 = vpop.permute.xlu0 %8188
      %v8222 = vrot.slane %v8127, 1
      %v8223 = vrot.slane %v8129, 1
      %v8224 = vrot.slane %v8131, 1
      %v8225 = vrot.slane %v8133, 1
      %v8226 = vrot.slane %v8135, 1
      %v8227 = vrot.slane %v8137, 1
      %v8228 = vrot.slane %v8139, 1
      %v8229 = vrot.slane %v8141, 1
      %v8230 = vrot.slane %v8143, 1
      %v8231 = vrot.slane %v8145, 1
      %v8232 = vrot.slane %v8147, 1
      %v8233 = vrot.slane %v8149, 1
      %v8234 = vrot.slane %v8151, 1
      %v8235 = vrot.slane %v8153, 1
      %v8236 = vrot.slane %v8155, 1
      %v8237 = vrot.slane %v8157, 1
      %v8238 = vrot.slane %v8159, 1
      %v8239 = vrot.slane %v8161, 1
      %v8240 = vrot.slane %v8163, 1
      %v8241 = vrot.slane %v8165, 1
      %v8242 = vrot.slane %v8167, 1
      %v8243 = vrot.slane %v8169, 1
      %v8244 = vrot.slane %v8171, 1
      %v8245 = vrot.slane %v8173, 1
      %v8246 = vrot.slane %v8175, 1
      %v8247 = vrot.slane %v8177, 1
      %v8248 = vrot.slane %v8179, 1
      %v8249 = vrot.slane %v8181, 1
      %v8250 = vrot.slane %v8183, 1
      %v8251 = vrot.slane %v8185, 1
      %v8252 = vrot.slane %v8187, 1
      %v8253 = vrot.slane %v8189, 1
      %v8254 = vsel %vm2180, %v8252, %v8253
      %v8255 = vsel %vm2180, %v8251, %v8252
      %v8256 = vsel %vm2180, %v8250, %v8251
      %v8257 = vsel %vm2180, %v8249, %v8250
      %v8258 = vsel %vm2180, %v8248, %v8249
      %v8259 = vsel %vm2180, %v8247, %v8248
      %v8260 = vsel %vm2180, %v8246, %v8247
      %v8261 = vsel %vm2180, %v8245, %v8246
      %v8262 = vsel %vm2180, %v8244, %v8245
      %v8263 = vsel %vm2180, %v8243, %v8244
      %v8264 = vsel %vm2180, %v8242, %v8243
      %v8265 = vsel %vm2180, %v8241, %v8242
      %v8266 = vsel %vm2180, %v8240, %v8241
      %v8267 = vsel %vm2180, %v8239, %v8240
      %v8268 = vsel %vm2180, %v8238, %v8239
      %v8269 = vsel %vm2180, %v8237, %v8238
      %v8270 = vsel %vm2180, %v8236, %v8237
      %v8271 = vsel %vm2180, %v8235, %v8236
      %v8272 = vsel %vm2180, %v8234, %v8235
      %v8273 = vsel %vm2180, %v8233, %v8234
      %v8274 = vsel %vm2180, %v8232, %v8233
      %v8275 = vsel %vm2180, %v8231, %v8232
      %v8276 = vsel %vm2180, %v8230, %v8231
      %v8277 = vsel %vm2180, %v8229, %v8230
      %v8278 = vsel %vm2180, %v8228, %v8229
      %v8279 = vsel %vm2180, %v8227, %v8228
      %v8280 = vsel %vm2180, %v8226, %v8227
      %v8281 = vsel %vm2180, %v8225, %v8226
      %v8282 = vsel %vm2180, %v8224, %v8225
      %v8283 = vsel %vm2180, %v8223, %v8224
      %v8284 = vsel %vm2180, %v8222, %v8223
      %v8285 = vsel %vm2180, %v8253, %v8222
      %v8286 = vsel %vm2309, %v8254, 0.0
      %v8287 = vsel %vm2310, %v8285, 0.0
      %v8288 = vsel %vm2311, %v8284, 0.0
      %v8289 = vsel %vm2312, %v8283, 0.0
      %v8290 = vsel %vm2313, %v8282, 0.0
      %v8291 = vsel %vm2314, %v8281, 0.0
      %v8292 = vsel %vm2315, %v8280, 0.0
      %v8293 = vsel %vm2316, %v8279, 0.0
      %v8294 = vsel %vm2317, %v8278, 0.0
      %v8295 = vsel %vm2318, %v8277, 0.0
      %v8296 = vsel %vm2319, %v8276, 0.0
      %v8297 = vsel %vm2320, %v8275, 0.0
      %v8298 = vsel %vm2321, %v8274, 0.0
      %v8299 = vsel %vm2322, %v8273, 0.0
      %v8300 = vsel %vm2323, %v8272, 0.0
      %v8301 = vsel %vm2324, %v8271, 0.0
      %v8302 = vsel %vm2325, %v8270, 0.0
      %v8303 = vsel %vm2326, %v8269, 0.0
      %v8304 = vsel %vm2327, %v8268, 0.0
      %v8305 = vsel %vm2328, %v8267, 0.0
      %v8306 = vsel %vm2329, %v8266, 0.0
      %v8307 = vsel %vm2330, %v8265, 0.0
      %v8308 = vsel %vm2331, %v8264, 0.0
      %v8309 = vsel %vm2332, %v8263, 0.0
      %v8310 = vsel %vm2333, %v8262, 0.0
      %v8311 = vsel %vm2334, %v8261, 0.0
      %v8312 = vsel %vm2335, %v8260, 0.0
      %v8313 = vsel %vm2336, %v8259, 0.0
      %v8314 = vsel %vm2337, %v8258, 0.0
      %v8315 = vsel %vm2338, %v8257, 0.0
      %v8316 = vsel %vm2339, %v8256, 0.0
      %v8317 = vsel %vm2340, %v8255, 0.0
      %v8318 = vadd.f32 %v8094, %v8286
      %v8319 = vadd.f32 %v8095, %v8287
      %v8320 = vadd.f32 %v8096, %v8288
      %v8321 = vadd.f32 %v8097, %v8289
      %v8322 = vadd.f32 %v8098, %v8290
      %v8323 = vadd.f32 %v8099, %v8291
      %v8324 = vadd.f32 %v8100, %v8292
      %v8325 = vadd.f32 %v8101, %v8293
      %v8326 = vadd.f32 %v8102, %v8294
      %v8327 = vadd.f32 %v8103, %v8295
      %v8328 = vadd.f32 %v8104, %v8296
      %v8329 = vadd.f32 %v8105, %v8297
      %v8330 = vadd.f32 %v8106, %v8298
      %v8331 = vadd.f32 %v8107, %v8299
      %v8332 = vadd.f32 %v8108, %v8300
      %v8333 = vadd.f32 %v8109, %v8301
      %v8334 = vadd.f32 %v8110, %v8302
      %v8335 = vadd.f32 %v8111, %v8303
      %v8336 = vadd.f32 %v8112, %v8304
      %v8337 = vadd.f32 %v8113, %v8305
      %v8338 = vadd.f32 %v8114, %v8306
      %v8339 = vadd.f32 %v8115, %v8307
      %v8340 = vadd.f32 %v8116, %v8308
      %v8341 = vadd.f32 %v8117, %v8309
      %v8342 = vadd.f32 %v8118, %v8310
      %v8343 = vadd.f32 %v8119, %v8311
      %v8344 = vadd.f32 %v8120, %v8312
      %v8345 = vadd.f32 %v8121, %v8313
      %v8346 = vadd.f32 %v8122, %v8314
      %v8347 = vadd.f32 %v8123, %v8315
      %v8348 = vadd.f32 %v8124, %v8316
      %v8349 = vadd.f32 %v8125, %v8317
      %8350 = vrot.lane.b32.xlu0 %v7727, 116
      %v8351 = vpop.permute.xlu0 %8350
      %8352 = vrot.lane.b32.xlu0 %v7729, 116
      %v8353 = vpop.permute.xlu0 %8352
      %8354 = vrot.lane.b32.xlu0 %v7732, 116
      %v8355 = vpop.permute.xlu0 %8354
      %8356 = vrot.lane.b32.xlu0 %v7734, 116
      %v8357 = vpop.permute.xlu0 %8356
      %8358 = vrot.lane.b32.xlu0 %v7737, 116
      %v8359 = vpop.permute.xlu0 %8358
      %8360 = vrot.lane.b32.xlu0 %v7739, 116
      %v8361 = vpop.permute.xlu0 %8360
      %8362 = vrot.lane.b32.xlu0 %v7742, 116
      %v8363 = vpop.permute.xlu0 %8362
      %8364 = vrot.lane.b32.xlu0 %v7744, 116
      %v8365 = vpop.permute.xlu0 %8364
      %8366 = vrot.lane.b32.xlu0 %v7747, 116
      %v8367 = vpop.permute.xlu0 %8366
      %8368 = vrot.lane.b32.xlu0 %v7749, 116
      %v8369 = vpop.permute.xlu0 %8368
      %8370 = vrot.lane.b32.xlu0 %v7752, 116
      %v8371 = vpop.permute.xlu0 %8370
      %8372 = vrot.lane.b32.xlu0 %v7754, 116
      %v8373 = vpop.permute.xlu0 %8372
      %8374 = vrot.lane.b32.xlu0 %v7757, 116
      %v8375 = vpop.permute.xlu0 %8374
      %8376 = vrot.lane.b32.xlu0 %v7759, 116
      %v8377 = vpop.permute.xlu0 %8376
      %8378 = vrot.lane.b32.xlu0 %v7762, 116
      %v8379 = vpop.permute.xlu0 %8378
      %8380 = vrot.lane.b32.xlu0 %v7764, 116
      %v8381 = vpop.permute.xlu0 %8380
      %8382 = vrot.lane.b32.xlu0 %v7767, 116
      %v8383 = vpop.permute.xlu0 %8382
      %8384 = vrot.lane.b32.xlu0 %v7769, 116
      %v8385 = vpop.permute.xlu0 %8384
      %8386 = vrot.lane.b32.xlu0 %v7772, 116
      %v8387 = vpop.permute.xlu0 %8386
      %8388 = vrot.lane.b32.xlu0 %v7774, 116
      %v8389 = vpop.permute.xlu0 %8388
      %8390 = vrot.lane.b32.xlu0 %v7777, 116
      %v8391 = vpop.permute.xlu0 %8390
      %8392 = vrot.lane.b32.xlu0 %v7779, 116
      %v8393 = vpop.permute.xlu0 %8392
      %8394 = vrot.lane.b32.xlu0 %v7782, 116
      %v8395 = vpop.permute.xlu0 %8394
      %8396 = vrot.lane.b32.xlu0 %v7784, 116
      %v8397 = vpop.permute.xlu0 %8396
      %8398 = vrot.lane.b32.xlu0 %v7787, 116
      %v8399 = vpop.permute.xlu0 %8398
      %8400 = vrot.lane.b32.xlu0 %v7789, 116
      %v8401 = vpop.permute.xlu0 %8400
      %8402 = vrot.lane.b32.xlu0 %v7792, 116
      %v8403 = vpop.permute.xlu0 %8402
      %8404 = vrot.lane.b32.xlu0 %v7794, 116
      %v8405 = vpop.permute.xlu0 %8404
      %8406 = vrot.lane.b32.xlu0 %v7797, 116
      %v8407 = vpop.permute.xlu0 %8406
      %8408 = vrot.lane.b32.xlu0 %v7799, 116
      %v8409 = vpop.permute.xlu0 %8408
      %8410 = vrot.lane.b32.xlu0 %v7802, 116
      %v8411 = vpop.permute.xlu0 %8410
      %8412 = vrot.lane.b32.xlu0 %v7804, 116
      %v8413 = vpop.permute.xlu0 %8412
      %v8446 = vrot.slane %v8351, 7
      %v8447 = vrot.slane %v8353, 7
      %v8448 = vrot.slane %v8355, 7
      %v8449 = vrot.slane %v8357, 7
      %v8450 = vrot.slane %v8359, 7
      %v8451 = vrot.slane %v8361, 7
      %v8452 = vrot.slane %v8363, 7
      %v8453 = vrot.slane %v8365, 7
      %v8454 = vrot.slane %v8367, 7
      %v8455 = vrot.slane %v8369, 7
      %v8456 = vrot.slane %v8371, 7
      %v8457 = vrot.slane %v8373, 7
      %v8458 = vrot.slane %v8375, 7
      %v8459 = vrot.slane %v8377, 7
      %v8460 = vrot.slane %v8379, 7
      %v8461 = vrot.slane %v8381, 7
      %v8462 = vrot.slane %v8383, 7
      %v8463 = vrot.slane %v8385, 7
      %v8464 = vrot.slane %v8387, 7
      %v8465 = vrot.slane %v8389, 7
      %v8466 = vrot.slane %v8391, 7
      %v8467 = vrot.slane %v8393, 7
      %v8468 = vrot.slane %v8395, 7
      %v8469 = vrot.slane %v8397, 7
      %v8470 = vrot.slane %v8399, 7
      %v8471 = vrot.slane %v8401, 7
      %v8472 = vrot.slane %v8403, 7
      %v8473 = vrot.slane %v8405, 7
      %v8474 = vrot.slane %v8407, 7
      %v8475 = vrot.slane %v8409, 7
      %v8476 = vrot.slane %v8411, 7
      %v8477 = vrot.slane %v8413, 7
      %v8478 = vsel %vm1539, %v8476, %v8477
      %v8479 = vsel %vm1539, %v8475, %v8476
      %v8480 = vsel %vm1539, %v8474, %v8475
      %v8481 = vsel %vm1539, %v8473, %v8474
      %v8482 = vsel %vm1539, %v8472, %v8473
      %v8483 = vsel %vm1539, %v8471, %v8472
      %v8484 = vsel %vm1539, %v8470, %v8471
      %v8485 = vsel %vm1539, %v8469, %v8470
      %v8486 = vsel %vm1539, %v8468, %v8469
      %v8487 = vsel %vm1539, %v8467, %v8468
      %v8488 = vsel %vm1539, %v8466, %v8467
      %v8489 = vsel %vm1539, %v8465, %v8466
      %v8490 = vsel %vm1539, %v8464, %v8465
      %v8491 = vsel %vm1539, %v8463, %v8464
      %v8492 = vsel %vm1539, %v8462, %v8463
      %v8493 = vsel %vm1539, %v8461, %v8462
      %v8494 = vsel %vm1539, %v8460, %v8461
      %v8495 = vsel %vm1539, %v8459, %v8460
      %v8496 = vsel %vm1539, %v8458, %v8459
      %v8497 = vsel %vm1539, %v8457, %v8458
      %v8498 = vsel %vm1539, %v8456, %v8457
      %v8499 = vsel %vm1539, %v8455, %v8456
      %v8500 = vsel %vm1539, %v8454, %v8455
      %v8501 = vsel %vm1539, %v8453, %v8454
      %v8502 = vsel %vm1539, %v8452, %v8453
      %v8503 = vsel %vm1539, %v8451, %v8452
      %v8504 = vsel %vm1539, %v8450, %v8451
      %v8505 = vsel %vm1539, %v8449, %v8450
      %v8506 = vsel %vm1539, %v8448, %v8449
      %v8507 = vsel %vm1539, %v8447, %v8448
      %v8508 = vsel %vm1539, %v8446, %v8447
      %v8509 = vsel %vm1539, %v8477, %v8446
      %v8510 = vsel %vm2597, %v8509, 0.0
      %v8511 = vsel %vm2598, %v8508, 0.0
      %v8512 = vsel %vm2599, %v8507, 0.0
      %v8513 = vsel %vm2600, %v8506, 0.0
      %v8514 = vsel %vm2601, %v8505, 0.0
      %v8515 = vsel %vm2602, %v8504, 0.0
      %v8516 = vsel %vm2603, %v8503, 0.0
      %v8517 = vsel %vm2604, %v8502, 0.0
      %v8518 = vsel %vm2605, %v8501, 0.0
      %v8519 = vsel %vm2606, %v8500, 0.0
      %v8520 = vsel %vm2607, %v8499, 0.0
      %v8521 = vsel %vm2608, %v8498, 0.0
      %v8522 = vsel %vm2609, %v8497, 0.0
      %v8523 = vsel %vm2610, %v8496, 0.0
      %v8524 = vsel %vm2611, %v8495, 0.0
      %v8525 = vsel %vm2612, %v8494, 0.0
      %v8526 = vsel %vm2613, %v8493, 0.0
      %v8527 = vsel %vm2614, %v8492, 0.0
      %v8528 = vsel %vm2615, %v8491, 0.0
      %v8529 = vsel %vm2616, %v8490, 0.0
      %v8530 = vsel %vm2617, %v8489, 0.0
      %v8531 = vsel %vm2618, %v8488, 0.0
      %v8532 = vsel %vm2619, %v8487, 0.0
      %v8533 = vsel %vm2620, %v8486, 0.0
      %v8534 = vsel %vm2621, %v8485, 0.0
      %v8535 = vsel %vm2622, %v8484, 0.0
      %v8536 = vsel %vm2623, %v8483, 0.0
      %v8537 = vsel %vm2624, %v8482, 0.0
      %v8538 = vsel %vm2625, %v8481, 0.0
      %v8539 = vsel %vm2626, %v8480, 0.0
      %v8540 = vsel %vm2627, %v8479, 0.0
      %v8541 = vsel %vm2628, %v8478, 0.0
      %v8542 = vadd.f32 %v8318, %v8510
      %v8543 = vadd.f32 %v8319, %v8511
      %v8544 = vadd.f32 %v8320, %v8512
      %v8545 = vadd.f32 %v8321, %v8513
      %v8546 = vadd.f32 %v8322, %v8514
      %v8547 = vadd.f32 %v8323, %v8515
      %v8548 = vadd.f32 %v8324, %v8516
      %v8549 = vadd.f32 %v8325, %v8517
      %v8550 = vadd.f32 %v8326, %v8518
      %v8551 = vadd.f32 %v8327, %v8519
      %v8552 = vadd.f32 %v8328, %v8520
      %v8553 = vadd.f32 %v8329, %v8521
      %v8554 = vadd.f32 %v8330, %v8522
      %v8555 = vadd.f32 %v8331, %v8523
      %v8556 = vadd.f32 %v8332, %v8524
      %v8557 = vadd.f32 %v8333, %v8525
      %v8558 = vadd.f32 %v8334, %v8526
      %v8559 = vadd.f32 %v8335, %v8527
      %v8560 = vadd.f32 %v8336, %v8528
      %v8561 = vadd.f32 %v8337, %v8529
      %v8562 = vadd.f32 %v8338, %v8530
      %v8563 = vadd.f32 %v8339, %v8531
      %v8564 = vadd.f32 %v8340, %v8532
      %v8565 = vadd.f32 %v8341, %v8533
      %v8566 = vadd.f32 %v8342, %v8534
      %v8567 = vadd.f32 %v8343, %v8535
      %v8568 = vadd.f32 %v8344, %v8536
      %v8569 = vadd.f32 %v8345, %v8537
      %v8570 = vadd.f32 %v8346, %v8538
      %v8571 = vadd.f32 %v8347, %v8539
      %v8572 = vadd.f32 %v8348, %v8540
      %v8573 = vadd.f32 %v8349, %v8541
      %8574 = vrot.lane.b32.xlu0 %v7727, 112
      %v8575 = vpop.permute.xlu0 %8574
      %8576 = vrot.lane.b32.xlu0 %v7729, 112
      %v8577 = vpop.permute.xlu0 %8576
      %8578 = vrot.lane.b32.xlu0 %v7732, 112
      %v8579 = vpop.permute.xlu0 %8578
      %8580 = vrot.lane.b32.xlu0 %v7734, 112
      %v8581 = vpop.permute.xlu0 %8580
      %8582 = vrot.lane.b32.xlu0 %v7737, 112
      %v8583 = vpop.permute.xlu0 %8582
      %8584 = vrot.lane.b32.xlu0 %v7739, 112
      %v8585 = vpop.permute.xlu0 %8584
      %8586 = vrot.lane.b32.xlu0 %v7742, 112
      %v8587 = vpop.permute.xlu0 %8586
      %8588 = vrot.lane.b32.xlu0 %v7744, 112
      %v8589 = vpop.permute.xlu0 %8588
      %8590 = vrot.lane.b32.xlu0 %v7747, 112
      %v8591 = vpop.permute.xlu0 %8590
      %8592 = vrot.lane.b32.xlu0 %v7749, 112
      %v8593 = vpop.permute.xlu0 %8592
      %8594 = vrot.lane.b32.xlu0 %v7752, 112
      %v8595 = vpop.permute.xlu0 %8594
      %8596 = vrot.lane.b32.xlu0 %v7754, 112
      %v8597 = vpop.permute.xlu0 %8596
      %8598 = vrot.lane.b32.xlu0 %v7757, 112
      %v8599 = vpop.permute.xlu0 %8598
      %8600 = vrot.lane.b32.xlu0 %v7759, 112
      %v8601 = vpop.permute.xlu0 %8600
      %8602 = vrot.lane.b32.xlu0 %v7762, 112
      %v8603 = vpop.permute.xlu0 %8602
      %8604 = vrot.lane.b32.xlu0 %v7764, 112
      %v8605 = vpop.permute.xlu0 %8604
      %8606 = vrot.lane.b32.xlu0 %v7767, 112
      %v8607 = vpop.permute.xlu0 %8606
      %8608 = vrot.lane.b32.xlu0 %v7769, 112
      %v8609 = vpop.permute.xlu0 %8608
      %8610 = vrot.lane.b32.xlu0 %v7772, 112
      %v8611 = vpop.permute.xlu0 %8610
      %8612 = vrot.lane.b32.xlu0 %v7774, 112
      %v8613 = vpop.permute.xlu0 %8612
      %8614 = vrot.lane.b32.xlu0 %v7777, 112
      %v8615 = vpop.permute.xlu0 %8614
      %8616 = vrot.lane.b32.xlu0 %v7779, 112
      %v8617 = vpop.permute.xlu0 %8616
      %8618 = vrot.lane.b32.xlu0 %v7782, 112
      %v8619 = vpop.permute.xlu0 %8618
      %8620 = vrot.lane.b32.xlu0 %v7784, 112
      %v8621 = vpop.permute.xlu0 %8620
      %8622 = vrot.lane.b32.xlu0 %v7787, 112
      %v8623 = vpop.permute.xlu0 %8622
      %8624 = vrot.lane.b32.xlu0 %v7789, 112
      %v8625 = vpop.permute.xlu0 %8624
      %8626 = vrot.lane.b32.xlu0 %v7792, 112
      %v8627 = vpop.permute.xlu0 %8626
      %8628 = vrot.lane.b32.xlu0 %v7794, 112
      %v8629 = vpop.permute.xlu0 %8628
      %8630 = vrot.lane.b32.xlu0 %v7797, 112
      %v8631 = vpop.permute.xlu0 %8630
      %8632 = vrot.lane.b32.xlu0 %v7799, 112
      %v8633 = vpop.permute.xlu0 %8632
      %8634 = vrot.lane.b32.xlu0 %v7802, 112
      %v8635 = vpop.permute.xlu0 %8634
      %8636 = vrot.lane.b32.xlu0 %v7804, 112
      %v8637 = vpop.permute.xlu0 %8636
      %v8670 = vadd.f32 %v8542, %v8575
      %v8671 = vadd.f32 %v8543, %v8577
      %v8672 = vadd.f32 %v8544, %v8579
      %v8673 = vadd.f32 %v8545, %v8581
      %v8674 = vadd.f32 %v8546, %v8583
      %v8675 = vadd.f32 %v8547, %v8585
      %v8676 = vadd.f32 %v8548, %v8587
      %v8677 = vadd.f32 %v8549, %v8589
      %v8678 = vadd.f32 %v8550, %v8591
      %v8679 = vadd.f32 %v8551, %v8593
      %v8680 = vadd.f32 %v8552, %v8595
      %v8681 = vadd.f32 %v8553, %v8597
      %v8682 = vadd.f32 %v8554, %v8599
      %v8683 = vadd.f32 %v8555, %v8601
      %v8684 = vadd.f32 %v8556, %v8603
      %v8685 = vadd.f32 %v8557, %v8605
      %v8686 = vadd.f32 %v8558, %v8607
      %v8687 = vadd.f32 %v8559, %v8609
      %v8688 = vadd.f32 %v8560, %v8611
      %v8689 = vadd.f32 %v8561, %v8613
      %v8690 = vadd.f32 %v8562, %v8615
      %v8691 = vadd.f32 %v8563, %v8617
      %v8692 = vadd.f32 %v8564, %v8619
      %v8693 = vadd.f32 %v8565, %v8621
      %v8694 = vadd.f32 %v8566, %v8623
      %v8695 = vadd.f32 %v8567, %v8625
      %v8696 = vadd.f32 %v8568, %v8627
      %v8697 = vadd.f32 %v8569, %v8629
      %v8698 = vadd.f32 %v8570, %v8631
      %v8699 = vadd.f32 %v8571, %v8633
      %v8700 = vadd.f32 %v8572, %v8635
      %v8701 = vadd.f32 %v8573, %v8637
      %8702 = vrot.lane.b32.xlu0 %v7727, 108
      %v8703 = vpop.permute.xlu0 %8702
      %8704 = vrot.lane.b32.xlu0 %v7729, 108
      %v8705 = vpop.permute.xlu0 %8704
      %8706 = vrot.lane.b32.xlu0 %v7732, 108
      %v8707 = vpop.permute.xlu0 %8706
      %8708 = vrot.lane.b32.xlu0 %v7734, 108
      %v8709 = vpop.permute.xlu0 %8708
      %8710 = vrot.lane.b32.xlu0 %v7737, 108
      %v8711 = vpop.permute.xlu0 %8710
      %8712 = vrot.lane.b32.xlu0 %v7739, 108
      %v8713 = vpop.permute.xlu0 %8712
      %8714 = vrot.lane.b32.xlu0 %v7742, 108
      %v8715 = vpop.permute.xlu0 %8714
      %8716 = vrot.lane.b32.xlu0 %v7744, 108
      %v8717 = vpop.permute.xlu0 %8716
      %8718 = vrot.lane.b32.xlu0 %v7747, 108
      %v8719 = vpop.permute.xlu0 %8718
      %8720 = vrot.lane.b32.xlu0 %v7749, 108
      %v8721 = vpop.permute.xlu0 %8720
      %8722 = vrot.lane.b32.xlu0 %v7752, 108
      %v8723 = vpop.permute.xlu0 %8722
      %8724 = vrot.lane.b32.xlu0 %v7754, 108
      %v8725 = vpop.permute.xlu0 %8724
      %8726 = vrot.lane.b32.xlu0 %v7757, 108
      %v8727 = vpop.permute.xlu0 %8726
      %8728 = vrot.lane.b32.xlu0 %v7759, 108
      %v8729 = vpop.permute.xlu0 %8728
      %8730 = vrot.lane.b32.xlu0 %v7762, 108
      %v8731 = vpop.permute.xlu0 %8730
      %8732 = vrot.lane.b32.xlu0 %v7764, 108
      %v8733 = vpop.permute.xlu0 %8732
      %8734 = vrot.lane.b32.xlu0 %v7767, 108
      %v8735 = vpop.permute.xlu0 %8734
      %8736 = vrot.lane.b32.xlu0 %v7769, 108
      %v8737 = vpop.permute.xlu0 %8736
      %8738 = vrot.lane.b32.xlu0 %v7772, 108
      %v8739 = vpop.permute.xlu0 %8738
      %8740 = vrot.lane.b32.xlu0 %v7774, 108
      %v8741 = vpop.permute.xlu0 %8740
      %8742 = vrot.lane.b32.xlu0 %v7777, 108
      %v8743 = vpop.permute.xlu0 %8742
      %8744 = vrot.lane.b32.xlu0 %v7779, 108
      %v8745 = vpop.permute.xlu0 %8744
      %8746 = vrot.lane.b32.xlu0 %v7782, 108
      %v8747 = vpop.permute.xlu0 %8746
      %8748 = vrot.lane.b32.xlu0 %v7784, 108
      %v8749 = vpop.permute.xlu0 %8748
      %8750 = vrot.lane.b32.xlu0 %v7787, 108
      %v8751 = vpop.permute.xlu0 %8750
      %8752 = vrot.lane.b32.xlu0 %v7789, 108
      %v8753 = vpop.permute.xlu0 %8752
      %8754 = vrot.lane.b32.xlu0 %v7792, 108
      %v8755 = vpop.permute.xlu0 %8754
      %8756 = vrot.lane.b32.xlu0 %v7794, 108
      %v8757 = vpop.permute.xlu0 %8756
      %8758 = vrot.lane.b32.xlu0 %v7797, 108
      %v8759 = vpop.permute.xlu0 %8758
      %8760 = vrot.lane.b32.xlu0 %v7799, 108
      %v8761 = vpop.permute.xlu0 %8760
      %8762 = vrot.lane.b32.xlu0 %v7802, 108
      %v8763 = vpop.permute.xlu0 %8762
      %8764 = vrot.lane.b32.xlu0 %v7804, 108
      %v8765 = vpop.permute.xlu0 %8764
      %v8798 = vrot.slane %v8703, 1
      %v8799 = vrot.slane %v8705, 1
      %v8800 = vrot.slane %v8707, 1
      %v8801 = vrot.slane %v8709, 1
      %v8802 = vrot.slane %v8711, 1
      %v8803 = vrot.slane %v8713, 1
      %v8804 = vrot.slane %v8715, 1
      %v8805 = vrot.slane %v8717, 1
      %v8806 = vrot.slane %v8719, 1
      %v8807 = vrot.slane %v8721, 1
      %v8808 = vrot.slane %v8723, 1
      %v8809 = vrot.slane %v8725, 1
      %v8810 = vrot.slane %v8727, 1
      %v8811 = vrot.slane %v8729, 1
      %v8812 = vrot.slane %v8731, 1
      %v8813 = vrot.slane %v8733, 1
      %v8814 = vrot.slane %v8735, 1
      %v8815 = vrot.slane %v8737, 1
      %v8816 = vrot.slane %v8739, 1
      %v8817 = vrot.slane %v8741, 1
      %v8818 = vrot.slane %v8743, 1
      %v8819 = vrot.slane %v8745, 1
      %v8820 = vrot.slane %v8747, 1
      %v8821 = vrot.slane %v8749, 1
      %v8822 = vrot.slane %v8751, 1
      %v8823 = vrot.slane %v8753, 1
      %v8824 = vrot.slane %v8755, 1
      %v8825 = vrot.slane %v8757, 1
      %v8826 = vrot.slane %v8759, 1
      %v8827 = vrot.slane %v8761, 1
      %v8828 = vrot.slane %v8763, 1
      %v8829 = vrot.slane %v8765, 1
      %v8830 = vsel %vm2180, %v8828, %v8829
      %v8831 = vsel %vm2180, %v8827, %v8828
      %v8832 = vsel %vm2180, %v8826, %v8827
      %v8833 = vsel %vm2180, %v8825, %v8826
      %v8834 = vsel %vm2180, %v8824, %v8825
      %v8835 = vsel %vm2180, %v8823, %v8824
      %v8836 = vsel %vm2180, %v8822, %v8823
      %v8837 = vsel %vm2180, %v8821, %v8822
      %v8838 = vsel %vm2180, %v8820, %v8821
      %v8839 = vsel %vm2180, %v8819, %v8820
      %v8840 = vsel %vm2180, %v8818, %v8819
      %v8841 = vsel %vm2180, %v8817, %v8818
      %v8842 = vsel %vm2180, %v8816, %v8817
      %v8843 = vsel %vm2180, %v8815, %v8816
      %v8844 = vsel %vm2180, %v8814, %v8815
      %v8845 = vsel %vm2180, %v8813, %v8814
      %v8846 = vsel %vm2180, %v8812, %v8813
      %v8847 = vsel %vm2180, %v8811, %v8812
      %v8848 = vsel %vm2180, %v8810, %v8811
      %v8849 = vsel %vm2180, %v8809, %v8810
      %v8850 = vsel %vm2180, %v8808, %v8809
      %v8851 = vsel %vm2180, %v8807, %v8808
      %v8852 = vsel %vm2180, %v8806, %v8807
      %v8853 = vsel %vm2180, %v8805, %v8806
      %v8854 = vsel %vm2180, %v8804, %v8805
      %v8855 = vsel %vm2180, %v8803, %v8804
      %v8856 = vsel %vm2180, %v8802, %v8803
      %v8857 = vsel %vm2180, %v8801, %v8802
      %v8858 = vsel %vm2180, %v8800, %v8801
      %v8859 = vsel %vm2180, %v8799, %v8800
      %v8860 = vsel %vm2180, %v8798, %v8799
      %v8861 = vsel %vm2180, %v8829, %v8798
      %v8862 = vsel %vm3013, %v8860, 0.0
      %v8863 = vsel %vm3014, %v8859, 0.0
      %v8864 = vsel %vm3015, %v8858, 0.0
      %v8865 = vsel %vm3016, %v8857, 0.0
      %v8866 = vsel %vm3017, %v8856, 0.0
      %v8867 = vsel %vm3018, %v8855, 0.0
      %v8868 = vsel %vm3019, %v8854, 0.0
      %v8869 = vsel %vm3020, %v8853, 0.0
      %v8870 = vsel %vm3021, %v8852, 0.0
      %v8871 = vsel %vm3022, %v8851, 0.0
      %v8872 = vsel %vm3023, %v8850, 0.0
      %v8873 = vsel %vm3024, %v8849, 0.0
      %v8874 = vsel %vm3025, %v8848, 0.0
      %v8875 = vsel %vm3026, %v8847, 0.0
      %v8876 = vsel %vm3027, %v8846, 0.0
      %v8877 = vsel %vm3028, %v8845, 0.0
      %v8878 = vsel %vm3029, %v8844, 0.0
      %v8879 = vsel %vm3030, %v8843, 0.0
      %v8880 = vsel %vm3031, %v8842, 0.0
      %v8881 = vsel %vm3032, %v8841, 0.0
      %v8882 = vsel %vm3033, %v8840, 0.0
      %v8883 = vsel %vm3034, %v8839, 0.0
      %v8884 = vsel %vm3035, %v8838, 0.0
      %v8885 = vsel %vm3036, %v8837, 0.0
      %v8886 = vsel %vm3037, %v8836, 0.0
      %v8887 = vsel %vm3038, %v8835, 0.0
      %v8888 = vsel %vm3039, %v8834, 0.0
      %v8889 = vsel %vm3040, %v8833, 0.0
      %v8890 = vsel %vm3041, %v8832, 0.0
      %v8891 = vsel %vm3042, %v8831, 0.0
      %v8892 = vsel %vm3043, %v8830, 0.0
      %v8893 = vsel %vm3044, %v8861, 0.0
      %v8894 = vadd.f32 %v8670, %v8862
      %v8895 = vadd.f32 %v8671, %v8863
      %v8896 = vadd.f32 %v8672, %v8864
      %v8897 = vadd.f32 %v8673, %v8865
      %v8898 = vadd.f32 %v8674, %v8866
      %v8899 = vadd.f32 %v8675, %v8867
      %v8900 = vadd.f32 %v8676, %v8868
      %v8901 = vadd.f32 %v8677, %v8869
      %v8902 = vadd.f32 %v8678, %v8870
      %v8903 = vadd.f32 %v8679, %v8871
      %v8904 = vadd.f32 %v8680, %v8872
      %v8905 = vadd.f32 %v8681, %v8873
      %v8906 = vadd.f32 %v8682, %v8874
      %v8907 = vadd.f32 %v8683, %v8875
      %v8908 = vadd.f32 %v8684, %v8876
      %v8909 = vadd.f32 %v8685, %v8877
      %v8910 = vadd.f32 %v8686, %v8878
      %v8911 = vadd.f32 %v8687, %v8879
      %v8912 = vadd.f32 %v8688, %v8880
      %v8913 = vadd.f32 %v8689, %v8881
      %v8914 = vadd.f32 %v8690, %v8882
      %v8915 = vadd.f32 %v8691, %v8883
      %v8916 = vadd.f32 %v8692, %v8884
      %v8917 = vadd.f32 %v8693, %v8885
      %v8918 = vadd.f32 %v8694, %v8886
      %v8919 = vadd.f32 %v8695, %v8887
      %v8920 = vadd.f32 %v8696, %v8888
      %v8921 = vadd.f32 %v8697, %v8889
      %v8922 = vadd.f32 %v8698, %v8890
      %v8923 = vadd.f32 %v8699, %v8891
      %v8924 = vadd.f32 %v8700, %v8892
      %v8925 = vadd.f32 %v8701, %v8893
      %8926 = vrot.lane.b32.xlu0 %v7727, 104
      %v8927 = vpop.permute.xlu0 %8926
      %8928 = vrot.lane.b32.xlu0 %v7729, 104
      %v8929 = vpop.permute.xlu0 %8928
      %8930 = vrot.lane.b32.xlu0 %v7732, 104
      %v8931 = vpop.permute.xlu0 %8930
      %8932 = vrot.lane.b32.xlu0 %v7734, 104
      %v8933 = vpop.permute.xlu0 %8932
      %8934 = vrot.lane.b32.xlu0 %v7737, 104
      %v8935 = vpop.permute.xlu0 %8934
      %8936 = vrot.lane.b32.xlu0 %v7739, 104
      %v8937 = vpop.permute.xlu0 %8936
      %8938 = vrot.lane.b32.xlu0 %v7742, 104
      %v8939 = vpop.permute.xlu0 %8938
      %8940 = vrot.lane.b32.xlu0 %v7744, 104
      %v8941 = vpop.permute.xlu0 %8940
      %8942 = vrot.lane.b32.xlu0 %v7747, 104
      %v8943 = vpop.permute.xlu0 %8942
      %8944 = vrot.lane.b32.xlu0 %v7749, 104
      %v8945 = vpop.permute.xlu0 %8944
      %8946 = vrot.lane.b32.xlu0 %v7752, 104
      %v8947 = vpop.permute.xlu0 %8946
      %8948 = vrot.lane.b32.xlu0 %v7754, 104
      %v8949 = vpop.permute.xlu0 %8948
      %8950 = vrot.lane.b32.xlu0 %v7757, 104
      %v8951 = vpop.permute.xlu0 %8950
      %8952 = vrot.lane.b32.xlu0 %v7759, 104
      %v8953 = vpop.permute.xlu0 %8952
      %8954 = vrot.lane.b32.xlu0 %v7762, 104
      %v8955 = vpop.permute.xlu0 %8954
      %8956 = vrot.lane.b32.xlu0 %v7764, 104
      %v8957 = vpop.permute.xlu0 %8956
      %8958 = vrot.lane.b32.xlu0 %v7767, 104
      %v8959 = vpop.permute.xlu0 %8958
      %8960 = vrot.lane.b32.xlu0 %v7769, 104
      %v8961 = vpop.permute.xlu0 %8960
      %8962 = vrot.lane.b32.xlu0 %v7772, 104
      %v8963 = vpop.permute.xlu0 %8962
      %8964 = vrot.lane.b32.xlu0 %v7774, 104
      %v8965 = vpop.permute.xlu0 %8964
      %8966 = vrot.lane.b32.xlu0 %v7777, 104
      %v8967 = vpop.permute.xlu0 %8966
      %8968 = vrot.lane.b32.xlu0 %v7779, 104
      %v8969 = vpop.permute.xlu0 %8968
      %8970 = vrot.lane.b32.xlu0 %v7782, 104
      %v8971 = vpop.permute.xlu0 %8970
      %8972 = vrot.lane.b32.xlu0 %v7784, 104
      %v8973 = vpop.permute.xlu0 %8972
      %8974 = vrot.lane.b32.xlu0 %v7787, 104
      %v8975 = vpop.permute.xlu0 %8974
      %8976 = vrot.lane.b32.xlu0 %v7789, 104
      %v8977 = vpop.permute.xlu0 %8976
      %8978 = vrot.lane.b32.xlu0 %v7792, 104
      %v8979 = vpop.permute.xlu0 %8978
      %8980 = vrot.lane.b32.xlu0 %v7794, 104
      %v8981 = vpop.permute.xlu0 %8980
      %8982 = vrot.lane.b32.xlu0 %v7797, 104
      %v8983 = vpop.permute.xlu0 %8982
      %8984 = vrot.lane.b32.xlu0 %v7799, 104
      %v8985 = vpop.permute.xlu0 %8984
      %8986 = vrot.lane.b32.xlu0 %v7802, 104
      %v8987 = vpop.permute.xlu0 %8986
      %8988 = vrot.lane.b32.xlu0 %v7804, 104
      %v8989 = vpop.permute.xlu0 %8988
      %v9022 = vrot.slane %v8927, 7
      %v9023 = vrot.slane %v8929, 7
      %v9024 = vrot.slane %v8931, 7
      %v9025 = vrot.slane %v8933, 7
      %v9026 = vrot.slane %v8935, 7
      %v9027 = vrot.slane %v8937, 7
      %v9028 = vrot.slane %v8939, 7
      %v9029 = vrot.slane %v8941, 7
      %v9030 = vrot.slane %v8943, 7
      %v9031 = vrot.slane %v8945, 7
      %v9032 = vrot.slane %v8947, 7
      %v9033 = vrot.slane %v8949, 7
      %v9034 = vrot.slane %v8951, 7
      %v9035 = vrot.slane %v8953, 7
      %v9036 = vrot.slane %v8955, 7
      %v9037 = vrot.slane %v8957, 7
      %v9038 = vrot.slane %v8959, 7
      %v9039 = vrot.slane %v8961, 7
      %v9040 = vrot.slane %v8963, 7
      %v9041 = vrot.slane %v8965, 7
      %v9042 = vrot.slane %v8967, 7
      %v9043 = vrot.slane %v8969, 7
      %v9044 = vrot.slane %v8971, 7
      %v9045 = vrot.slane %v8973, 7
      %v9046 = vrot.slane %v8975, 7
      %v9047 = vrot.slane %v8977, 7
      %v9048 = vrot.slane %v8979, 7
      %v9049 = vrot.slane %v8981, 7
      %v9050 = vrot.slane %v8983, 7
      %v9051 = vrot.slane %v8985, 7
      %v9052 = vrot.slane %v8987, 7
      %v9053 = vrot.slane %v8989, 7
      %v9054 = vsel %vm1539, %v9052, %v9053
      %v9055 = vsel %vm1539, %v9051, %v9052
      %v9056 = vsel %vm1539, %v9050, %v9051
      %v9057 = vsel %vm1539, %v9049, %v9050
      %v9058 = vsel %vm1539, %v9048, %v9049
      %v9059 = vsel %vm1539, %v9047, %v9048
      %v9060 = vsel %vm1539, %v9046, %v9047
      %v9061 = vsel %vm1539, %v9045, %v9046
      %v9062 = vsel %vm1539, %v9044, %v9045
      %v9063 = vsel %vm1539, %v9043, %v9044
      %v9064 = vsel %vm1539, %v9042, %v9043
      %v9065 = vsel %vm1539, %v9041, %v9042
      %v9066 = vsel %vm1539, %v9040, %v9041
      %v9067 = vsel %vm1539, %v9039, %v9040
      %v9068 = vsel %vm1539, %v9038, %v9039
      %v9069 = vsel %vm1539, %v9037, %v9038
      %v9070 = vsel %vm1539, %v9036, %v9037
      %v9071 = vsel %vm1539, %v9035, %v9036
      %v9072 = vsel %vm1539, %v9034, %v9035
      %v9073 = vsel %vm1539, %v9033, %v9034
      %v9074 = vsel %vm1539, %v9032, %v9033
      %v9075 = vsel %vm1539, %v9031, %v9032
      %v9076 = vsel %vm1539, %v9030, %v9031
      %v9077 = vsel %vm1539, %v9029, %v9030
      %v9078 = vsel %vm1539, %v9028, %v9029
      %v9079 = vsel %vm1539, %v9027, %v9028
      %v9080 = vsel %vm1539, %v9026, %v9027
      %v9081 = vsel %vm1539, %v9025, %v9026
      %v9082 = vsel %vm1539, %v9024, %v9025
      %v9083 = vsel %vm1539, %v9023, %v9024
      %v9084 = vsel %vm1539, %v9022, %v9023
      %v9085 = vsel %vm1539, %v9053, %v9022
      %v9086 = vsel %vm3365, %v9083, 0.0
      %v9087 = vsel %vm3366, %v9082, 0.0
      %v9088 = vsel %vm3367, %v9081, 0.0
      %v9089 = vsel %vm3368, %v9080, 0.0
      %v9090 = vsel %vm3369, %v9079, 0.0
      %v9091 = vsel %vm3370, %v9078, 0.0
      %v9092 = vsel %vm3371, %v9077, 0.0
      %v9093 = vsel %vm3372, %v9076, 0.0
      %v9094 = vsel %vm3373, %v9075, 0.0
      %v9095 = vsel %vm3374, %v9074, 0.0
      %v9096 = vsel %vm3375, %v9073, 0.0
      %v9097 = vsel %vm3376, %v9072, 0.0
      %v9098 = vsel %vm3377, %v9071, 0.0
      %v9099 = vsel %vm3378, %v9070, 0.0
      %v9100 = vsel %vm3379, %v9069, 0.0
      %v9101 = vsel %vm3380, %v9068, 0.0
      %v9102 = vsel %vm3381, %v9067, 0.0
      %v9103 = vsel %vm3382, %v9066, 0.0
      %v9104 = vsel %vm3383, %v9065, 0.0
      %v9105 = vsel %vm3384, %v9064, 0.0
      %v9106 = vsel %vm3385, %v9063, 0.0
      %v9107 = vsel %vm3386, %v9062, 0.0
      %v9108 = vsel %vm3387, %v9061, 0.0
      %v9109 = vsel %vm3388, %v9060, 0.0
      %v9110 = vsel %vm3389, %v9059, 0.0
      %v9111 = vsel %vm3390, %v9058, 0.0
      %v9112 = vsel %vm3391, %v9057, 0.0
      %v9113 = vsel %vm3392, %v9056, 0.0
      %v9114 = vsel %vm3393, %v9055, 0.0
      %v9115 = vsel %vm3394, %v9054, 0.0
      %v9116 = vsel %vm3395, %v9085, 0.0
      %v9117 = vsel %vm3396, %v9084, 0.0
      %v9118 = vadd.f32 %v8894, %v9086
      %v9119 = vadd.f32 %v8895, %v9087
      %v9120 = vadd.f32 %v8896, %v9088
      %v9121 = vadd.f32 %v8897, %v9089
      %v9122 = vadd.f32 %v8898, %v9090
      %v9123 = vadd.f32 %v8899, %v9091
      %v9124 = vadd.f32 %v8900, %v9092
      %v9125 = vadd.f32 %v8901, %v9093
      %v9126 = vadd.f32 %v8902, %v9094
      %v9127 = vadd.f32 %v8903, %v9095
      %v9128 = vadd.f32 %v8904, %v9096
      %v9129 = vadd.f32 %v8905, %v9097
      %v9130 = vadd.f32 %v8906, %v9098
      %v9131 = vadd.f32 %v8907, %v9099
      %v9132 = vadd.f32 %v8908, %v9100
      %v9133 = vadd.f32 %v8909, %v9101
      %v9134 = vadd.f32 %v8910, %v9102
      %v9135 = vadd.f32 %v8911, %v9103
      %v9136 = vadd.f32 %v8912, %v9104
      %v9137 = vadd.f32 %v8913, %v9105
      %v9138 = vadd.f32 %v8914, %v9106
      %v9139 = vadd.f32 %v8915, %v9107
      %v9140 = vadd.f32 %v8916, %v9108
      %v9141 = vadd.f32 %v8917, %v9109
      %v9142 = vadd.f32 %v8918, %v9110
      %v9143 = vadd.f32 %v8919, %v9111
      %v9144 = vadd.f32 %v8920, %v9112
      %v9145 = vadd.f32 %v8921, %v9113
      %v9146 = vadd.f32 %v8922, %v9114
      %v9147 = vadd.f32 %v8923, %v9115
      %v9148 = vadd.f32 %v8924, %v9116
      %v9149 = vadd.f32 %v8925, %v9117
      %9150 = vrot.lane.b32.xlu0 %v7727, 100
      %v9151 = vpop.permute.xlu0 %9150
      %9152 = vrot.lane.b32.xlu0 %v7729, 100
      %v9153 = vpop.permute.xlu0 %9152
      %9154 = vrot.lane.b32.xlu0 %v7732, 100
      %v9155 = vpop.permute.xlu0 %9154
      %9156 = vrot.lane.b32.xlu0 %v7734, 100
      %v9157 = vpop.permute.xlu0 %9156
      %9158 = vrot.lane.b32.xlu0 %v7737, 100
      %v9159 = vpop.permute.xlu0 %9158
      %9160 = vrot.lane.b32.xlu0 %v7739, 100
      %v9161 = vpop.permute.xlu0 %9160
      %9162 = vrot.lane.b32.xlu0 %v7742, 100
      %v9163 = vpop.permute.xlu0 %9162
      %9164 = vrot.lane.b32.xlu0 %v7744, 100
      %v9165 = vpop.permute.xlu0 %9164
      %9166 = vrot.lane.b32.xlu0 %v7747, 100
      %v9167 = vpop.permute.xlu0 %9166
      %9168 = vrot.lane.b32.xlu0 %v7749, 100
      %v9169 = vpop.permute.xlu0 %9168
      %9170 = vrot.lane.b32.xlu0 %v7752, 100
      %v9171 = vpop.permute.xlu0 %9170
      %9172 = vrot.lane.b32.xlu0 %v7754, 100
      %v9173 = vpop.permute.xlu0 %9172
      %9174 = vrot.lane.b32.xlu0 %v7757, 100
      %v9175 = vpop.permute.xlu0 %9174
      %9176 = vrot.lane.b32.xlu0 %v7759, 100
      %v9177 = vpop.permute.xlu0 %9176
      %9178 = vrot.lane.b32.xlu0 %v7762, 100
      %v9179 = vpop.permute.xlu0 %9178
      %9180 = vrot.lane.b32.xlu0 %v7764, 100
      %v9181 = vpop.permute.xlu0 %9180
      %9182 = vrot.lane.b32.xlu0 %v7767, 100
      %v9183 = vpop.permute.xlu0 %9182
      %9184 = vrot.lane.b32.xlu0 %v7769, 100
      %v9185 = vpop.permute.xlu0 %9184
      %9186 = vrot.lane.b32.xlu0 %v7772, 100
      %v9187 = vpop.permute.xlu0 %9186
      %9188 = vrot.lane.b32.xlu0 %v7774, 100
      %v9189 = vpop.permute.xlu0 %9188
      %9190 = vrot.lane.b32.xlu0 %v7777, 100
      %v9191 = vpop.permute.xlu0 %9190
      %9192 = vrot.lane.b32.xlu0 %v7779, 100
      %v9193 = vpop.permute.xlu0 %9192
      %9194 = vrot.lane.b32.xlu0 %v7782, 100
      %v9195 = vpop.permute.xlu0 %9194
      %9196 = vrot.lane.b32.xlu0 %v7784, 100
      %v9197 = vpop.permute.xlu0 %9196
      %9198 = vrot.lane.b32.xlu0 %v7787, 100
      %v9199 = vpop.permute.xlu0 %9198
      %9200 = vrot.lane.b32.xlu0 %v7789, 100
      %v9201 = vpop.permute.xlu0 %9200
      %9202 = vrot.lane.b32.xlu0 %v7792, 100
      %v9203 = vpop.permute.xlu0 %9202
      %9204 = vrot.lane.b32.xlu0 %v7794, 100
      %v9205 = vpop.permute.xlu0 %9204
      %9206 = vrot.lane.b32.xlu0 %v7797, 100
      %v9207 = vpop.permute.xlu0 %9206
      %9208 = vrot.lane.b32.xlu0 %v7799, 100
      %v9209 = vpop.permute.xlu0 %9208
      %9210 = vrot.lane.b32.xlu0 %v7802, 100
      %v9211 = vpop.permute.xlu0 %9210
      %9212 = vrot.lane.b32.xlu0 %v7804, 100
      %v9213 = vpop.permute.xlu0 %9212
      %v9246 = vsel %vm3589, %v9155, 0.0
      %v9247 = vsel %vm3590, %v9157, 0.0
      %v9248 = vsel %vm3591, %v9159, 0.0
      %v9249 = vsel %vm3592, %v9161, 0.0
      %v9250 = vsel %vm3593, %v9163, 0.0
      %v9251 = vsel %vm3594, %v9165, 0.0
      %v9252 = vsel %vm3595, %v9167, 0.0
      %v9253 = vsel %vm3596, %v9169, 0.0
      %v9254 = vsel %vm3597, %v9171, 0.0
      %v9255 = vsel %vm3598, %v9173, 0.0
      %v9256 = vsel %vm3599, %v9175, 0.0
      %v9257 = vsel %vm3600, %v9177, 0.0
      %v9258 = vsel %vm3601, %v9179, 0.0
      %v9259 = vsel %vm3602, %v9181, 0.0
      %v9260 = vsel %vm3603, %v9183, 0.0
      %v9261 = vsel %vm3604, %v9185, 0.0
      %v9262 = vsel %vm3605, %v9187, 0.0
      %v9263 = vsel %vm3606, %v9189, 0.0
      %v9264 = vsel %vm3607, %v9191, 0.0
      %v9265 = vsel %vm3608, %v9193, 0.0
      %v9266 = vsel %vm3609, %v9195, 0.0
      %v9267 = vsel %vm3610, %v9197, 0.0
      %v9268 = vsel %vm3611, %v9199, 0.0
      %v9269 = vsel %vm3612, %v9201, 0.0
      %v9270 = vsel %vm3613, %v9203, 0.0
      %v9271 = vsel %vm3614, %v9205, 0.0
      %v9272 = vsel %vm3615, %v9207, 0.0
      %v9273 = vsel %vm3616, %v9209, 0.0
      %v9274 = vsel %vm3617, %v9211, 0.0
      %v9275 = vsel %vm3618, %v9213, 0.0
      %v9276 = vsel %vm3619, %v9151, 0.0
      %v9277 = vsel %vm3620, %v9153, 0.0
      %v9278 = vadd.f32 %v9118, %v9246
      %v9279 = vadd.f32 %v9119, %v9247
      %v9280 = vadd.f32 %v9120, %v9248
      %v9281 = vadd.f32 %v9121, %v9249
      %v9282 = vadd.f32 %v9122, %v9250
      %v9283 = vadd.f32 %v9123, %v9251
      %v9284 = vadd.f32 %v9124, %v9252
      %v9285 = vadd.f32 %v9125, %v9253
      %v9286 = vadd.f32 %v9126, %v9254
      %v9287 = vadd.f32 %v9127, %v9255
      %v9288 = vadd.f32 %v9128, %v9256
      %v9289 = vadd.f32 %v9129, %v9257
      %v9290 = vadd.f32 %v9130, %v9258
      %v9291 = vadd.f32 %v9131, %v9259
      %v9292 = vadd.f32 %v9132, %v9260
      %v9293 = vadd.f32 %v9133, %v9261
      %v9294 = vadd.f32 %v9134, %v9262
      %v9295 = vadd.f32 %v9135, %v9263
      %v9296 = vadd.f32 %v9136, %v9264
      %v9297 = vadd.f32 %v9137, %v9265
      %v9298 = vadd.f32 %v9138, %v9266
      %v9299 = vadd.f32 %v9139, %v9267
      %v9300 = vadd.f32 %v9140, %v9268
      %v9301 = vadd.f32 %v9141, %v9269
      %v9302 = vadd.f32 %v9142, %v9270
      %v9303 = vadd.f32 %v9143, %v9271
      %v9304 = vadd.f32 %v9144, %v9272
      %v9305 = vadd.f32 %v9145, %v9273
      %v9306 = vadd.f32 %v9146, %v9274
      %v9307 = vadd.f32 %v9147, %v9275
      %v9308 = vadd.f32 %v9148, %v9276
      %v9309 = vadd.f32 %v9149, %v9277
      %9310 = vrot.lane.b32.xlu0 %v7727, 96
      %v9311 = vpop.permute.xlu0 %9310
      %9312 = vrot.lane.b32.xlu0 %v7729, 96
      %v9313 = vpop.permute.xlu0 %9312
      %9314 = vrot.lane.b32.xlu0 %v7732, 96
      %v9315 = vpop.permute.xlu0 %9314
      %9316 = vrot.lane.b32.xlu0 %v7734, 96
      %v9317 = vpop.permute.xlu0 %9316
      %9318 = vrot.lane.b32.xlu0 %v7737, 96
      %v9319 = vpop.permute.xlu0 %9318
      %9320 = vrot.lane.b32.xlu0 %v7739, 96
      %v9321 = vpop.permute.xlu0 %9320
      %9322 = vrot.lane.b32.xlu0 %v7742, 96
      %v9323 = vpop.permute.xlu0 %9322
      %9324 = vrot.lane.b32.xlu0 %v7744, 96
      %v9325 = vpop.permute.xlu0 %9324
      %9326 = vrot.lane.b32.xlu0 %v7747, 96
      %v9327 = vpop.permute.xlu0 %9326
      %9328 = vrot.lane.b32.xlu0 %v7749, 96
      %v9329 = vpop.permute.xlu0 %9328
      %9330 = vrot.lane.b32.xlu0 %v7752, 96
      %v9331 = vpop.permute.xlu0 %9330
      %9332 = vrot.lane.b32.xlu0 %v7754, 96
      %v9333 = vpop.permute.xlu0 %9332
      %9334 = vrot.lane.b32.xlu0 %v7757, 96
      %v9335 = vpop.permute.xlu0 %9334
      %9336 = vrot.lane.b32.xlu0 %v7759, 96
      %v9337 = vpop.permute.xlu0 %9336
      %9338 = vrot.lane.b32.xlu0 %v7762, 96
      %v9339 = vpop.permute.xlu0 %9338
      %9340 = vrot.lane.b32.xlu0 %v7764, 96
      %v9341 = vpop.permute.xlu0 %9340
      %9342 = vrot.lane.b32.xlu0 %v7767, 96
      %v9343 = vpop.permute.xlu0 %9342
      %9344 = vrot.lane.b32.xlu0 %v7769, 96
      %v9345 = vpop.permute.xlu0 %9344
      %9346 = vrot.lane.b32.xlu0 %v7772, 96
      %v9347 = vpop.permute.xlu0 %9346
      %9348 = vrot.lane.b32.xlu0 %v7774, 96
      %v9349 = vpop.permute.xlu0 %9348
      %9350 = vrot.lane.b32.xlu0 %v7777, 96
      %v9351 = vpop.permute.xlu0 %9350
      %9352 = vrot.lane.b32.xlu0 %v7779, 96
      %v9353 = vpop.permute.xlu0 %9352
      %9354 = vrot.lane.b32.xlu0 %v7782, 96
      %v9355 = vpop.permute.xlu0 %9354
      %9356 = vrot.lane.b32.xlu0 %v7784, 96
      %v9357 = vpop.permute.xlu0 %9356
      %9358 = vrot.lane.b32.xlu0 %v7787, 96
      %v9359 = vpop.permute.xlu0 %9358
      %9360 = vrot.lane.b32.xlu0 %v7789, 96
      %v9361 = vpop.permute.xlu0 %9360
      %9362 = vrot.lane.b32.xlu0 %v7792, 96
      %v9363 = vpop.permute.xlu0 %9362
      %9364 = vrot.lane.b32.xlu0 %v7794, 96
      %v9365 = vpop.permute.xlu0 %9364
      %9366 = vrot.lane.b32.xlu0 %v7797, 96
      %v9367 = vpop.permute.xlu0 %9366
      %9368 = vrot.lane.b32.xlu0 %v7799, 96
      %v9369 = vpop.permute.xlu0 %9368
      %9370 = vrot.lane.b32.xlu0 %v7802, 96
      %v9371 = vpop.permute.xlu0 %9370
      %9372 = vrot.lane.b32.xlu0 %v7804, 96
      %v9373 = vpop.permute.xlu0 %9372
      %v9406 = vrot.slane %v9311, 1
      %v9407 = vrot.slane %v9313, 1
      %v9408 = vrot.slane %v9315, 1
      %v9409 = vrot.slane %v9317, 1
      %v9410 = vrot.slane %v9319, 1
      %v9411 = vrot.slane %v9321, 1
      %v9412 = vrot.slane %v9323, 1
      %v9413 = vrot.slane %v9325, 1
      %v9414 = vrot.slane %v9327, 1
      %v9415 = vrot.slane %v9329, 1
      %v9416 = vrot.slane %v9331, 1
      %v9417 = vrot.slane %v9333, 1
      %v9418 = vrot.slane %v9335, 1
      %v9419 = vrot.slane %v9337, 1
      %v9420 = vrot.slane %v9339, 1
      %v9421 = vrot.slane %v9341, 1
      %v9422 = vrot.slane %v9343, 1
      %v9423 = vrot.slane %v9345, 1
      %v9424 = vrot.slane %v9347, 1
      %v9425 = vrot.slane %v9349, 1
      %v9426 = vrot.slane %v9351, 1
      %v9427 = vrot.slane %v9353, 1
      %v9428 = vrot.slane %v9355, 1
      %v9429 = vrot.slane %v9357, 1
      %v9430 = vrot.slane %v9359, 1
      %v9431 = vrot.slane %v9361, 1
      %v9432 = vrot.slane %v9363, 1
      %v9433 = vrot.slane %v9365, 1
      %v9434 = vrot.slane %v9367, 1
      %v9435 = vrot.slane %v9369, 1
      %v9436 = vrot.slane %v9371, 1
      %v9437 = vrot.slane %v9373, 1
      %v9438 = vsel %vm2180, %v9436, %v9437
      %v9439 = vsel %vm2180, %v9435, %v9436
      %v9440 = vsel %vm2180, %v9434, %v9435
      %v9441 = vsel %vm2180, %v9433, %v9434
      %v9442 = vsel %vm2180, %v9432, %v9433
      %v9443 = vsel %vm2180, %v9431, %v9432
      %v9444 = vsel %vm2180, %v9430, %v9431
      %v9445 = vsel %vm2180, %v9429, %v9430
      %v9446 = vsel %vm2180, %v9428, %v9429
      %v9447 = vsel %vm2180, %v9427, %v9428
      %v9448 = vsel %vm2180, %v9426, %v9427
      %v9449 = vsel %vm2180, %v9425, %v9426
      %v9450 = vsel %vm2180, %v9424, %v9425
      %v9451 = vsel %vm2180, %v9423, %v9424
      %v9452 = vsel %vm2180, %v9422, %v9423
      %v9453 = vsel %vm2180, %v9421, %v9422
      %v9454 = vsel %vm2180, %v9420, %v9421
      %v9455 = vsel %vm2180, %v9419, %v9420
      %v9456 = vsel %vm2180, %v9418, %v9419
      %v9457 = vsel %vm2180, %v9417, %v9418
      %v9458 = vsel %vm2180, %v9416, %v9417
      %v9459 = vsel %vm2180, %v9415, %v9416
      %v9460 = vsel %vm2180, %v9414, %v9415
      %v9461 = vsel %vm2180, %v9413, %v9414
      %v9462 = vsel %vm2180, %v9412, %v9413
      %v9463 = vsel %vm2180, %v9411, %v9412
      %v9464 = vsel %vm2180, %v9410, %v9411
      %v9465 = vsel %vm2180, %v9409, %v9410
      %v9466 = vsel %vm2180, %v9408, %v9409
      %v9467 = vsel %vm2180, %v9407, %v9408
      %v9468 = vsel %vm2180, %v9406, %v9407
      %v9469 = vsel %vm2180, %v9437, %v9406
      %v9470 = vsel %vm3909, %v9466, 0.0
      %v9471 = vsel %vm3910, %v9465, 0.0
      %v9472 = vsel %vm3911, %v9464, 0.0
      %v9473 = vsel %vm3912, %v9463, 0.0
      %v9474 = vsel %vm3913, %v9462, 0.0
      %v9475 = vsel %vm3914, %v9461, 0.0
      %v9476 = vsel %vm3915, %v9460, 0.0
      %v9477 = vsel %vm3916, %v9459, 0.0
      %v9478 = vsel %vm3917, %v9458, 0.0
      %v9479 = vsel %vm3918, %v9457, 0.0
      %v9480 = vsel %vm3919, %v9456, 0.0
      %v9481 = vsel %vm3920, %v9455, 0.0
      %v9482 = vsel %vm3921, %v9454, 0.0
      %v9483 = vsel %vm3922, %v9453, 0.0
      %v9484 = vsel %vm3923, %v9452, 0.0
      %v9485 = vsel %vm3924, %v9451, 0.0
      %v9486 = vsel %vm3925, %v9450, 0.0
      %v9487 = vsel %vm3926, %v9449, 0.0
      %v9488 = vsel %vm3927, %v9448, 0.0
      %v9489 = vsel %vm3928, %v9447, 0.0
      %v9490 = vsel %vm3929, %v9446, 0.0
      %v9491 = vsel %vm3930, %v9445, 0.0
      %v9492 = vsel %vm3931, %v9444, 0.0
      %v9493 = vsel %vm3932, %v9443, 0.0
      %v9494 = vsel %vm3933, %v9442, 0.0
      %v9495 = vsel %vm3934, %v9441, 0.0
      %v9496 = vsel %vm3935, %v9440, 0.0
      %v9497 = vsel %vm3936, %v9439, 0.0
      %v9498 = vsel %vm3937, %v9438, 0.0
      %v9499 = vsel %vm3938, %v9469, 0.0
      %v9500 = vsel %vm3939, %v9468, 0.0
      %v9501 = vsel %vm3940, %v9467, 0.0
      %v9502 = vadd.f32 %v9278, %v9470
      %v9503 = vadd.f32 %v9279, %v9471
      %v9504 = vadd.f32 %v9280, %v9472
      %v9505 = vadd.f32 %v9281, %v9473
      %v9506 = vadd.f32 %v9282, %v9474
      %v9507 = vadd.f32 %v9283, %v9475
      %v9508 = vadd.f32 %v9284, %v9476
      %v9509 = vadd.f32 %v9285, %v9477
      %v9510 = vadd.f32 %v9286, %v9478
      %v9511 = vadd.f32 %v9287, %v9479
      %v9512 = vadd.f32 %v9288, %v9480
      %v9513 = vadd.f32 %v9289, %v9481
      %v9514 = vadd.f32 %v9290, %v9482
      %v9515 = vadd.f32 %v9291, %v9483
      %v9516 = vadd.f32 %v9292, %v9484
      %v9517 = vadd.f32 %v9293, %v9485
      %v9518 = vadd.f32 %v9294, %v9486
      %v9519 = vadd.f32 %v9295, %v9487
      %v9520 = vadd.f32 %v9296, %v9488
      %v9521 = vadd.f32 %v9297, %v9489
      %v9522 = vadd.f32 %v9298, %v9490
      %v9523 = vadd.f32 %v9299, %v9491
      %v9524 = vadd.f32 %v9300, %v9492
      %v9525 = vadd.f32 %v9301, %v9493
      %v9526 = vadd.f32 %v9302, %v9494
      %v9527 = vadd.f32 %v9303, %v9495
      %v9528 = vadd.f32 %v9304, %v9496
      %v9529 = vadd.f32 %v9305, %v9497
      %v9530 = vadd.f32 %v9306, %v9498
      %v9531 = vadd.f32 %v9307, %v9499
      %v9532 = vadd.f32 %v9308, %v9500
      %v9533 = vadd.f32 %v9309, %v9501
      %9566 = vrot.lane.b32.xlu0 %v3973, 4
      %v9567 = vpop.permute.xlu0 %9566
      %9568 = vrot.lane.b32.xlu0 %v3974, 4
      %v9569 = vpop.permute.xlu0 %9568
      %9570 = vrot.lane.b32.xlu0 %v3975, 4
      %v9571 = vpop.permute.xlu0 %9570
      %9572 = vrot.lane.b32.xlu0 %v3976, 4
      %v9573 = vpop.permute.xlu0 %9572
      %9574 = vrot.lane.b32.xlu0 %v3977, 4
      %v9575 = vpop.permute.xlu0 %9574
      %9576 = vrot.lane.b32.xlu0 %v3978, 4
      %v9577 = vpop.permute.xlu0 %9576
      %9578 = vrot.lane.b32.xlu0 %v3979, 4
      %v9579 = vpop.permute.xlu0 %9578
      %9580 = vrot.lane.b32.xlu0 %v3980, 4
      %v9581 = vpop.permute.xlu0 %9580
      %9582 = vrot.lane.b32.xlu0 %v3981, 4
      %v9583 = vpop.permute.xlu0 %9582
      %9584 = vrot.lane.b32.xlu0 %v3982, 4
      %v9585 = vpop.permute.xlu0 %9584
      %9586 = vrot.lane.b32.xlu0 %v3983, 4
      %v9587 = vpop.permute.xlu0 %9586
      %9588 = vrot.lane.b32.xlu0 %v3984, 4
      %v9589 = vpop.permute.xlu0 %9588
      %9590 = vrot.lane.b32.xlu0 %v3985, 4
      %v9591 = vpop.permute.xlu0 %9590
      %9592 = vrot.lane.b32.xlu0 %v3986, 4
      %v9593 = vpop.permute.xlu0 %9592
      %9594 = vrot.lane.b32.xlu0 %v3987, 4
      %v9595 = vpop.permute.xlu0 %9594
      %9596 = vrot.lane.b32.xlu0 %v3988, 4
      %v9597 = vpop.permute.xlu0 %9596
      %9598 = vrot.lane.b32.xlu0 %v3989, 4
      %v9599 = vpop.permute.xlu0 %9598
      %9600 = vrot.lane.b32.xlu0 %v3990, 4
      %v9601 = vpop.permute.xlu0 %9600
      %9602 = vrot.lane.b32.xlu0 %v3991, 4
      %v9603 = vpop.permute.xlu0 %9602
      %9604 = vrot.lane.b32.xlu0 %v3992, 4
      %v9605 = vpop.permute.xlu0 %9604
      %9606 = vrot.lane.b32.xlu0 %v3993, 4
      %v9607 = vpop.permute.xlu0 %9606
      %9608 = vrot.lane.b32.xlu0 %v3994, 4
      %v9609 = vpop.permute.xlu0 %9608
      %9610 = vrot.lane.b32.xlu0 %v3995, 4
      %v9611 = vpop.permute.xlu0 %9610
      %9612 = vrot.lane.b32.xlu0 %v3996, 4
      %v9613 = vpop.permute.xlu0 %9612
      %9614 = vrot.lane.b32.xlu0 %v3997, 4
      %v9615 = vpop.permute.xlu0 %9614
      %9616 = vrot.lane.b32.xlu0 %v3998, 4
      %v9617 = vpop.permute.xlu0 %9616
      %9618 = vrot.lane.b32.xlu0 %v3999, 4
      %v9619 = vpop.permute.xlu0 %9618
      %9620 = vrot.lane.b32.xlu0 %v4000, 4
      %v9621 = vpop.permute.xlu0 %9620
      %9622 = vrot.lane.b32.xlu0 %v4001, 4
      %v9623 = vpop.permute.xlu0 %9622
      %9624 = vrot.lane.b32.xlu0 %v4002, 4
      %v9625 = vpop.permute.xlu0 %9624
      %9626 = vrot.lane.b32.xlu0 %v4003, 4
      %v9627 = vpop.permute.xlu0 %9626
      %9628 = vrot.lane.b32.xlu0 %v4004, 4
      %v9629 = vpop.permute.xlu0 %9628
      %9694 = vrot.lane.b32.xlu0 %v6675, 8
      %v9695 = vpop.permute.xlu0 %9694
      %9696 = vrot.lane.b32.xlu0 %v6676, 8
      %v9697 = vpop.permute.xlu0 %9696
      %9698 = vrot.lane.b32.xlu0 %v6677, 8
      %v9699 = vpop.permute.xlu0 %9698
      %9700 = vrot.lane.b32.xlu0 %v6678, 8
      %v9701 = vpop.permute.xlu0 %9700
      %9702 = vrot.lane.b32.xlu0 %v6679, 8
      %v9703 = vpop.permute.xlu0 %9702
      %9704 = vrot.lane.b32.xlu0 %v6680, 8
      %v9705 = vpop.permute.xlu0 %9704
      %9706 = vrot.lane.b32.xlu0 %v6681, 8
      %v9707 = vpop.permute.xlu0 %9706
      %9708 = vrot.lane.b32.xlu0 %v6682, 8
      %v9709 = vpop.permute.xlu0 %9708
      %9710 = vrot.lane.b32.xlu0 %v6683, 8
      %v9711 = vpop.permute.xlu0 %9710
      %9712 = vrot.lane.b32.xlu0 %v6684, 8
      %v9713 = vpop.permute.xlu0 %9712
      %9714 = vrot.lane.b32.xlu0 %v6685, 8
      %v9715 = vpop.permute.xlu0 %9714
      %9716 = vrot.lane.b32.xlu0 %v6686, 8
      %v9717 = vpop.permute.xlu0 %9716
      %9718 = vrot.lane.b32.xlu0 %v6687, 8
      %v9719 = vpop.permute.xlu0 %9718
      %9720 = vrot.lane.b32.xlu0 %v6688, 8
      %v9721 = vpop.permute.xlu0 %9720
      %9722 = vrot.lane.b32.xlu0 %v6689, 8
      %v9723 = vpop.permute.xlu0 %9722
      %9724 = vrot.lane.b32.xlu0 %v6690, 8
      %v9725 = vpop.permute.xlu0 %9724
      %9726 = vrot.lane.b32.xlu0 %v6691, 8
      %v9727 = vpop.permute.xlu0 %9726
      %9728 = vrot.lane.b32.xlu0 %v6692, 8
      %v9729 = vpop.permute.xlu0 %9728
      %9730 = vrot.lane.b32.xlu0 %v6693, 8
      %v9731 = vpop.permute.xlu0 %9730
      %9732 = vrot.lane.b32.xlu0 %v6694, 8
      %v9733 = vpop.permute.xlu0 %9732
      %9734 = vrot.lane.b32.xlu0 %v6695, 8
      %v9735 = vpop.permute.xlu0 %9734
      %9736 = vrot.lane.b32.xlu0 %v6696, 8
      %v9737 = vpop.permute.xlu0 %9736
      %9738 = vrot.lane.b32.xlu0 %v6697, 8
      %v9739 = vpop.permute.xlu0 %9738
      %9740 = vrot.lane.b32.xlu0 %v6698, 8
      %v9741 = vpop.permute.xlu0 %9740
      %9742 = vrot.lane.b32.xlu0 %v6699, 8
      %v9743 = vpop.permute.xlu0 %9742
      %9744 = vrot.lane.b32.xlu0 %v6700, 8
      %v9745 = vpop.permute.xlu0 %9744
      %9746 = vrot.lane.b32.xlu0 %v6701, 8
      %v9747 = vpop.permute.xlu0 %9746
      %9748 = vrot.lane.b32.xlu0 %v6702, 8
      %v9749 = vpop.permute.xlu0 %9748
      %9750 = vrot.lane.b32.xlu0 %v6703, 8
      %v9751 = vpop.permute.xlu0 %9750
      %9752 = vrot.lane.b32.xlu0 %v6704, 8
      %v9753 = vpop.permute.xlu0 %9752
      %9754 = vrot.lane.b32.xlu0 %v6705, 8
      %v9755 = vpop.permute.xlu0 %9754
      %9756 = vrot.lane.b32.xlu0 %v6706, 8
      %v9757 = vpop.permute.xlu0 %9756
      %9822 = vrot.lane.b32.xlu0 %v9502, 12
      %v9823 = vpop.permute.xlu0 %9822
      %9824 = vrot.lane.b32.xlu0 %v9503, 12
      %v9825 = vpop.permute.xlu0 %9824
      %9826 = vrot.lane.b32.xlu0 %v9504, 12
      %v9827 = vpop.permute.xlu0 %9826
      %9828 = vrot.lane.b32.xlu0 %v9505, 12
      %v9829 = vpop.permute.xlu0 %9828
      %9830 = vrot.lane.b32.xlu0 %v9506, 12
      %v9831 = vpop.permute.xlu0 %9830
      %9832 = vrot.lane.b32.xlu0 %v9507, 12
      %v9833 = vpop.permute.xlu0 %9832
      %9834 = vrot.lane.b32.xlu0 %v9508, 12
      %v9835 = vpop.permute.xlu0 %9834
      %9836 = vrot.lane.b32.xlu0 %v9509, 12
      %v9837 = vpop.permute.xlu0 %9836
      %9838 = vrot.lane.b32.xlu0 %v9510, 12
      %v9839 = vpop.permute.xlu0 %9838
      %9840 = vrot.lane.b32.xlu0 %v9511, 12
      %v9841 = vpop.permute.xlu0 %9840
      %9842 = vrot.lane.b32.xlu0 %v9512, 12
      %v9843 = vpop.permute.xlu0 %9842
      %9844 = vrot.lane.b32.xlu0 %v9513, 12
      %v9845 = vpop.permute.xlu0 %9844
      %9846 = vrot.lane.b32.xlu0 %v9514, 12
      %v9847 = vpop.permute.xlu0 %9846
      %9848 = vrot.lane.b32.xlu0 %v9515, 12
      %v9849 = vpop.permute.xlu0 %9848
      %9850 = vrot.lane.b32.xlu0 %v9516, 12
      %v9851 = vpop.permute.xlu0 %9850
      %9852 = vrot.lane.b32.xlu0 %v9517, 12
      %v9853 = vpop.permute.xlu0 %9852
      %9854 = vrot.lane.b32.xlu0 %v9518, 12
      %v9855 = vpop.permute.xlu0 %9854
      %9856 = vrot.lane.b32.xlu0 %v9519, 12
      %v9857 = vpop.permute.xlu0 %9856
      %9858 = vrot.lane.b32.xlu0 %v9520, 12
      %v9859 = vpop.permute.xlu0 %9858
      %9860 = vrot.lane.b32.xlu0 %v9521, 12
      %v9861 = vpop.permute.xlu0 %9860
      %9862 = vrot.lane.b32.xlu0 %v9522, 12
      %v9863 = vpop.permute.xlu0 %9862
      %9864 = vrot.lane.b32.xlu0 %v9523, 12
      %v9865 = vpop.permute.xlu0 %9864
      %9866 = vrot.lane.b32.xlu0 %v9524, 12
      %v9867 = vpop.permute.xlu0 %9866
      %9868 = vrot.lane.b32.xlu0 %v9525, 12
      %v9869 = vpop.permute.xlu0 %9868
      %9870 = vrot.lane.b32.xlu0 %v9526, 12
      %v9871 = vpop.permute.xlu0 %9870
      %9872 = vrot.lane.b32.xlu0 %v9527, 12
      %v9873 = vpop.permute.xlu0 %9872
      %9874 = vrot.lane.b32.xlu0 %v9528, 12
      %v9875 = vpop.permute.xlu0 %9874
      %9876 = vrot.lane.b32.xlu0 %v9529, 12
      %v9877 = vpop.permute.xlu0 %9876
      %9878 = vrot.lane.b32.xlu0 %v9530, 12
      %v9879 = vpop.permute.xlu0 %9878
      %9880 = vrot.lane.b32.xlu0 %v9531, 12
      %v9881 = vpop.permute.xlu0 %9880
      %9882 = vrot.lane.b32.xlu0 %v9532, 12
      %v9883 = vpop.permute.xlu0 %9882
      %9884 = vrot.lane.b32.xlu0 %v9533, 12
      %v9885 = vpop.permute.xlu0 %9884
      %v9918 = vsel %vm621, %v589, %v9567
      %v9919 = vsel %vm621, %v590, %v9569
      %v9920 = vsel %vm621, %v591, %v9571
      %v9921 = vsel %vm621, %v592, %v9573
      %v9922 = vsel %vm621, %v593, %v9575
      %v9923 = vsel %vm621, %v594, %v9577
      %v9924 = vsel %vm621, %v595, %v9579
      %v9925 = vsel %vm621, %v596, %v9581
      %v9926 = vsel %vm621, %v597, %v9583
      %v9927 = vsel %vm621, %v598, %v9585
      %v9928 = vsel %vm621, %v599, %v9587
      %v9929 = vsel %vm621, %v600, %v9589
      %v9930 = vsel %vm621, %v601, %v9591
      %v9931 = vsel %vm621, %v602, %v9593
      %v9932 = vsel %vm621, %v603, %v9595
      %v9933 = vsel %vm621, %v604, %v9597
      %v9934 = vsel %vm621, %v605, %v9599
      %v9935 = vsel %vm621, %v606, %v9601
      %v9936 = vsel %vm621, %v607, %v9603
      %v9937 = vsel %vm621, %v608, %v9605
      %v9938 = vsel %vm621, %v609, %v9607
      %v9939 = vsel %vm621, %v610, %v9609
      %v9940 = vsel %vm621, %v611, %v9611
      %v9941 = vsel %vm621, %v612, %v9613
      %v9942 = vsel %vm621, %v613, %v9615
      %v9943 = vsel %vm621, %v614, %v9617
      %v9944 = vsel %vm621, %v615, %v9619
      %v9945 = vsel %vm621, %v616, %v9621
      %v9946 = vsel %vm621, %v617, %v9623
      %v9947 = vsel %vm621, %v618, %v9625
      %v9948 = vsel %vm621, %v619, %v9627
      %v9949 = vsel %vm621, %v620, %v9629
      %vm9950 = vcmask 64512
      %v9951 = vsel %vm9950, %v9918, %v9695
      %v9952 = vsel %vm9950, %v9919, %v9697
      %v9953 = vsel %vm9950, %v9920, %v9699
      %v9954 = vsel %vm9950, %v9921, %v9701
      %v9955 = vsel %vm9950, %v9922, %v9703
      %v9956 = vsel %vm9950, %v9923, %v9705
      %v9957 = vsel %vm9950, %v9924, %v9707
      %v9958 = vsel %vm9950, %v9925, %v9709
      %v9959 = vsel %vm9950, %v9926, %v9711
      %v9960 = vsel %vm9950, %v9927, %v9713
      %v9961 = vsel %vm9950, %v9928, %v9715
      %v9962 = vsel %vm9950, %v9929, %v9717
      %v9963 = vsel %vm9950, %v9930, %v9719
      %v9964 = vsel %vm9950, %v9931, %v9721
      %v9965 = vsel %vm9950, %v9932, %v9723
      %v9966 = vsel %vm9950, %v9933, %v9725
      %v9967 = vsel %vm9950, %v9934, %v9727
      %v9968 = vsel %vm9950, %v9935, %v9729
      %v9969 = vsel %vm9950, %v9936, %v9731
      %v9970 = vsel %vm9950, %v9937, %v9733
      %v9971 = vsel %vm9950, %v9938, %v9735
      %v9972 = vsel %vm9950, %v9939, %v9737
      %v9973 = vsel %vm9950, %v9940, %v9739
      %v9974 = vsel %vm9950, %v9941, %v9741
      %v9975 = vsel %vm9950, %v9942, %v9743
      %v9976 = vsel %vm9950, %v9943, %v9745
      %v9977 = vsel %vm9950, %v9944, %v9747
      %v9978 = vsel %vm9950, %v9945, %v9749
      %v9979 = vsel %vm9950, %v9946, %v9751
      %v9980 = vsel %vm9950, %v9947, %v9753
      %v9981 = vsel %vm9950, %v9948, %v9755
      %v9982 = vsel %vm9950, %v9949, %v9757
      %vm9983 = vcmask 97280
      %v9984 = vsel %vm9983, %v9951, %v9823
      %v9985 = vsel %vm9983, %v9952, %v9825
      %v9986 = vsel %vm9983, %v9953, %v9827
      %v9987 = vsel %vm9983, %v9954, %v9829
      %v9988 = vsel %vm9983, %v9955, %v9831
      %v9989 = vsel %vm9983, %v9956, %v9833
      %v9990 = vsel %vm9983, %v9957, %v9835
      %v9991 = vsel %vm9983, %v9958, %v9837
      %v9992 = vsel %vm9983, %v9959, %v9839
      %v9993 = vsel %vm9983, %v9960, %v9841
      %v9994 = vsel %vm9983, %v9961, %v9843
      %v9995 = vsel %vm9983, %v9962, %v9845
      %v9996 = vsel %vm9983, %v9963, %v9847
      %v9997 = vsel %vm9983, %v9964, %v9849
      %v9998 = vsel %vm9983, %v9965, %v9851
      %v9999 = vsel %vm9983, %v9966, %v9853
      %v10000 = vsel %vm9983, %v9967, %v9855
      %v10001 = vsel %vm9983, %v9968, %v9857
      %v10002 = vsel %vm9983, %v9969, %v9859
      %v10003 = vsel %vm9983, %v9970, %v9861
      %v10004 = vsel %vm9983, %v9971, %v9863
      %v10005 = vsel %vm9983, %v9972, %v9865
      %v10006 = vsel %vm9983, %v9973, %v9867
      %v10007 = vsel %vm9983, %v9974, %v9869
      %v10008 = vsel %vm9983, %v9975, %v9871
      %v10009 = vsel %vm9983, %v9976, %v9873
      %v10010 = vsel %vm9983, %v9977, %v9875
      %v10011 = vsel %vm9983, %v9978, %v9877
      %v10012 = vsel %vm9983, %v9979, %v9879
      %v10013 = vsel %vm9983, %v9980, %v9881
      %v10014 = vsel %vm9983, %v9981, %v9883
      %v10015 = vsel %vm9983, %v9982, %v9885
      %10016 = vst.msk [vmem:[%s170] sm:$0xff] %vm1066, %v9984
      %10017 = vst.msk [vmem:[%s170 + $0x8] sm:$0xff] %vm1066, %v9985
      %10018 = vst.msk [vmem:[%s170 + $0x10] sm:$0xff] %vm1066, %v9986
      %10019 = vst.msk [vmem:[%s170 + $0x18] sm:$0xff] %vm1066, %v9987
      %10020 = vst.msk [vmem:[%s170 + $0x20] sm:$0xff] %vm1066, %v9988
      %10021 = vst.msk [vmem:[%s170 + $0x28] sm:$0xff] %vm1066, %v9989
      %10022 = vst.msk [vmem:[%s170 + $0x30] sm:$0xff] %vm1066, %v9990
      %10023 = vst.msk [vmem:[%s170 + $0x38] sm:$0xff] %vm1066, %v9991
      %10024 = vst.msk [vmem:[%s170 + $0x40] sm:$0xff] %vm1066, %v9992
      %10025 = vst.msk [vmem:[%s170 + $0x48] sm:$0xff] %vm1066, %v9993
      %10026 = vst.msk [vmem:[%s170 + $0x50] sm:$0xff] %vm1066, %v9994
      %10027 = vst.msk [vmem:[%s170 + $0x58] sm:$0xff] %vm1066, %v9995
      %10028 = vst.msk [vmem:[%s170 + $0x60] sm:$0xff] %vm1066, %v9996
      %10029 = vst.msk [vmem:[%s170 + $0x68] sm:$0xff] %vm1066, %v9997
      %10030 = vst.msk [vmem:[%s170 + $0x70] sm:$0xff] %vm1066, %v9998
      %10031 = vst.msk [vmem:[%s170 + $0x78] sm:$0xff] %vm1066, %v9999
      %10032 = vst.msk [vmem:[%s170 + $0x80] sm:$0xff] %vm1066, %v10000
      %10033 = vst.msk [vmem:[%s170 + $0x88] sm:$0xff] %vm1066, %v10001
      %10034 = vst.msk [vmem:[%s170 + $0x90] sm:$0xff] %vm1066, %v10002
      %10035 = vst.msk [vmem:[%s170 + $0x98] sm:$0xff] %vm1066, %v10003
      %10036 = vst.msk [vmem:[%s170 + $0xa0] sm:$0xff] %vm1066, %v10004
      %10037 = vst.msk [vmem:[%s170 + $0xa8] sm:$0xff] %vm1066, %v10005
      %10038 = vst.msk [vmem:[%s170 + $0xb0] sm:$0xff] %vm1066, %v10006
      %10039 = vst.msk [vmem:[%s170 + $0xb8] sm:$0xff] %vm1066, %v10007
      %10040 = vst.msk [vmem:[%s170 + $0xc0] sm:$0xff] %vm1066, %v10008
      %10041 = vst.msk [vmem:[%s170 + $0xc8] sm:$0xff] %vm1066, %v10009
      %10042 = vst.msk [vmem:[%s170 + $0xd0] sm:$0xff] %vm1066, %v10010
      %10043 = vst.msk [vmem:[%s170 + $0xd8] sm:$0xff] %vm1066, %v10011
      %10044 = vst.msk [vmem:[%s170 + $0xe0] sm:$0xff] %vm1066, %v10012
      %10045 = vst.msk [vmem:[%s170 + $0xe8] sm:$0xff] %vm1066, %v10013
      %10046 = vst.msk [vmem:[%s170 + $0xf0] sm:$0xff] %vm1066, %v10014
      %10047 = vst.msk [vmem:[%s170 + $0xf8] sm:$0xff] %vm1066, %v10015
      %p10048 = scmp.lt.s32.totalorder %s14, 1
      %s10049 = scalar_select %p10048, %s14, 1
      %s10050 = smul.addr %s10049, 32
      %s10051 = smul.addr %s10050, 8
      %s10052 = scalar_lea.vmem %s3, %s10051
      // Predicated region
      $region33: #{dense_block_forward.1} parent=31 // pred_check
        %p10053 = pneg %p100
      $region34: #{dense_block_forward.1} parent=31 // pred_check_branch
        %10055 = sbr.rel (%p10053) target = $region36
      $region35: #{dense_block_forward.1} parent=31 // pred_region
        _
      $region36: #{dense_block_forward.1} parent=31 // pred_fallthru
        _
    $region32: #{dense_block_forward.1} parent=5 // pred_fallthru
      _
    %p10056 = scmp.le.s32.totalorder 2, %s9
    // Predicated region
    $region37: #{dense_block_forward.1} parent=5 // pred_check
      %p10057 = pneg %p10056
    $region38: #{dense_block_forward.1} parent=5 // pred_check_branch
      %10059 = sbr.rel (%p10057) target = $region40
    $region39: #{dense_block_forward.1} parent=5 // pred_region
      %s10060 = ssub.s32 %s9, 2
      // Predicated region
      $region41: #{dense_block_forward.1} parent=39 // pred_check
        %p10061 = pneg %p106
      $region42: #{dense_block_forward.1} parent=39 // pred_check_branch
        %10063 = sbr.rel (%p10061) target = $region44
      $region43: #{dense_block_forward.1} parent=39 // pred_region
        %p10064 = scmp.lt.s32.totalorder %s15, 1
        %s10065 = scalar_select %p10064, %s15, 1
        %s10066 = smul.addr %s10065, 32
        %s10067 = smul.addr %s10066, 8
        %s10068 = scalar_lea.vmem %s3, %s10067
      $region44: #{dense_block_forward.1} parent=39 // pred_fallthru
        _
    $region40: #{dense_block_forward.1} parent=5 // pred_fallthru
      _
  $region6: #{dense_block_forward.1} parent=0 // loop_footer
    %s13 = sadd.s32 1, %s9
  $region7: #{dense_block_forward.1} parent=0 // loop_footer_branch
    %8 = sbr.rel target = $region3
  $region8: #{dense_block_forward.1} parent=0 // loop_exit
    _

</llo_original>
